<compile_context>
chip_gen: v7x
topology: tpu7x:2x2x1
jax: 0.10.0
libtpu: 0.0.40
codegen_flags: <defaults>
</compile_context>

<pallas_src>
import jax
import jax.numpy as jnp
from jax.experimental import pallas as pl
from jax.experimental.pallas import tpu as pltpu


# -----------------------------------------------------------------------------
# Config (cfg.* values from the original repo, fixed here deterministically)
# -----------------------------------------------------------------------------
NUM_LATENT_CODE = 4       # cfg.num_latent_code
D_FEATURE = 256
D_HIDDEN = 256
D_OUT = 3
MULTIRES_VIEW = 4
EMBED_VIEW_DIM = 3 + 3 * 2 * MULTIRES_VIEW            # 27
D_IN0 = 9 + D_FEATURE + (EMBED_VIEW_DIM - 3)          # 289 (full lin0 fan-in)
D_GEOM = 3 + EMBED_VIEW_DIM + 3                       # 33 (points+posenc+normals)
D_GEOM_PAD = 128                                      # 33 padded to one lane tile
D_OUT_PAD = 128                                       # 3 padded to lane-dense 128
LATENT_DIM = 128


# -----------------------------------------------------------------------------
# Pallas kernel: the whole MLP for a tile of TN points.
# -----------------------------------------------------------------------------
def _color_mlp_kernel(xg_ref, xf_ref,
                      w0g_ref, w0f_ref, b0_ref,
                      w123_ref, b1_ref, b2_ref, b3_ref,
                      w4_ref, b4_ref,
                      o_ref):
    # lin0 = f32 geometric part (K=128) + bf16 feature part (K=256), both
    # accumulated in f32.  The in-kernel bf16 cast of the features replaces the
    # wrapper-side HBM cast pass.
    h = jnp.dot(xg_ref[...], w0g_ref[...],
                preferred_element_type=jnp.float32)
    h = h + jnp.dot(xf_ref[...].astype(jnp.bfloat16), w0f_ref[...],
                    preferred_element_type=jnp.float32)
    h = jnp.maximum(h + b0_ref[...], 0.0)                            # lin0 + relu

    h = jnp.dot(h.astype(jnp.bfloat16), w123_ref[:D_HIDDEN, :],
                preferred_element_type=jnp.float32) + b1_ref[...]
    h = jnp.maximum(h, 0.0)                                          # lin1 + relu

    h = jnp.dot(h.astype(jnp.bfloat16), w123_ref[D_HIDDEN:2 * D_HIDDEN, :],
                preferred_element_type=jnp.float32) + b2_ref[...]
    h = jnp.maximum(h, 0.0)                                          # lin2 + relu

    # lin3 on cat([net, latent]): the latent part (latent @ W3b) is constant
    # across all points and has been folded into b3 in the wrapper.
    h = jnp.dot(h.astype(jnp.bfloat16), w123_ref[2 * D_HIDDEN:, :],
                preferred_element_type=jnp.float32) + b3_ref[...]
    h = jnp.maximum(h, 0.0)                                          # lin3 + relu

    y = jnp.dot(h.astype(jnp.bfloat16), w4_ref[...],
                preferred_element_type=jnp.float32) + b4_ref[...]
    o_ref[...] = jax.nn.sigmoid(y).astype(o_ref.dtype)               # squeeze_out


def _const_spec(shape, single_buffer):
    """Weight / bias resident in VMEM, same block for every grid step."""
    index_map = lambda i: (0,) * len(shape)
    if single_buffer:
        # index_map never changes -> one resident copy is enough; drop the
        # second pipeline buffer (~0.9 MB total) and its prologue DMA.
        return pl.BlockSpec(shape, index_map, pipeline_mode=pl.Buffered(1))
    return pl.BlockSpec(shape, index_map)


def _choose_tile_n(n, max_tile=1024):
    """Largest tile <= max_tile that yields an even number of blocks >= 2.

    Even block count keeps both v7x TensorCores busy with no straggler step
    (no effect on single-TC v5e/v6e); large tiles amortize the ~0.35us/step
    pipeline overhead.  Tiles are multiples of 16 (bf16 sublane packing of the
    output tile)."""
    pairs = max(1, -(-n // (2 * max_tile)))      # number of block pairs
    tile = -(-n // (2 * pairs))                  # cdiv(n, 2*pairs)
    tile = -(-tile // 16) * 16                   # round up to multiple of 16
    return max(16, min(max_tile, tile))


def color_mlp_pallas(x_geom, x_feat, latent, params, *, tile_n=None):
    """x_geom: (N, 33|128) f32, x_feat: (N, 256), latent: (1, 128) -> (N, 3) f32."""
    n = x_feat.shape[0]
    assert x_feat.shape[1] == D_FEATURE
    if x_geom.shape[1] == D_GEOM:                # allow unpadded geometric input
        x_geom = jnp.pad(x_geom, ((0, 0), (0, D_GEOM_PAD - D_GEOM)))
    assert x_geom.shape == (n, D_GEOM_PAD)

    (w0, b0, w1, b1, w2, b2, w3a, w3b, b3, w4, b4) = params

    # --- constant folding / packing done once outside the kernel -------------
    # latent projection is constant across points -> fold into bias.
    b3_eff = b3 + latent.astype(jnp.float32) @ w3b                    # (1, 256)

    # split lin0: geometric rows stay f32 (accuracy), feature rows go bf16.
    w0g = jnp.pad(w0[:D_GEOM], ((0, D_GEOM_PAD - D_GEOM), (0, 0)))    # (128,256) f32
    w0f = w0[D_GEOM:].astype(jnp.bfloat16)                            # (256,256) bf16

    # pack the three 256x256 hidden weights into one resident bf16 buffer.
    w123 = jnp.concatenate([w1, w2, w3a], axis=0).astype(jnp.bfloat16)  # (768,256)

    # pad lin4 output 3 -> 128 for lane-dense stores (extra cols sliced away).
    w4_p = jnp.pad(w4, ((0, 0), (0, D_OUT_PAD - D_OUT))).astype(jnp.bfloat16)
    b4_p = jnp.pad(b4, ((0, 0), (0, D_OUT_PAD - D_OUT)))              # (1,128) f32

    if tile_n is None:
        tile_n = _choose_tile_n(n)
    assert tile_n % 16 == 0, "tile_n must be a multiple of 16"
    grid = (pl.cdiv(n, tile_n),)   # no explicit N padding: partial last block OK

    # advisory cost estimate for the XLA scheduler
    flops = 2 * n * (D_GEOM_PAD * D_HIDDEN + D_FEATURE * D_HIDDEN
                     + 3 * D_HIDDEN * D_HIDDEN + D_HIDDEN * D_OUT_PAD)
    weight_bytes = (D_GEOM_PAD * D_HIDDEN * 4 + D_FEATURE * D_HIDDEN * 2
                    + 3 * D_HIDDEN * D_HIDDEN * 2 + D_HIDDEN * D_OUT_PAD * 2
                    + (4 * D_HIDDEN + D_OUT_PAD) * 4)
    bytes_accessed = (n * D_GEOM_PAD * 4
                      + n * D_FEATURE * jnp.dtype(x_feat.dtype).itemsize
                      + n * D_OUT_PAD * 2                             # bf16 out
                      + weight_bytes)
    cost = pl.CostEstimate(flops=int(flops),
                           transcendentals=int(n * D_OUT_PAD),
                           bytes_accessed=int(bytes_accessed))

    # only very large point tiles need more than the scoped-VMEM default
    # (relevant on v7x, which has 64 MiB physical VMEM).
    vmem_limit = (48 << 20) if tile_n >= 2048 else None
    compiler_params = pltpu.CompilerParams(
        dimension_semantics=("parallel",),
        vmem_limit_bytes=vmem_limit,
    )

    def _run(single_buffer_weights):
        const = lambda a: _const_spec(a.shape, single_buffer_weights)
        in_specs = [
            pl.BlockSpec((tile_n, D_GEOM_PAD), lambda i: (i, 0)),   # geom tile f32
            pl.BlockSpec((tile_n, D_FEATURE), lambda i: (i, 0)),    # feature tile
            const(w0g), const(w0f), const(b0),
            const(w123), const(b1), const(b2), const(b3_eff),
            const(w4_p), const(b4_p),
        ]
        out_specs = pl.BlockSpec((tile_n, D_OUT_PAD), lambda i: (i, 0))
        return pl.pallas_call(
            _color_mlp_kernel,
            out_shape=jax.ShapeDtypeStruct((n, D_OUT_PAD), jnp.bfloat16),
            grid_spec=pltpu.PrefetchScalarGridSpec(
                num_scalar_prefetch=0,
                grid=grid,
                in_specs=in_specs,
                out_specs=out_specs,
            ),
            compiler_params=compiler_params,
            cost_estimate=cost,
        )(x_geom, x_feat, w0g, w0f, b0, w123, b1, b2, b3_eff, w4_p, b4_p)

    try:
        out = _run(True)
    except Exception:
        # Fallback if this JAX/Mosaic build rejects pipeline_mode=Buffered(1)
        # on top-level pallas_call BlockSpecs (costs ~0.9 MB extra VMEM only).
        out = _run(False)

    # drop the 125 padded output lanes (they hold sigmoid(0)=0.5 and must never
    # be summed, only discarded).  Upcast to f32 for downstream consumers.
    return out[:, :D_OUT].astype(jnp.float32)


# -----------------------------------------------------------------------------
# Glue: positional embedding, small concat, embedding lookup (plain JAX)
# -----------------------------------------------------------------------------
def embed_view(v):
    """NeRF embedder, multires=4, include_input=True: (N, 3) -> (N, 27)."""
    outs = [v]
    for i in range(MULTIRES_VIEW):
        freq = 2.0 ** i
        outs.append(jnp.sin(v * freq))
        outs.append(jnp.cos(v * freq))
    return jnp.concatenate(outs, axis=-1)


def color_network_forward(params, color_latent_table,
                          points, normals, view_dirs, feature_vectors,
                          latent_index, *, tile_n=None):
    n = points.shape[0]
    view_emb = embed_view(view_dirs)                                   # (N, 27)
    # mode == 'idr': cat([points, view_dirs(embedded), normals]) is only 33
    # dims -> build it (already zero-padded to 128 lanes) in one fused concat;
    # feature_vectors (N, 256) are passed to the kernel untouched.
    x_geom = jnp.concatenate(
        [points, view_emb, normals,
         jnp.zeros((n, D_GEOM_PAD - D_GEOM), points.dtype)], axis=-1)  # (N, 128)
    latent = color_latent_table[latent_index]                          # (1, 128)
    return color_mlp_pallas(x_geom, feature_vectors, latent, params, tile_n=tile_n)


# Pure-JAX f32 reference (for verification only)
def color_network_reference(params, color_latent_table,
                            points, normals, view_dirs, feature_vectors,
                            latent_index):
    (w0, b0, w1, b1, w2, b2, w3a, w3b, b3, w4, b4) = params
    view_emb = embed_view(view_dirs)
    x = jnp.concatenate([points, view_emb, normals, feature_vectors], axis=-1)
    relu = lambda t: jnp.maximum(t, 0.0)
    net = relu(x @ w0 + b0)
    net = relu(net @ w1 + b1)
    net = relu(net @ w2 + b2)
    latent = color_latent_table[latent_index]                          # (1, 128)
    latent = jnp.broadcast_to(latent, (net.shape[0], LATENT_DIM))
    features = jnp.concatenate([net, latent], axis=1)
    w3 = jnp.concatenate([w3a, w3b], axis=0)
    net = relu(features @ w3 + b3)
    out = net @ w4 + b4
    return jax.nn.sigmoid(out)


# -----------------------------------------------------------------------------
# Deterministic parameter init (PyTorch-Linear-style uniform bounds)
# weight_norm is identity at init time, so plain weights match the module.
# -----------------------------------------------------------------------------
def _init_linear(key, fan_in, fan_out):
    kw, kb = jax.random.split(key)
    bound = 1.0 / jnp.sqrt(float(fan_in))
    w = jax.random.uniform(kw, (fan_in, fan_out), jnp.float32, -bound, bound)
    b = jax.random.uniform(kb, (1, fan_out), jnp.float32, -bound, bound)
    return w, b


def init_params(key):
    k0, k1, k2, k3, k4, ke = jax.random.split(key, 6)
    w0, b0 = _init_linear(k0, D_IN0, D_HIDDEN)                     # lin0: 289 -> 256
    w1, b1 = _init_linear(k1, D_HIDDEN, D_HIDDEN)                  # lin1
    w2, b2 = _init_linear(k2, D_HIDDEN, D_HIDDEN)                  # lin2
    w3, b3 = _init_linear(k3, D_HIDDEN + LATENT_DIM, D_HIDDEN)     # lin3: 384 -> 256
    w4, b4 = _init_linear(k4, D_HIDDEN, D_OUT)                     # lin4: 256 -> 3
    w3a, w3b = w3[:D_HIDDEN], w3[D_HIDDEN:]
    color_latent_table = jax.random.normal(
        ke, (NUM_LATENT_CODE, LATENT_DIM), jnp.float32)            # nn.Embedding
    params = (w0, b0, w1, b1, w2, b2, w3a, w3b, b3, w4, b4)
    return params, color_latent_table


# -----------------------------------------------------------------------------
if __name__ == "__main__":
    key = jax.random.PRNGKey(0)
    kp, kn, kv, kf, kw = jax.random.split(key, 5)

    N = 512  # small demo; auto tile picks 256 -> grid of 2 (both v7x TCs busy)
    points = jax.random.normal(kp, (N, 3), jnp.float32)
    normals = jax.random.normal(kn, (N, 3), jnp.float32)
    view_dirs = jax.random.normal(kv, (N, 3), jnp.float32)
    feature_vectors = 0.1 * jax.random.normal(kf, (N, D_FEATURE), jnp.float32)
    latent_index = jnp.array([1], dtype=jnp.int32)

    params, color_latent_table = init_params(kw)

    out = color_network_forward(params, color_latent_table,
                                points, normals, view_dirs, feature_vectors,
                                latent_index)
    out = jax.block_until_ready(out)

    ref = color_network_reference(params, color_latent_table,
                                  points, normals, view_dirs, feature_vectors,
                                  latent_index)
    assert out.shape == (N, D_OUT)
    # bf16 feature/weight matmuls with f32 accumulation + bf16 output store.
    assert jnp.allclose(out, ref, atol=2e-2, rtol=5e-2), "mismatch vs reference"

    print("KERNEL_OK")
</pallas_src>

<mosaic_0001>
module attributes {stable_mosaic.version = 11 : i64} {
  func.func @_color_mlp_kernel(%arg0: i32, %arg1: memref<256x128xf32, #tpu.memory_space<vmem>>, %arg2: memref<256x256xf32, #tpu.memory_space<vmem>>, %arg3: memref<128x256xf32, #tpu.memory_space<vmem>>, %arg4: memref<256x256xbf16, #tpu.memory_space<vmem>>, %arg5: memref<1x256xf32, #tpu.memory_space<vmem>>, %arg6: memref<768x256xbf16, #tpu.memory_space<vmem>>, %arg7: memref<1x256xf32, #tpu.memory_space<vmem>>, %arg8: memref<1x256xf32, #tpu.memory_space<vmem>>, %arg9: memref<1x256xf32, #tpu.memory_space<vmem>>, %arg10: memref<256x128xbf16, #tpu.memory_space<vmem>>, %arg11: memref<1x128xf32, #tpu.memory_space<vmem>>, %arg12: memref<256x128xbf16, #tpu.memory_space<vmem>>) attributes {dimension_semantics = [#tpu.dimension_semantics<parallel>], iteration_bounds = array<i64: 2>, scalar_prefetch = 0 : i64, scratch_operands = 0 : i64, tpu.core_type = #tpu.core_type<tc>, window_params = [{transform_indices = @transform_0, window_bounds = array<i64: 256, 128>}, {transform_indices = @transform_1, window_bounds = array<i64: 256, 256>}, {pipeline_mode = #tpu.pipeline_mode<synchronous>, transform_indices = @transform_2, window_bounds = array<i64: 128, 256>}, {pipeline_mode = #tpu.pipeline_mode<synchronous>, transform_indices = @transform_3, window_bounds = array<i64: 256, 256>}, {pipeline_mode = #tpu.pipeline_mode<synchronous>, transform_indices = @transform_4, window_bounds = array<i64: 1, 256>}, {pipeline_mode = #tpu.pipeline_mode<synchronous>, transform_indices = @transform_5, window_bounds = array<i64: 768, 256>}, {pipeline_mode = #tpu.pipeline_mode<synchronous>, transform_indices = @transform_6, window_bounds = array<i64: 1, 256>}, {pipeline_mode = #tpu.pipeline_mode<synchronous>, transform_indices = @transform_7, window_bounds = array<i64: 1, 256>}, {pipeline_mode = #tpu.pipeline_mode<synchronous>, transform_indices = @transform_8, window_bounds = array<i64: 1, 256>}, {pipeline_mode = #tpu.pipeline_mode<synchronous>, transform_indices = @transform_9, window_bounds = array<i64: 256, 128>}, {pipeline_mode = #tpu.pipeline_mode<synchronous>, transform_indices = @transform_10, window_bounds = array<i64: 1, 128>}, {transform_indices = @transform_11, window_bounds = array<i64: 256, 128>}]} {
    %c0 = arith.constant 0 : index
    %c0_0 = arith.constant 0 : index
    %0 = vector.load %arg1[%c0, %c0_0] : memref<256x128xf32, #tpu.memory_space<vmem>>, vector<256x128xf32>
    %c0_1 = arith.constant 0 : index
    %c0_2 = arith.constant 0 : index
    %1 = vector.load %arg3[%c0_1, %c0_2] : memref<128x256xf32, #tpu.memory_space<vmem>>, vector<128x256xf32>
    %cst = arith.constant dense<0.000000e+00> : vector<256x256xf32>
    %2 = tpu.matmul %0, %1, %cst {dimension_numbers = #tpu.dot_dimension_numbers<[1], [0], [0], [1], [0, 0, 1, 1], [], []>} : vector<256x128xf32>, vector<128x256xf32>, vector<256x256xf32> -> vector<256x256xf32>
    %c0_3 = arith.constant 0 : index
    %c0_4 = arith.constant 0 : index
    %3 = vector.load %arg2[%c0_3, %c0_4] : memref<256x256xf32, #tpu.memory_space<vmem>>, vector<256x256xf32>
    %4 = arith.truncf %3 : vector<256x256xf32> to vector<256x256xbf16>
    %c0_5 = arith.constant 0 : index
    %c0_6 = arith.constant 0 : index
    %5 = vector.load %arg4[%c0_5, %c0_6] : memref<256x256xbf16, #tpu.memory_space<vmem>>, vector<256x256xbf16>
    %cst_7 = arith.constant dense<0.000000e+00> : vector<256x256xf32>
    %6 = tpu.matmul %4, %5, %cst_7 {dimension_numbers = #tpu.dot_dimension_numbers<[1], [0], [0], [1], [0, 0, 1, 1], [], []>} : vector<256x256xbf16>, vector<256x256xbf16>, vector<256x256xf32> -> vector<256x256xf32>
    %7 = arith.addf %2, %6 : vector<256x256xf32>
    %c0_8 = arith.constant 0 : index
    %c0_9 = arith.constant 0 : index
    %8 = vector.load %arg5[%c0_8, %c0_9] : memref<1x256xf32, #tpu.memory_space<vmem>>, vector<1x256xf32>
    %9 = vector.broadcast %8 : vector<1x256xf32> to vector<256x256xf32>
    %10 = arith.addf %7, %9 : vector<256x256xf32>
    %cst_10 = arith.constant 0.000000e+00 : f32
    %11 = vector.broadcast %cst_10 : f32 to vector<256x256xf32>
    %12 = arith.maximumf %10, %11 : vector<256x256xf32>
    %13 = arith.truncf %12 : vector<256x256xf32> to vector<256x256xbf16>
    %c0_11 = arith.constant 0 : index
    %c0_12 = arith.constant 0 : index
    %14 = vector.load %arg6[%c0_11, %c0_12] : memref<768x256xbf16, #tpu.memory_space<vmem>>, vector<256x256xbf16>
    %cst_13 = arith.constant dense<0.000000e+00> : vector<256x256xf32>
    %15 = tpu.matmul %13, %14, %cst_13 {dimension_numbers = #tpu.dot_dimension_numbers<[1], [0], [0], [1], [0, 0, 1, 1], [], []>} : vector<256x256xbf16>, vector<256x256xbf16>, vector<256x256xf32> -> vector<256x256xf32>
    %c0_14 = arith.constant 0 : index
    %c0_15 = arith.constant 0 : index
    %16 = vector.load %arg7[%c0_14, %c0_15] : memref<1x256xf32, #tpu.memory_space<vmem>>, vector<1x256xf32>
    %17 = vector.broadcast %16 : vector<1x256xf32> to vector<256x256xf32>
    %18 = arith.addf %15, %17 : vector<256x256xf32>
    %cst_16 = arith.constant 0.000000e+00 : f32
    %19 = vector.broadcast %cst_16 : f32 to vector<256x256xf32>
    %20 = arith.maximumf %18, %19 : vector<256x256xf32>
    %21 = arith.truncf %20 : vector<256x256xf32> to vector<256x256xbf16>
    %c256 = arith.constant 256 : index
    %c0_17 = arith.constant 0 : index
    %22 = vector.load %arg6[%c256, %c0_17] : memref<768x256xbf16, #tpu.memory_space<vmem>>, vector<256x256xbf16>
    %cst_18 = arith.constant dense<0.000000e+00> : vector<256x256xf32>
    %23 = tpu.matmul %21, %22, %cst_18 {dimension_numbers = #tpu.dot_dimension_numbers<[1], [0], [0], [1], [0, 0, 1, 1], [], []>} : vector<256x256xbf16>, vector<256x256xbf16>, vector<256x256xf32> -> vector<256x256xf32>
    %c0_19 = arith.constant 0 : index
    %c0_20 = arith.constant 0 : index
    %24 = vector.load %arg8[%c0_19, %c0_20] : memref<1x256xf32, #tpu.memory_space<vmem>>, vector<1x256xf32>
    %25 = vector.broadcast %24 : vector<1x256xf32> to vector<256x256xf32>
    %26 = arith.addf %23, %25 : vector<256x256xf32>
    %cst_21 = arith.constant 0.000000e+00 : f32
    %27 = vector.broadcast %cst_21 : f32 to vector<256x256xf32>
    %28 = arith.maximumf %26, %27 : vector<256x256xf32>
    %29 = arith.truncf %28 : vector<256x256xf32> to vector<256x256xbf16>
    %c512 = arith.constant 512 : index
    %c0_22 = arith.constant 0 : index
    %30 = vector.load %arg6[%c512, %c0_22] : memref<768x256xbf16, #tpu.memory_space<vmem>>, vector<256x256xbf16>
    %cst_23 = arith.constant dense<0.000000e+00> : vector<256x256xf32>
    %31 = tpu.matmul %29, %30, %cst_23 {dimension_numbers = #tpu.dot_dimension_numbers<[1], [0], [0], [1], [0, 0, 1, 1], [], []>} : vector<256x256xbf16>, vector<256x256xbf16>, vector<256x256xf32> -> vector<256x256xf32>
    %c0_24 = arith.constant 0 : index
    %c0_25 = arith.constant 0 : index
    %32 = vector.load %arg9[%c0_24, %c0_25] : memref<1x256xf32, #tpu.memory_space<vmem>>, vector<1x256xf32>
    %33 = vector.broadcast %32 : vector<1x256xf32> to vector<256x256xf32>
    %34 = arith.addf %31, %33 : vector<256x256xf32>
    %cst_26 = arith.constant 0.000000e+00 : f32
    %35 = vector.broadcast %cst_26 : f32 to vector<256x256xf32>
    %36 = arith.maximumf %34, %35 : vector<256x256xf32>
    %37 = arith.truncf %36 : vector<256x256xf32> to vector<256x256xbf16>
    %c0_27 = arith.constant 0 : index
    %c0_28 = arith.constant 0 : index
    %38 = vector.load %arg10[%c0_27, %c0_28] : memref<256x128xbf16, #tpu.memory_space<vmem>>, vector<256x128xbf16>
    %cst_29 = arith.constant dense<0.000000e+00> : vector<256x128xf32>
    %39 = tpu.matmul %37, %38, %cst_29 {dimension_numbers = #tpu.dot_dimension_numbers<[1], [0], [0], [1], [0, 0, 1, 1], [], []>} : vector<256x256xbf16>, vector<256x128xbf16>, vector<256x128xf32> -> vector<256x128xf32>
    %c0_30 = arith.constant 0 : index
    %c0_31 = arith.constant 0 : index
    %40 = vector.load %arg11[%c0_30, %c0_31] : memref<1x128xf32, #tpu.memory_space<vmem>>, vector<1x128xf32>
    %41 = vector.broadcast %40 : vector<1x128xf32> to vector<256x128xf32>
    %42 = arith.addf %39, %41 : vector<256x128xf32>
    %43 = arith.negf %42 : vector<256x128xf32>
    %44 = math.exp %43 : vector<256x128xf32>
    %cst_32 = arith.constant 1.000000e+00 : f32
    %45 = vector.broadcast %cst_32 : f32 to vector<256x128xf32>
    %46 = arith.addf %45, %44 : vector<256x128xf32>
    %47 = arith.divf %45, %46 : vector<256x128xf32>
    %48 = arith.truncf %47 : vector<256x128xf32> to vector<256x128xbf16>
    %c0_33 = arith.constant 0 : index
    %c0_34 = arith.constant 0 : index
    %49 = vector.load %arg12[%c0_33, %c0_34] : memref<256x128xbf16, #tpu.memory_space<vmem>>, vector<256x128xbf16>
    tpu.vector_store %arg12[%c0_33, %c0_34], %48 {strides = array<i32>} : memref<256x128xbf16, #tpu.memory_space<vmem>>, vector<256x128xbf16>,
    return
  }
  func.func @transform_0(%arg0: i32) -> (i32, i32) {
    %c0_i32 = arith.constant 0 : i32
    %c0_i32_0 = arith.constant 0 : i32
    return %arg0, %c0_i32 : i32, i32
  }
  func.func @transform_1(%arg0: i32) -> (i32, i32) {
    %c0_i32 = arith.constant 0 : i32
    %c0_i32_0 = arith.constant 0 : i32
    return %arg0, %c0_i32 : i32, i32
  }
  func.func @transform_2(%arg0: i32) -> (i32, i32) {
    %c0_i32 = arith.constant 0 : i32
    %c0_i32_0 = arith.constant 0 : i32
    %c0_i32_1 = arith.constant 0 : i32
    return %c0_i32, %c0_i32_0 : i32, i32
  }
  func.func @transform_3(%arg0: i32) -> (i32, i32) {
    %c0_i32 = arith.constant 0 : i32
    %c0_i32_0 = arith.constant 0 : i32
    %c0_i32_1 = arith.constant 0 : i32
    return %c0_i32, %c0_i32_0 : i32, i32
  }
  func.func @transform_4(%arg0: i32) -> (i32, i32) {
    %c0_i32 = arith.constant 0 : i32
    %c0_i32_0 = arith.constant 0 : i32
    %c0_i32_1 = arith.constant 0 : i32
    return %c0_i32, %c0_i32_0 : i32, i32
  }
  func.func @transform_5(%arg0: i32) -> (i32, i32) {
    %c0_i32 = arith.constant 0 : i32
    %c0_i32_0 = arith.constant 0 : i32
    %c0_i32_1 = arith.constant 0 : i32
    return %c0_i32, %c0_i32_0 : i32, i32
  }
  func.func @transform_6(%arg0: i32) -> (i32, i32) {
    %c0_i32 = arith.constant 0 : i32
    %c0_i32_0 = arith.constant 0 : i32
    %c0_i32_1 = arith.constant 0 : i32
    return %c0_i32, %c0_i32_0 : i32, i32
  }
  func.func @transform_7(%arg0: i32) -> (i32, i32) {
    %c0_i32 = arith.constant 0 : i32
    %c0_i32_0 = arith.constant 0 : i32
    %c0_i32_1 = arith.constant 0 : i32
    return %c0_i32, %c0_i32_0 : i32, i32
  }
  func.func @transform_8(%arg0: i32) -> (i32, i32) {
    %c0_i32 = arith.constant 0 : i32
    %c0_i32_0 = arith.constant 0 : i32
    %c0_i32_1 = arith.constant 0 : i32
    return %c0_i32, %c0_i32_0 : i32, i32
  }
  func.func @transform_9(%arg0: i32) -> (i32, i32) {
    %c0_i32 = arith.constant 0 : i32
    %c0_i32_0 = arith.constant 0 : i32
    %c0_i32_1 = arith.constant 0 : i32
    return %c0_i32, %c0_i32_0 : i32, i32
  }
  func.func @transform_10(%arg0: i32) -> (i32, i32) {
    %c0_i32 = arith.constant 0 : i32
    %c0_i32_0 = arith.constant 0 : i32
    %c0_i32_1 = arith.constant 0 : i32
    return %c0_i32, %c0_i32_0 : i32, i32
  }
  func.func @transform_11(%arg0: i32) -> (i32, i32) {
    %c0_i32 = arith.constant 0 : i32
    %c0_i32_0 = arith.constant 0 : i32
    return %arg0, %c0_i32 : i32, i32
  }
}

module attributes {stable_mosaic.version = 11 : i64} {
  func.func @_color_mlp_kernel(%arg0: i32, %arg1: memref<256x128xf32, #tpu.memory_space<vmem>>, %arg2: memref<256x256xf32, #tpu.memory_space<vmem>>, %arg3: memref<128x256xf32, #tpu.memory_space<vmem>>, %arg4: memref<256x256xbf16, #tpu.memory_space<vmem>>, %arg5: memref<1x256xf32, #tpu.memory_space<vmem>>, %arg6: memref<768x256xbf16, #tpu.memory_space<vmem>>, %arg7: memref<1x256xf32, #tpu.memory_space<vmem>>, %arg8: memref<1x256xf32, #tpu.memory_space<vmem>>, %arg9: memref<1x256xf32, #tpu.memory_space<vmem>>, %arg10: memref<256x128xbf16, #tpu.memory_space<vmem>>, %arg11: memref<1x128xf32, #tpu.memory_space<vmem>>, %arg12: memref<256x128xbf16, #tpu.memory_space<vmem>>) attributes {dimension_semantics = [#tpu.dimension_semantics<parallel>], iteration_bounds = array<i64: 2>, scalar_prefetch = 0 : i64, scratch_operands = 0 : i64, tpu.core_type = #tpu.core_type<tc>, window_params = [{transform_indices = @transform_0, window_bounds = array<i64: 256, 128>}, {transform_indices = @transform_1, window_bounds = array<i64: 256, 256>}, {pipeline_mode = #tpu.pipeline_mode<synchronous>, transform_indices = @transform_2, window_bounds = array<i64: 128, 256>}, {pipeline_mode = #tpu.pipeline_mode<synchronous>, transform_indices = @transform_3, window_bounds = array<i64: 256, 256>}, {pipeline_mode = #tpu.pipeline_mode<synchronous>, transform_indices = @transform_4, window_bounds = array<i64: 1, 256>}, {pipeline_mode = #tpu.pipeline_mode<synchronous>, transform_indices = @transform_5, window_bounds = array<i64: 768, 256>}, {pipeline_mode = #tpu.pipeline_mode<synchronous>, transform_indices = @transform_6, window_bounds = array<i64: 1, 256>}, {pipeline_mode = #tpu.pipeline_mode<synchronous>, transform_indices = @transform_7, window_bounds = array<i64: 1, 256>}, {pipeline_mode = #tpu.pipeline_mode<synchronous>, transform_indices = @transform_8, window_bounds = array<i64: 1, 256>}, {pipeline_mode = #tpu.pipeline_mode<synchronous>, transform_indices = @transform_9, window_bounds = array<i64: 256, 128>}, {pipeline_mode = #tpu.pipeline_mode<synchronous>, transform_indices = @transform_10, window_bounds = array<i64: 1, 128>}, {transform_indices = @transform_11, window_bounds = array<i64: 256, 128>}]} {
    %c0 = arith.constant 0 : index
    %c0_0 = arith.constant 0 : index
    %0 = vector.load %arg1[%c0, %c0_0] : memref<256x128xf32, #tpu.memory_space<vmem>>, vector<256x128xf32>
    %c0_1 = arith.constant 0 : index
    %c0_2 = arith.constant 0 : index
    %1 = vector.load %arg3[%c0_1, %c0_2] : memref<128x256xf32, #tpu.memory_space<vmem>>, vector<128x256xf32>
    %cst = arith.constant dense<0.000000e+00> : vector<256x256xf32>
    %2 = tpu.matmul %0, %1, %cst {dimension_numbers = #tpu.dot_dimension_numbers<[1], [0], [0], [1], [0, 0, 1, 1], [], []>} : vector<256x128xf32>, vector<128x256xf32>, vector<256x256xf32> -> vector<256x256xf32>
    %c0_3 = arith.constant 0 : index
    %c0_4 = arith.constant 0 : index
    %3 = vector.load %arg2[%c0_3, %c0_4] : memref<256x256xf32, #tpu.memory_space<vmem>>, vector<256x256xf32>
    %4 = arith.truncf %3 : vector<256x256xf32> to vector<256x256xbf16>
    %c0_5 = arith.constant 0 : index
    %c0_6 = arith.constant 0 : index
    %5 = vector.load %arg4[%c0_5, %c0_6] : memref<256x256xbf16, #tpu.memory_space<vmem>>, vector<256x256xbf16>
    %cst_7 = arith.constant dense<0.000000e+00> : vector<256x256xf32>
    %6 = tpu.matmul %4, %5, %cst_7 {dimension_numbers = #tpu.dot_dimension_numbers<[1], [0], [0], [1], [0, 0, 1, 1], [], []>} : vector<256x256xbf16>, vector<256x256xbf16>, vector<256x256xf32> -> vector<256x256xf32>
    %7 = arith.addf %2, %6 : vector<256x256xf32>
    %c0_8 = arith.constant 0 : index
    %c0_9 = arith.constant 0 : index
    %8 = vector.load %arg5[%c0_8, %c0_9] : memref<1x256xf32, #tpu.memory_space<vmem>>, vector<1x256xf32>
    %9 = vector.broadcast %8 : vector<1x256xf32> to vector<256x256xf32>
    %10 = arith.addf %7, %9 : vector<256x256xf32>
    %cst_10 = arith.constant 0.000000e+00 : f32
    %11 = vector.broadcast %cst_10 : f32 to vector<256x256xf32>
    %12 = arith.maximumf %10, %11 : vector<256x256xf32>
    %13 = arith.truncf %12 : vector<256x256xf32> to vector<256x256xbf16>
    %c0_11 = arith.constant 0 : index
    %c0_12 = arith.constant 0 : index
    %14 = vector.load %arg6[%c0_11, %c0_12] : memref<768x256xbf16, #tpu.memory_space<vmem>>, vector<256x256xbf16>
    %cst_13 = arith.constant dense<0.000000e+00> : vector<256x256xf32>
    %15 = tpu.matmul %13, %14, %cst_13 {dimension_numbers = #tpu.dot_dimension_numbers<[1], [0], [0], [1], [0, 0, 1, 1], [], []>} : vector<256x256xbf16>, vector<256x256xbf16>, vector<256x256xf32> -> vector<256x256xf32>
    %c0_14 = arith.constant 0 : index
    %c0_15 = arith.constant 0 : index
    %16 = vector.load %arg7[%c0_14, %c0_15] : memref<1x256xf32, #tpu.memory_space<vmem>>, vector<1x256xf32>
    %17 = vector.broadcast %16 : vector<1x256xf32> to vector<256x256xf32>
    %18 = arith.addf %15, %17 : vector<256x256xf32>
    %cst_16 = arith.constant 0.000000e+00 : f32
    %19 = vector.broadcast %cst_16 : f32 to vector<256x256xf32>
    %20 = arith.maximumf %18, %19 : vector<256x256xf32>
    %21 = arith.truncf %20 : vector<256x256xf32> to vector<256x256xbf16>
    %c256 = arith.constant 256 : index
    %c0_17 = arith.constant 0 : index
    %22 = vector.load %arg6[%c256, %c0_17] : memref<768x256xbf16, #tpu.memory_space<vmem>>, vector<256x256xbf16>
    %cst_18 = arith.constant dense<0.000000e+00> : vector<256x256xf32>
    %23 = tpu.matmul %21, %22, %cst_18 {dimension_numbers = #tpu.dot_dimension_numbers<[1], [0], [0], [1], [0, 0, 1, 1], [], []>} : vector<256x256xbf16>, vector<256x256xbf16>, vector<256x256xf32> -> vector<256x256xf32>
    %c0_19 = arith.constant 0 : index
    %c0_20 = arith.constant 0 : index
    %24 = vector.load %arg8[%c0_19, %c0_20] : memref<1x256xf32, #tpu.memory_space<vmem>>, vector<1x256xf32>
    %25 = vector.broadcast %24 : vector<1x256xf32> to vector<256x256xf32>
    %26 = arith.addf %23, %25 : vector<256x256xf32>
    %cst_21 = arith.constant 0.000000e+00 : f32
    %27 = vector.broadcast %cst_21 : f32 to vector<256x256xf32>
    %28 = arith.maximumf %26, %27 : vector<256x256xf32>
    %29 = arith.truncf %28 : vector<256x256xf32> to vector<256x256xbf16>
    %c512 = arith.constant 512 : index
    %c0_22 = arith.constant 0 : index
    %30 = vector.load %arg6[%c512, %c0_22] : memref<768x256xbf16, #tpu.memory_space<vmem>>, vector<256x256xbf16>
    %cst_23 = arith.constant dense<0.000000e+00> : vector<256x256xf32>
    %31 = tpu.matmul %29, %30, %cst_23 {dimension_numbers = #tpu.dot_dimension_numbers<[1], [0], [0], [1], [0, 0, 1, 1], [], []>} : vector<256x256xbf16>, vector<256x256xbf16>, vector<256x256xf32> -> vector<256x256xf32>
    %c0_24 = arith.constant 0 : index
    %c0_25 = arith.constant 0 : index
    %32 = vector.load %arg9[%c0_24, %c0_25] : memref<1x256xf32, #tpu.memory_space<vmem>>, vector<1x256xf32>
    %33 = vector.broadcast %32 : vector<1x256xf32> to vector<256x256xf32>
    %34 = arith.addf %31, %33 : vector<256x256xf32>
    %cst_26 = arith.constant 0.000000e+00 : f32
    %35 = vector.broadcast %cst_26 : f32 to vector<256x256xf32>
    %36 = arith.maximumf %34, %35 : vector<256x256xf32>
    %37 = arith.truncf %36 : vector<256x256xf32> to vector<256x256xbf16>
    %c0_27 = arith.constant 0 : index
    %c0_28 = arith.constant 0 : index
    %38 = vector.load %arg10[%c0_27, %c0_28] : memref<256x128xbf16, #tpu.memory_space<vmem>>, vector<256x128xbf16>
    %cst_29 = arith.constant dense<0.000000e+00> : vector<256x128xf32>
    %39 = tpu.matmul %37, %38, %cst_29 {dimension_numbers = #tpu.dot_dimension_numbers<[1], [0], [0], [1], [0, 0, 1, 1], [], []>} : vector<256x256xbf16>, vector<256x128xbf16>, vector<256x128xf32> -> vector<256x128xf32>
    %c0_30 = arith.constant 0 : index
    %c0_31 = arith.constant 0 : index
    %40 = vector.load %arg11[%c0_30, %c0_31] : memref<1x128xf32, #tpu.memory_space<vmem>>, vector<1x128xf32>
    %41 = vector.broadcast %40 : vector<1x128xf32> to vector<256x128xf32>
    %42 = arith.addf %39, %41 : vector<256x128xf32>
    %43 = arith.negf %42 : vector<256x128xf32>
    %44 = math.exp %43 : vector<256x128xf32>
    %cst_32 = arith.constant 1.000000e+00 : f32
    %45 = vector.broadcast %cst_32 : f32 to vector<256x128xf32>
    %46 = arith.addf %45, %44 : vector<256x128xf32>
    %47 = arith.divf %45, %46 : vector<256x128xf32>
    %48 = arith.truncf %47 : vector<256x128xf32> to vector<256x128xbf16>
    %c0_33 = arith.constant 0 : index
    %c0_34 = arith.constant 0 : index
    %49 = vector.load %arg12[%c0_33, %c0_34] : memref<256x128xbf16, #tpu.memory_space<vmem>>, vector<256x128xbf16>
    tpu.vector_store %arg12[%c0_33, %c0_34], %48 {strides = array<i32>} : memref<256x128xbf16, #tpu.memory_space<vmem>>, vector<256x128xbf16>,
    return
  }
  func.func @transform_0(%arg0: i32) -> (i32, i32) {
    %c0_i32 = arith.constant 0 : i32
    %c0_i32_0 = arith.constant 0 : i32
    return %arg0, %c0_i32 : i32, i32
  }
  func.func @transform_1(%arg0: i32) -> (i32, i32) {
    %c0_i32 = arith.constant 0 : i32
    %c0_i32_0 = arith.constant 0 : i32
    return %arg0, %c0_i32 : i32, i32
  }
  func.func @transform_2(%arg0: i32) -> (i32, i32) {
    %c0_i32 = arith.constant 0 : i32
    %c0_i32_0 = arith.constant 0 : i32
    %c0_i32_1 = arith.constant 0 : i32
    return %c0_i32, %c0_i32_0 : i32, i32
  }
  func.func @transform_3(%arg0: i32) -> (i32, i32) {
    %c0_i32 = arith.constant 0 : i32
    %c0_i32_0 = arith.constant 0 : i32
    %c0_i32_1 = arith.constant 0 : i32
    return %c0_i32, %c0_i32_0 : i32, i32
  }
  func.func @transform_4(%arg0: i32) -> (i32, i32) {
    %c0_i32 = arith.constant 0 : i32
    %c0_i32_0 = arith.constant 0 : i32
    %c0_i32_1 = arith.constant 0 : i32
    return %c0_i32, %c0_i32_0 : i32, i32
  }
  func.func @transform_5(%arg0: i32) -> (i32, i32) {
    %c0_i32 = arith.constant 0 : i32
    %c0_i32_0 = arith.constant 0 : i32
    %c0_i32_1 = arith.constant 0 : i32
    return %c0_i32, %c0_i32_0 : i32, i32
  }
  func.func @transform_6(%arg0: i32) -> (i32, i32) {
    %c0_i32 = arith.constant 0 : i32
    %c0_i32_0 = arith.constant 0 : i32
    %c0_i32_1 = arith.constant 0 : i32
    return %c0_i32, %c0_i32_0 : i32, i32
  }
  func.func @transform_7(%arg0: i32) -> (i32, i32) {
    %c0_i32 = arith.constant 0 : i32
    %c0_i32_0 = arith.constant 0 : i32
    %c0_i32_1 = arith.constant 0 : i32
    return %c0_i32, %c0_i32_0 : i32, i32
  }
  func.func @transform_8(%arg0: i32) -> (i32, i32) {
    %c0_i32 = arith.constant 0 : i32
    %c0_i32_0 = arith.constant 0 : i32
    %c0_i32_1 = arith.constant 0 : i32
    return %c0_i32, %c0_i32_0 : i32, i32
  }
  func.func @transform_9(%arg0: i32) -> (i32, i32) {
    %c0_i32 = arith.constant 0 : i32
    %c0_i32_0 = arith.constant 0 : i32
    %c0_i32_1 = arith.constant 0 : i32
    return %c0_i32, %c0_i32_0 : i32, i32
  }
  func.func @transform_10(%arg0: i32) -> (i32, i32) {
    %c0_i32 = arith.constant 0 : i32
    %c0_i32_0 = arith.constant 0 : i32
    %c0_i32_1 = arith.constant 0 : i32
    return %c0_i32, %c0_i32_0 : i32, i32
  }
  func.func @transform_11(%arg0: i32) -> (i32, i32) {
    %c0_i32 = arith.constant 0 : i32
    %c0_i32_0 = arith.constant 0 : i32
    return %arg0, %c0_i32 : i32, i32
  }
}

</mosaic_0001>

<llo_original>
// kernel: tpu_custom_call.1
$region0: #{tpu_custom_call.1}
  #allocation0 [shape = 'u32[]', space=smem, size = 0x4, offset = 0x4, fixed_abs, tag = 'smem constant byte address 0x4 - core index']
  #allocation1 [shape = 'u32[144,128]{1,0:T(1,128)}', space=vmem, size = 0x12000, scoped, tag = 'internal scratch']
  %s0 = inlined_call_operand.hbm [shape: f32[512,128], index: 0, kind: input, shape index: {}]
  %s1 = inlined_call_operand.hbm [shape: f32[512,256], index: 1, kind: input, shape index: {}]
  %s2 = inlined_call_operand.hbm [shape: f32[128,256], index: 2, kind: input, shape index: {}]
  %s3 = inlined_call_operand.hbm [shape: bf16[256,256], index: 3, kind: input, shape index: {}]
  %s4 = inlined_call_operand.vmem [shape: f32[1,256], index: 4, kind: input, shape index: {}]
  %s5 = inlined_call_operand.hbm [shape: bf16[768,256], index: 5, kind: input, shape index: {}]
  %s6 = inlined_call_operand.vmem [shape: f32[1,256], index: 6, kind: input, shape index: {}]
  %s7 = inlined_call_operand.vmem [shape: f32[1,256], index: 7, kind: input, shape index: {}]
  %s8 = inlined_call_operand.vmem [shape: f32[1,256], index: 8, kind: input, shape index: {}]
  %s9 = inlined_call_operand.hbm [shape: bf16[256,128], index: 9, kind: input, shape index: {}]
  %s10 = inlined_call_operand.vmem [shape: f32[1,128], index: 10, kind: input, shape index: {}]
  %s11 = inlined_call_operand.hbm [shape: bf16[512,128], index: 11, kind: output, shape index: {}]
  %s12 = sld [smem:[#allocation0]]
  $region101: #{tpu_custom_call.1} parent=0
    _
  %s14 = ssub.s32 1, %s12
  %s15 = scalar_select 0, %s14, %s12
  $region1: #{tpu_custom_call.1} parent=0
    #allocation2 [shape = 'u8[262144]{0}', space=vmem, size = 0x40000, scoped, tag = 'input window, operand 0']
    #allocation3 [shape = 's32[2]{0}', space=sflag, size = 0x8, scoped, tag = 'scoped memory for tpu_custom_call.1']
    #allocation4 [shape = 's32[2]{0}', space=sflag, size = 0x8, scoped, tag = 'scoped memory for tpu_custom_call.1']
    #allocation5 [shape = 'u8[524288]{0}', space=vmem, size = 0x80000, scoped, tag = 'input window, operand 1']
    #allocation6 [shape = 's32[2]{0}', space=sflag, size = 0x8, scoped, tag = 'scoped memory for tpu_custom_call.1']
    #allocation7 [shape = 'u8[131072]{0}', space=vmem, size = 0x20000, scoped, tag = 'input window, operand 2, single buffered']
    #allocation8 [shape = 'u8[131072]{0}', space=vmem, size = 0x20000, scoped, tag = 'input window, operand 3, single buffered']
    #allocation9 [shape = 's32[1]{0}', space=sflag, size = 0x4, scoped, tag = 'scoped memory for tpu_custom_call.1']
    #allocation10 [shape = 'u8[393216]{0}', space=vmem, size = 0x60000, scoped, tag = 'input window, operand 5, single buffered']
    #allocation11 [shape = 'u8[65536]{0}', space=vmem, size = 0x10000, scoped, tag = 'input window, operand 9, single buffered']
    #allocation12 [shape = 's32[1]{0}', space=sflag, size = 0x4, scoped, tag = 'scoped memory for tpu_custom_call.1']
    #allocation13 [shape = 'u8[131072]{0}', space=vmem, size = 0x20000, scoped, tag = 'output window, operand 0']
    %16 = vsyncpa [#allocation3], 0
    %s17 = scalar_lea.sflag [#allocation3], 1
    %18 = vsyncpa %s17, 0
    %19 = vsyncpa [#allocation6], 0
    %s20 = scalar_lea.sflag [#allocation6], 1
    %21 = vsyncpa %s20, 0
    %22 = vsyncpa [#allocation9], 0
    %23 = vsyncpa [#allocation12], 0
    %24 = vsyncpa [#allocation4], 0
    %s25 = scalar_lea.sflag [#allocation4], 1
    %26 = vsyncpa %s25, 0
    loop: start=0, step=1, limit=4
    $region2: #{tpu_custom_call.1} parent=1 // loop_pre_header
      _
    $region3: #{tpu_custom_call.1} parent=1 // loop_header
      %s28 = sphi 0, %s32
      %p29 = scmp.ge.s32.totalorder %s28, 4
      %s38 = sphi 0, %s40
      %s41 = sphi 0, %s38
      %s42 = sphi 0, %s41
      %s58 = sphi 0, %s42
      %s64 = sphi 0, %s66
      %s67 = sphi 0, %s64
      %s68 = sphi 0, %s67
      %s84 = sphi 0, %s68
      %s88 = sphi 0, %s88
      %s90 = sphi 0, %s88
      %s91 = sphi 0, %s90
      %s105 = sphi 0, %s91
      %s109 = sphi 0, %s109
      %s111 = sphi 0, %s109
      %s112 = sphi 0, %s111
      %s126 = sphi 0, %s112
      %s130 = sphi 0, %s130
      %s132 = sphi 0, %s130
      %s133 = sphi 0, %s132
      %s147 = sphi 0, %s133
      %s151 = sphi 0, %s151
      %s153 = sphi 0, %s151
      %s154 = sphi 0, %s153
      %s168 = sphi 0, %s154
      %s172 = sphi 0, %s172
      %s174 = sphi 0, %s172
      %s175 = sphi 0, %s174
      %s189 = sphi 0, %s175
      %s193 = sphi 0, %s193
      %s195 = sphi 0, %s193
      %s196 = sphi 0, %s195
      %s210 = sphi 0, %s196
      %s214 = sphi 0, %s214
      %s216 = sphi 0, %s214
      %s217 = sphi 0, %s216
      %s231 = sphi 0, %s217
      %s235 = sphi 0, %s235
      %s237 = sphi 0, %s235
      %s238 = sphi 0, %s237
      %s252 = sphi 0, %s238
      %s256 = sphi 0, %s256
      %s258 = sphi 0, %s256
      %s259 = sphi 0, %s258
      %s273 = sphi 0, %s259
      %s279 = sphi 0, %s281
      %s282 = sphi 0, %s279
      %s283 = sphi 0, %s282
      %s299 = sphi 0, %s283
    $region4: #{tpu_custom_call.1} parent=1 // loop_header_branch
      %31 = sbr.rel (%p29) target = $region8
    $region5: #{tpu_custom_call.1} parent=1 // loop_body
      %s33 = ssub.s32 %s28, 1
      %s34 = ssub.s32 %s28, 2
      %s35 = sadd.s32 %s28, 1
      %s36 = ssub.s32 %s28, %s35
      %p37 = scmp.eq.s32.totalorder %s36, 0
      %s39 = sadd.s32 %s38, 1
      %s40 = scalar_select %p37, %s38, %s39
      %p43 = pneg %p37
      %p44 = scmp.eq.s32.totalorder %s28, 1
      %p45 = por %p43, %p44
      %p46 = scmp.ne.s32.totalorder %s38, %s41
      %p47 = scmp.eq.s32.totalorder %s28, 0
      %p48 = por %p46, %p47
      %p49 = scmp.ne.s32.totalorder %s38, %s41
      %p50 = scmp.eq.s32.totalorder %s33, 1
      %p51 = por %p49, %p50
      %p52 = scmp.ne.s32.totalorder %s41, %s42
      %p53 = scmp.eq.s32.totalorder %s33, 0
      %p54 = por %p52, %p53
      %p55 = scmp.ne.s32.totalorder %s41, %s42
      %p56 = scmp.eq.s32.totalorder %s34, 1
      %p57 = por %p55, %p56
      %p59 = scmp.ne.s32.totalorder %s42, %s58
      %p60 = scmp.eq.s32.totalorder %s34, 0
      %p61 = por %p59, %p60
      %s62 = ssub.s32 %s28, %s35
      %p63 = scmp.eq.s32.totalorder %s62, 0
      %s65 = sadd.s32 %s64, 1
      %s66 = scalar_select %p63, %s64, %s65
      %p69 = pneg %p63
      %p70 = scmp.eq.s32.totalorder %s28, 1
      %p71 = por %p69, %p70
      %p72 = scmp.ne.s32.totalorder %s64, %s67
      %p73 = scmp.eq.s32.totalorder %s28, 0
      %p74 = por %p72, %p73
      %p75 = scmp.ne.s32.totalorder %s64, %s67
      %p76 = scmp.eq.s32.totalorder %s33, 1
      %p77 = por %p75, %p76
      %p78 = scmp.ne.s32.totalorder %s67, %s68
      %p79 = scmp.eq.s32.totalorder %s33, 0
      %p80 = por %p78, %p79
      %p81 = scmp.ne.s32.totalorder %s67, %s68
      %p82 = scmp.eq.s32.totalorder %s34, 1
      %p83 = por %p81, %p82
      %p85 = scmp.ne.s32.totalorder %s68, %s84
      %p86 = scmp.eq.s32.totalorder %s34, 0
      %p87 = por %p85, %p86
      %s89 = sadd.s32 %s88, 1
      %p92 = scmp.eq.s32.totalorder %s28, 1
      %p93 = scmp.ne.s32.totalorder %s88, %s90
      %p94 = scmp.eq.s32.totalorder %s28, 0
      %p95 = por %p93, %p94
      %p96 = scmp.ne.s32.totalorder %s88, %s90
      %p97 = scmp.eq.s32.totalorder %s33, 1
      %p98 = por %p96, %p97
      %p99 = scmp.ne.s32.totalorder %s90, %s91
      %p100 = scmp.eq.s32.totalorder %s33, 0
      %p101 = por %p99, %p100
      %p102 = scmp.ne.s32.totalorder %s90, %s91
      %p103 = scmp.eq.s32.totalorder %s34, 1
      %p104 = por %p102, %p103
      %p106 = scmp.ne.s32.totalorder %s91, %s105
      %p107 = scmp.eq.s32.totalorder %s34, 0
      %p108 = por %p106, %p107
      %s110 = sadd.s32 %s109, 1
      %p113 = scmp.eq.s32.totalorder %s28, 1
      %p114 = scmp.ne.s32.totalorder %s109, %s111
      %p115 = scmp.eq.s32.totalorder %s28, 0
      %p116 = por %p114, %p115
      %p117 = scmp.ne.s32.totalorder %s109, %s111
      %p118 = scmp.eq.s32.totalorder %s33, 1
      %p119 = por %p117, %p118
      %p120 = scmp.ne.s32.totalorder %s111, %s112
      %p121 = scmp.eq.s32.totalorder %s33, 0
      %p122 = por %p120, %p121
      %p123 = scmp.ne.s32.totalorder %s111, %s112
      %p124 = scmp.eq.s32.totalorder %s34, 1
      %p125 = por %p123, %p124
      %p127 = scmp.ne.s32.totalorder %s112, %s126
      %p128 = scmp.eq.s32.totalorder %s34, 0
      %p129 = por %p127, %p128
      %s131 = sadd.s32 %s130, 1
      %p134 = scmp.eq.s32.totalorder %s28, 1
      %p135 = scmp.ne.s32.totalorder %s130, %s132
      %p136 = scmp.eq.s32.totalorder %s28, 0
      %p137 = por %p135, %p136
      %p138 = scmp.ne.s32.totalorder %s130, %s132
      %p139 = scmp.eq.s32.totalorder %s33, 1
      %p140 = por %p138, %p139
      %p141 = scmp.ne.s32.totalorder %s132, %s133
      %p142 = scmp.eq.s32.totalorder %s33, 0
      %p143 = por %p141, %p142
      %p144 = scmp.ne.s32.totalorder %s132, %s133
      %p145 = scmp.eq.s32.totalorder %s34, 1
      %p146 = por %p144, %p145
      %p148 = scmp.ne.s32.totalorder %s133, %s147
      %p149 = scmp.eq.s32.totalorder %s34, 0
      %p150 = por %p148, %p149
      %s152 = sadd.s32 %s151, 1
      %p155 = scmp.eq.s32.totalorder %s28, 1
      %p156 = scmp.ne.s32.totalorder %s151, %s153
      %p157 = scmp.eq.s32.totalorder %s28, 0
      %p158 = por %p156, %p157
      %p159 = scmp.ne.s32.totalorder %s151, %s153
      %p160 = scmp.eq.s32.totalorder %s33, 1
      %p161 = por %p159, %p160
      %p162 = scmp.ne.s32.totalorder %s153, %s154
      %p163 = scmp.eq.s32.totalorder %s33, 0
      %p164 = por %p162, %p163
      %p165 = scmp.ne.s32.totalorder %s153, %s154
      %p166 = scmp.eq.s32.totalorder %s34, 1
      %p167 = por %p165, %p166
      %p169 = scmp.ne.s32.totalorder %s154, %s168
      %p170 = scmp.eq.s32.totalorder %s34, 0
      %p171 = por %p169, %p170
      %s173 = sadd.s32 %s172, 1
      %p176 = scmp.eq.s32.totalorder %s28, 1
      %p177 = scmp.ne.s32.totalorder %s172, %s174
      %p178 = scmp.eq.s32.totalorder %s28, 0
      %p179 = por %p177, %p178
      %p180 = scmp.ne.s32.totalorder %s172, %s174
      %p181 = scmp.eq.s32.totalorder %s33, 1
      %p182 = por %p180, %p181
      %p183 = scmp.ne.s32.totalorder %s174, %s175
      %p184 = scmp.eq.s32.totalorder %s33, 0
      %p185 = por %p183, %p184
      %p186 = scmp.ne.s32.totalorder %s174, %s175
      %p187 = scmp.eq.s32.totalorder %s34, 1
      %p188 = por %p186, %p187
      %p190 = scmp.ne.s32.totalorder %s175, %s189
      %p191 = scmp.eq.s32.totalorder %s34, 0
      %p192 = por %p190, %p191
      %s194 = sadd.s32 %s193, 1
      %p197 = scmp.eq.s32.totalorder %s28, 1
      %p198 = scmp.ne.s32.totalorder %s193, %s195
      %p199 = scmp.eq.s32.totalorder %s28, 0
      %p200 = por %p198, %p199
      %p201 = scmp.ne.s32.totalorder %s193, %s195
      %p202 = scmp.eq.s32.totalorder %s33, 1
      %p203 = por %p201, %p202
      %p204 = scmp.ne.s32.totalorder %s195, %s196
      %p205 = scmp.eq.s32.totalorder %s33, 0
      %p206 = por %p204, %p205
      %p207 = scmp.ne.s32.totalorder %s195, %s196
      %p208 = scmp.eq.s32.totalorder %s34, 1
      %p209 = por %p207, %p208
      %p211 = scmp.ne.s32.totalorder %s196, %s210
      %p212 = scmp.eq.s32.totalorder %s34, 0
      %p213 = por %p211, %p212
      %s215 = sadd.s32 %s214, 1
      %p218 = scmp.eq.s32.totalorder %s28, 1
      %p219 = scmp.ne.s32.totalorder %s214, %s216
      %p220 = scmp.eq.s32.totalorder %s28, 0
      %p221 = por %p219, %p220
      %p222 = scmp.ne.s32.totalorder %s214, %s216
      %p223 = scmp.eq.s32.totalorder %s33, 1
      %p224 = por %p222, %p223
      %p225 = scmp.ne.s32.totalorder %s216, %s217
      %p226 = scmp.eq.s32.totalorder %s33, 0
      %p227 = por %p225, %p226
      %p228 = scmp.ne.s32.totalorder %s216, %s217
      %p229 = scmp.eq.s32.totalorder %s34, 1
      %p230 = por %p228, %p229
      %p232 = scmp.ne.s32.totalorder %s217, %s231
      %p233 = scmp.eq.s32.totalorder %s34, 0
      %p234 = por %p232, %p233
      %s236 = sadd.s32 %s235, 1
      %p239 = scmp.eq.s32.totalorder %s28, 1
      %p240 = scmp.ne.s32.totalorder %s235, %s237
      %p241 = scmp.eq.s32.totalorder %s28, 0
      %p242 = por %p240, %p241
      %p243 = scmp.ne.s32.totalorder %s235, %s237
      %p244 = scmp.eq.s32.totalorder %s33, 1
      %p245 = por %p243, %p244
      %p246 = scmp.ne.s32.totalorder %s237, %s238
      %p247 = scmp.eq.s32.totalorder %s33, 0
      %p248 = por %p246, %p247
      %p249 = scmp.ne.s32.totalorder %s237, %s238
      %p250 = scmp.eq.s32.totalorder %s34, 1
      %p251 = por %p249, %p250
      %p253 = scmp.ne.s32.totalorder %s238, %s252
      %p254 = scmp.eq.s32.totalorder %s34, 0
      %p255 = por %p253, %p254
      %s257 = sadd.s32 %s256, 1
      %p260 = scmp.eq.s32.totalorder %s28, 1
      %p261 = scmp.ne.s32.totalorder %s256, %s258
      %p262 = scmp.eq.s32.totalorder %s28, 0
      %p263 = por %p261, %p262
      %p264 = scmp.ne.s32.totalorder %s256, %s258
      %p265 = scmp.eq.s32.totalorder %s33, 1
      %p266 = por %p264, %p265
      %p267 = scmp.ne.s32.totalorder %s258, %s259
      %p268 = scmp.eq.s32.totalorder %s33, 0
      %p269 = por %p267, %p268
      %p270 = scmp.ne.s32.totalorder %s258, %s259
      %p271 = scmp.eq.s32.totalorder %s34, 1
      %p272 = por %p270, %p271
      %p274 = scmp.ne.s32.totalorder %s259, %s273
      %p275 = scmp.eq.s32.totalorder %s34, 0
      %p276 = por %p274, %p275
      %s277 = ssub.s32 %s28, %s35
      %p278 = scmp.eq.s32.totalorder %s277, 0
      %s280 = sadd.s32 %s279, 1
      %s281 = scalar_select %p278, %s279, %s280
      %p284 = pneg %p278
      %p285 = scmp.eq.s32.totalorder %s28, 1
      %p286 = por %p284, %p285
      %p287 = scmp.ne.s32.totalorder %s279, %s282
      %p288 = scmp.eq.s32.totalorder %s28, 0
      %p289 = por %p287, %p288
      %p290 = scmp.ne.s32.totalorder %s279, %s282
      %p291 = scmp.eq.s32.totalorder %s33, 1
      %p292 = por %p290, %p291
      %p293 = scmp.ne.s32.totalorder %s282, %s283
      %p294 = scmp.eq.s32.totalorder %s33, 0
      %p295 = por %p293, %p294
      %p296 = scmp.ne.s32.totalorder %s282, %s283
      %p297 = scmp.eq.s32.totalorder %s34, 1
      %p298 = por %p296, %p297
      %p300 = scmp.ne.s32.totalorder %s283, %s299
      %p301 = scmp.eq.s32.totalorder %s34, 0
      %p302 = por %p300, %p301
      %p303 = scmp.le.s32.totalorder 1, %s28
      %p304 = scmp.lt.s32.totalorder %s28, 3
      %p305 = pnand %p303, %p304
      %p306 = pneg %p305
      // Predicated region
      $region9: #{tpu_custom_call.1} parent=5 // pred_check
        _
      $region10: #{tpu_custom_call.1} parent=5 // pred_check_branch
        %308 = sbr.rel (%p305) target = $region12
      $region11: #{tpu_custom_call.1} parent=5 // pred_region
        %s309 = ssub.s32 %s28, 1
        // Predicated region
        $region13: #{tpu_custom_call.1} parent=11 // pred_check
          %p310 = pneg %p101
        $region14: #{tpu_custom_call.1} parent=11 // pred_check_branch
          %312 = sbr.rel (%p310) target = $region16
        $region15: #{tpu_custom_call.1} parent=11 // pred_region
          %s314 = ssub.s32 4096, 4096
          %315 = vsyncadd [#allocation6], %s314
          %s316 = sshll.u32 [#allocation7], 4
          %s317 = int_to_ptr.vmem [resolvable:$true] %s316
          %322 = dma.hbm_to_vmem [thread:$0]  %s2, 4096, %s317, [#allocation6], 256, 256, 16
        $region16: #{tpu_custom_call.1} parent=11 // pred_fallthru
          _
        // Predicated region
        $region17: #{tpu_custom_call.1} parent=11 // pred_check
          %p323 = pneg %p122
        $region18: #{tpu_custom_call.1} parent=11 // pred_check_branch
          %325 = sbr.rel (%p323) target = $region20
        $region19: #{tpu_custom_call.1} parent=11 // pred_region
          %s327 = ssub.s32 4096, 4096
          %328 = vsyncadd [#allocation9], %s327
          %s329 = sshll.u32 [#allocation8], 4
          %s330 = int_to_ptr.vmem [resolvable:$true] %s329
          %335 = dma.hbm_to_vmem [thread:$0]  %s3, 4096, %s330, [#allocation9], 128, 128, 8
        $region20: #{tpu_custom_call.1} parent=11 // pred_fallthru
          _
        // Predicated region
        $region21: #{tpu_custom_call.1} parent=11 // pred_check
          %p336 = pneg %p143
        $region22: #{tpu_custom_call.1} parent=11 // pred_check_branch
          %338 = sbr.rel (%p336) target = $region24
        $region23: #{tpu_custom_call.1} parent=11 // pred_region
          _
        $region24: #{tpu_custom_call.1} parent=11 // pred_fallthru
          _
        // Predicated region
        $region25: #{tpu_custom_call.1} parent=11 // pred_check
          %p339 = pneg %p164
        $region26: #{tpu_custom_call.1} parent=11 // pred_check_branch
          %341 = sbr.rel (%p339) target = $region28
        $region27: #{tpu_custom_call.1} parent=11 // pred_region
          %s343 = ssub.s32 12288, 12288
          %344 = vsyncadd [#allocation9], %s343
          %s345 = sshll.u32 [#allocation10], 4
          %s346 = int_to_ptr.vmem [resolvable:$true] %s345
          %351 = dma.hbm_to_vmem [thread:$0]  %s5, 12288, %s346, [#allocation9], 128, 128, 8
        $region28: #{tpu_custom_call.1} parent=11 // pred_fallthru
          _
        // Predicated region
        $region29: #{tpu_custom_call.1} parent=11 // pred_check
          %p352 = pneg %p185
        $region30: #{tpu_custom_call.1} parent=11 // pred_check_branch
          %354 = sbr.rel (%p352) target = $region32
        $region31: #{tpu_custom_call.1} parent=11 // pred_region
          _
        $region32: #{tpu_custom_call.1} parent=11 // pred_fallthru
          _
        // Predicated region
        $region33: #{tpu_custom_call.1} parent=11 // pred_check
          %p355 = pneg %p206
        $region34: #{tpu_custom_call.1} parent=11 // pred_check_branch
          %357 = sbr.rel (%p355) target = $region36
        $region35: #{tpu_custom_call.1} parent=11 // pred_region
          _
        $region36: #{tpu_custom_call.1} parent=11 // pred_fallthru
          _
        // Predicated region
        $region37: #{tpu_custom_call.1} parent=11 // pred_check
          %p358 = pneg %p227
        $region38: #{tpu_custom_call.1} parent=11 // pred_check_branch
          %360 = sbr.rel (%p358) target = $region40
        $region39: #{tpu_custom_call.1} parent=11 // pred_region
          _
        $region40: #{tpu_custom_call.1} parent=11 // pred_fallthru
          _
        // Predicated region
        $region41: #{tpu_custom_call.1} parent=11 // pred_check
          %p361 = pneg %p248
        $region42: #{tpu_custom_call.1} parent=11 // pred_check_branch
          %363 = sbr.rel (%p361) target = $region44
        $region43: #{tpu_custom_call.1} parent=11 // pred_region
          %s365 = ssub.s32 2048, 2048
          %366 = vsyncadd [#allocation12], %s365
          %s367 = sshll.u32 [#allocation11], 4
          %s368 = int_to_ptr.vmem [resolvable:$true] %s367
          %373 = dma.hbm_to_vmem [thread:$0]  %s9, 2048, %s368, [#allocation12], 64, 64, 4
        $region44: #{tpu_custom_call.1} parent=11 // pred_fallthru
          _
        // Predicated region
        $region45: #{tpu_custom_call.1} parent=11 // pred_check
          %p374 = pneg %p269
        $region46: #{tpu_custom_call.1} parent=11 // pred_check_branch
          %376 = sbr.rel (%p374) target = $region48
        $region47: #{tpu_custom_call.1} parent=11 // pred_region
          _
        $region48: #{tpu_custom_call.1} parent=11 // pred_fallthru
          _
      $region12: #{tpu_custom_call.1} parent=5 // pred_fallthru
        _
      %p377 = scmp.lt.s32.totalorder %s28, 2
      // Predicated region
      $region49: #{tpu_custom_call.1} parent=5 // pred_check
        %p378 = pneg %p377
      $region50: #{tpu_custom_call.1} parent=5 // pred_check_branch
        %380 = sbr.rel (%p378) target = $region52
      $region51: #{tpu_custom_call.1} parent=5 // pred_region
        // Predicated region
        $region53: #{tpu_custom_call.1} parent=51 // pred_check
          %p381 = pneg %p48
        $region54: #{tpu_custom_call.1} parent=51 // pred_check_branch
          %383 = sbr.rel (%p381) target = $region56
        $region55: #{tpu_custom_call.1} parent=51 // pred_region
          %s384 = sand.u32 %s38, 1
          %s385 = scalar_lea.sflag [#allocation3], %s384
          %s386 = sand.u32 %s38, 1
          %s387 = smul.addr %s386, 256
          %s388 = scalar_lea.vmem [#allocation2], %s387
          %s389 = smul.u32 32, %s28
          %s391 = ssub.s32 4096, 4096
          %392 = vsyncadd %s385, %s391
          %s393 = smul.addr %s389, 128
          %s394 = scalar_lea.hbm %s0, %s393
          %s395 = sshll.u32 %s388, 4
          %s396 = int_to_ptr.vmem [resolvable:$true] %s395
          %401 = dma.hbm_to_vmem [thread:$0]  %s394, 4096, %s396, %s385, 128, 128, 8
        $region56: #{tpu_custom_call.1} parent=51 // pred_fallthru
          _
        // Predicated region
        $region57: #{tpu_custom_call.1} parent=51 // pred_check
          %p402 = pneg %p74
        $region58: #{tpu_custom_call.1} parent=51 // pred_check_branch
          %404 = sbr.rel (%p402) target = $region60
        $region59: #{tpu_custom_call.1} parent=51 // pred_region
          %s405 = sand.u32 %s28, 1
          %s406 = scalar_lea.sflag [#allocation6], %s405
          %s407 = sand.u32 %s64, 1
          %s408 = smul.addr %s407, 512
          %s409 = scalar_lea.vmem [#allocation5], %s408
          %s410 = smul.u32 32, %s28
          %s412 = ssub.s32 8192, 8192
          %413 = vsyncadd %s406, %s412
          %s414 = smul.addr %s410, 2
          %s415 = smul.addr %s414, 128
          %s416 = scalar_lea.hbm %s1, %s415
          %s417 = sshll.u32 %s409, 4
          %s418 = int_to_ptr.vmem [resolvable:$true] %s417
          %423 = dma.hbm_to_vmem [thread:$0]  %s416, 8192, %s418, %s406, 256, 256, 16
        $region60: #{tpu_custom_call.1} parent=51 // pred_fallthru
          _
      $region52: #{tpu_custom_call.1} parent=5 // pred_fallthru
        _
      %p424 = scmp.le.s32.totalorder 1, %s28
      %p425 = scmp.lt.s32.totalorder %s28, 3
      %p426 = pnand %p424, %p425
      %p427 = pneg %p426
      // Predicated region
      $region61: #{tpu_custom_call.1} parent=5 // pred_check
        _
      $region62: #{tpu_custom_call.1} parent=5 // pred_check_branch
        %429 = sbr.rel (%p426) target = $region64
      $region63: #{tpu_custom_call.1} parent=5 // pred_region
        %s430 = ssub.s32 %s28, 1
        %s431 = sand.u32 %s41, 1
        %s432 = scalar_lea.sflag [#allocation3], %s431
        %s433 = sand.u32 %s41, 1
        %s434 = smul.addr %s433, 256
        %s435 = scalar_lea.vmem [#allocation2], %s434
        // Predicated region
        $region65: #{tpu_custom_call.1} parent=63 // pred_check
          %p436 = pneg %p54
        $region66: #{tpu_custom_call.1} parent=63 // pred_check_branch
          %438 = sbr.rel (%p436) target = $region68
        $region67: #{tpu_custom_call.1} parent=63 // pred_region
          %439 = dma.done %s432, 4096
        $region68: #{tpu_custom_call.1} parent=63 // pred_fallthru
          _
        %s440 = sand.u32 %s33, 1
        %s441 = scalar_lea.sflag [#allocation6], %s440
        %s442 = sand.u32 %s67, 1
        %s443 = smul.addr %s442, 512
        %s444 = scalar_lea.vmem [#allocation5], %s443
        // Predicated region
        $region69: #{tpu_custom_call.1} parent=63 // pred_check
          %p445 = pneg %p80
        $region70: #{tpu_custom_call.1} parent=63 // pred_check_branch
          %447 = sbr.rel (%p445) target = $region72
        $region71: #{tpu_custom_call.1} parent=63 // pred_region
          %448 = dma.done %s441, 8192
        $region72: #{tpu_custom_call.1} parent=63 // pred_fallthru
          _
        // Predicated region
        $region73: #{tpu_custom_call.1} parent=63 // pred_check
          %p449 = pneg %p101
        $region74: #{tpu_custom_call.1} parent=63 // pred_check_branch
          %451 = sbr.rel (%p449) target = $region76
        $region75: #{tpu_custom_call.1} parent=63 // pred_region
          %452 = dma.done [#allocation6], 4096
        $region76: #{tpu_custom_call.1} parent=63 // pred_fallthru
          _
        // Predicated region
        $region77: #{tpu_custom_call.1} parent=63 // pred_check
          %p453 = pneg %p122
        $region78: #{tpu_custom_call.1} parent=63 // pred_check_branch
          %455 = sbr.rel (%p453) target = $region80
        $region79: #{tpu_custom_call.1} parent=63 // pred_region
          %456 = dma.done [#allocation9], 4096
        $region80: #{tpu_custom_call.1} parent=63 // pred_fallthru
          _
        // Predicated region
        $region81: #{tpu_custom_call.1} parent=63 // pred_check
          %p457 = pneg %p164
        $region82: #{tpu_custom_call.1} parent=63 // pred_check_branch
          %459 = sbr.rel (%p457) target = $region84
        $region83: #{tpu_custom_call.1} parent=63 // pred_region
          %460 = dma.done [#allocation9], 12288
        $region84: #{tpu_custom_call.1} parent=63 // pred_fallthru
          _
        // Predicated region
        $region85: #{tpu_custom_call.1} parent=63 // pred_check
          %p461 = pneg %p248
        $region86: #{tpu_custom_call.1} parent=63 // pred_check_branch
          %463 = sbr.rel (%p461) target = $region88
        $region87: #{tpu_custom_call.1} parent=63 // pred_region
          %464 = dma.done [#allocation12], 2048
        $region88: #{tpu_custom_call.1} parent=63 // pred_fallthru
          _
        %s465 = sand.u32 %s41, 1
        %s466 = scalar_lea.sflag [#allocation3], %s465
        %s467 = sand.u32 %s41, 1
        %s468 = smul.addr %s467, 256
        %s469 = scalar_lea.vmem [#allocation2], %s468
        %p470 = pneg %p54
        %p471 = pneg %p51
        %s472 = sand.u32 %s33, 1
        %s473 = scalar_lea.sflag [#allocation6], %s472
        %s474 = sand.u32 %s67, 1
        %s475 = smul.addr %s474, 512
        %s476 = scalar_lea.vmem [#allocation5], %s475
        %p477 = pneg %p80
        %p478 = pneg %p77
        %p479 = pneg %p101
        %p480 = pneg %p98
        %p481 = pneg %p122
        %p482 = pneg %p119
        %p483 = pneg %p143
        %p484 = pneg %p140
        %p485 = pneg %p164
        %p486 = pneg %p161
        %p487 = pneg %p185
        %p488 = pneg %p182
        %p489 = pneg %p206
        %p490 = pneg %p203
        %p491 = pneg %p227
        %p492 = pneg %p224
        %p493 = pneg %p248
        %p494 = pneg %p245
        %p495 = pneg %p269
        %p496 = pneg %p266
        %p497 = pneg %p295
        %p498 = pneg %p292
        %s499 = sand.u32 %s282, 1
        %s500 = scalar_lea.sflag [#allocation4], %s499
        %s501 = sand.u32 %s282, 1
        %s502 = smul.addr %s501, 128
        %s503 = scalar_lea.vmem [#allocation13], %s502
        %s504 = smul.u32 32, %s33
        %s505 = smul.u32 32, %s33
        %s506 = smul.u32 32, %s33
        %v508 = vld [vmem:[%s435] sm:$0xff]
        %v509 = vld [vmem:[%s435 + $0x8] sm:$0xff]
        %v510 = vld [vmem:[%s435 + $0x10] sm:$0xff]
        %v511 = vld [vmem:[%s435 + $0x18] sm:$0xff]
        %v512 = vld [vmem:[%s435 + $0x20] sm:$0xff]
        %v513 = vld [vmem:[%s435 + $0x28] sm:$0xff]
        %v514 = vld [vmem:[%s435 + $0x30] sm:$0xff]
        %v515 = vld [vmem:[%s435 + $0x38] sm:$0xff]
        %v516 = vld [vmem:[%s435 + $0x40] sm:$0xff]
        %v517 = vld [vmem:[%s435 + $0x48] sm:$0xff]
        %v518 = vld [vmem:[%s435 + $0x50] sm:$0xff]
        %v519 = vld [vmem:[%s435 + $0x58] sm:$0xff]
        %v520 = vld [vmem:[%s435 + $0x60] sm:$0xff]
        %v521 = vld [vmem:[%s435 + $0x68] sm:$0xff]
        %v522 = vld [vmem:[%s435 + $0x70] sm:$0xff]
        %v523 = vld [vmem:[%s435 + $0x78] sm:$0xff]
        %v524 = vld [vmem:[%s435 + $0x80] sm:$0xff]
        %v525 = vld [vmem:[%s435 + $0x88] sm:$0xff]
        %v526 = vld [vmem:[%s435 + $0x90] sm:$0xff]
        %v527 = vld [vmem:[%s435 + $0x98] sm:$0xff]
        %v528 = vld [vmem:[%s435 + $0xa0] sm:$0xff]
        %v529 = vld [vmem:[%s435 + $0xa8] sm:$0xff]
        %v530 = vld [vmem:[%s435 + $0xb0] sm:$0xff]
        %v531 = vld [vmem:[%s435 + $0xb8] sm:$0xff]
        %v532 = vld [vmem:[%s435 + $0xc0] sm:$0xff]
        %v533 = vld [vmem:[%s435 + $0xc8] sm:$0xff]
        %v534 = vld [vmem:[%s435 + $0xd0] sm:$0xff]
        %v535 = vld [vmem:[%s435 + $0xd8] sm:$0xff]
        %v536 = vld [vmem:[%s435 + $0xe0] sm:$0xff]
        %v537 = vld [vmem:[%s435 + $0xe8] sm:$0xff]
        %v538 = vld [vmem:[%s435 + $0xf0] sm:$0xff]
        %v539 = vld [vmem:[%s435 + $0xf8] sm:$0xff]
        %v540 = vld [vmem:[#allocation7] sm:$0xff]
        %v541 = vld [vmem:[#allocation7 + $0x8] sm:$0xff]
        %v542 = vld [vmem:[#allocation7 + $0x10] sm:$0xff]
        %v543 = vld [vmem:[#allocation7 + $0x18] sm:$0xff]
        %v544 = vld [vmem:[#allocation7 + $0x20] sm:$0xff]
        %v545 = vld [vmem:[#allocation7 + $0x28] sm:$0xff]
        %v546 = vld [vmem:[#allocation7 + $0x30] sm:$0xff]
        %v547 = vld [vmem:[#allocation7 + $0x38] sm:$0xff]
        %v548 = vld [vmem:[#allocation7 + $0x40] sm:$0xff]
        %v549 = vld [vmem:[#allocation7 + $0x48] sm:$0xff]
        %v550 = vld [vmem:[#allocation7 + $0x50] sm:$0xff]
        %v551 = vld [vmem:[#allocation7 + $0x58] sm:$0xff]
        %v552 = vld [vmem:[#allocation7 + $0x60] sm:$0xff]
        %v553 = vld [vmem:[#allocation7 + $0x68] sm:$0xff]
        %v554 = vld [vmem:[#allocation7 + $0x70] sm:$0xff]
        %v555 = vld [vmem:[#allocation7 + $0x78] sm:$0xff]
        %v556 = vld [vmem:[#allocation7 + $0x80] sm:$0xff]
        %v557 = vld [vmem:[#allocation7 + $0x88] sm:$0xff]
        %v558 = vld [vmem:[#allocation7 + $0x90] sm:$0xff]
        %v559 = vld [vmem:[#allocation7 + $0x98] sm:$0xff]
        %v560 = vld [vmem:[#allocation7 + $0xa0] sm:$0xff]
        %v561 = vld [vmem:[#allocation7 + $0xa8] sm:$0xff]
        %v562 = vld [vmem:[#allocation7 + $0xb0] sm:$0xff]
        %v563 = vld [vmem:[#allocation7 + $0xb8] sm:$0xff]
        %v564 = vld [vmem:[#allocation7 + $0xc0] sm:$0xff]
        %v565 = vld [vmem:[#allocation7 + $0xc8] sm:$0xff]
        %v566 = vld [vmem:[#allocation7 + $0xd0] sm:$0xff]
        %v567 = vld [vmem:[#allocation7 + $0xd8] sm:$0xff]
        %v568 = vld [vmem:[#allocation7 + $0xe0] sm:$0xff]
        %v569 = vld [vmem:[#allocation7 + $0xe8] sm:$0xff]
        %v570 = vld [vmem:[#allocation7 + $0xf0] sm:$0xff]
        %v571 = vld [vmem:[#allocation7 + $0xf8] sm:$0xff]
        %v572 = vld [vmem:[%s444] sm:$0xff]
        %v573 = vld [vmem:[%s444 + $0x8] sm:$0xff]
        %v574 = vld [vmem:[%s444 + $0x10] sm:$0xff]
        %v575 = vld [vmem:[%s444 + $0x18] sm:$0xff]
        %v576 = vld [vmem:[%s444 + $0x20] sm:$0xff]
        %v577 = vld [vmem:[%s444 + $0x28] sm:$0xff]
        %v578 = vld [vmem:[%s444 + $0x30] sm:$0xff]
        %v579 = vld [vmem:[%s444 + $0x38] sm:$0xff]
        %v580 = vld [vmem:[%s444 + $0x40] sm:$0xff]
        %v581 = vld [vmem:[%s444 + $0x48] sm:$0xff]
        %v582 = vld [vmem:[%s444 + $0x50] sm:$0xff]
        %v583 = vld [vmem:[%s444 + $0x58] sm:$0xff]
        %v584 = vld [vmem:[%s444 + $0x60] sm:$0xff]
        %v585 = vld [vmem:[%s444 + $0x68] sm:$0xff]
        %v586 = vld [vmem:[%s444 + $0x70] sm:$0xff]
        %v587 = vld [vmem:[%s444 + $0x78] sm:$0xff]
        %v588 = vld [vmem:[%s444 + $0x80] sm:$0xff]
        %v589 = vld [vmem:[%s444 + $0x88] sm:$0xff]
        %v590 = vld [vmem:[%s444 + $0x90] sm:$0xff]
        %v591 = vld [vmem:[%s444 + $0x98] sm:$0xff]
        %v592 = vld [vmem:[%s444 + $0xa0] sm:$0xff]
        %v593 = vld [vmem:[%s444 + $0xa8] sm:$0xff]
        %v594 = vld [vmem:[%s444 + $0xb0] sm:$0xff]
        %v595 = vld [vmem:[%s444 + $0xb8] sm:$0xff]
        %v596 = vld [vmem:[%s444 + $0xc0] sm:$0xff]
        %v597 = vld [vmem:[%s444 + $0xc8] sm:$0xff]
        %v598 = vld [vmem:[%s444 + $0xd0] sm:$0xff]
        %v599 = vld [vmem:[%s444 + $0xd8] sm:$0xff]
        %v600 = vld [vmem:[%s444 + $0xe0] sm:$0xff]
        %v601 = vld [vmem:[%s444 + $0xe8] sm:$0xff]
        %v602 = vld [vmem:[%s444 + $0xf0] sm:$0xff]
        %v603 = vld [vmem:[%s444 + $0xf8] sm:$0xff]
        %v604 = vld [vmem:[%s444 + $0x100] sm:$0xff]
        %v605 = vld [vmem:[%s444 + $0x108] sm:$0xff]
        %v606 = vld [vmem:[%s444 + $0x110] sm:$0xff]
        %v607 = vld [vmem:[%s444 + $0x118] sm:$0xff]
        %v608 = vld [vmem:[%s444 + $0x120] sm:$0xff]
        %v609 = vld [vmem:[%s444 + $0x128] sm:$0xff]
        %v610 = vld [vmem:[%s444 + $0x130] sm:$0xff]
        %v611 = vld [vmem:[%s444 + $0x138] sm:$0xff]
        %v612 = vld [vmem:[%s444 + $0x140] sm:$0xff]
        %v613 = vld [vmem:[%s444 + $0x148] sm:$0xff]
        %v614 = vld [vmem:[%s444 + $0x150] sm:$0xff]
        %v615 = vld [vmem:[%s444 + $0x158] sm:$0xff]
        %v616 = vld [vmem:[%s444 + $0x160] sm:$0xff]
        %v617 = vld [vmem:[%s444 + $0x168] sm:$0xff]
        %v618 = vld [vmem:[%s444 + $0x170] sm:$0xff]
        %v619 = vld [vmem:[%s444 + $0x178] sm:$0xff]
        %v620 = vld [vmem:[%s444 + $0x180] sm:$0xff]
        %v621 = vld [vmem:[%s444 + $0x188] sm:$0xff]
        %v622 = vld [vmem:[%s444 + $0x190] sm:$0xff]
        %v623 = vld [vmem:[%s444 + $0x198] sm:$0xff]
        %v624 = vld [vmem:[%s444 + $0x1a0] sm:$0xff]
        %v625 = vld [vmem:[%s444 + $0x1a8] sm:$0xff]
        %v626 = vld [vmem:[%s444 + $0x1b0] sm:$0xff]
        %v627 = vld [vmem:[%s444 + $0x1b8] sm:$0xff]
        %v628 = vld [vmem:[%s444 + $0x1c0] sm:$0xff]
        %v629 = vld [vmem:[%s444 + $0x1c8] sm:$0xff]
        %v630 = vld [vmem:[%s444 + $0x1d0] sm:$0xff]
        %v631 = vld [vmem:[%s444 + $0x1d8] sm:$0xff]
        %v632 = vld [vmem:[%s444 + $0x1e0] sm:$0xff]
        %v633 = vld [vmem:[%s444 + $0x1e8] sm:$0xff]
        %v634 = vld [vmem:[%s444 + $0x1f0] sm:$0xff]
        %v635 = vld [vmem:[%s444 + $0x1f8] sm:$0xff]
        %v636 = vpack.c.bf16 %v574, %v572
        %v637 = vpack.c.bf16 %v575, %v573
        %v638 = vpack.c.bf16 %v578, %v576
        %v639 = vpack.c.bf16 %v579, %v577
        %v640 = vpack.c.bf16 %v582, %v580
        %v641 = vpack.c.bf16 %v583, %v581
        %v642 = vpack.c.bf16 %v586, %v584
        %v643 = vpack.c.bf16 %v587, %v585
        %v644 = vpack.c.bf16 %v590, %v588
        %v645 = vpack.c.bf16 %v591, %v589
        %v646 = vpack.c.bf16 %v594, %v592
        %v647 = vpack.c.bf16 %v595, %v593
        %v648 = vpack.c.bf16 %v598, %v596
        %v649 = vpack.c.bf16 %v599, %v597
        %v650 = vpack.c.bf16 %v602, %v600
        %v651 = vpack.c.bf16 %v603, %v601
        %v652 = vpack.c.bf16 %v606, %v604
        %v653 = vpack.c.bf16 %v607, %v605
        %v654 = vpack.c.bf16 %v610, %v608
        %v655 = vpack.c.bf16 %v611, %v609
        %v656 = vpack.c.bf16 %v614, %v612
        %v657 = vpack.c.bf16 %v615, %v613
        %v658 = vpack.c.bf16 %v618, %v616
        %v659 = vpack.c.bf16 %v619, %v617
        %v660 = vpack.c.bf16 %v622, %v620
        %v661 = vpack.c.bf16 %v623, %v621
        %v662 = vpack.c.bf16 %v626, %v624
        %v663 = vpack.c.bf16 %v627, %v625
        %v664 = vpack.c.bf16 %v630, %v628
        %v665 = vpack.c.bf16 %v631, %v629
        %v666 = vpack.c.bf16 %v634, %v632
        %v667 = vpack.c.bf16 %v635, %v633
        %v668 = vld [vmem:[#allocation8] sm:$0xff]
        %v669 = vld [vmem:[#allocation8 + $0x8] sm:$0xff]
        %v670 = vld [vmem:[#allocation8 + $0x10] sm:$0xff]
        %v671 = vld [vmem:[#allocation8 + $0x18] sm:$0xff]
        %v672 = vld [vmem:[#allocation8 + $0x20] sm:$0xff]
        %v673 = vld [vmem:[#allocation8 + $0x28] sm:$0xff]
        %v674 = vld [vmem:[#allocation8 + $0x30] sm:$0xff]
        %v675 = vld [vmem:[#allocation8 + $0x38] sm:$0xff]
        %v676 = vld [vmem:[#allocation8 + $0x40] sm:$0xff]
        %v677 = vld [vmem:[#allocation8 + $0x48] sm:$0xff]
        %v678 = vld [vmem:[#allocation8 + $0x50] sm:$0xff]
        %v679 = vld [vmem:[#allocation8 + $0x58] sm:$0xff]
        %v680 = vld [vmem:[#allocation8 + $0x60] sm:$0xff]
        %v681 = vld [vmem:[#allocation8 + $0x68] sm:$0xff]
        %v682 = vld [vmem:[#allocation8 + $0x70] sm:$0xff]
        %v683 = vld [vmem:[#allocation8 + $0x78] sm:$0xff]
        %v684 = vld [vmem:[#allocation8 + $0x80] sm:$0xff]
        %v685 = vld [vmem:[#allocation8 + $0x88] sm:$0xff]
        %v686 = vld [vmem:[#allocation8 + $0x90] sm:$0xff]
        %v687 = vld [vmem:[#allocation8 + $0x98] sm:$0xff]
        %v688 = vld [vmem:[#allocation8 + $0xa0] sm:$0xff]
        %v689 = vld [vmem:[#allocation8 + $0xa8] sm:$0xff]
        %v690 = vld [vmem:[#allocation8 + $0xb0] sm:$0xff]
        %v691 = vld [vmem:[#allocation8 + $0xb8] sm:$0xff]
        %v692 = vld [vmem:[#allocation8 + $0xc0] sm:$0xff]
        %v693 = vld [vmem:[#allocation8 + $0xc8] sm:$0xff]
        %v694 = vld [vmem:[#allocation8 + $0xd0] sm:$0xff]
        %v695 = vld [vmem:[#allocation8 + $0xd8] sm:$0xff]
        %v696 = vld [vmem:[#allocation8 + $0xe0] sm:$0xff]
        %v697 = vld [vmem:[#allocation8 + $0xe8] sm:$0xff]
        %v698 = vld [vmem:[#allocation8 + $0xf0] sm:$0xff]
        %v699 = vld [vmem:[#allocation8 + $0xf8] sm:$0xff]
        %v732 = vunpack.c.l.b16 %v668
        %v733 = vunpack.c.h.b16 %v668
        %v734 = vunpack.c.l.b16 %v669
        %v735 = vunpack.c.h.b16 %v669
        %v736 = vunpack.c.l.b16 %v670
        %v737 = vunpack.c.h.b16 %v670
        %v738 = vunpack.c.l.b16 %v671
        %v739 = vunpack.c.h.b16 %v671
        %v740 = vunpack.c.l.b16 %v672
        %v741 = vunpack.c.h.b16 %v672
        %v742 = vunpack.c.l.b16 %v673
        %v743 = vunpack.c.h.b16 %v673
        %v744 = vunpack.c.l.b16 %v674
        %v745 = vunpack.c.h.b16 %v674
        %v746 = vunpack.c.l.b16 %v675
        %v747 = vunpack.c.h.b16 %v675
        %v748 = vunpack.c.l.b16 %v676
        %v749 = vunpack.c.h.b16 %v676
        %v750 = vunpack.c.l.b16 %v677
        %v751 = vunpack.c.h.b16 %v677
        %v752 = vunpack.c.l.b16 %v678
        %v753 = vunpack.c.h.b16 %v678
        %v754 = vunpack.c.l.b16 %v679
        %v755 = vunpack.c.h.b16 %v679
        %v756 = vunpack.c.l.b16 %v680
        %v757 = vunpack.c.h.b16 %v680
        %v758 = vunpack.c.l.b16 %v681
        %v759 = vunpack.c.h.b16 %v681
        %v760 = vunpack.c.l.b16 %v682
        %v761 = vunpack.c.h.b16 %v682
        %v762 = vunpack.c.l.b16 %v683
        %v763 = vunpack.c.h.b16 %v683
        %v764 = vunpack.c.l.b16 %v684
        %v765 = vunpack.c.h.b16 %v684
        %v766 = vunpack.c.l.b16 %v685
        %v767 = vunpack.c.h.b16 %v685
        %v768 = vunpack.c.l.b16 %v686
        %v769 = vunpack.c.h.b16 %v686
        %v770 = vunpack.c.l.b16 %v687
        %v771 = vunpack.c.h.b16 %v687
        %v772 = vunpack.c.l.b16 %v688
        %v773 = vunpack.c.h.b16 %v688
        %v774 = vunpack.c.l.b16 %v689
        %v775 = vunpack.c.h.b16 %v689
        %v776 = vunpack.c.l.b16 %v690
        %v777 = vunpack.c.h.b16 %v690
        %v778 = vunpack.c.l.b16 %v691
        %v779 = vunpack.c.h.b16 %v691
        %v780 = vunpack.c.l.b16 %v692
        %v781 = vunpack.c.h.b16 %v692
        %v782 = vunpack.c.l.b16 %v693
        %v783 = vunpack.c.h.b16 %v693
        %v784 = vunpack.c.l.b16 %v694
        %v785 = vunpack.c.h.b16 %v694
        %v786 = vunpack.c.l.b16 %v695
        %v787 = vunpack.c.h.b16 %v695
        %v788 = vunpack.c.l.b16 %v696
        %v789 = vunpack.c.h.b16 %v696
        %v790 = vunpack.c.l.b16 %v697
        %v791 = vunpack.c.h.b16 %v697
        %v792 = vunpack.c.l.b16 %v698
        %v793 = vunpack.c.h.b16 %v698
        %v794 = vunpack.c.l.b16 %v699
        %v795 = vunpack.c.h.b16 %v699
        %v796 = vpack.c.b16 %v734, %v732
        %v797 = vpack.c.b16 %v735, %v733
        %v798 = vpack.c.b16 %v738, %v736
        %v799 = vpack.c.b16 %v739, %v737
        %v800 = vpack.c.b16 %v742, %v740
        %v801 = vpack.c.b16 %v743, %v741
        %v802 = vpack.c.b16 %v746, %v744
        %v803 = vpack.c.b16 %v747, %v745
        %v804 = vpack.c.b16 %v750, %v748
        %v805 = vpack.c.b16 %v751, %v749
        %v806 = vpack.c.b16 %v754, %v752
        %v807 = vpack.c.b16 %v755, %v753
        %v808 = vpack.c.b16 %v758, %v756
        %v809 = vpack.c.b16 %v759, %v757
        %v810 = vpack.c.b16 %v762, %v760
        %v811 = vpack.c.b16 %v763, %v761
        %v812 = vpack.c.b16 %v766, %v764
        %v813 = vpack.c.b16 %v767, %v765
        %v814 = vpack.c.b16 %v770, %v768
        %v815 = vpack.c.b16 %v771, %v769
        %v816 = vpack.c.b16 %v774, %v772
        %v817 = vpack.c.b16 %v775, %v773
        %v818 = vpack.c.b16 %v778, %v776
        %v819 = vpack.c.b16 %v779, %v777
        %v820 = vpack.c.b16 %v782, %v780
        %v821 = vpack.c.b16 %v783, %v781
        %v822 = vpack.c.b16 %v786, %v784
        %v823 = vpack.c.b16 %v787, %v785
        %v824 = vpack.c.b16 %v790, %v788
        %v825 = vpack.c.b16 %v791, %v789
        %v826 = vpack.c.b16 %v794, %v792
        %v827 = vpack.c.b16 %v795, %v793
        %860 = vmatprep.subr.bf16.mxu0 %v797
        %861 = vmatpush1.bf16.msra.mxu0 %v796
        %862 = vmatprep.subr.bf16.mxu0 %v799
        %863 = vmatpush1.bf16.msra.mxu0 %v798
        %864 = vmatprep.subr.bf16.mxu0 %v801
        %865 = vmatpush1.bf16.msra.mxu0 %v800
        %866 = vmatprep.subr.bf16.mxu0 %v803
        %867 = vmatpush1.bf16.msra.mxu0 %v802
        %868 = vmatprep.subr.bf16.mxu0 %v805
        %869 = vmatpush1.bf16.msra.mxu0 %v804
        %870 = vmatprep.subr.bf16.mxu0 %v807
        %871 = vmatpush1.bf16.msra.mxu0 %v806
        %872 = vmatprep.subr.bf16.mxu0 %v809
        %873 = vmatpush1.bf16.msra.mxu0 %v808
        %874 = vmatprep.subr.bf16.mxu0 %v811
        %875 = vmatpush1.bf16.msra.mxu0 %v810
        %876 = vmatprep.subr.bf16.mxu0 %v813
        %877 = vmatpush1.bf16.msra.mxu0 %v812
        %878 = vmatprep.subr.bf16.mxu0 %v815
        %879 = vmatpush1.bf16.msra.mxu0 %v814
        %880 = vmatprep.subr.bf16.mxu0 %v817
        %881 = vmatpush1.bf16.msra.mxu0 %v816
        %882 = vmatprep.subr.bf16.mxu0 %v819
        %883 = vmatpush1.bf16.msra.mxu0 %v818
        %884 = vmatprep.subr.bf16.mxu0 %v821
        %885 = vmatpush1.bf16.msra.mxu0 %v820
        %886 = vmatprep.subr.bf16.mxu0 %v823
        %887 = vmatpush1.bf16.msra.mxu0 %v822
        %888 = vmatprep.subr.bf16.mxu0 %v825
        %889 = vmatpush1.bf16.msra.mxu0 %v824
        %890 = vmatprep.subr.bf16.mxu0 %v827
        %891 = vmatpush1.bf16.msra.mxu0 %v826
        %892 = vmatprep.mubr.bf16.mxu0 %v637
        %893 = vmatmul.mubr.bf16.gmra.mrb[0].mxu0 %v636
        %v894 = vpop.f32.mrb[0].mxu0
        %v895 = vadd.f32 0.0, %v894
        %v896 = vpop.f32.mrb[0].mxu0
        %v897 = vadd.f32 0.0, %v896
        %v898 = vpop.f32.mrb[0].mxu0
        %v899 = vadd.f32 0.0, %v898
        %v900 = vpop.f32.mrb[0].mxu0
        %v901 = vadd.f32 0.0, %v900
        %902 = vmatprep.mubr.bf16.mxu0 %v639
        %903 = vmatmul.mubr.bf16.gmra.mrb[0].mxu0 %v638
        %v904 = vpop.f32.mrb[0].mxu0
        %v905 = vadd.f32 0.0, %v904
        %v906 = vpop.f32.mrb[0].mxu0
        %v907 = vadd.f32 0.0, %v906
        %v908 = vpop.f32.mrb[0].mxu0
        %v909 = vadd.f32 0.0, %v908
        %v910 = vpop.f32.mrb[0].mxu0
        %v911 = vadd.f32 0.0, %v910
        %912 = vmatprep.mubr.bf16.mxu0 %v641
        %913 = vmatmul.mubr.bf16.gmra.mrb[0].mxu0 %v640
        %v914 = vpop.f32.mrb[0].mxu0
        %v915 = vadd.f32 0.0, %v914
        %v916 = vpop.f32.mrb[0].mxu0
        %v917 = vadd.f32 0.0, %v916
        %v918 = vpop.f32.mrb[0].mxu0
        %v919 = vadd.f32 0.0, %v918
        %v920 = vpop.f32.mrb[0].mxu0
        %v921 = vadd.f32 0.0, %v920
        %922 = vmatprep.mubr.bf16.mxu0 %v643
        %923 = vmatmul.mubr.bf16.gmra.mrb[0].mxu0 %v642
        %v924 = vpop.f32.mrb[0].mxu0
        %v925 = vadd.f32 0.0, %v924
        %v926 = vpop.f32.mrb[0].mxu0
        %v927 = vadd.f32 0.0, %v926
        %v928 = vpop.f32.mrb[0].mxu0
        %v929 = vadd.f32 0.0, %v928
        %v930 = vpop.f32.mrb[0].mxu0
        %v931 = vadd.f32 0.0, %v930
        %932 = vmatprep.mubr.bf16.mxu0 %v645
        %933 = vmatmul.mubr.bf16.gmra.mrb[0].mxu0 %v644
        %v934 = vpop.f32.mrb[0].mxu0
        %v935 = vadd.f32 0.0, %v934
        %v936 = vpop.f32.mrb[0].mxu0
        %v937 = vadd.f32 0.0, %v936
        %v938 = vpop.f32.mrb[0].mxu0
        %v939 = vadd.f32 0.0, %v938
        %v940 = vpop.f32.mrb[0].mxu0
        %v941 = vadd.f32 0.0, %v940
        %942 = vmatprep.mubr.bf16.mxu0 %v647
        %943 = vmatmul.mubr.bf16.gmra.mrb[0].mxu0 %v646
        %v944 = vpop.f32.mrb[0].mxu0
        %v945 = vadd.f32 0.0, %v944
        %v946 = vpop.f32.mrb[0].mxu0
        %v947 = vadd.f32 0.0, %v946
        %v948 = vpop.f32.mrb[0].mxu0
        %v949 = vadd.f32 0.0, %v948
        %v950 = vpop.f32.mrb[0].mxu0
        %v951 = vadd.f32 0.0, %v950
        %952 = vmatprep.mubr.bf16.mxu0 %v649
        %953 = vmatmul.mubr.bf16.gmra.mrb[0].mxu0 %v648
        %v954 = vpop.f32.mrb[0].mxu0
        %v955 = vadd.f32 0.0, %v954
        %v956 = vpop.f32.mrb[0].mxu0
        %v957 = vadd.f32 0.0, %v956
        %v958 = vpop.f32.mrb[0].mxu0
        %v959 = vadd.f32 0.0, %v958
        %v960 = vpop.f32.mrb[0].mxu0
        %v961 = vadd.f32 0.0, %v960
        %962 = vmatprep.mubr.bf16.mxu0 %v651
        %963 = vmatmul.mubr.bf16.gmra.mrb[0].mxu0 %v650
        %v964 = vpop.f32.mrb[0].mxu0
        %v965 = vadd.f32 0.0, %v964
        %v966 = vpop.f32.mrb[0].mxu0
        %v967 = vadd.f32 0.0, %v966
        %v968 = vpop.f32.mrb[0].mxu0
        %v969 = vadd.f32 0.0, %v968
        %v970 = vpop.f32.mrb[0].mxu0
        %v971 = vadd.f32 0.0, %v970
        %972 = vmatprep.mubr.bf16.mxu0 %v653
        %973 = vmatmul.mubr.bf16.gmra.mrb[0].mxu0 %v652
        %v974 = vpop.f32.mrb[0].mxu0
        %v975 = vadd.f32 0.0, %v974
        %v976 = vpop.f32.mrb[0].mxu0
        %v977 = vadd.f32 0.0, %v976
        %v978 = vpop.f32.mrb[0].mxu0
        %v979 = vadd.f32 0.0, %v978
        %v980 = vpop.f32.mrb[0].mxu0
        %v981 = vadd.f32 0.0, %v980
        %982 = vmatprep.mubr.bf16.mxu0 %v655
        %983 = vmatmul.mubr.bf16.gmra.mrb[0].mxu0 %v654
        %v984 = vpop.f32.mrb[0].mxu0
        %v985 = vadd.f32 0.0, %v984
        %v986 = vpop.f32.mrb[0].mxu0
        %v987 = vadd.f32 0.0, %v986
        %v988 = vpop.f32.mrb[0].mxu0
        %v989 = vadd.f32 0.0, %v988
        %v990 = vpop.f32.mrb[0].mxu0
        %v991 = vadd.f32 0.0, %v990
        %992 = vmatprep.mubr.bf16.mxu0 %v657
        %993 = vmatmul.mubr.bf16.gmra.mrb[0].mxu0 %v656
        %v994 = vpop.f32.mrb[0].mxu0
        %v995 = vadd.f32 0.0, %v994
        %v996 = vpop.f32.mrb[0].mxu0
        %v997 = vadd.f32 0.0, %v996
        %v998 = vpop.f32.mrb[0].mxu0
        %v999 = vadd.f32 0.0, %v998
        %v1000 = vpop.f32.mrb[0].mxu0
        %v1001 = vadd.f32 0.0, %v1000
        %1002 = vmatprep.mubr.bf16.mxu0 %v659
        %1003 = vmatmul.mubr.bf16.gmra.mrb[0].mxu0 %v658
        %v1004 = vpop.f32.mrb[0].mxu0
        %v1005 = vadd.f32 0.0, %v1004
        %v1006 = vpop.f32.mrb[0].mxu0
        %v1007 = vadd.f32 0.0, %v1006
        %v1008 = vpop.f32.mrb[0].mxu0
        %v1009 = vadd.f32 0.0, %v1008
        %v1010 = vpop.f32.mrb[0].mxu0
        %v1011 = vadd.f32 0.0, %v1010
        %1012 = vmatprep.mubr.bf16.mxu0 %v661
        %1013 = vmatmul.mubr.bf16.gmra.mrb[0].mxu0 %v660
        %v1014 = vpop.f32.mrb[0].mxu0
        %v1015 = vadd.f32 0.0, %v1014
        %v1016 = vpop.f32.mrb[0].mxu0
        %v1017 = vadd.f32 0.0, %v1016
        %v1018 = vpop.f32.mrb[0].mxu0
        %v1019 = vadd.f32 0.0, %v1018
        %v1020 = vpop.f32.mrb[0].mxu0
        %v1021 = vadd.f32 0.0, %v1020
        %1022 = vmatprep.mubr.bf16.mxu0 %v663
        %1023 = vmatmul.mubr.bf16.gmra.mrb[0].mxu0 %v662
        %v1024 = vpop.f32.mrb[0].mxu0
        %v1025 = vadd.f32 0.0, %v1024
        %v1026 = vpop.f32.mrb[0].mxu0
        %v1027 = vadd.f32 0.0, %v1026
        %v1028 = vpop.f32.mrb[0].mxu0
        %v1029 = vadd.f32 0.0, %v1028
        %v1030 = vpop.f32.mrb[0].mxu0
        %v1031 = vadd.f32 0.0, %v1030
        %1032 = vmatprep.mubr.bf16.mxu0 %v665
        %1033 = vmatmul.mubr.bf16.gmra.mrb[0].mxu0 %v664
        %v1034 = vpop.f32.mrb[0].mxu0
        %v1035 = vadd.f32 0.0, %v1034
        %v1036 = vpop.f32.mrb[0].mxu0
        %v1037 = vadd.f32 0.0, %v1036
        %v1038 = vpop.f32.mrb[0].mxu0
        %v1039 = vadd.f32 0.0, %v1038
        %v1040 = vpop.f32.mrb[0].mxu0
        %v1041 = vadd.f32 0.0, %v1040
        %1042 = vmatprep.mubr.bf16.mxu0 %v667
        %1043 = vmatmul.mubr.bf16.gmra.mrb[0].mxu0 %v666
        %v1044 = vpop.f32.mrb[0].mxu0
        %v1045 = vadd.f32 0.0, %v1044
        %v1046 = vpop.f32.mrb[0].mxu0
        %v1047 = vadd.f32 0.0, %v1046
        %v1048 = vpop.f32.mrb[0].mxu0
        %v1049 = vadd.f32 0.0, %v1048
        %v1050 = vpop.f32.mrb[0].mxu0
        %v1051 = vadd.f32 0.0, %v1050
        %1052 = vdwg.mxu0
        %1053 = vmatprep.subr.mxu0 %v541
        %1054 = vmatpush1.msra.mxu0 %v540
        %1055 = vmatprep.subr.mxu0 %v543
        %1056 = vmatpush1.msra.mxu0 %v542
        %1057 = vmatprep.subr.mxu0 %v545
        %1058 = vmatpush1.msra.mxu0 %v544
        %1059 = vmatprep.subr.mxu0 %v547
        %1060 = vmatpush1.msra.mxu0 %v546
        %1061 = vmatprep.subr.mxu0 %v549
        %1062 = vmatpush1.msra.mxu0 %v548
        %1063 = vmatprep.subr.mxu0 %v551
        %1064 = vmatpush1.msra.mxu0 %v550
        %1065 = vmatprep.subr.mxu0 %v553
        %1066 = vmatpush1.msra.mxu0 %v552
        %1067 = vmatprep.subr.mxu0 %v555
        %1068 = vmatpush1.msra.mxu0 %v554
        %1069 = vmatprep.subr.mxu0 %v557
        %1070 = vmatpush1.msra.mxu0 %v556
        %1071 = vmatprep.subr.mxu0 %v559
        %1072 = vmatpush1.msra.mxu0 %v558
        %1073 = vmatprep.subr.mxu0 %v561
        %1074 = vmatpush1.msra.mxu0 %v560
        %1075 = vmatprep.subr.mxu0 %v563
        %1076 = vmatpush1.msra.mxu0 %v562
        %1077 = vmatprep.subr.mxu0 %v565
        %1078 = vmatpush1.msra.mxu0 %v564
        %1079 = vmatprep.subr.mxu0 %v567
        %1080 = vmatpush1.msra.mxu0 %v566
        %1081 = vmatprep.subr.mxu0 %v569
        %1082 = vmatpush1.msra.mxu0 %v568
        %1083 = vmatprep.subr.mxu0 %v571
        %1084 = vmatpush1.msra.mxu0 %v570
        %1085 = vmatprep.subr.mxu0 0.0
        %1086 = vmatpush1.msra.mxu0 0.0
        %1087 = vmatprep.subr.mxu0 0.0
        %1088 = vmatpush1.msra.mxu0 0.0
        %1089 = vmatprep.subr.mxu0 0.0
        %1090 = vmatpush1.msra.mxu0 0.0
        %1091 = vmatprep.subr.mxu0 0.0
        %1092 = vmatpush1.msra.mxu0 0.0
        %1093 = vmatprep.subr.mxu0 0.0
        %1094 = vmatpush1.msra.mxu0 0.0
        %1095 = vmatprep.subr.mxu0 0.0
        %1096 = vmatpush1.msra.mxu0 0.0
        %1097 = vmatprep.subr.mxu0 0.0
        %1098 = vmatpush1.msra.mxu0 0.0
        %1099 = vmatprep.subr.mxu0 0.0
        %1100 = vmatpush1.msra.mxu0 0.0
        %1101 = vmatprep.subr.mxu0 0.0
        %1102 = vmatpush1.msra.mxu0 0.0
        %1103 = vmatprep.subr.mxu0 0.0
        %1104 = vmatpush1.msra.mxu0 0.0
        %1105 = vmatprep.subr.mxu0 0.0
        %1106 = vmatpush1.msra.mxu0 0.0
        %1107 = vmatprep.subr.mxu0 0.0
        %1108 = vmatpush1.msra.mxu0 0.0
        %1109 = vmatprep.subr.mxu0 0.0
        %1110 = vmatpush1.msra.mxu0 0.0
        %1111 = vmatprep.subr.mxu0 0.0
        %1112 = vmatpush1.msra.mxu0 0.0
        %1113 = vmatprep.subr.mxu0 0.0
        %1114 = vmatpush1.msra.mxu0 0.0
        %1115 = vmatprep.subr.mxu0 0.0
        %1116 = vmatpush1.msra.mxu0 0.0
        %1117 = vmatprep.mubr.f32.mxu0 0.0
        %1118 = vmatmul.mubr.f32.gmra.mrb[0].mxu0 %v508
        %v1119 = vpop.f32.mrb[0].mxu0
        %v1120 = vadd.f32 %v895, %v1119
        %v1121 = vpop.f32.mrb[0].mxu0
        %v1122 = vadd.f32 %v897, %v1121
        %1123 = vmatprep.mubr.f32.mxu0 0.0
        %1124 = vmatmul.mubr.f32.gmra.mrb[0].mxu0 %v509
        %v1125 = vpop.f32.mrb[0].mxu0
        %v1126 = vadd.f32 %v899, %v1125
        %v1127 = vpop.f32.mrb[0].mxu0
        %v1128 = vadd.f32 %v901, %v1127
        %1129 = vmatprep.mubr.f32.mxu0 0.0
        %1130 = vmatmul.mubr.f32.gmra.mrb[0].mxu0 %v510
        %v1131 = vpop.f32.mrb[0].mxu0
        %v1132 = vadd.f32 %v905, %v1131
        %v1133 = vpop.f32.mrb[0].mxu0
        %v1134 = vadd.f32 %v907, %v1133
        %1135 = vmatprep.mubr.f32.mxu0 0.0
        %1136 = vmatmul.mubr.f32.gmra.mrb[0].mxu0 %v511
        %v1137 = vpop.f32.mrb[0].mxu0
        %v1138 = vadd.f32 %v909, %v1137
        %v1139 = vpop.f32.mrb[0].mxu0
        %v1140 = vadd.f32 %v911, %v1139
        %1141 = vmatprep.mubr.f32.mxu0 0.0
        %1142 = vmatmul.mubr.f32.gmra.mrb[0].mxu0 %v512
        %v1143 = vpop.f32.mrb[0].mxu0
        %v1144 = vadd.f32 %v915, %v1143
        %v1145 = vpop.f32.mrb[0].mxu0
        %v1146 = vadd.f32 %v917, %v1145
        %1147 = vmatprep.mubr.f32.mxu0 0.0
        %1148 = vmatmul.mubr.f32.gmra.mrb[0].mxu0 %v513
        %v1149 = vpop.f32.mrb[0].mxu0
        %v1150 = vadd.f32 %v919, %v1149
        %v1151 = vpop.f32.mrb[0].mxu0
        %v1152 = vadd.f32 %v921, %v1151
        %1153 = vmatprep.mubr.f32.mxu0 0.0
        %1154 = vmatmul.mubr.f32.gmra.mrb[0].mxu0 %v514
        %v1155 = vpop.f32.mrb[0].mxu0
        %v1156 = vadd.f32 %v925, %v1155
        %v1157 = vpop.f32.mrb[0].mxu0
        %v1158 = vadd.f32 %v927, %v1157
        %1159 = vmatprep.mubr.f32.mxu0 0.0
        %1160 = vmatmul.mubr.f32.gmra.mrb[0].mxu0 %v515
        %v1161 = vpop.f32.mrb[0].mxu0
        %v1162 = vadd.f32 %v929, %v1161
        %v1163 = vpop.f32.mrb[0].mxu0
        %v1164 = vadd.f32 %v931, %v1163
        %1165 = vmatprep.mubr.f32.mxu0 0.0
        %1166 = vmatmul.mubr.f32.gmra.mrb[0].mxu0 %v516
        %v1167 = vpop.f32.mrb[0].mxu0
        %v1168 = vadd.f32 %v935, %v1167
        %v1169 = vpop.f32.mrb[0].mxu0
        %v1170 = vadd.f32 %v937, %v1169
        %1171 = vmatprep.mubr.f32.mxu0 0.0
        %1172 = vmatmul.mubr.f32.gmra.mrb[0].mxu0 %v517
        %v1173 = vpop.f32.mrb[0].mxu0
        %v1174 = vadd.f32 %v939, %v1173
        %v1175 = vpop.f32.mrb[0].mxu0
        %v1176 = vadd.f32 %v941, %v1175
        %1177 = vmatprep.mubr.f32.mxu0 0.0
        %1178 = vmatmul.mubr.f32.gmra.mrb[0].mxu0 %v518
        %v1179 = vpop.f32.mrb[0].mxu0
        %v1180 = vadd.f32 %v945, %v1179
        %v1181 = vpop.f32.mrb[0].mxu0
        %v1182 = vadd.f32 %v947, %v1181
        %1183 = vmatprep.mubr.f32.mxu0 0.0
        %1184 = vmatmul.mubr.f32.gmra.mrb[0].mxu0 %v519
        %v1185 = vpop.f32.mrb[0].mxu0
        %v1186 = vadd.f32 %v949, %v1185
        %v1187 = vpop.f32.mrb[0].mxu0
        %v1188 = vadd.f32 %v951, %v1187
        %1189 = vmatprep.mubr.f32.mxu0 0.0
        %1190 = vmatmul.mubr.f32.gmra.mrb[0].mxu0 %v520
        %v1191 = vpop.f32.mrb[0].mxu0
        %v1192 = vadd.f32 %v955, %v1191
        %v1193 = vpop.f32.mrb[0].mxu0
        %v1194 = vadd.f32 %v957, %v1193
        %1195 = vmatprep.mubr.f32.mxu0 0.0
        %1196 = vmatmul.mubr.f32.gmra.mrb[0].mxu0 %v521
        %v1197 = vpop.f32.mrb[0].mxu0
        %v1198 = vadd.f32 %v959, %v1197
        %v1199 = vpop.f32.mrb[0].mxu0
        %v1200 = vadd.f32 %v961, %v1199
        %1201 = vmatprep.mubr.f32.mxu0 0.0
        %1202 = vmatmul.mubr.f32.gmra.mrb[0].mxu0 %v522
        %v1203 = vpop.f32.mrb[0].mxu0
        %v1204 = vadd.f32 %v965, %v1203
        %v1205 = vpop.f32.mrb[0].mxu0
        %v1206 = vadd.f32 %v967, %v1205
        %1207 = vmatprep.mubr.f32.mxu0 0.0
        %1208 = vmatmul.mubr.f32.gmra.mrb[0].mxu0 %v523
        %v1209 = vpop.f32.mrb[0].mxu0
        %v1210 = vadd.f32 %v969, %v1209
        %v1211 = vpop.f32.mrb[0].mxu0
        %v1212 = vadd.f32 %v971, %v1211
        %1213 = vmatprep.mubr.f32.mxu0 0.0
        %1214 = vmatmul.mubr.f32.gmra.mrb[0].mxu0 %v524
        %v1215 = vpop.f32.mrb[0].mxu0
        %v1216 = vadd.f32 %v975, %v1215
        %v1217 = vpop.f32.mrb[0].mxu0
        %v1218 = vadd.f32 %v977, %v1217
        %1219 = vmatprep.mubr.f32.mxu0 0.0
        %1220 = vmatmul.mubr.f32.gmra.mrb[0].mxu0 %v525
        %v1221 = vpop.f32.mrb[0].mxu0
        %v1222 = vadd.f32 %v979, %v1221
        %v1223 = vpop.f32.mrb[0].mxu0
        %v1224 = vadd.f32 %v981, %v1223
        %1225 = vmatprep.mubr.f32.mxu0 0.0
        %1226 = vmatmul.mubr.f32.gmra.mrb[0].mxu0 %v526
        %v1227 = vpop.f32.mrb[0].mxu0
        %v1228 = vadd.f32 %v985, %v1227
        %v1229 = vpop.f32.mrb[0].mxu0
        %v1230 = vadd.f32 %v987, %v1229
        %1231 = vmatprep.mubr.f32.mxu0 0.0
        %1232 = vmatmul.mubr.f32.gmra.mrb[0].mxu0 %v527
        %v1233 = vpop.f32.mrb[0].mxu0
        %v1234 = vadd.f32 %v989, %v1233
        %v1235 = vpop.f32.mrb[0].mxu0
        %v1236 = vadd.f32 %v991, %v1235
        %1237 = vmatprep.mubr.f32.mxu0 0.0
        %1238 = vmatmul.mubr.f32.gmra.mrb[0].mxu0 %v528
        %v1239 = vpop.f32.mrb[0].mxu0
        %v1240 = vadd.f32 %v995, %v1239
        %v1241 = vpop.f32.mrb[0].mxu0
        %v1242 = vadd.f32 %v997, %v1241
        %1243 = vmatprep.mubr.f32.mxu0 0.0
        %1244 = vmatmul.mubr.f32.gmra.mrb[0].mxu0 %v529
        %v1245 = vpop.f32.mrb[0].mxu0
        %v1246 = vadd.f32 %v999, %v1245
        %v1247 = vpop.f32.mrb[0].mxu0
        %v1248 = vadd.f32 %v1001, %v1247
        %1249 = vmatprep.mubr.f32.mxu0 0.0
        %1250 = vmatmul.mubr.f32.gmra.mrb[0].mxu0 %v530
        %v1251 = vpop.f32.mrb[0].mxu0
        %v1252 = vadd.f32 %v1005, %v1251
        %v1253 = vpop.f32.mrb[0].mxu0
        %v1254 = vadd.f32 %v1007, %v1253
        %1255 = vmatprep.mubr.f32.mxu0 0.0
        %1256 = vmatmul.mubr.f32.gmra.mrb[0].mxu0 %v531
        %v1257 = vpop.f32.mrb[0].mxu0
        %v1258 = vadd.f32 %v1009, %v1257
        %v1259 = vpop.f32.mrb[0].mxu0
        %v1260 = vadd.f32 %v1011, %v1259
        %1261 = vmatprep.mubr.f32.mxu0 0.0
        %1262 = vmatmul.mubr.f32.gmra.mrb[0].mxu0 %v532
        %v1263 = vpop.f32.mrb[0].mxu0
        %v1264 = vadd.f32 %v1015, %v1263
        %v1265 = vpop.f32.mrb[0].mxu0
        %v1266 = vadd.f32 %v1017, %v1265
        %1267 = vmatprep.mubr.f32.mxu0 0.0
        %1268 = vmatmul.mubr.f32.gmra.mrb[0].mxu0 %v533
        %v1269 = vpop.f32.mrb[0].mxu0
        %v1270 = vadd.f32 %v1019, %v1269
        %v1271 = vpop.f32.mrb[0].mxu0
        %v1272 = vadd.f32 %v1021, %v1271
        %1273 = vmatprep.mubr.f32.mxu0 0.0
        %1274 = vmatmul.mubr.f32.gmra.mrb[0].mxu0 %v534
        %v1275 = vpop.f32.mrb[0].mxu0
        %v1276 = vadd.f32 %v1025, %v1275
        %v1277 = vpop.f32.mrb[0].mxu0
        %v1278 = vadd.f32 %v1027, %v1277
        %1279 = vmatprep.mubr.f32.mxu0 0.0
        %1280 = vmatmul.mubr.f32.gmra.mrb[0].mxu0 %v535
        %v1281 = vpop.f32.mrb[0].mxu0
        %v1282 = vadd.f32 %v1029, %v1281
        %v1283 = vpop.f32.mrb[0].mxu0
        %v1284 = vadd.f32 %v1031, %v1283
        %1285 = vmatprep.mubr.f32.mxu0 0.0
        %1286 = vmatmul.mubr.f32.gmra.mrb[0].mxu0 %v536
        %v1287 = vpop.f32.mrb[0].mxu0
        %v1288 = vadd.f32 %v1035, %v1287
        %v1289 = vpop.f32.mrb[0].mxu0
        %v1290 = vadd.f32 %v1037, %v1289
        %1291 = vmatprep.mubr.f32.mxu0 0.0
        %1292 = vmatmul.mubr.f32.gmra.mrb[0].mxu0 %v537
        %v1293 = vpop.f32.mrb[0].mxu0
        %v1294 = vadd.f32 %v1039, %v1293
        %v1295 = vpop.f32.mrb[0].mxu0
        %v1296 = vadd.f32 %v1041, %v1295
        %1297 = vmatprep.mubr.f32.mxu0 0.0
        %1298 = vmatmul.mubr.f32.gmra.mrb[0].mxu0 %v538
        %v1299 = vpop.f32.mrb[0].mxu0
        %v1300 = vadd.f32 %v1045, %v1299
        %v1301 = vpop.f32.mrb[0].mxu0
        %v1302 = vadd.f32 %v1047, %v1301
        %1303 = vmatprep.mubr.f32.mxu0 0.0
        %1304 = vmatmul.mubr.f32.gmra.mrb[0].mxu0 %v539
        %v1305 = vpop.f32.mrb[0].mxu0
        %v1306 = vadd.f32 %v1049, %v1305
        %v1307 = vpop.f32.mrb[0].mxu0
        %v1308 = vadd.f32 %v1051, %v1307
        %1309 = vdwg.mxu0
        %v1310 = vld [vmem:[%s4] sm:$0x3]
        %v1312 = vlaneseq
        %v1313 = vshrl.u32 %v1312, 7
        %v1314 = vsub.s32 0, %v1313
        %v1315 = vrot.slane %v1310, %v1314
        %v1316 = vlaneseq
        %v1317 = vshrl.u32 %v1316, 7
        %v1318 = vsub.s32 1, %v1317
        %v1319 = vrot.slane %v1310, %v1318
        %v1322 = vadd.f32 %v1120, %v1315
        %v1323 = vadd.f32 %v1122, %v1319
        %v1324 = vadd.f32 %v1126, %v1315
        %v1325 = vadd.f32 %v1128, %v1319
        %v1326 = vadd.f32 %v1132, %v1315
        %v1327 = vadd.f32 %v1134, %v1319
        %v1328 = vadd.f32 %v1138, %v1315
        %v1329 = vadd.f32 %v1140, %v1319
        %v1330 = vadd.f32 %v1144, %v1315
        %v1331 = vadd.f32 %v1146, %v1319
        %v1332 = vadd.f32 %v1150, %v1315
        %v1333 = vadd.f32 %v1152, %v1319
        %v1334 = vadd.f32 %v1156, %v1315
        %v1335 = vadd.f32 %v1158, %v1319
        %v1336 = vadd.f32 %v1162, %v1315
        %v1337 = vadd.f32 %v1164, %v1319
        %v1338 = vadd.f32 %v1168, %v1315
        %v1339 = vadd.f32 %v1170, %v1319
        %v1340 = vadd.f32 %v1174, %v1315
        %v1341 = vadd.f32 %v1176, %v1319
        %v1342 = vadd.f32 %v1180, %v1315
        %v1343 = vadd.f32 %v1182, %v1319
        %v1344 = vadd.f32 %v1186, %v1315
        %v1345 = vadd.f32 %v1188, %v1319
        %v1346 = vadd.f32 %v1192, %v1315
        %v1347 = vadd.f32 %v1194, %v1319
        %v1348 = vadd.f32 %v1198, %v1315
        %v1349 = vadd.f32 %v1200, %v1319
        %v1350 = vadd.f32 %v1204, %v1315
        %v1351 = vadd.f32 %v1206, %v1319
        %v1352 = vadd.f32 %v1210, %v1315
        %v1353 = vadd.f32 %v1212, %v1319
        %v1354 = vadd.f32 %v1216, %v1315
        %v1355 = vadd.f32 %v1218, %v1319
        %v1356 = vadd.f32 %v1222, %v1315
        %v1357 = vadd.f32 %v1224, %v1319
        %v1358 = vadd.f32 %v1228, %v1315
        %v1359 = vadd.f32 %v1230, %v1319
        %v1360 = vadd.f32 %v1234, %v1315
        %v1361 = vadd.f32 %v1236, %v1319
        %v1362 = vadd.f32 %v1240, %v1315
        %v1363 = vadd.f32 %v1242, %v1319
        %v1364 = vadd.f32 %v1246, %v1315
        %v1365 = vadd.f32 %v1248, %v1319
        %v1366 = vadd.f32 %v1252, %v1315
        %v1367 = vadd.f32 %v1254, %v1319
        %v1368 = vadd.f32 %v1258, %v1315
        %v1369 = vadd.f32 %v1260, %v1319
        %v1370 = vadd.f32 %v1264, %v1315
        %v1371 = vadd.f32 %v1266, %v1319
        %v1372 = vadd.f32 %v1270, %v1315
        %v1373 = vadd.f32 %v1272, %v1319
        %v1374 = vadd.f32 %v1276, %v1315
        %v1375 = vadd.f32 %v1278, %v1319
        %v1376 = vadd.f32 %v1282, %v1315
        %v1377 = vadd.f32 %v1284, %v1319
        %v1378 = vadd.f32 %v1288, %v1315
        %v1379 = vadd.f32 %v1290, %v1319
        %v1380 = vadd.f32 %v1294, %v1315
        %v1381 = vadd.f32 %v1296, %v1319
        %v1382 = vadd.f32 %v1300, %v1315
        %v1383 = vadd.f32 %v1302, %v1319
        %v1384 = vadd.f32 %v1306, %v1315
        %v1385 = vadd.f32 %v1308, %v1319
        %v1386 = vmax.f32 %v1322, 0.0
        %v1387 = vmax.f32 %v1323, 0.0
        %v1388 = vmax.f32 %v1324, 0.0
        %v1389 = vmax.f32 %v1325, 0.0
        %v1390 = vmax.f32 %v1326, 0.0
        %v1391 = vmax.f32 %v1327, 0.0
        %v1392 = vmax.f32 %v1328, 0.0
        %v1393 = vmax.f32 %v1329, 0.0
        %v1394 = vmax.f32 %v1330, 0.0
        %v1395 = vmax.f32 %v1331, 0.0
        %v1396 = vmax.f32 %v1332, 0.0
        %v1397 = vmax.f32 %v1333, 0.0
        %v1398 = vmax.f32 %v1334, 0.0
        %v1399 = vmax.f32 %v1335, 0.0
        %v1400 = vmax.f32 %v1336, 0.0
        %v1401 = vmax.f32 %v1337, 0.0
        %v1402 = vmax.f32 %v1338, 0.0
        %v1403 = vmax.f32 %v1339, 0.0
        %v1404 = vmax.f32 %v1340, 0.0
        %v1405 = vmax.f32 %v1341, 0.0
        %v1406 = vmax.f32 %v1342, 0.0
        %v1407 = vmax.f32 %v1343, 0.0
        %v1408 = vmax.f32 %v1344, 0.0
        %v1409 = vmax.f32 %v1345, 0.0
        %v1410 = vmax.f32 %v1346, 0.0
        %v1411 = vmax.f32 %v1347, 0.0
        %v1412 = vmax.f32 %v1348, 0.0
        %v1413 = vmax.f32 %v1349, 0.0
        %v1414 = vmax.f32 %v1350, 0.0
        %v1415 = vmax.f32 %v1351, 0.0
        %v1416 = vmax.f32 %v1352, 0.0
        %v1417 = vmax.f32 %v1353, 0.0
        %v1418 = vmax.f32 %v1354, 0.0
        %v1419 = vmax.f32 %v1355, 0.0
        %v1420 = vmax.f32 %v1356, 0.0
        %v1421 = vmax.f32 %v1357, 0.0
        %v1422 = vmax.f32 %v1358, 0.0
        %v1423 = vmax.f32 %v1359, 0.0
        %v1424 = vmax.f32 %v1360, 0.0
        %v1425 = vmax.f32 %v1361, 0.0
        %v1426 = vmax.f32 %v1362, 0.0
        %v1427 = vmax.f32 %v1363, 0.0
        %v1428 = vmax.f32 %v1364, 0.0
        %v1429 = vmax.f32 %v1365, 0.0
        %v1430 = vmax.f32 %v1366, 0.0
        %v1431 = vmax.f32 %v1367, 0.0
        %v1432 = vmax.f32 %v1368, 0.0
        %v1433 = vmax.f32 %v1369, 0.0
        %v1434 = vmax.f32 %v1370, 0.0
        %v1435 = vmax.f32 %v1371, 0.0
        %v1436 = vmax.f32 %v1372, 0.0
        %v1437 = vmax.f32 %v1373, 0.0
        %v1438 = vmax.f32 %v1374, 0.0
        %v1439 = vmax.f32 %v1375, 0.0
        %v1440 = vmax.f32 %v1376, 0.0
        %v1441 = vmax.f32 %v1377, 0.0
        %v1442 = vmax.f32 %v1378, 0.0
        %v1443 = vmax.f32 %v1379, 0.0
        %v1444 = vmax.f32 %v1380, 0.0
        %v1445 = vmax.f32 %v1381, 0.0
        %v1446 = vmax.f32 %v1382, 0.0
        %v1447 = vmax.f32 %v1383, 0.0
        %v1448 = vmax.f32 %v1384, 0.0
        %v1449 = vmax.f32 %v1385, 0.0
        %v1450 = vpack.c.bf16 %v1388, %v1386
        %v1451 = vpack.c.bf16 %v1389, %v1387
        %v1452 = vpack.c.bf16 %v1392, %v1390
        %v1453 = vpack.c.bf16 %v1393, %v1391
        %v1454 = vpack.c.bf16 %v1396, %v1394
        %v1455 = vpack.c.bf16 %v1397, %v1395
        %v1456 = vpack.c.bf16 %v1400, %v1398
        %v1457 = vpack.c.bf16 %v1401, %v1399
        %v1458 = vpack.c.bf16 %v1404, %v1402
        %v1459 = vpack.c.bf16 %v1405, %v1403
        %v1460 = vpack.c.bf16 %v1408, %v1406
        %v1461 = vpack.c.bf16 %v1409, %v1407
        %v1462 = vpack.c.bf16 %v1412, %v1410
        %v1463 = vpack.c.bf16 %v1413, %v1411
        %v1464 = vpack.c.bf16 %v1416, %v1414
        %v1465 = vpack.c.bf16 %v1417, %v1415
        %v1466 = vpack.c.bf16 %v1420, %v1418
        %v1467 = vpack.c.bf16 %v1421, %v1419
        %v1468 = vpack.c.bf16 %v1424, %v1422
        %v1469 = vpack.c.bf16 %v1425, %v1423
        %v1470 = vpack.c.bf16 %v1428, %v1426
        %v1471 = vpack.c.bf16 %v1429, %v1427
        %v1472 = vpack.c.bf16 %v1432, %v1430
        %v1473 = vpack.c.bf16 %v1433, %v1431
        %v1474 = vpack.c.bf16 %v1436, %v1434
        %v1475 = vpack.c.bf16 %v1437, %v1435
        %v1476 = vpack.c.bf16 %v1440, %v1438
        %v1477 = vpack.c.bf16 %v1441, %v1439
        %v1478 = vpack.c.bf16 %v1444, %v1442
        %v1479 = vpack.c.bf16 %v1445, %v1443
        %v1480 = vpack.c.bf16 %v1448, %v1446
        %v1481 = vpack.c.bf16 %v1449, %v1447
        %v1482 = vld [vmem:[#allocation10] sm:$0xff]
        %v1483 = vld [vmem:[#allocation10 + $0x8] sm:$0xff]
        %v1484 = vld [vmem:[#allocation10 + $0x10] sm:$0xff]
        %v1485 = vld [vmem:[#allocation10 + $0x18] sm:$0xff]
        %v1486 = vld [vmem:[#allocation10 + $0x20] sm:$0xff]
        %v1487 = vld [vmem:[#allocation10 + $0x28] sm:$0xff]
        %v1488 = vld [vmem:[#allocation10 + $0x30] sm:$0xff]
        %v1489 = vld [vmem:[#allocation10 + $0x38] sm:$0xff]
        %v1490 = vld [vmem:[#allocation10 + $0x40] sm:$0xff]
        %v1491 = vld [vmem:[#allocation10 + $0x48] sm:$0xff]
        %v1492 = vld [vmem:[#allocation10 + $0x50] sm:$0xff]
        %v1493 = vld [vmem:[#allocation10 + $0x58] sm:$0xff]
        %v1494 = vld [vmem:[#allocation10 + $0x60] sm:$0xff]
        %v1495 = vld [vmem:[#allocation10 + $0x68] sm:$0xff]
        %v1496 = vld [vmem:[#allocation10 + $0x70] sm:$0xff]
        %v1497 = vld [vmem:[#allocation10 + $0x78] sm:$0xff]
        %v1498 = vld [vmem:[#allocation10 + $0x80] sm:$0xff]
        %v1499 = vld [vmem:[#allocation10 + $0x88] sm:$0xff]
        %v1500 = vld [vmem:[#allocation10 + $0x90] sm:$0xff]
        %v1501 = vld [vmem:[#allocation10 + $0x98] sm:$0xff]
        %v1502 = vld [vmem:[#allocation10 + $0xa0] sm:$0xff]
        %v1503 = vld [vmem:[#allocation10 + $0xa8] sm:$0xff]
        %v1504 = vld [vmem:[#allocation10 + $0xb0] sm:$0xff]
        %v1505 = vld [vmem:[#allocation10 + $0xb8] sm:$0xff]
        %v1506 = vld [vmem:[#allocation10 + $0xc0] sm:$0xff]
        %v1507 = vld [vmem:[#allocation10 + $0xc8] sm:$0xff]
        %v1508 = vld [vmem:[#allocation10 + $0xd0] sm:$0xff]
        %v1509 = vld [vmem:[#allocation10 + $0xd8] sm:$0xff]
        %v1510 = vld [vmem:[#allocation10 + $0xe0] sm:$0xff]
        %v1511 = vld [vmem:[#allocation10 + $0xe8] sm:$0xff]
        %v1512 = vld [vmem:[#allocation10 + $0xf0] sm:$0xff]
        %v1513 = vld [vmem:[#allocation10 + $0xf8] sm:$0xff]
        %v1514 = vld [vmem:[%s6] sm:$0x3]
        %v1516 = vlaneseq
        %v1517 = vshrl.u32 %v1516, 7
        %v1518 = vsub.s32 0, %v1517
        %v1519 = vrot.slane %v1514, %v1518
        %v1520 = vlaneseq
        %v1521 = vshrl.u32 %v1520, 7
        %v1522 = vsub.s32 1, %v1521
        %v1523 = vrot.slane %v1514, %v1522
        %v1558 = vunpack.c.l.b16 %v1482
        %v1559 = vunpack.c.h.b16 %v1482
        %v1560 = vunpack.c.l.b16 %v1483
        %v1561 = vunpack.c.h.b16 %v1483
        %v1562 = vunpack.c.l.b16 %v1484
        %v1563 = vunpack.c.h.b16 %v1484
        %v1564 = vunpack.c.l.b16 %v1485
        %v1565 = vunpack.c.h.b16 %v1485
        %v1566 = vunpack.c.l.b16 %v1486
        %v1567 = vunpack.c.h.b16 %v1486
        %v1568 = vunpack.c.l.b16 %v1487
        %v1569 = vunpack.c.h.b16 %v1487
        %v1570 = vunpack.c.l.b16 %v1488
        %v1571 = vunpack.c.h.b16 %v1488
        %v1572 = vunpack.c.l.b16 %v1489
        %v1573 = vunpack.c.h.b16 %v1489
        %v1574 = vunpack.c.l.b16 %v1490
        %v1575 = vunpack.c.h.b16 %v1490
        %v1576 = vunpack.c.l.b16 %v1491
        %v1577 = vunpack.c.h.b16 %v1491
        %v1578 = vunpack.c.l.b16 %v1492
        %v1579 = vunpack.c.h.b16 %v1492
        %v1580 = vunpack.c.l.b16 %v1493
        %v1581 = vunpack.c.h.b16 %v1493
        %v1582 = vunpack.c.l.b16 %v1494
        %v1583 = vunpack.c.h.b16 %v1494
        %v1584 = vunpack.c.l.b16 %v1495
        %v1585 = vunpack.c.h.b16 %v1495
        %v1586 = vunpack.c.l.b16 %v1496
        %v1587 = vunpack.c.h.b16 %v1496
        %v1588 = vunpack.c.l.b16 %v1497
        %v1589 = vunpack.c.h.b16 %v1497
        %v1590 = vunpack.c.l.b16 %v1498
        %v1591 = vunpack.c.h.b16 %v1498
        %v1592 = vunpack.c.l.b16 %v1499
        %v1593 = vunpack.c.h.b16 %v1499
        %v1594 = vunpack.c.l.b16 %v1500
        %v1595 = vunpack.c.h.b16 %v1500
        %v1596 = vunpack.c.l.b16 %v1501
        %v1597 = vunpack.c.h.b16 %v1501
        %v1598 = vunpack.c.l.b16 %v1502
        %v1599 = vunpack.c.h.b16 %v1502
        %v1600 = vunpack.c.l.b16 %v1503
        %v1601 = vunpack.c.h.b16 %v1503
        %v1602 = vunpack.c.l.b16 %v1504
        %v1603 = vunpack.c.h.b16 %v1504
        %v1604 = vunpack.c.l.b16 %v1505
        %v1605 = vunpack.c.h.b16 %v1505
        %v1606 = vunpack.c.l.b16 %v1506
        %v1607 = vunpack.c.h.b16 %v1506
        %v1608 = vunpack.c.l.b16 %v1507
        %v1609 = vunpack.c.h.b16 %v1507
        %v1610 = vunpack.c.l.b16 %v1508
        %v1611 = vunpack.c.h.b16 %v1508
        %v1612 = vunpack.c.l.b16 %v1509
        %v1613 = vunpack.c.h.b16 %v1509
        %v1614 = vunpack.c.l.b16 %v1510
        %v1615 = vunpack.c.h.b16 %v1510
        %v1616 = vunpack.c.l.b16 %v1511
        %v1617 = vunpack.c.h.b16 %v1511
        %v1618 = vunpack.c.l.b16 %v1512
        %v1619 = vunpack.c.h.b16 %v1512
        %v1620 = vunpack.c.l.b16 %v1513
        %v1621 = vunpack.c.h.b16 %v1513
        %v1622 = vpack.c.b16 %v1560, %v1558
        %v1623 = vpack.c.b16 %v1561, %v1559
        %v1624 = vpack.c.b16 %v1564, %v1562
        %v1625 = vpack.c.b16 %v1565, %v1563
        %v1626 = vpack.c.b16 %v1568, %v1566
        %v1627 = vpack.c.b16 %v1569, %v1567
        %v1628 = vpack.c.b16 %v1572, %v1570
        %v1629 = vpack.c.b16 %v1573, %v1571
        %v1630 = vpack.c.b16 %v1576, %v1574
        %v1631 = vpack.c.b16 %v1577, %v1575
        %v1632 = vpack.c.b16 %v1580, %v1578
        %v1633 = vpack.c.b16 %v1581, %v1579
        %v1634 = vpack.c.b16 %v1584, %v1582
        %v1635 = vpack.c.b16 %v1585, %v1583
        %v1636 = vpack.c.b16 %v1588, %v1586
        %v1637 = vpack.c.b16 %v1589, %v1587
        %v1638 = vpack.c.b16 %v1592, %v1590
        %v1639 = vpack.c.b16 %v1593, %v1591
        %v1640 = vpack.c.b16 %v1596, %v1594
        %v1641 = vpack.c.b16 %v1597, %v1595
        %v1642 = vpack.c.b16 %v1600, %v1598
        %v1643 = vpack.c.b16 %v1601, %v1599
        %v1644 = vpack.c.b16 %v1604, %v1602
        %v1645 = vpack.c.b16 %v1605, %v1603
        %v1646 = vpack.c.b16 %v1608, %v1606
        %v1647 = vpack.c.b16 %v1609, %v1607
        %v1648 = vpack.c.b16 %v1612, %v1610
        %v1649 = vpack.c.b16 %v1613, %v1611
        %v1650 = vpack.c.b16 %v1616, %v1614
        %v1651 = vpack.c.b16 %v1617, %v1615
        %v1652 = vpack.c.b16 %v1620, %v1618
        %v1653 = vpack.c.b16 %v1621, %v1619
        %1686 = vmatprep.subr.bf16.mxu0 %v1623
        %1687 = vmatpush1.bf16.msra.mxu0 %v1622
        %1688 = vmatprep.subr.bf16.mxu0 %v1625
        %1689 = vmatpush1.bf16.msra.mxu0 %v1624
        %1690 = vmatprep.subr.bf16.mxu0 %v1627
        %1691 = vmatpush1.bf16.msra.mxu0 %v1626
        %1692 = vmatprep.subr.bf16.mxu0 %v1629
        %1693 = vmatpush1.bf16.msra.mxu0 %v1628
        %1694 = vmatprep.subr.bf16.mxu0 %v1631
        %1695 = vmatpush1.bf16.msra.mxu0 %v1630
        %1696 = vmatprep.subr.bf16.mxu0 %v1633
        %1697 = vmatpush1.bf16.msra.mxu0 %v1632
        %1698 = vmatprep.subr.bf16.mxu0 %v1635
        %1699 = vmatpush1.bf16.msra.mxu0 %v1634
        %1700 = vmatprep.subr.bf16.mxu0 %v1637
        %1701 = vmatpush1.bf16.msra.mxu0 %v1636
        %1702 = vmatprep.subr.bf16.mxu0 %v1639
        %1703 = vmatpush1.bf16.msra.mxu0 %v1638
        %1704 = vmatprep.subr.bf16.mxu0 %v1641
        %1705 = vmatpush1.bf16.msra.mxu0 %v1640
        %1706 = vmatprep.subr.bf16.mxu0 %v1643
        %1707 = vmatpush1.bf16.msra.mxu0 %v1642
        %1708 = vmatprep.subr.bf16.mxu0 %v1645
        %1709 = vmatpush1.bf16.msra.mxu0 %v1644
        %1710 = vmatprep.subr.bf16.mxu0 %v1647
        %1711 = vmatpush1.bf16.msra.mxu0 %v1646
        %1712 = vmatprep.subr.bf16.mxu0 %v1649
        %1713 = vmatpush1.bf16.msra.mxu0 %v1648
        %1714 = vmatprep.subr.bf16.mxu0 %v1651
        %1715 = vmatpush1.bf16.msra.mxu0 %v1650
        %1716 = vmatprep.subr.bf16.mxu0 %v1653
        %1717 = vmatpush1.bf16.msra.mxu0 %v1652
        %1718 = vmatprep.mubr.bf16.mxu0 %v1451
        %1719 = vmatmul.mubr.bf16.gmra.mrb[0].mxu0 %v1450
        %v1720 = vpop.f32.mrb[0].mxu0
        %v1721 = vadd.f32 %v1519, %v1720
        %v1722 = vpop.f32.mrb[0].mxu0
        %v1723 = vadd.f32 %v1523, %v1722
        %v1724 = vpop.f32.mrb[0].mxu0
        %v1725 = vadd.f32 %v1519, %v1724
        %v1726 = vpop.f32.mrb[0].mxu0
        %v1727 = vadd.f32 %v1523, %v1726
        %1728 = vmatprep.mubr.bf16.mxu0 %v1453
        %1729 = vmatmul.mubr.bf16.gmra.mrb[0].mxu0 %v1452
        %v1730 = vpop.f32.mrb[0].mxu0
        %v1731 = vadd.f32 %v1519, %v1730
        %v1732 = vpop.f32.mrb[0].mxu0
        %v1733 = vadd.f32 %v1523, %v1732
        %v1734 = vpop.f32.mrb[0].mxu0
        %v1735 = vadd.f32 %v1519, %v1734
        %v1736 = vpop.f32.mrb[0].mxu0
        %v1737 = vadd.f32 %v1523, %v1736
        %1738 = vmatprep.mubr.bf16.mxu0 %v1455
        %1739 = vmatmul.mubr.bf16.gmra.mrb[0].mxu0 %v1454
        %v1740 = vpop.f32.mrb[0].mxu0
        %v1741 = vadd.f32 %v1519, %v1740
        %v1742 = vpop.f32.mrb[0].mxu0
        %v1743 = vadd.f32 %v1523, %v1742
        %v1744 = vpop.f32.mrb[0].mxu0
        %v1745 = vadd.f32 %v1519, %v1744
        %v1746 = vpop.f32.mrb[0].mxu0
        %v1747 = vadd.f32 %v1523, %v1746
        %1748 = vmatprep.mubr.bf16.mxu0 %v1457
        %1749 = vmatmul.mubr.bf16.gmra.mrb[0].mxu0 %v1456
        %v1750 = vpop.f32.mrb[0].mxu0
        %v1751 = vadd.f32 %v1519, %v1750
        %v1752 = vpop.f32.mrb[0].mxu0
        %v1753 = vadd.f32 %v1523, %v1752
        %v1754 = vpop.f32.mrb[0].mxu0
        %v1755 = vadd.f32 %v1519, %v1754
        %v1756 = vpop.f32.mrb[0].mxu0
        %v1757 = vadd.f32 %v1523, %v1756
        %1758 = vmatprep.mubr.bf16.mxu0 %v1459
        %1759 = vmatmul.mubr.bf16.gmra.mrb[0].mxu0 %v1458
        %v1760 = vpop.f32.mrb[0].mxu0
        %v1761 = vadd.f32 %v1519, %v1760
        %v1762 = vpop.f32.mrb[0].mxu0
        %v1763 = vadd.f32 %v1523, %v1762
        %v1764 = vpop.f32.mrb[0].mxu0
        %v1765 = vadd.f32 %v1519, %v1764
        %v1766 = vpop.f32.mrb[0].mxu0
        %v1767 = vadd.f32 %v1523, %v1766
        %1768 = vmatprep.mubr.bf16.mxu0 %v1461
        %1769 = vmatmul.mubr.bf16.gmra.mrb[0].mxu0 %v1460
        %v1770 = vpop.f32.mrb[0].mxu0
        %v1771 = vadd.f32 %v1519, %v1770
        %v1772 = vpop.f32.mrb[0].mxu0
        %v1773 = vadd.f32 %v1523, %v1772
        %v1774 = vpop.f32.mrb[0].mxu0
        %v1775 = vadd.f32 %v1519, %v1774
        %v1776 = vpop.f32.mrb[0].mxu0
        %v1777 = vadd.f32 %v1523, %v1776
        %1778 = vmatprep.mubr.bf16.mxu0 %v1463
        %1779 = vmatmul.mubr.bf16.gmra.mrb[0].mxu0 %v1462
        %v1780 = vpop.f32.mrb[0].mxu0
        %v1781 = vadd.f32 %v1519, %v1780
        %v1782 = vpop.f32.mrb[0].mxu0
        %v1783 = vadd.f32 %v1523, %v1782
        %v1784 = vpop.f32.mrb[0].mxu0
        %v1785 = vadd.f32 %v1519, %v1784
        %v1786 = vpop.f32.mrb[0].mxu0
        %v1787 = vadd.f32 %v1523, %v1786
        %1788 = vmatprep.mubr.bf16.mxu0 %v1465
        %1789 = vmatmul.mubr.bf16.gmra.mrb[0].mxu0 %v1464
        %v1790 = vpop.f32.mrb[0].mxu0
        %v1791 = vadd.f32 %v1519, %v1790
        %v1792 = vpop.f32.mrb[0].mxu0
        %v1793 = vadd.f32 %v1523, %v1792
        %v1794 = vpop.f32.mrb[0].mxu0
        %v1795 = vadd.f32 %v1519, %v1794
        %v1796 = vpop.f32.mrb[0].mxu0
        %v1797 = vadd.f32 %v1523, %v1796
        %1798 = vmatprep.mubr.bf16.mxu0 %v1467
        %1799 = vmatmul.mubr.bf16.gmra.mrb[0].mxu0 %v1466
        %v1800 = vpop.f32.mrb[0].mxu0
        %v1801 = vadd.f32 %v1519, %v1800
        %v1802 = vpop.f32.mrb[0].mxu0
        %v1803 = vadd.f32 %v1523, %v1802
        %v1804 = vpop.f32.mrb[0].mxu0
        %v1805 = vadd.f32 %v1519, %v1804
        %v1806 = vpop.f32.mrb[0].mxu0
        %v1807 = vadd.f32 %v1523, %v1806
        %1808 = vmatprep.mubr.bf16.mxu0 %v1469
        %1809 = vmatmul.mubr.bf16.gmra.mrb[0].mxu0 %v1468
        %v1810 = vpop.f32.mrb[0].mxu0
        %v1811 = vadd.f32 %v1519, %v1810
        %v1812 = vpop.f32.mrb[0].mxu0
        %v1813 = vadd.f32 %v1523, %v1812
        %v1814 = vpop.f32.mrb[0].mxu0
        %v1815 = vadd.f32 %v1519, %v1814
        %v1816 = vpop.f32.mrb[0].mxu0
        %v1817 = vadd.f32 %v1523, %v1816
        %1818 = vmatprep.mubr.bf16.mxu0 %v1471
        %1819 = vmatmul.mubr.bf16.gmra.mrb[0].mxu0 %v1470
        %v1820 = vpop.f32.mrb[0].mxu0
        %v1821 = vadd.f32 %v1519, %v1820
        %v1822 = vpop.f32.mrb[0].mxu0
        %v1823 = vadd.f32 %v1523, %v1822
        %v1824 = vpop.f32.mrb[0].mxu0
        %v1825 = vadd.f32 %v1519, %v1824
        %v1826 = vpop.f32.mrb[0].mxu0
        %v1827 = vadd.f32 %v1523, %v1826
        %1828 = vmatprep.mubr.bf16.mxu0 %v1473
        %1829 = vmatmul.mubr.bf16.gmra.mrb[0].mxu0 %v1472
        %v1830 = vpop.f32.mrb[0].mxu0
        %v1831 = vadd.f32 %v1519, %v1830
        %v1832 = vpop.f32.mrb[0].mxu0
        %v1833 = vadd.f32 %v1523, %v1832
        %v1834 = vpop.f32.mrb[0].mxu0
        %v1835 = vadd.f32 %v1519, %v1834
        %v1836 = vpop.f32.mrb[0].mxu0
        %v1837 = vadd.f32 %v1523, %v1836
        %1838 = vmatprep.mubr.bf16.mxu0 %v1475
        %1839 = vmatmul.mubr.bf16.gmra.mrb[0].mxu0 %v1474
        %v1840 = vpop.f32.mrb[0].mxu0
        %v1841 = vadd.f32 %v1519, %v1840
        %v1842 = vpop.f32.mrb[0].mxu0
        %v1843 = vadd.f32 %v1523, %v1842
        %v1844 = vpop.f32.mrb[0].mxu0
        %v1845 = vadd.f32 %v1519, %v1844
        %v1846 = vpop.f32.mrb[0].mxu0
        %v1847 = vadd.f32 %v1523, %v1846
        %1848 = vmatprep.mubr.bf16.mxu0 %v1477
        %1849 = vmatmul.mubr.bf16.gmra.mrb[0].mxu0 %v1476
        %v1850 = vpop.f32.mrb[0].mxu0
        %v1851 = vadd.f32 %v1519, %v1850
        %v1852 = vpop.f32.mrb[0].mxu0
        %v1853 = vadd.f32 %v1523, %v1852
        %v1854 = vpop.f32.mrb[0].mxu0
        %v1855 = vadd.f32 %v1519, %v1854
        %v1856 = vpop.f32.mrb[0].mxu0
        %v1857 = vadd.f32 %v1523, %v1856
        %1858 = vmatprep.mubr.bf16.mxu0 %v1479
        %1859 = vmatmul.mubr.bf16.gmra.mrb[0].mxu0 %v1478
        %v1860 = vpop.f32.mrb[0].mxu0
        %v1861 = vadd.f32 %v1519, %v1860
        %v1862 = vpop.f32.mrb[0].mxu0
        %v1863 = vadd.f32 %v1523, %v1862
        %v1864 = vpop.f32.mrb[0].mxu0
        %v1865 = vadd.f32 %v1519, %v1864
        %v1866 = vpop.f32.mrb[0].mxu0
        %v1867 = vadd.f32 %v1523, %v1866
        %1868 = vmatprep.mubr.bf16.mxu0 %v1481
        %1869 = vmatmul.mubr.bf16.gmra.mrb[0].mxu0 %v1480
        %v1870 = vpop.f32.mrb[0].mxu0
        %v1871 = vadd.f32 %v1519, %v1870
        %v1872 = vpop.f32.mrb[0].mxu0
        %v1873 = vadd.f32 %v1523, %v1872
        %v1874 = vpop.f32.mrb[0].mxu0
        %v1875 = vadd.f32 %v1519, %v1874
        %v1876 = vpop.f32.mrb[0].mxu0
        %v1877 = vadd.f32 %v1523, %v1876
        %1878 = vdwg.mxu0
        %v1879 = vmax.f32 %v1721, 0.0
        %v1880 = vmax.f32 %v1723, 0.0
        %v1881 = vmax.f32 %v1725, 0.0
        %v1882 = vmax.f32 %v1727, 0.0
        %v1883 = vmax.f32 %v1731, 0.0
        %v1884 = vmax.f32 %v1733, 0.0
        %v1885 = vmax.f32 %v1735, 0.0
        %v1886 = vmax.f32 %v1737, 0.0
        %v1887 = vmax.f32 %v1741, 0.0
        %v1888 = vmax.f32 %v1743, 0.0
        %v1889 = vmax.f32 %v1745, 0.0
        %v1890 = vmax.f32 %v1747, 0.0
        %v1891 = vmax.f32 %v1751, 0.0
        %v1892 = vmax.f32 %v1753, 0.0
        %v1893 = vmax.f32 %v1755, 0.0
        %v1894 = vmax.f32 %v1757, 0.0
        %v1895 = vmax.f32 %v1761, 0.0
        %v1896 = vmax.f32 %v1763, 0.0
        %v1897 = vmax.f32 %v1765, 0.0
        %v1898 = vmax.f32 %v1767, 0.0
        %v1899 = vmax.f32 %v1771, 0.0
        %v1900 = vmax.f32 %v1773, 0.0
        %v1901 = vmax.f32 %v1775, 0.0
        %v1902 = vmax.f32 %v1777, 0.0
        %v1903 = vmax.f32 %v1781, 0.0
        %v1904 = vmax.f32 %v1783, 0.0
        %v1905 = vmax.f32 %v1785, 0.0
        %v1906 = vmax.f32 %v1787, 0.0
        %v1907 = vmax.f32 %v1791, 0.0
        %v1908 = vmax.f32 %v1793, 0.0
        %v1909 = vmax.f32 %v1795, 0.0
        %v1910 = vmax.f32 %v1797, 0.0
        %v1911 = vmax.f32 %v1801, 0.0
        %v1912 = vmax.f32 %v1803, 0.0
        %v1913 = vmax.f32 %v1805, 0.0
        %v1914 = vmax.f32 %v1807, 0.0
        %v1915 = vmax.f32 %v1811, 0.0
        %v1916 = vmax.f32 %v1813, 0.0
        %v1917 = vmax.f32 %v1815, 0.0
        %v1918 = vmax.f32 %v1817, 0.0
        %v1919 = vmax.f32 %v1821, 0.0
        %v1920 = vmax.f32 %v1823, 0.0
        %v1921 = vmax.f32 %v1825, 0.0
        %v1922 = vmax.f32 %v1827, 0.0
        %v1923 = vmax.f32 %v1831, 0.0
        %v1924 = vmax.f32 %v1833, 0.0
        %v1925 = vmax.f32 %v1835, 0.0
        %v1926 = vmax.f32 %v1837, 0.0
        %v1927 = vmax.f32 %v1841, 0.0
        %v1928 = vmax.f32 %v1843, 0.0
        %v1929 = vmax.f32 %v1845, 0.0
        %v1930 = vmax.f32 %v1847, 0.0
        %v1931 = vmax.f32 %v1851, 0.0
        %v1932 = vmax.f32 %v1853, 0.0
        %v1933 = vmax.f32 %v1855, 0.0
        %v1934 = vmax.f32 %v1857, 0.0
        %v1935 = vmax.f32 %v1861, 0.0
        %v1936 = vmax.f32 %v1863, 0.0
        %v1937 = vmax.f32 %v1865, 0.0
        %v1938 = vmax.f32 %v1867, 0.0
        %v1939 = vmax.f32 %v1871, 0.0
        %v1940 = vmax.f32 %v1873, 0.0
        %v1941 = vmax.f32 %v1875, 0.0
        %v1942 = vmax.f32 %v1877, 0.0
        %v1943 = vpack.c.bf16 %v1881, %v1879
        %v1944 = vpack.c.bf16 %v1882, %v1880
        %v1945 = vpack.c.bf16 %v1885, %v1883
        %v1946 = vpack.c.bf16 %v1886, %v1884
        %v1947 = vpack.c.bf16 %v1889, %v1887
        %v1948 = vpack.c.bf16 %v1890, %v1888
        %v1949 = vpack.c.bf16 %v1893, %v1891
        %v1950 = vpack.c.bf16 %v1894, %v1892
        %v1951 = vpack.c.bf16 %v1897, %v1895
        %v1952 = vpack.c.bf16 %v1898, %v1896
        %v1953 = vpack.c.bf16 %v1901, %v1899
        %v1954 = vpack.c.bf16 %v1902, %v1900
        %v1955 = vpack.c.bf16 %v1905, %v1903
        %v1956 = vpack.c.bf16 %v1906, %v1904
        %v1957 = vpack.c.bf16 %v1909, %v1907
        %v1958 = vpack.c.bf16 %v1910, %v1908
        %v1959 = vpack.c.bf16 %v1913, %v1911
        %v1960 = vpack.c.bf16 %v1914, %v1912
        %v1961 = vpack.c.bf16 %v1917, %v1915
        %v1962 = vpack.c.bf16 %v1918, %v1916
        %v1963 = vpack.c.bf16 %v1921, %v1919
        %v1964 = vpack.c.bf16 %v1922, %v1920
        %v1965 = vpack.c.bf16 %v1925, %v1923
        %v1966 = vpack.c.bf16 %v1926, %v1924
        %v1967 = vpack.c.bf16 %v1929, %v1927
        %v1968 = vpack.c.bf16 %v1930, %v1928
        %v1969 = vpack.c.bf16 %v1933, %v1931
        %v1970 = vpack.c.bf16 %v1934, %v1932
        %v1971 = vpack.c.bf16 %v1937, %v1935
        %v1972 = vpack.c.bf16 %v1938, %v1936
        %v1973 = vpack.c.bf16 %v1941, %v1939
        %v1974 = vpack.c.bf16 %v1942, %v1940
        %v1975 = vld [vmem:[#allocation10 + $0x100] sm:$0xff]
        %v1976 = vld [vmem:[#allocation10 + $0x108] sm:$0xff]
        %v1977 = vld [vmem:[#allocation10 + $0x110] sm:$0xff]
        %v1978 = vld [vmem:[#allocation10 + $0x118] sm:$0xff]
        %v1979 = vld [vmem:[#allocation10 + $0x120] sm:$0xff]
        %v1980 = vld [vmem:[#allocation10 + $0x128] sm:$0xff]
        %v1981 = vld [vmem:[#allocation10 + $0x130] sm:$0xff]
        %v1982 = vld [vmem:[#allocation10 + $0x138] sm:$0xff]
        %v1983 = vld [vmem:[#allocation10 + $0x140] sm:$0xff]
        %v1984 = vld [vmem:[#allocation10 + $0x148] sm:$0xff]
        %v1985 = vld [vmem:[#allocation10 + $0x150] sm:$0xff]
        %v1986 = vld [vmem:[#allocation10 + $0x158] sm:$0xff]
        %v1987 = vld [vmem:[#allocation10 + $0x160] sm:$0xff]
        %v1988 = vld [vmem:[#allocation10 + $0x168] sm:$0xff]
        %v1989 = vld [vmem:[#allocation10 + $0x170] sm:$0xff]
        %v1990 = vld [vmem:[#allocation10 + $0x178] sm:$0xff]
        %v1991 = vld [vmem:[#allocation10 + $0x180] sm:$0xff]
        %v1992 = vld [vmem:[#allocation10 + $0x188] sm:$0xff]
        %v1993 = vld [vmem:[#allocation10 + $0x190] sm:$0xff]
        %v1994 = vld [vmem:[#allocation10 + $0x198] sm:$0xff]
        %v1995 = vld [vmem:[#allocation10 + $0x1a0] sm:$0xff]
        %v1996 = vld [vmem:[#allocation10 + $0x1a8] sm:$0xff]
        %v1997 = vld [vmem:[#allocation10 + $0x1b0] sm:$0xff]
        %v1998 = vld [vmem:[#allocation10 + $0x1b8] sm:$0xff]
        %v1999 = vld [vmem:[#allocation10 + $0x1c0] sm:$0xff]
        %v2000 = vld [vmem:[#allocation10 + $0x1c8] sm:$0xff]
        %v2001 = vld [vmem:[#allocation10 + $0x1d0] sm:$0xff]
        %v2002 = vld [vmem:[#allocation10 + $0x1d8] sm:$0xff]
        %v2003 = vld [vmem:[#allocation10 + $0x1e0] sm:$0xff]
        %v2004 = vld [vmem:[#allocation10 + $0x1e8] sm:$0xff]
        %v2005 = vld [vmem:[#allocation10 + $0x1f0] sm:$0xff]
        %v2006 = vld [vmem:[#allocation10 + $0x1f8] sm:$0xff]
        %v2007 = vld [vmem:[%s7] sm:$0x3]
        %v2009 = vlaneseq
        %v2010 = vshrl.u32 %v2009, 7
        %v2011 = vsub.s32 0, %v2010
        %v2012 = vrot.slane %v2007, %v2011
        %v2013 = vlaneseq
        %v2014 = vshrl.u32 %v2013, 7
        %v2015 = vsub.s32 1, %v2014
        %v2016 = vrot.slane %v2007, %v2015
        %v2051 = vunpack.c.l.b16 %v1975
        %v2052 = vunpack.c.h.b16 %v1975
        %v2053 = vunpack.c.l.b16 %v1976
        %v2054 = vunpack.c.h.b16 %v1976
        %v2055 = vunpack.c.l.b16 %v1977
        %v2056 = vunpack.c.h.b16 %v1977
        %v2057 = vunpack.c.l.b16 %v1978
        %v2058 = vunpack.c.h.b16 %v1978
        %v2059 = vunpack.c.l.b16 %v1979
        %v2060 = vunpack.c.h.b16 %v1979
        %v2061 = vunpack.c.l.b16 %v1980
        %v2062 = vunpack.c.h.b16 %v1980
        %v2063 = vunpack.c.l.b16 %v1981
        %v2064 = vunpack.c.h.b16 %v1981
        %v2065 = vunpack.c.l.b16 %v1982
        %v2066 = vunpack.c.h.b16 %v1982
        %v2067 = vunpack.c.l.b16 %v1983
        %v2068 = vunpack.c.h.b16 %v1983
        %v2069 = vunpack.c.l.b16 %v1984
        %v2070 = vunpack.c.h.b16 %v1984
        %v2071 = vunpack.c.l.b16 %v1985
        %v2072 = vunpack.c.h.b16 %v1985
        %v2073 = vunpack.c.l.b16 %v1986
        %v2074 = vunpack.c.h.b16 %v1986
        %v2075 = vunpack.c.l.b16 %v1987
        %v2076 = vunpack.c.h.b16 %v1987
        %v2077 = vunpack.c.l.b16 %v1988
        %v2078 = vunpack.c.h.b16 %v1988
        %v2079 = vunpack.c.l.b16 %v1989
        %v2080 = vunpack.c.h.b16 %v1989
        %v2081 = vunpack.c.l.b16 %v1990
        %v2082 = vunpack.c.h.b16 %v1990
        %v2083 = vunpack.c.l.b16 %v1991
        %v2084 = vunpack.c.h.b16 %v1991
        %v2085 = vunpack.c.l.b16 %v1992
        %v2086 = vunpack.c.h.b16 %v1992
        %v2087 = vunpack.c.l.b16 %v1993
        %v2088 = vunpack.c.h.b16 %v1993
        %v2089 = vunpack.c.l.b16 %v1994
        %v2090 = vunpack.c.h.b16 %v1994
        %v2091 = vunpack.c.l.b16 %v1995
        %v2092 = vunpack.c.h.b16 %v1995
        %v2093 = vunpack.c.l.b16 %v1996
        %v2094 = vunpack.c.h.b16 %v1996
        %v2095 = vunpack.c.l.b16 %v1997
        %v2096 = vunpack.c.h.b16 %v1997
        %v2097 = vunpack.c.l.b16 %v1998
        %v2098 = vunpack.c.h.b16 %v1998
        %v2099 = vunpack.c.l.b16 %v1999
        %v2100 = vunpack.c.h.b16 %v1999
        %v2101 = vunpack.c.l.b16 %v2000
        %v2102 = vunpack.c.h.b16 %v2000
        %v2103 = vunpack.c.l.b16 %v2001
        %v2104 = vunpack.c.h.b16 %v2001
        %v2105 = vunpack.c.l.b16 %v2002
        %v2106 = vunpack.c.h.b16 %v2002
        %v2107 = vunpack.c.l.b16 %v2003
        %v2108 = vunpack.c.h.b16 %v2003
        %v2109 = vunpack.c.l.b16 %v2004
        %v2110 = vunpack.c.h.b16 %v2004
        %v2111 = vunpack.c.l.b16 %v2005
        %v2112 = vunpack.c.h.b16 %v2005
        %v2113 = vunpack.c.l.b16 %v2006
        %v2114 = vunpack.c.h.b16 %v2006
        %v2115 = vpack.c.b16 %v2053, %v2051
        %v2116 = vpack.c.b16 %v2054, %v2052
        %v2117 = vpack.c.b16 %v2057, %v2055
        %v2118 = vpack.c.b16 %v2058, %v2056
        %v2119 = vpack.c.b16 %v2061, %v2059
        %v2120 = vpack.c.b16 %v2062, %v2060
        %v2121 = vpack.c.b16 %v2065, %v2063
        %v2122 = vpack.c.b16 %v2066, %v2064
        %v2123 = vpack.c.b16 %v2069, %v2067
        %v2124 = vpack.c.b16 %v2070, %v2068
        %v2125 = vpack.c.b16 %v2073, %v2071
        %v2126 = vpack.c.b16 %v2074, %v2072
        %v2127 = vpack.c.b16 %v2077, %v2075
        %v2128 = vpack.c.b16 %v2078, %v2076
        %v2129 = vpack.c.b16 %v2081, %v2079
        %v2130 = vpack.c.b16 %v2082, %v2080
        %v2131 = vpack.c.b16 %v2085, %v2083
        %v2132 = vpack.c.b16 %v2086, %v2084
        %v2133 = vpack.c.b16 %v2089, %v2087
        %v2134 = vpack.c.b16 %v2090, %v2088
        %v2135 = vpack.c.b16 %v2093, %v2091
        %v2136 = vpack.c.b16 %v2094, %v2092
        %v2137 = vpack.c.b16 %v2097, %v2095
        %v2138 = vpack.c.b16 %v2098, %v2096
        %v2139 = vpack.c.b16 %v2101, %v2099
        %v2140 = vpack.c.b16 %v2102, %v2100
        %v2141 = vpack.c.b16 %v2105, %v2103
        %v2142 = vpack.c.b16 %v2106, %v2104
        %v2143 = vpack.c.b16 %v2109, %v2107
        %v2144 = vpack.c.b16 %v2110, %v2108
        %v2145 = vpack.c.b16 %v2113, %v2111
        %v2146 = vpack.c.b16 %v2114, %v2112
        %2179 = vmatprep.subr.bf16.mxu0 %v2116
        %2180 = vmatpush1.bf16.msra.mxu0 %v2115
        %2181 = vmatprep.subr.bf16.mxu0 %v2118
        %2182 = vmatpush1.bf16.msra.mxu0 %v2117
        %2183 = vmatprep.subr.bf16.mxu0 %v2120
        %2184 = vmatpush1.bf16.msra.mxu0 %v2119
        %2185 = vmatprep.subr.bf16.mxu0 %v2122
        %2186 = vmatpush1.bf16.msra.mxu0 %v2121
        %2187 = vmatprep.subr.bf16.mxu0 %v2124
        %2188 = vmatpush1.bf16.msra.mxu0 %v2123
        %2189 = vmatprep.subr.bf16.mxu0 %v2126
        %2190 = vmatpush1.bf16.msra.mxu0 %v2125
        %2191 = vmatprep.subr.bf16.mxu0 %v2128
        %2192 = vmatpush1.bf16.msra.mxu0 %v2127
        %2193 = vmatprep.subr.bf16.mxu0 %v2130
        %2194 = vmatpush1.bf16.msra.mxu0 %v2129
        %2195 = vmatprep.subr.bf16.mxu0 %v2132
        %2196 = vmatpush1.bf16.msra.mxu0 %v2131
        %2197 = vmatprep.subr.bf16.mxu0 %v2134
        %2198 = vmatpush1.bf16.msra.mxu0 %v2133
        %2199 = vmatprep.subr.bf16.mxu0 %v2136
        %2200 = vmatpush1.bf16.msra.mxu0 %v2135
        %2201 = vmatprep.subr.bf16.mxu0 %v2138
        %2202 = vmatpush1.bf16.msra.mxu0 %v2137
        %2203 = vmatprep.subr.bf16.mxu0 %v2140
        %2204 = vmatpush1.bf16.msra.mxu0 %v2139
        %2205 = vmatprep.subr.bf16.mxu0 %v2142
        %2206 = vmatpush1.bf16.msra.mxu0 %v2141
        %2207 = vmatprep.subr.bf16.mxu0 %v2144
        %2208 = vmatpush1.bf16.msra.mxu0 %v2143
        %2209 = vmatprep.subr.bf16.mxu0 %v2146
        %2210 = vmatpush1.bf16.msra.mxu0 %v2145
        %2211 = vmatprep.mubr.bf16.mxu0 %v1944
        %2212 = vmatmul.mubr.bf16.gmra.mrb[0].mxu0 %v1943
        %v2213 = vpop.f32.mrb[0].mxu0
        %v2214 = vadd.f32 %v2012, %v2213
        %v2215 = vpop.f32.mrb[0].mxu0
        %v2216 = vadd.f32 %v2016, %v2215
        %v2217 = vpop.f32.mrb[0].mxu0
        %v2218 = vadd.f32 %v2012, %v2217
        %v2219 = vpop.f32.mrb[0].mxu0
        %v2220 = vadd.f32 %v2016, %v2219
        %2221 = vmatprep.mubr.bf16.mxu0 %v1946
        %2222 = vmatmul.mubr.bf16.gmra.mrb[0].mxu0 %v1945
        %v2223 = vpop.f32.mrb[0].mxu0
        %v2224 = vadd.f32 %v2012, %v2223
        %v2225 = vpop.f32.mrb[0].mxu0
        %v2226 = vadd.f32 %v2016, %v2225
        %v2227 = vpop.f32.mrb[0].mxu0
        %v2228 = vadd.f32 %v2012, %v2227
        %v2229 = vpop.f32.mrb[0].mxu0
        %v2230 = vadd.f32 %v2016, %v2229
        %2231 = vmatprep.mubr.bf16.mxu0 %v1948
        %2232 = vmatmul.mubr.bf16.gmra.mrb[0].mxu0 %v1947
        %v2233 = vpop.f32.mrb[0].mxu0
        %v2234 = vadd.f32 %v2012, %v2233
        %v2235 = vpop.f32.mrb[0].mxu0
        %v2236 = vadd.f32 %v2016, %v2235
        %v2237 = vpop.f32.mrb[0].mxu0
        %v2238 = vadd.f32 %v2012, %v2237
        %v2239 = vpop.f32.mrb[0].mxu0
        %v2240 = vadd.f32 %v2016, %v2239
        %2241 = vmatprep.mubr.bf16.mxu0 %v1950
        %2242 = vmatmul.mubr.bf16.gmra.mrb[0].mxu0 %v1949
        %v2243 = vpop.f32.mrb[0].mxu0
        %v2244 = vadd.f32 %v2012, %v2243
        %v2245 = vpop.f32.mrb[0].mxu0
        %v2246 = vadd.f32 %v2016, %v2245
        %v2247 = vpop.f32.mrb[0].mxu0
        %v2248 = vadd.f32 %v2012, %v2247
        %v2249 = vpop.f32.mrb[0].mxu0
        %v2250 = vadd.f32 %v2016, %v2249
        %2251 = vmatprep.mubr.bf16.mxu0 %v1952
        %2252 = vmatmul.mubr.bf16.gmra.mrb[0].mxu0 %v1951
        %v2253 = vpop.f32.mrb[0].mxu0
        %v2254 = vadd.f32 %v2012, %v2253
        %v2255 = vpop.f32.mrb[0].mxu0
        %v2256 = vadd.f32 %v2016, %v2255
        %v2257 = vpop.f32.mrb[0].mxu0
        %v2258 = vadd.f32 %v2012, %v2257
        %v2259 = vpop.f32.mrb[0].mxu0
        %v2260 = vadd.f32 %v2016, %v2259
        %2261 = vmatprep.mubr.bf16.mxu0 %v1954
        %2262 = vmatmul.mubr.bf16.gmra.mrb[0].mxu0 %v1953
        %v2263 = vpop.f32.mrb[0].mxu0
        %v2264 = vadd.f32 %v2012, %v2263
        %v2265 = vpop.f32.mrb[0].mxu0
        %v2266 = vadd.f32 %v2016, %v2265
        %v2267 = vpop.f32.mrb[0].mxu0
        %v2268 = vadd.f32 %v2012, %v2267
        %v2269 = vpop.f32.mrb[0].mxu0
        %v2270 = vadd.f32 %v2016, %v2269
        %2271 = vmatprep.mubr.bf16.mxu0 %v1956
        %2272 = vmatmul.mubr.bf16.gmra.mrb[0].mxu0 %v1955
        %v2273 = vpop.f32.mrb[0].mxu0
        %v2274 = vadd.f32 %v2012, %v2273
        %v2275 = vpop.f32.mrb[0].mxu0
        %v2276 = vadd.f32 %v2016, %v2275
        %v2277 = vpop.f32.mrb[0].mxu0
        %v2278 = vadd.f32 %v2012, %v2277
        %v2279 = vpop.f32.mrb[0].mxu0
        %v2280 = vadd.f32 %v2016, %v2279
        %2281 = vmatprep.mubr.bf16.mxu0 %v1958
        %2282 = vmatmul.mubr.bf16.gmra.mrb[0].mxu0 %v1957
        %v2283 = vpop.f32.mrb[0].mxu0
        %v2284 = vadd.f32 %v2012, %v2283
        %v2285 = vpop.f32.mrb[0].mxu0
        %v2286 = vadd.f32 %v2016, %v2285
        %v2287 = vpop.f32.mrb[0].mxu0
        %v2288 = vadd.f32 %v2012, %v2287
        %v2289 = vpop.f32.mrb[0].mxu0
        %v2290 = vadd.f32 %v2016, %v2289
        %2291 = vmatprep.mubr.bf16.mxu0 %v1960
        %2292 = vmatmul.mubr.bf16.gmra.mrb[0].mxu0 %v1959
        %v2293 = vpop.f32.mrb[0].mxu0
        %v2294 = vadd.f32 %v2012, %v2293
        %v2295 = vpop.f32.mrb[0].mxu0
        %v2296 = vadd.f32 %v2016, %v2295
        %v2297 = vpop.f32.mrb[0].mxu0
        %v2298 = vadd.f32 %v2012, %v2297
        %v2299 = vpop.f32.mrb[0].mxu0
        %v2300 = vadd.f32 %v2016, %v2299
        %2301 = vmatprep.mubr.bf16.mxu0 %v1962
        %2302 = vmatmul.mubr.bf16.gmra.mrb[0].mxu0 %v1961
        %v2303 = vpop.f32.mrb[0].mxu0
        %v2304 = vadd.f32 %v2012, %v2303
        %v2305 = vpop.f32.mrb[0].mxu0
        %v2306 = vadd.f32 %v2016, %v2305
        %v2307 = vpop.f32.mrb[0].mxu0
        %v2308 = vadd.f32 %v2012, %v2307
        %v2309 = vpop.f32.mrb[0].mxu0
        %v2310 = vadd.f32 %v2016, %v2309
        %2311 = vmatprep.mubr.bf16.mxu0 %v1964
        %2312 = vmatmul.mubr.bf16.gmra.mrb[0].mxu0 %v1963
        %v2313 = vpop.f32.mrb[0].mxu0
        %v2314 = vadd.f32 %v2012, %v2313
        %v2315 = vpop.f32.mrb[0].mxu0
        %v2316 = vadd.f32 %v2016, %v2315
        %v2317 = vpop.f32.mrb[0].mxu0
        %v2318 = vadd.f32 %v2012, %v2317
        %v2319 = vpop.f32.mrb[0].mxu0
        %v2320 = vadd.f32 %v2016, %v2319
        %2321 = vmatprep.mubr.bf16.mxu0 %v1966
        %2322 = vmatmul.mubr.bf16.gmra.mrb[0].mxu0 %v1965
        %v2323 = vpop.f32.mrb[0].mxu0
        %v2324 = vadd.f32 %v2012, %v2323
        %v2325 = vpop.f32.mrb[0].mxu0
        %v2326 = vadd.f32 %v2016, %v2325
        %v2327 = vpop.f32.mrb[0].mxu0
        %v2328 = vadd.f32 %v2012, %v2327
        %v2329 = vpop.f32.mrb[0].mxu0
        %v2330 = vadd.f32 %v2016, %v2329
        %2331 = vmatprep.mubr.bf16.mxu0 %v1968
        %2332 = vmatmul.mubr.bf16.gmra.mrb[0].mxu0 %v1967
        %v2333 = vpop.f32.mrb[0].mxu0
        %v2334 = vadd.f32 %v2012, %v2333
        %v2335 = vpop.f32.mrb[0].mxu0
        %v2336 = vadd.f32 %v2016, %v2335
        %v2337 = vpop.f32.mrb[0].mxu0
        %v2338 = vadd.f32 %v2012, %v2337
        %v2339 = vpop.f32.mrb[0].mxu0
        %v2340 = vadd.f32 %v2016, %v2339
        %2341 = vmatprep.mubr.bf16.mxu0 %v1970
        %2342 = vmatmul.mubr.bf16.gmra.mrb[0].mxu0 %v1969
        %v2343 = vpop.f32.mrb[0].mxu0
        %v2344 = vadd.f32 %v2012, %v2343
        %v2345 = vpop.f32.mrb[0].mxu0
        %v2346 = vadd.f32 %v2016, %v2345
        %v2347 = vpop.f32.mrb[0].mxu0
        %v2348 = vadd.f32 %v2012, %v2347
        %v2349 = vpop.f32.mrb[0].mxu0
        %v2350 = vadd.f32 %v2016, %v2349
        %2351 = vmatprep.mubr.bf16.mxu0 %v1972
        %2352 = vmatmul.mubr.bf16.gmra.mrb[0].mxu0 %v1971
        %v2353 = vpop.f32.mrb[0].mxu0
        %v2354 = vadd.f32 %v2012, %v2353
        %v2355 = vpop.f32.mrb[0].mxu0
        %v2356 = vadd.f32 %v2016, %v2355
        %v2357 = vpop.f32.mrb[0].mxu0
        %v2358 = vadd.f32 %v2012, %v2357
        %v2359 = vpop.f32.mrb[0].mxu0
        %v2360 = vadd.f32 %v2016, %v2359
        %2361 = vmatprep.mubr.bf16.mxu0 %v1974
        %2362 = vmatmul.mubr.bf16.gmra.mrb[0].mxu0 %v1973
        %v2363 = vpop.f32.mrb[0].mxu0
        %v2364 = vadd.f32 %v2012, %v2363
        %v2365 = vpop.f32.mrb[0].mxu0
        %v2366 = vadd.f32 %v2016, %v2365
        %v2367 = vpop.f32.mrb[0].mxu0
        %v2368 = vadd.f32 %v2012, %v2367
        %v2369 = vpop.f32.mrb[0].mxu0
        %v2370 = vadd.f32 %v2016, %v2369
        %2371 = vdwg.mxu0
        %v2372 = vmax.f32 %v2214, 0.0
        %v2373 = vmax.f32 %v2216, 0.0
        %v2374 = vmax.f32 %v2218, 0.0
        %v2375 = vmax.f32 %v2220, 0.0
        %v2376 = vmax.f32 %v2224, 0.0
        %v2377 = vmax.f32 %v2226, 0.0
        %v2378 = vmax.f32 %v2228, 0.0
        %v2379 = vmax.f32 %v2230, 0.0
        %v2380 = vmax.f32 %v2234, 0.0
        %v2381 = vmax.f32 %v2236, 0.0
        %v2382 = vmax.f32 %v2238, 0.0
        %v2383 = vmax.f32 %v2240, 0.0
        %v2384 = vmax.f32 %v2244, 0.0
        %v2385 = vmax.f32 %v2246, 0.0
        %v2386 = vmax.f32 %v2248, 0.0
        %v2387 = vmax.f32 %v2250, 0.0
        %v2388 = vmax.f32 %v2254, 0.0
        %v2389 = vmax.f32 %v2256, 0.0
        %v2390 = vmax.f32 %v2258, 0.0
        %v2391 = vmax.f32 %v2260, 0.0
        %v2392 = vmax.f32 %v2264, 0.0
        %v2393 = vmax.f32 %v2266, 0.0
        %v2394 = vmax.f32 %v2268, 0.0
        %v2395 = vmax.f32 %v2270, 0.0
        %v2396 = vmax.f32 %v2274, 0.0
        %v2397 = vmax.f32 %v2276, 0.0
        %v2398 = vmax.f32 %v2278, 0.0
        %v2399 = vmax.f32 %v2280, 0.0
        %v2400 = vmax.f32 %v2284, 0.0
        %v2401 = vmax.f32 %v2286, 0.0
        %v2402 = vmax.f32 %v2288, 0.0
        %v2403 = vmax.f32 %v2290, 0.0
        %v2404 = vmax.f32 %v2294, 0.0
        %v2405 = vmax.f32 %v2296, 0.0
        %v2406 = vmax.f32 %v2298, 0.0
        %v2407 = vmax.f32 %v2300, 0.0
        %v2408 = vmax.f32 %v2304, 0.0
        %v2409 = vmax.f32 %v2306, 0.0
        %v2410 = vmax.f32 %v2308, 0.0
        %v2411 = vmax.f32 %v2310, 0.0
        %v2412 = vmax.f32 %v2314, 0.0
        %v2413 = vmax.f32 %v2316, 0.0
        %v2414 = vmax.f32 %v2318, 0.0
        %v2415 = vmax.f32 %v2320, 0.0
        %v2416 = vmax.f32 %v2324, 0.0
        %v2417 = vmax.f32 %v2326, 0.0
        %v2418 = vmax.f32 %v2328, 0.0
        %v2419 = vmax.f32 %v2330, 0.0
        %v2420 = vmax.f32 %v2334, 0.0
        %v2421 = vmax.f32 %v2336, 0.0
        %v2422 = vmax.f32 %v2338, 0.0
        %v2423 = vmax.f32 %v2340, 0.0
        %v2424 = vmax.f32 %v2344, 0.0
        %v2425 = vmax.f32 %v2346, 0.0
        %v2426 = vmax.f32 %v2348, 0.0
        %v2427 = vmax.f32 %v2350, 0.0
        %v2428 = vmax.f32 %v2354, 0.0
        %v2429 = vmax.f32 %v2356, 0.0
        %v2430 = vmax.f32 %v2358, 0.0
        %v2431 = vmax.f32 %v2360, 0.0
        %v2432 = vmax.f32 %v2364, 0.0
        %v2433 = vmax.f32 %v2366, 0.0
        %v2434 = vmax.f32 %v2368, 0.0
        %v2435 = vmax.f32 %v2370, 0.0
        %v2436 = vpack.c.bf16 %v2374, %v2372
        %v2437 = vpack.c.bf16 %v2375, %v2373
        %v2438 = vpack.c.bf16 %v2378, %v2376
        %v2439 = vpack.c.bf16 %v2379, %v2377
        %v2440 = vpack.c.bf16 %v2382, %v2380
        %v2441 = vpack.c.bf16 %v2383, %v2381
        %v2442 = vpack.c.bf16 %v2386, %v2384
        %v2443 = vpack.c.bf16 %v2387, %v2385
        %v2444 = vpack.c.bf16 %v2390, %v2388
        %v2445 = vpack.c.bf16 %v2391, %v2389
        %v2446 = vpack.c.bf16 %v2394, %v2392
        %v2447 = vpack.c.bf16 %v2395, %v2393
        %v2448 = vpack.c.bf16 %v2398, %v2396
        %v2449 = vpack.c.bf16 %v2399, %v2397
        %v2450 = vpack.c.bf16 %v2402, %v2400
        %v2451 = vpack.c.bf16 %v2403, %v2401
        %v2452 = vpack.c.bf16 %v2406, %v2404
        %v2453 = vpack.c.bf16 %v2407, %v2405
        %v2454 = vpack.c.bf16 %v2410, %v2408
        %v2455 = vpack.c.bf16 %v2411, %v2409
        %v2456 = vpack.c.bf16 %v2414, %v2412
        %v2457 = vpack.c.bf16 %v2415, %v2413
        %v2458 = vpack.c.bf16 %v2418, %v2416
        %v2459 = vpack.c.bf16 %v2419, %v2417
        %v2460 = vpack.c.bf16 %v2422, %v2420
        %v2461 = vpack.c.bf16 %v2423, %v2421
        %v2462 = vpack.c.bf16 %v2426, %v2424
        %v2463 = vpack.c.bf16 %v2427, %v2425
        %v2464 = vpack.c.bf16 %v2430, %v2428
        %v2465 = vpack.c.bf16 %v2431, %v2429
        %v2466 = vpack.c.bf16 %v2434, %v2432
        %v2467 = vpack.c.bf16 %v2435, %v2433
        %v2468 = vld [vmem:[#allocation10 + $0x200] sm:$0xff]
        %v2469 = vld [vmem:[#allocation10 + $0x208] sm:$0xff]
        %v2470 = vld [vmem:[#allocation10 + $0x210] sm:$0xff]
        %v2471 = vld [vmem:[#allocation10 + $0x218] sm:$0xff]
        %v2472 = vld [vmem:[#allocation10 + $0x220] sm:$0xff]
        %v2473 = vld [vmem:[#allocation10 + $0x228] sm:$0xff]
        %v2474 = vld [vmem:[#allocation10 + $0x230] sm:$0xff]
        %v2475 = vld [vmem:[#allocation10 + $0x238] sm:$0xff]
        %v2476 = vld [vmem:[#allocation10 + $0x240] sm:$0xff]
        %v2477 = vld [vmem:[#allocation10 + $0x248] sm:$0xff]
        %v2478 = vld [vmem:[#allocation10 + $0x250] sm:$0xff]
        %v2479 = vld [vmem:[#allocation10 + $0x258] sm:$0xff]
        %v2480 = vld [vmem:[#allocation10 + $0x260] sm:$0xff]
        %v2481 = vld [vmem:[#allocation10 + $0x268] sm:$0xff]
        %v2482 = vld [vmem:[#allocation10 + $0x270] sm:$0xff]
        %v2483 = vld [vmem:[#allocation10 + $0x278] sm:$0xff]
        %v2484 = vld [vmem:[#allocation10 + $0x280] sm:$0xff]
        %v2485 = vld [vmem:[#allocation10 + $0x288] sm:$0xff]
        %v2486 = vld [vmem:[#allocation10 + $0x290] sm:$0xff]
        %v2487 = vld [vmem:[#allocation10 + $0x298] sm:$0xff]
        %v2488 = vld [vmem:[#allocation10 + $0x2a0] sm:$0xff]
        %v2489 = vld [vmem:[#allocation10 + $0x2a8] sm:$0xff]
        %v2490 = vld [vmem:[#allocation10 + $0x2b0] sm:$0xff]
        %v2491 = vld [vmem:[#allocation10 + $0x2b8] sm:$0xff]
        %v2492 = vld [vmem:[#allocation10 + $0x2c0] sm:$0xff]
        %v2493 = vld [vmem:[#allocation10 + $0x2c8] sm:$0xff]
        %v2494 = vld [vmem:[#allocation10 + $0x2d0] sm:$0xff]
        %v2495 = vld [vmem:[#allocation10 + $0x2d8] sm:$0xff]
        %v2496 = vld [vmem:[#allocation10 + $0x2e0] sm:$0xff]
        %v2497 = vld [vmem:[#allocation10 + $0x2e8] sm:$0xff]
        %v2498 = vld [vmem:[#allocation10 + $0x2f0] sm:$0xff]
        %v2499 = vld [vmem:[#allocation10 + $0x2f8] sm:$0xff]
        %v2500 = vld [vmem:[%s8] sm:$0x3]
        %v2502 = vlaneseq
        %v2503 = vshrl.u32 %v2502, 7
        %v2504 = vsub.s32 0, %v2503
        %v2505 = vrot.slane %v2500, %v2504
        %v2506 = vlaneseq
        %v2507 = vshrl.u32 %v2506, 7
        %v2508 = vsub.s32 1, %v2507
        %v2509 = vrot.slane %v2500, %v2508
        %v2544 = vunpack.c.l.b16 %v2468
        %v2545 = vunpack.c.h.b16 %v2468
        %v2546 = vunpack.c.l.b16 %v2469
        %v2547 = vunpack.c.h.b16 %v2469
        %v2548 = vunpack.c.l.b16 %v2470
        %v2549 = vunpack.c.h.b16 %v2470
        %v2550 = vunpack.c.l.b16 %v2471
        %v2551 = vunpack.c.h.b16 %v2471
        %v2552 = vunpack.c.l.b16 %v2472
        %v2553 = vunpack.c.h.b16 %v2472
        %v2554 = vunpack.c.l.b16 %v2473
        %v2555 = vunpack.c.h.b16 %v2473
        %v2556 = vunpack.c.l.b16 %v2474
        %v2557 = vunpack.c.h.b16 %v2474
        %v2558 = vunpack.c.l.b16 %v2475
        %v2559 = vunpack.c.h.b16 %v2475
        %v2560 = vunpack.c.l.b16 %v2476
        %v2561 = vunpack.c.h.b16 %v2476
        %v2562 = vunpack.c.l.b16 %v2477
        %v2563 = vunpack.c.h.b16 %v2477
        %v2564 = vunpack.c.l.b16 %v2478
        %v2565 = vunpack.c.h.b16 %v2478
        %v2566 = vunpack.c.l.b16 %v2479
        %v2567 = vunpack.c.h.b16 %v2479
        %v2568 = vunpack.c.l.b16 %v2480
        %v2569 = vunpack.c.h.b16 %v2480
        %v2570 = vunpack.c.l.b16 %v2481
        %v2571 = vunpack.c.h.b16 %v2481
        %v2572 = vunpack.c.l.b16 %v2482
        %v2573 = vunpack.c.h.b16 %v2482
        %v2574 = vunpack.c.l.b16 %v2483
        %v2575 = vunpack.c.h.b16 %v2483
        %v2576 = vunpack.c.l.b16 %v2484
        %v2577 = vunpack.c.h.b16 %v2484
        %v2578 = vunpack.c.l.b16 %v2485
        %v2579 = vunpack.c.h.b16 %v2485
        %v2580 = vunpack.c.l.b16 %v2486
        %v2581 = vunpack.c.h.b16 %v2486
        %v2582 = vunpack.c.l.b16 %v2487
        %v2583 = vunpack.c.h.b16 %v2487
        %v2584 = vunpack.c.l.b16 %v2488
        %v2585 = vunpack.c.h.b16 %v2488
        %v2586 = vunpack.c.l.b16 %v2489
        %v2587 = vunpack.c.h.b16 %v2489
        %v2588 = vunpack.c.l.b16 %v2490
        %v2589 = vunpack.c.h.b16 %v2490
        %v2590 = vunpack.c.l.b16 %v2491
        %v2591 = vunpack.c.h.b16 %v2491
        %v2592 = vunpack.c.l.b16 %v2492
        %v2593 = vunpack.c.h.b16 %v2492
        %v2594 = vunpack.c.l.b16 %v2493
        %v2595 = vunpack.c.h.b16 %v2493
        %v2596 = vunpack.c.l.b16 %v2494
        %v2597 = vunpack.c.h.b16 %v2494
        %v2598 = vunpack.c.l.b16 %v2495
        %v2599 = vunpack.c.h.b16 %v2495
        %v2600 = vunpack.c.l.b16 %v2496
        %v2601 = vunpack.c.h.b16 %v2496
        %v2602 = vunpack.c.l.b16 %v2497
        %v2603 = vunpack.c.h.b16 %v2497
        %v2604 = vunpack.c.l.b16 %v2498
        %v2605 = vunpack.c.h.b16 %v2498
        %v2606 = vunpack.c.l.b16 %v2499
        %v2607 = vunpack.c.h.b16 %v2499
        %v2608 = vpack.c.b16 %v2546, %v2544
        %v2609 = vpack.c.b16 %v2547, %v2545
        %v2610 = vpack.c.b16 %v2550, %v2548
        %v2611 = vpack.c.b16 %v2551, %v2549
        %v2612 = vpack.c.b16 %v2554, %v2552
        %v2613 = vpack.c.b16 %v2555, %v2553
        %v2614 = vpack.c.b16 %v2558, %v2556
        %v2615 = vpack.c.b16 %v2559, %v2557
        %v2616 = vpack.c.b16 %v2562, %v2560
        %v2617 = vpack.c.b16 %v2563, %v2561
        %v2618 = vpack.c.b16 %v2566, %v2564
        %v2619 = vpack.c.b16 %v2567, %v2565
        %v2620 = vpack.c.b16 %v2570, %v2568
        %v2621 = vpack.c.b16 %v2571, %v2569
        %v2622 = vpack.c.b16 %v2574, %v2572
        %v2623 = vpack.c.b16 %v2575, %v2573
        %v2624 = vpack.c.b16 %v2578, %v2576
        %v2625 = vpack.c.b16 %v2579, %v2577
        %v2626 = vpack.c.b16 %v2582, %v2580
        %v2627 = vpack.c.b16 %v2583, %v2581
        %v2628 = vpack.c.b16 %v2586, %v2584
        %v2629 = vpack.c.b16 %v2587, %v2585
        %v2630 = vpack.c.b16 %v2590, %v2588
        %v2631 = vpack.c.b16 %v2591, %v2589
        %v2632 = vpack.c.b16 %v2594, %v2592
        %v2633 = vpack.c.b16 %v2595, %v2593
        %v2634 = vpack.c.b16 %v2598, %v2596
        %v2635 = vpack.c.b16 %v2599, %v2597
        %v2636 = vpack.c.b16 %v2602, %v2600
        %v2637 = vpack.c.b16 %v2603, %v2601
        %v2638 = vpack.c.b16 %v2606, %v2604
        %v2639 = vpack.c.b16 %v2607, %v2605
        %2672 = vmatprep.subr.bf16.mxu0 %v2609
        %2673 = vmatpush1.bf16.msra.mxu0 %v2608
        %2674 = vmatprep.subr.bf16.mxu0 %v2611
        %2675 = vmatpush1.bf16.msra.mxu0 %v2610
        %2676 = vmatprep.subr.bf16.mxu0 %v2613
        %2677 = vmatpush1.bf16.msra.mxu0 %v2612
        %2678 = vmatprep.subr.bf16.mxu0 %v2615
        %2679 = vmatpush1.bf16.msra.mxu0 %v2614
        %2680 = vmatprep.subr.bf16.mxu0 %v2617
        %2681 = vmatpush1.bf16.msra.mxu0 %v2616
        %2682 = vmatprep.subr.bf16.mxu0 %v2619
        %2683 = vmatpush1.bf16.msra.mxu0 %v2618
        %2684 = vmatprep.subr.bf16.mxu0 %v2621
        %2685 = vmatpush1.bf16.msra.mxu0 %v2620
        %2686 = vmatprep.subr.bf16.mxu0 %v2623
        %2687 = vmatpush1.bf16.msra.mxu0 %v2622
        %2688 = vmatprep.subr.bf16.mxu0 %v2625
        %2689 = vmatpush1.bf16.msra.mxu0 %v2624
        %2690 = vmatprep.subr.bf16.mxu0 %v2627
        %2691 = vmatpush1.bf16.msra.mxu0 %v2626
        %2692 = vmatprep.subr.bf16.mxu0 %v2629
        %2693 = vmatpush1.bf16.msra.mxu0 %v2628
        %2694 = vmatprep.subr.bf16.mxu0 %v2631
        %2695 = vmatpush1.bf16.msra.mxu0 %v2630
        %2696 = vmatprep.subr.bf16.mxu0 %v2633
        %2697 = vmatpush1.bf16.msra.mxu0 %v2632
        %2698 = vmatprep.subr.bf16.mxu0 %v2635
        %2699 = vmatpush1.bf16.msra.mxu0 %v2634
        %2700 = vmatprep.subr.bf16.mxu0 %v2637
        %2701 = vmatpush1.bf16.msra.mxu0 %v2636
        %2702 = vmatprep.subr.bf16.mxu0 %v2639
        %2703 = vmatpush1.bf16.msra.mxu0 %v2638
        %2704 = vmatprep.mubr.bf16.mxu0 %v2437
        %2705 = vmatmul.mubr.bf16.gmra.mrb[0].mxu0 %v2436
        %v2706 = vpop.f32.mrb[0].mxu0
        %v2707 = vadd.f32 %v2505, %v2706
        %v2708 = vpop.f32.mrb[0].mxu0
        %v2709 = vadd.f32 %v2509, %v2708
        %v2710 = vpop.f32.mrb[0].mxu0
        %v2711 = vadd.f32 %v2505, %v2710
        %v2712 = vpop.f32.mrb[0].mxu0
        %v2713 = vadd.f32 %v2509, %v2712
        %2714 = vmatprep.mubr.bf16.mxu0 %v2439
        %2715 = vmatmul.mubr.bf16.gmra.mrb[0].mxu0 %v2438
        %v2716 = vpop.f32.mrb[0].mxu0
        %v2717 = vadd.f32 %v2505, %v2716
        %v2718 = vpop.f32.mrb[0].mxu0
        %v2719 = vadd.f32 %v2509, %v2718
        %v2720 = vpop.f32.mrb[0].mxu0
        %v2721 = vadd.f32 %v2505, %v2720
        %v2722 = vpop.f32.mrb[0].mxu0
        %v2723 = vadd.f32 %v2509, %v2722
        %2724 = vmatprep.mubr.bf16.mxu0 %v2441
        %2725 = vmatmul.mubr.bf16.gmra.mrb[0].mxu0 %v2440
        %v2726 = vpop.f32.mrb[0].mxu0
        %v2727 = vadd.f32 %v2505, %v2726
        %v2728 = vpop.f32.mrb[0].mxu0
        %v2729 = vadd.f32 %v2509, %v2728
        %v2730 = vpop.f32.mrb[0].mxu0
        %v2731 = vadd.f32 %v2505, %v2730
        %v2732 = vpop.f32.mrb[0].mxu0
        %v2733 = vadd.f32 %v2509, %v2732
        %2734 = vmatprep.mubr.bf16.mxu0 %v2443
        %2735 = vmatmul.mubr.bf16.gmra.mrb[0].mxu0 %v2442
        %v2736 = vpop.f32.mrb[0].mxu0
        %v2737 = vadd.f32 %v2505, %v2736
        %v2738 = vpop.f32.mrb[0].mxu0
        %v2739 = vadd.f32 %v2509, %v2738
        %v2740 = vpop.f32.mrb[0].mxu0
        %v2741 = vadd.f32 %v2505, %v2740
        %v2742 = vpop.f32.mrb[0].mxu0
        %v2743 = vadd.f32 %v2509, %v2742
        %2744 = vmatprep.mubr.bf16.mxu0 %v2445
        %2745 = vmatmul.mubr.bf16.gmra.mrb[0].mxu0 %v2444
        %v2746 = vpop.f32.mrb[0].mxu0
        %v2747 = vadd.f32 %v2505, %v2746
        %v2748 = vpop.f32.mrb[0].mxu0
        %v2749 = vadd.f32 %v2509, %v2748
        %v2750 = vpop.f32.mrb[0].mxu0
        %v2751 = vadd.f32 %v2505, %v2750
        %v2752 = vpop.f32.mrb[0].mxu0
        %v2753 = vadd.f32 %v2509, %v2752
        %2754 = vmatprep.mubr.bf16.mxu0 %v2447
        %2755 = vmatmul.mubr.bf16.gmra.mrb[0].mxu0 %v2446
        %v2756 = vpop.f32.mrb[0].mxu0
        %v2757 = vadd.f32 %v2505, %v2756
        %v2758 = vpop.f32.mrb[0].mxu0
        %v2759 = vadd.f32 %v2509, %v2758
        %v2760 = vpop.f32.mrb[0].mxu0
        %v2761 = vadd.f32 %v2505, %v2760
        %v2762 = vpop.f32.mrb[0].mxu0
        %v2763 = vadd.f32 %v2509, %v2762
        %2764 = vmatprep.mubr.bf16.mxu0 %v2449
        %2765 = vmatmul.mubr.bf16.gmra.mrb[0].mxu0 %v2448
        %v2766 = vpop.f32.mrb[0].mxu0
        %v2767 = vadd.f32 %v2505, %v2766
        %v2768 = vpop.f32.mrb[0].mxu0
        %v2769 = vadd.f32 %v2509, %v2768
        %v2770 = vpop.f32.mrb[0].mxu0
        %v2771 = vadd.f32 %v2505, %v2770
        %v2772 = vpop.f32.mrb[0].mxu0
        %v2773 = vadd.f32 %v2509, %v2772
        %2774 = vmatprep.mubr.bf16.mxu0 %v2451
        %2775 = vmatmul.mubr.bf16.gmra.mrb[0].mxu0 %v2450
        %v2776 = vpop.f32.mrb[0].mxu0
        %v2777 = vadd.f32 %v2505, %v2776
        %v2778 = vpop.f32.mrb[0].mxu0
        %v2779 = vadd.f32 %v2509, %v2778
        %v2780 = vpop.f32.mrb[0].mxu0
        %v2781 = vadd.f32 %v2505, %v2780
        %v2782 = vpop.f32.mrb[0].mxu0
        %v2783 = vadd.f32 %v2509, %v2782
        %2784 = vmatprep.mubr.bf16.mxu0 %v2453
        %2785 = vmatmul.mubr.bf16.gmra.mrb[0].mxu0 %v2452
        %v2786 = vpop.f32.mrb[0].mxu0
        %v2787 = vadd.f32 %v2505, %v2786
        %v2788 = vpop.f32.mrb[0].mxu0
        %v2789 = vadd.f32 %v2509, %v2788
        %v2790 = vpop.f32.mrb[0].mxu0
        %v2791 = vadd.f32 %v2505, %v2790
        %v2792 = vpop.f32.mrb[0].mxu0
        %v2793 = vadd.f32 %v2509, %v2792
        %2794 = vmatprep.mubr.bf16.mxu0 %v2455
        %2795 = vmatmul.mubr.bf16.gmra.mrb[0].mxu0 %v2454
        %v2796 = vpop.f32.mrb[0].mxu0
        %v2797 = vadd.f32 %v2505, %v2796
        %v2798 = vpop.f32.mrb[0].mxu0
        %v2799 = vadd.f32 %v2509, %v2798
        %v2800 = vpop.f32.mrb[0].mxu0
        %v2801 = vadd.f32 %v2505, %v2800
        %v2802 = vpop.f32.mrb[0].mxu0
        %v2803 = vadd.f32 %v2509, %v2802
        %2804 = vmatprep.mubr.bf16.mxu0 %v2457
        %2805 = vmatmul.mubr.bf16.gmra.mrb[0].mxu0 %v2456
        %v2806 = vpop.f32.mrb[0].mxu0
        %v2807 = vadd.f32 %v2505, %v2806
        %v2808 = vpop.f32.mrb[0].mxu0
        %v2809 = vadd.f32 %v2509, %v2808
        %v2810 = vpop.f32.mrb[0].mxu0
        %v2811 = vadd.f32 %v2505, %v2810
        %v2812 = vpop.f32.mrb[0].mxu0
        %v2813 = vadd.f32 %v2509, %v2812
        %2814 = vmatprep.mubr.bf16.mxu0 %v2459
        %2815 = vmatmul.mubr.bf16.gmra.mrb[0].mxu0 %v2458
        %v2816 = vpop.f32.mrb[0].mxu0
        %v2817 = vadd.f32 %v2505, %v2816
        %v2818 = vpop.f32.mrb[0].mxu0
        %v2819 = vadd.f32 %v2509, %v2818
        %v2820 = vpop.f32.mrb[0].mxu0
        %v2821 = vadd.f32 %v2505, %v2820
        %v2822 = vpop.f32.mrb[0].mxu0
        %v2823 = vadd.f32 %v2509, %v2822
        %2824 = vmatprep.mubr.bf16.mxu0 %v2461
        %2825 = vmatmul.mubr.bf16.gmra.mrb[0].mxu0 %v2460
        %v2826 = vpop.f32.mrb[0].mxu0
        %v2827 = vadd.f32 %v2505, %v2826
        %v2828 = vpop.f32.mrb[0].mxu0
        %v2829 = vadd.f32 %v2509, %v2828
        %v2830 = vpop.f32.mrb[0].mxu0
        %v2831 = vadd.f32 %v2505, %v2830
        %v2832 = vpop.f32.mrb[0].mxu0
        %v2833 = vadd.f32 %v2509, %v2832
        %2834 = vmatprep.mubr.bf16.mxu0 %v2463
        %2835 = vmatmul.mubr.bf16.gmra.mrb[0].mxu0 %v2462
        %v2836 = vpop.f32.mrb[0].mxu0
        %v2837 = vadd.f32 %v2505, %v2836
        %v2838 = vpop.f32.mrb[0].mxu0
        %v2839 = vadd.f32 %v2509, %v2838
        %v2840 = vpop.f32.mrb[0].mxu0
        %v2841 = vadd.f32 %v2505, %v2840
        %v2842 = vpop.f32.mrb[0].mxu0
        %v2843 = vadd.f32 %v2509, %v2842
        %2844 = vmatprep.mubr.bf16.mxu0 %v2465
        %2845 = vmatmul.mubr.bf16.gmra.mrb[0].mxu0 %v2464
        %v2846 = vpop.f32.mrb[0].mxu0
        %v2847 = vadd.f32 %v2505, %v2846
        %v2848 = vpop.f32.mrb[0].mxu0
        %v2849 = vadd.f32 %v2509, %v2848
        %v2850 = vpop.f32.mrb[0].mxu0
        %v2851 = vadd.f32 %v2505, %v2850
        %v2852 = vpop.f32.mrb[0].mxu0
        %v2853 = vadd.f32 %v2509, %v2852
        %2854 = vmatprep.mubr.bf16.mxu0 %v2467
        %2855 = vmatmul.mubr.bf16.gmra.mrb[0].mxu0 %v2466
        %v2856 = vpop.f32.mrb[0].mxu0
        %v2857 = vadd.f32 %v2505, %v2856
        %v2858 = vpop.f32.mrb[0].mxu0
        %v2859 = vadd.f32 %v2509, %v2858
        %v2860 = vpop.f32.mrb[0].mxu0
        %v2861 = vadd.f32 %v2505, %v2860
        %v2862 = vpop.f32.mrb[0].mxu0
        %v2863 = vadd.f32 %v2509, %v2862
        %2864 = vdwg.mxu0
        %v2865 = vmax.f32 %v2707, 0.0
        %v2866 = vmax.f32 %v2709, 0.0
        %v2867 = vmax.f32 %v2711, 0.0
        %v2868 = vmax.f32 %v2713, 0.0
        %v2869 = vmax.f32 %v2717, 0.0
        %v2870 = vmax.f32 %v2719, 0.0
        %v2871 = vmax.f32 %v2721, 0.0
        %v2872 = vmax.f32 %v2723, 0.0
        %v2873 = vmax.f32 %v2727, 0.0
        %v2874 = vmax.f32 %v2729, 0.0
        %v2875 = vmax.f32 %v2731, 0.0
        %v2876 = vmax.f32 %v2733, 0.0
        %v2877 = vmax.f32 %v2737, 0.0
        %v2878 = vmax.f32 %v2739, 0.0
        %v2879 = vmax.f32 %v2741, 0.0
        %v2880 = vmax.f32 %v2743, 0.0
        %v2881 = vmax.f32 %v2747, 0.0
        %v2882 = vmax.f32 %v2749, 0.0
        %v2883 = vmax.f32 %v2751, 0.0
        %v2884 = vmax.f32 %v2753, 0.0
        %v2885 = vmax.f32 %v2757, 0.0
        %v2886 = vmax.f32 %v2759, 0.0
        %v2887 = vmax.f32 %v2761, 0.0
        %v2888 = vmax.f32 %v2763, 0.0
        %v2889 = vmax.f32 %v2767, 0.0
        %v2890 = vmax.f32 %v2769, 0.0
        %v2891 = vmax.f32 %v2771, 0.0
        %v2892 = vmax.f32 %v2773, 0.0
        %v2893 = vmax.f32 %v2777, 0.0
        %v2894 = vmax.f32 %v2779, 0.0
        %v2895 = vmax.f32 %v2781, 0.0
        %v2896 = vmax.f32 %v2783, 0.0
        %v2897 = vmax.f32 %v2787, 0.0
        %v2898 = vmax.f32 %v2789, 0.0
        %v2899 = vmax.f32 %v2791, 0.0
        %v2900 = vmax.f32 %v2793, 0.0
        %v2901 = vmax.f32 %v2797, 0.0
        %v2902 = vmax.f32 %v2799, 0.0
        %v2903 = vmax.f32 %v2801, 0.0
        %v2904 = vmax.f32 %v2803, 0.0
        %v2905 = vmax.f32 %v2807, 0.0
        %v2906 = vmax.f32 %v2809, 0.0
        %v2907 = vmax.f32 %v2811, 0.0
        %v2908 = vmax.f32 %v2813, 0.0
        %v2909 = vmax.f32 %v2817, 0.0
        %v2910 = vmax.f32 %v2819, 0.0
        %v2911 = vmax.f32 %v2821, 0.0
        %v2912 = vmax.f32 %v2823, 0.0
        %v2913 = vmax.f32 %v2827, 0.0
        %v2914 = vmax.f32 %v2829, 0.0
        %v2915 = vmax.f32 %v2831, 0.0
        %v2916 = vmax.f32 %v2833, 0.0
        %v2917 = vmax.f32 %v2837, 0.0
        %v2918 = vmax.f32 %v2839, 0.0
        %v2919 = vmax.f32 %v2841, 0.0
        %v2920 = vmax.f32 %v2843, 0.0
        %v2921 = vmax.f32 %v2847, 0.0
        %v2922 = vmax.f32 %v2849, 0.0
        %v2923 = vmax.f32 %v2851, 0.0
        %v2924 = vmax.f32 %v2853, 0.0
        %v2925 = vmax.f32 %v2857, 0.0
        %v2926 = vmax.f32 %v2859, 0.0
        %v2927 = vmax.f32 %v2861, 0.0
        %v2928 = vmax.f32 %v2863, 0.0
        %v2929 = vpack.c.bf16 %v2867, %v2865
        %v2930 = vpack.c.bf16 %v2868, %v2866
        %v2931 = vpack.c.bf16 %v2871, %v2869
        %v2932 = vpack.c.bf16 %v2872, %v2870
        %v2933 = vpack.c.bf16 %v2875, %v2873
        %v2934 = vpack.c.bf16 %v2876, %v2874
        %v2935 = vpack.c.bf16 %v2879, %v2877
        %v2936 = vpack.c.bf16 %v2880, %v2878
        %v2937 = vpack.c.bf16 %v2883, %v2881
        %v2938 = vpack.c.bf16 %v2884, %v2882
        %v2939 = vpack.c.bf16 %v2887, %v2885
        %v2940 = vpack.c.bf16 %v2888, %v2886
        %v2941 = vpack.c.bf16 %v2891, %v2889
        %v2942 = vpack.c.bf16 %v2892, %v2890
        %v2943 = vpack.c.bf16 %v2895, %v2893
        %v2944 = vpack.c.bf16 %v2896, %v2894
        %v2945 = vpack.c.bf16 %v2899, %v2897
        %v2946 = vpack.c.bf16 %v2900, %v2898
        %v2947 = vpack.c.bf16 %v2903, %v2901
        %v2948 = vpack.c.bf16 %v2904, %v2902
        %v2949 = vpack.c.bf16 %v2907, %v2905
        %v2950 = vpack.c.bf16 %v2908, %v2906
        %v2951 = vpack.c.bf16 %v2911, %v2909
        %v2952 = vpack.c.bf16 %v2912, %v2910
        %v2953 = vpack.c.bf16 %v2915, %v2913
        %v2954 = vpack.c.bf16 %v2916, %v2914
        %v2955 = vpack.c.bf16 %v2919, %v2917
        %v2956 = vpack.c.bf16 %v2920, %v2918
        %v2957 = vpack.c.bf16 %v2923, %v2921
        %v2958 = vpack.c.bf16 %v2924, %v2922
        %v2959 = vpack.c.bf16 %v2927, %v2925
        %v2960 = vpack.c.bf16 %v2928, %v2926
        %v2961 = vld [vmem:[#allocation11] sm:$0xf]
        %v2962 = vld [vmem:[#allocation11 + $0x4] sm:$0xf]
        %v2963 = vld [vmem:[#allocation11 + $0x8] sm:$0xf]
        %v2964 = vld [vmem:[#allocation11 + $0xc] sm:$0xf]
        %v2965 = vld [vmem:[#allocation11 + $0x10] sm:$0xf]
        %v2966 = vld [vmem:[#allocation11 + $0x14] sm:$0xf]
        %v2967 = vld [vmem:[#allocation11 + $0x18] sm:$0xf]
        %v2968 = vld [vmem:[#allocation11 + $0x1c] sm:$0xf]
        %v2969 = vld [vmem:[#allocation11 + $0x20] sm:$0xf]
        %v2970 = vld [vmem:[#allocation11 + $0x24] sm:$0xf]
        %v2971 = vld [vmem:[#allocation11 + $0x28] sm:$0xf]
        %v2972 = vld [vmem:[#allocation11 + $0x2c] sm:$0xf]
        %v2973 = vld [vmem:[#allocation11 + $0x30] sm:$0xf]
        %v2974 = vld [vmem:[#allocation11 + $0x34] sm:$0xf]
        %v2975 = vld [vmem:[#allocation11 + $0x38] sm:$0xf]
        %v2976 = vld [vmem:[#allocation11 + $0x3c] sm:$0xf]
        %v2977 = vld [vmem:[#allocation11 + $0x40] sm:$0xf]
        %v2978 = vld [vmem:[#allocation11 + $0x44] sm:$0xf]
        %v2979 = vld [vmem:[#allocation11 + $0x48] sm:$0xf]
        %v2980 = vld [vmem:[#allocation11 + $0x4c] sm:$0xf]
        %v2981 = vld [vmem:[#allocation11 + $0x50] sm:$0xf]
        %v2982 = vld [vmem:[#allocation11 + $0x54] sm:$0xf]
        %v2983 = vld [vmem:[#allocation11 + $0x58] sm:$0xf]
        %v2984 = vld [vmem:[#allocation11 + $0x5c] sm:$0xf]
        %v2985 = vld [vmem:[#allocation11 + $0x60] sm:$0xf]
        %v2986 = vld [vmem:[#allocation11 + $0x64] sm:$0xf]
        %v2987 = vld [vmem:[#allocation11 + $0x68] sm:$0xf]
        %v2988 = vld [vmem:[#allocation11 + $0x6c] sm:$0xf]
        %v2989 = vld [vmem:[#allocation11 + $0x70] sm:$0xf]
        %v2990 = vld [vmem:[#allocation11 + $0x74] sm:$0xf]
        %v2991 = vld [vmem:[#allocation11 + $0x78] sm:$0xf]
        %v2992 = vld [vmem:[#allocation11 + $0x7c] sm:$0xf]
        %v2993 = vld [vmem:[%s10] sm:$0x1]
        %v2995 = vlaneseq
        %v2996 = vshrl.u32 %v2995, 7
        %v2997 = vsub.s32 0, %v2996
        %v2998 = vrot.slane %v2993, %v2997
        %v3032 = vunpack.c.l.b16 %v2961
        %v3033 = vunpack.c.l.b16 %v2962
        %v3034 = vunpack.c.l.b16 %v2963
        %v3035 = vunpack.c.l.b16 %v2964
        %v3036 = vunpack.c.l.b16 %v2965
        %v3037 = vunpack.c.l.b16 %v2966
        %v3038 = vunpack.c.l.b16 %v2967
        %v3039 = vunpack.c.l.b16 %v2968
        %v3040 = vunpack.c.l.b16 %v2969
        %v3041 = vunpack.c.l.b16 %v2970
        %v3042 = vunpack.c.l.b16 %v2971
        %v3043 = vunpack.c.l.b16 %v2972
        %v3044 = vunpack.c.l.b16 %v2973
        %v3045 = vunpack.c.l.b16 %v2974
        %v3046 = vunpack.c.l.b16 %v2975
        %v3047 = vunpack.c.l.b16 %v2976
        %v3048 = vunpack.c.l.b16 %v2977
        %v3049 = vunpack.c.l.b16 %v2978
        %v3050 = vunpack.c.l.b16 %v2979
        %v3051 = vunpack.c.l.b16 %v2980
        %v3052 = vunpack.c.l.b16 %v2981
        %v3053 = vunpack.c.l.b16 %v2982
        %v3054 = vunpack.c.l.b16 %v2983
        %v3055 = vunpack.c.l.b16 %v2984
        %v3056 = vunpack.c.l.b16 %v2985
        %v3057 = vunpack.c.l.b16 %v2986
        %v3058 = vunpack.c.l.b16 %v2987
        %v3059 = vunpack.c.l.b16 %v2988
        %v3060 = vunpack.c.l.b16 %v2989
        %v3061 = vunpack.c.l.b16 %v2990
        %v3062 = vunpack.c.l.b16 %v2991
        %v3063 = vunpack.c.l.b16 %v2992
        %v3064 = vpack.c.b16 %v3033, %v3032
        %v3065 = vpack.c.b16 %v3035, %v3034
        %v3066 = vpack.c.b16 %v3037, %v3036
        %v3067 = vpack.c.b16 %v3039, %v3038
        %v3068 = vpack.c.b16 %v3041, %v3040
        %v3069 = vpack.c.b16 %v3043, %v3042
        %v3070 = vpack.c.b16 %v3045, %v3044
        %v3071 = vpack.c.b16 %v3047, %v3046
        %v3072 = vpack.c.b16 %v3049, %v3048
        %v3073 = vpack.c.b16 %v3051, %v3050
        %v3074 = vpack.c.b16 %v3053, %v3052
        %v3075 = vpack.c.b16 %v3055, %v3054
        %v3076 = vpack.c.b16 %v3057, %v3056
        %v3077 = vpack.c.b16 %v3059, %v3058
        %v3078 = vpack.c.b16 %v3061, %v3060
        %v3079 = vpack.c.b16 %v3063, %v3062
        %3096 = vmatprep.subr.bf16.mxu0 0
        %3097 = vmatpush1.bf16.msra.mxu0 %v3064
        %3098 = vmatprep.subr.bf16.mxu0 0
        %3099 = vmatpush1.bf16.msra.mxu0 %v3065
        %3100 = vmatprep.subr.bf16.mxu0 0
        %3101 = vmatpush1.bf16.msra.mxu0 %v3066
        %3102 = vmatprep.subr.bf16.mxu0 0
        %3103 = vmatpush1.bf16.msra.mxu0 %v3067
        %3104 = vmatprep.subr.bf16.mxu0 0
        %3105 = vmatpush1.bf16.msra.mxu0 %v3068
        %3106 = vmatprep.subr.bf16.mxu0 0
        %3107 = vmatpush1.bf16.msra.mxu0 %v3069
        %3108 = vmatprep.subr.bf16.mxu0 0
        %3109 = vmatpush1.bf16.msra.mxu0 %v3070
        %3110 = vmatprep.subr.bf16.mxu0 0
        %3111 = vmatpush1.bf16.msra.mxu0 %v3071
        %3112 = vmatprep.subr.bf16.mxu0 0
        %3113 = vmatpush1.bf16.msra.mxu0 %v3072
        %3114 = vmatprep.subr.bf16.mxu0 0
        %3115 = vmatpush1.bf16.msra.mxu0 %v3073
        %3116 = vmatprep.subr.bf16.mxu0 0
        %3117 = vmatpush1.bf16.msra.mxu0 %v3074
        %3118 = vmatprep.subr.bf16.mxu0 0
        %3119 = vmatpush1.bf16.msra.mxu0 %v3075
        %3120 = vmatprep.subr.bf16.mxu0 0
        %3121 = vmatpush1.bf16.msra.mxu0 %v3076
        %3122 = vmatprep.subr.bf16.mxu0 0
        %3123 = vmatpush1.bf16.msra.mxu0 %v3077
        %3124 = vmatprep.subr.bf16.mxu0 0
        %3125 = vmatpush1.bf16.msra.mxu0 %v3078
        %3126 = vmatprep.subr.bf16.mxu0 0
        %3127 = vmatpush1.bf16.msra.mxu0 %v3079
        %3128 = vmatprep.mubr.bf16.mxu0 %v2930
        %3129 = vmatmul.mubr.bf16.gmra.mrb[0].mxu0 %v2929
        %v3130 = vpop.f32.mrb[0].mxu0
        %v3131 = vadd.f32 %v2998, %v3130
        %v3132 = vpop.f32.mrb[0].mxu0
        %v3133 = vpop.f32.mrb[0].mxu0
        %v3134 = vadd.f32 %v2998, %v3133
        %v3135 = vpop.f32.mrb[0].mxu0
        %3136 = vmatprep.mubr.bf16.mxu0 %v2932
        %3137 = vmatmul.mubr.bf16.gmra.mrb[0].mxu0 %v2931
        %v3138 = vpop.f32.mrb[0].mxu0
        %v3139 = vadd.f32 %v2998, %v3138
        %v3140 = vpop.f32.mrb[0].mxu0
        %v3141 = vpop.f32.mrb[0].mxu0
        %v3142 = vadd.f32 %v2998, %v3141
        %v3143 = vpop.f32.mrb[0].mxu0
        %3144 = vmatprep.mubr.bf16.mxu0 %v2934
        %3145 = vmatmul.mubr.bf16.gmra.mrb[0].mxu0 %v2933
        %v3146 = vpop.f32.mrb[0].mxu0
        %v3147 = vadd.f32 %v2998, %v3146
        %v3148 = vpop.f32.mrb[0].mxu0
        %v3149 = vpop.f32.mrb[0].mxu0
        %v3150 = vadd.f32 %v2998, %v3149
        %v3151 = vpop.f32.mrb[0].mxu0
        %3152 = vmatprep.mubr.bf16.mxu0 %v2936
        %3153 = vmatmul.mubr.bf16.gmra.mrb[0].mxu0 %v2935
        %v3154 = vpop.f32.mrb[0].mxu0
        %v3155 = vadd.f32 %v2998, %v3154
        %v3156 = vpop.f32.mrb[0].mxu0
        %v3157 = vpop.f32.mrb[0].mxu0
        %v3158 = vadd.f32 %v2998, %v3157
        %v3159 = vpop.f32.mrb[0].mxu0
        %3160 = vmatprep.mubr.bf16.mxu0 %v2938
        %3161 = vmatmul.mubr.bf16.gmra.mrb[0].mxu0 %v2937
        %v3162 = vpop.f32.mrb[0].mxu0
        %v3163 = vadd.f32 %v2998, %v3162
        %v3164 = vpop.f32.mrb[0].mxu0
        %v3165 = vpop.f32.mrb[0].mxu0
        %v3166 = vadd.f32 %v2998, %v3165
        %v3167 = vpop.f32.mrb[0].mxu0
        %3168 = vmatprep.mubr.bf16.mxu0 %v2940
        %3169 = vmatmul.mubr.bf16.gmra.mrb[0].mxu0 %v2939
        %v3170 = vpop.f32.mrb[0].mxu0
        %v3171 = vadd.f32 %v2998, %v3170
        %v3172 = vpop.f32.mrb[0].mxu0
        %v3173 = vpop.f32.mrb[0].mxu0
        %v3174 = vadd.f32 %v2998, %v3173
        %v3175 = vpop.f32.mrb[0].mxu0
        %3176 = vmatprep.mubr.bf16.mxu0 %v2942
        %3177 = vmatmul.mubr.bf16.gmra.mrb[0].mxu0 %v2941
        %v3178 = vpop.f32.mrb[0].mxu0
        %v3179 = vadd.f32 %v2998, %v3178
        %v3180 = vpop.f32.mrb[0].mxu0
        %v3181 = vpop.f32.mrb[0].mxu0
        %v3182 = vadd.f32 %v2998, %v3181
        %v3183 = vpop.f32.mrb[0].mxu0
        %3184 = vmatprep.mubr.bf16.mxu0 %v2944
        %3185 = vmatmul.mubr.bf16.gmra.mrb[0].mxu0 %v2943
        %v3186 = vpop.f32.mrb[0].mxu0
        %v3187 = vadd.f32 %v2998, %v3186
        %v3188 = vpop.f32.mrb[0].mxu0
        %v3189 = vpop.f32.mrb[0].mxu0
        %v3190 = vadd.f32 %v2998, %v3189
        %v3191 = vpop.f32.mrb[0].mxu0
        %3192 = vmatprep.mubr.bf16.mxu0 %v2946
        %3193 = vmatmul.mubr.bf16.gmra.mrb[0].mxu0 %v2945
        %v3194 = vpop.f32.mrb[0].mxu0
        %v3195 = vadd.f32 %v2998, %v3194
        %v3196 = vpop.f32.mrb[0].mxu0
        %v3197 = vpop.f32.mrb[0].mxu0
        %v3198 = vadd.f32 %v2998, %v3197
        %v3199 = vpop.f32.mrb[0].mxu0
        %3200 = vmatprep.mubr.bf16.mxu0 %v2948
        %3201 = vmatmul.mubr.bf16.gmra.mrb[0].mxu0 %v2947
        %v3202 = vpop.f32.mrb[0].mxu0
        %v3203 = vadd.f32 %v2998, %v3202
        %v3204 = vpop.f32.mrb[0].mxu0
        %v3205 = vpop.f32.mrb[0].mxu0
        %v3206 = vadd.f32 %v2998, %v3205
        %v3207 = vpop.f32.mrb[0].mxu0
        %3208 = vmatprep.mubr.bf16.mxu0 %v2950
        %3209 = vmatmul.mubr.bf16.gmra.mrb[0].mxu0 %v2949
        %v3210 = vpop.f32.mrb[0].mxu0
        %v3211 = vadd.f32 %v2998, %v3210
        %v3212 = vpop.f32.mrb[0].mxu0
        %v3213 = vpop.f32.mrb[0].mxu0
        %v3214 = vadd.f32 %v2998, %v3213
        %v3215 = vpop.f32.mrb[0].mxu0
        %3216 = vmatprep.mubr.bf16.mxu0 %v2952
        %3217 = vmatmul.mubr.bf16.gmra.mrb[0].mxu0 %v2951
        %v3218 = vpop.f32.mrb[0].mxu0
        %v3219 = vadd.f32 %v2998, %v3218
        %v3220 = vpop.f32.mrb[0].mxu0
        %v3221 = vpop.f32.mrb[0].mxu0
        %v3222 = vadd.f32 %v2998, %v3221
        %v3223 = vpop.f32.mrb[0].mxu0
        %3224 = vmatprep.mubr.bf16.mxu0 %v2954
        %3225 = vmatmul.mubr.bf16.gmra.mrb[0].mxu0 %v2953
        %v3226 = vpop.f32.mrb[0].mxu0
        %v3227 = vadd.f32 %v2998, %v3226
        %v3228 = vpop.f32.mrb[0].mxu0
        %v3229 = vpop.f32.mrb[0].mxu0
        %v3230 = vadd.f32 %v2998, %v3229
        %v3231 = vpop.f32.mrb[0].mxu0
        %3232 = vmatprep.mubr.bf16.mxu0 %v2956
        %3233 = vmatmul.mubr.bf16.gmra.mrb[0].mxu0 %v2955
        %v3234 = vpop.f32.mrb[0].mxu0
        %v3235 = vadd.f32 %v2998, %v3234
        %v3236 = vpop.f32.mrb[0].mxu0
        %v3237 = vpop.f32.mrb[0].mxu0
        %v3238 = vadd.f32 %v2998, %v3237
        %v3239 = vpop.f32.mrb[0].mxu0
        %3240 = vmatprep.mubr.bf16.mxu0 %v2958
        %3241 = vmatmul.mubr.bf16.gmra.mrb[0].mxu0 %v2957
        %v3242 = vpop.f32.mrb[0].mxu0
        %v3243 = vadd.f32 %v2998, %v3242
        %v3244 = vpop.f32.mrb[0].mxu0
        %v3245 = vpop.f32.mrb[0].mxu0
        %v3246 = vadd.f32 %v2998, %v3245
        %v3247 = vpop.f32.mrb[0].mxu0
        %3248 = vmatprep.mubr.bf16.mxu0 %v2960
        %3249 = vmatmul.mubr.bf16.gmra.mrb[0].mxu0 %v2959
        %v3250 = vpop.f32.mrb[0].mxu0
        %v3251 = vadd.f32 %v2998, %v3250
        %v3252 = vpop.f32.mrb[0].mxu0
        %v3253 = vpop.f32.mrb[0].mxu0
        %v3254 = vadd.f32 %v2998, %v3253
        %v3255 = vpop.f32.mrb[0].mxu0
        %3256 = vdwg.mxu0
        %v3257 = vxor.u32 %v3131, 2147483648
        %v3258 = vxor.u32 %v3134, 2147483648
        %v3259 = vxor.u32 %v3139, 2147483648
        %v3260 = vxor.u32 %v3142, 2147483648
        %v3261 = vxor.u32 %v3147, 2147483648
        %v3262 = vxor.u32 %v3150, 2147483648
        %v3263 = vxor.u32 %v3155, 2147483648
        %v3264 = vxor.u32 %v3158, 2147483648
        %v3265 = vxor.u32 %v3163, 2147483648
        %v3266 = vxor.u32 %v3166, 2147483648
        %v3267 = vxor.u32 %v3171, 2147483648
        %v3268 = vxor.u32 %v3174, 2147483648
        %v3269 = vxor.u32 %v3179, 2147483648
        %v3270 = vxor.u32 %v3182, 2147483648
        %v3271 = vxor.u32 %v3187, 2147483648
        %v3272 = vxor.u32 %v3190, 2147483648
        %v3273 = vxor.u32 %v3195, 2147483648
        %v3274 = vxor.u32 %v3198, 2147483648
        %v3275 = vxor.u32 %v3203, 2147483648
        %v3276 = vxor.u32 %v3206, 2147483648
        %v3277 = vxor.u32 %v3211, 2147483648
        %v3278 = vxor.u32 %v3214, 2147483648
        %v3279 = vxor.u32 %v3219, 2147483648
        %v3280 = vxor.u32 %v3222, 2147483648
        %v3281 = vxor.u32 %v3227, 2147483648
        %v3282 = vxor.u32 %v3230, 2147483648
        %v3283 = vxor.u32 %v3235, 2147483648
        %v3284 = vxor.u32 %v3238, 2147483648
        %v3285 = vxor.u32 %v3243, 2147483648
        %v3286 = vxor.u32 %v3246, 2147483648
        %v3287 = vxor.u32 %v3251, 2147483648
        %v3288 = vxor.u32 %v3254, 2147483648
        %v3289 = vmul.f32 %v3257, 1.442695
        %v3290 = vpow.pop %v3289
        %v3291 = vmul.f32 %v3258, 1.442695
        %v3292 = vpow.pop %v3291
        %v3293 = vmul.f32 %v3259, 1.442695
        %v3294 = vpow.pop %v3293
        %v3295 = vmul.f32 %v3260, 1.442695
        %v3296 = vpow.pop %v3295
        %v3297 = vmul.f32 %v3261, 1.442695
        %v3298 = vpow.pop %v3297
        %v3299 = vmul.f32 %v3262, 1.442695
        %v3300 = vpow.pop %v3299
        %v3301 = vmul.f32 %v3263, 1.442695
        %v3302 = vpow.pop %v3301
        %v3303 = vmul.f32 %v3264, 1.442695
        %v3304 = vpow.pop %v3303
        %v3305 = vmul.f32 %v3265, 1.442695
        %v3306 = vpow.pop %v3305
        %v3307 = vmul.f32 %v3266, 1.442695
        %v3308 = vpow.pop %v3307
        %v3309 = vmul.f32 %v3267, 1.442695
        %v3310 = vpow.pop %v3309
        %v3311 = vmul.f32 %v3268, 1.442695
        %v3312 = vpow.pop %v3311
        %v3313 = vmul.f32 %v3269, 1.442695
        %v3314 = vpow.pop %v3313
        %v3315 = vmul.f32 %v3270, 1.442695
        %v3316 = vpow.pop %v3315
        %v3317 = vmul.f32 %v3271, 1.442695
        %v3318 = vpow.pop %v3317
        %v3319 = vmul.f32 %v3272, 1.442695
        %v3320 = vpow.pop %v3319
        %v3321 = vmul.f32 %v3273, 1.442695
        %v3322 = vpow.pop %v3321
        %v3323 = vmul.f32 %v3274, 1.442695
        %v3324 = vpow.pop %v3323
        %v3325 = vmul.f32 %v3275, 1.442695
        %v3326 = vpow.pop %v3325
        %v3327 = vmul.f32 %v3276, 1.442695
        %v3328 = vpow.pop %v3327
        %v3329 = vmul.f32 %v3277, 1.442695
        %v3330 = vpow.pop %v3329
        %v3331 = vmul.f32 %v3278, 1.442695
        %v3332 = vpow.pop %v3331
        %v3333 = vmul.f32 %v3279, 1.442695
        %v3334 = vpow.pop %v3333
        %v3335 = vmul.f32 %v3280, 1.442695
        %v3336 = vpow.pop %v3335
        %v3337 = vmul.f32 %v3281, 1.442695
        %v3338 = vpow.pop %v3337
        %v3339 = vmul.f32 %v3282, 1.442695
        %v3340 = vpow.pop %v3339
        %v3341 = vmul.f32 %v3283, 1.442695
        %v3342 = vpow.pop %v3341
        %v3343 = vmul.f32 %v3284, 1.442695
        %v3344 = vpow.pop %v3343
        %v3345 = vmul.f32 %v3285, 1.442695
        %v3346 = vpow.pop %v3345
        %v3347 = vmul.f32 %v3286, 1.442695
        %v3348 = vpow.pop %v3347
        %v3349 = vmul.f32 %v3287, 1.442695
        %v3350 = vpow.pop %v3349
        %v3351 = vmul.f32 %v3288, 1.442695
        %v3352 = vpow.pop %v3351
        %v3353 = vadd.f32 %v3290, 1.0
        %v3354 = vadd.f32 %v3292, 1.0
        %v3355 = vadd.f32 %v3294, 1.0
        %v3356 = vadd.f32 %v3296, 1.0
        %v3357 = vadd.f32 %v3298, 1.0
        %v3358 = vadd.f32 %v3300, 1.0
        %v3359 = vadd.f32 %v3302, 1.0
        %v3360 = vadd.f32 %v3304, 1.0
        %v3361 = vadd.f32 %v3306, 1.0
        %v3362 = vadd.f32 %v3308, 1.0
        %v3363 = vadd.f32 %v3310, 1.0
        %v3364 = vadd.f32 %v3312, 1.0
        %v3365 = vadd.f32 %v3314, 1.0
        %v3366 = vadd.f32 %v3316, 1.0
        %v3367 = vadd.f32 %v3318, 1.0
        %v3368 = vadd.f32 %v3320, 1.0
        %v3369 = vadd.f32 %v3322, 1.0
        %v3370 = vadd.f32 %v3324, 1.0
        %v3371 = vadd.f32 %v3326, 1.0
        %v3372 = vadd.f32 %v3328, 1.0
        %v3373 = vadd.f32 %v3330, 1.0
        %v3374 = vadd.f32 %v3332, 1.0
        %v3375 = vadd.f32 %v3334, 1.0
        %v3376 = vadd.f32 %v3336, 1.0
        %v3377 = vadd.f32 %v3338, 1.0
        %v3378 = vadd.f32 %v3340, 1.0
        %v3379 = vadd.f32 %v3342, 1.0
        %v3380 = vadd.f32 %v3344, 1.0
        %v3381 = vadd.f32 %v3346, 1.0
        %v3382 = vadd.f32 %v3348, 1.0
        %v3383 = vadd.f32 %v3350, 1.0
        %v3384 = vadd.f32 %v3352, 1.0
        %v3385 = vrcp.pop %v3353
        %v3386 = vmul.f32 1.0, %v3385
        %v3387 = vrcp.pop %v3354
        %v3388 = vmul.f32 1.0, %v3387
        %v3389 = vrcp.pop %v3355
        %v3390 = vmul.f32 1.0, %v3389
        %v3391 = vrcp.pop %v3356
        %v3392 = vmul.f32 1.0, %v3391
        %v3393 = vrcp.pop %v3357
        %v3394 = vmul.f32 1.0, %v3393
        %v3395 = vrcp.pop %v3358
        %v3396 = vmul.f32 1.0, %v3395
        %v3397 = vrcp.pop %v3359
        %v3398 = vmul.f32 1.0, %v3397
        %v3399 = vrcp.pop %v3360
        %v3400 = vmul.f32 1.0, %v3399
        %v3401 = vrcp.pop %v3361
        %v3402 = vmul.f32 1.0, %v3401
        %v3403 = vrcp.pop %v3362
        %v3404 = vmul.f32 1.0, %v3403
        %v3405 = vrcp.pop %v3363
        %v3406 = vmul.f32 1.0, %v3405
        %v3407 = vrcp.pop %v3364
        %v3408 = vmul.f32 1.0, %v3407
        %v3409 = vrcp.pop %v3365
        %v3410 = vmul.f32 1.0, %v3409
        %v3411 = vrcp.pop %v3366
        %v3412 = vmul.f32 1.0, %v3411
        %v3413 = vrcp.pop %v3367
        %v3414 = vmul.f32 1.0, %v3413
        %v3415 = vrcp.pop %v3368
        %v3416 = vmul.f32 1.0, %v3415
        %v3417 = vrcp.pop %v3369
        %v3418 = vmul.f32 1.0, %v3417
        %v3419 = vrcp.pop %v3370
        %v3420 = vmul.f32 1.0, %v3419
        %v3421 = vrcp.pop %v3371
        %v3422 = vmul.f32 1.0, %v3421
        %v3423 = vrcp.pop %v3372
        %v3424 = vmul.f32 1.0, %v3423
        %v3425 = vrcp.pop %v3373
        %v3426 = vmul.f32 1.0, %v3425
        %v3427 = vrcp.pop %v3374
        %v3428 = vmul.f32 1.0, %v3427
        %v3429 = vrcp.pop %v3375
        %v3430 = vmul.f32 1.0, %v3429
        %v3431 = vrcp.pop %v3376
        %v3432 = vmul.f32 1.0, %v3431
        %v3433 = vrcp.pop %v3377
        %v3434 = vmul.f32 1.0, %v3433
        %v3435 = vrcp.pop %v3378
        %v3436 = vmul.f32 1.0, %v3435
        %v3437 = vrcp.pop %v3379
        %v3438 = vmul.f32 1.0, %v3437
        %v3439 = vrcp.pop %v3380
        %v3440 = vmul.f32 1.0, %v3439
        %v3441 = vrcp.pop %v3381
        %v3442 = vmul.f32 1.0, %v3441
        %v3443 = vrcp.pop %v3382
        %v3444 = vmul.f32 1.0, %v3443
        %v3445 = vrcp.pop %v3383
        %v3446 = vmul.f32 1.0, %v3445
        %v3447 = vrcp.pop %v3384
        %v3448 = vmul.f32 1.0, %v3447
        %v3449 = vpack.c.bf16 %v3388, %v3386
        %v3450 = vpack.c.bf16 %v3392, %v3390
        %v3451 = vpack.c.bf16 %v3396, %v3394
        %v3452 = vpack.c.bf16 %v3400, %v3398
        %v3453 = vpack.c.bf16 %v3404, %v3402
        %v3454 = vpack.c.bf16 %v3408, %v3406
        %v3455 = vpack.c.bf16 %v3412, %v3410
        %v3456 = vpack.c.bf16 %v3416, %v3414
        %v3457 = vpack.c.bf16 %v3420, %v3418
        %v3458 = vpack.c.bf16 %v3424, %v3422
        %v3459 = vpack.c.bf16 %v3428, %v3426
        %v3460 = vpack.c.bf16 %v3432, %v3430
        %v3461 = vpack.c.bf16 %v3436, %v3434
        %v3462 = vpack.c.bf16 %v3440, %v3438
        %v3463 = vpack.c.bf16 %v3444, %v3442
        %v3464 = vpack.c.bf16 %v3448, %v3446
        %v3481 = vunpack.c.l.b16 %v3449
        %v3482 = vunpack.c.h.b16 %v3449
        %v3483 = vunpack.c.l.b16 %v3450
        %v3484 = vunpack.c.h.b16 %v3450
        %v3485 = vunpack.c.l.b16 %v3451
        %v3486 = vunpack.c.h.b16 %v3451
        %v3487 = vunpack.c.l.b16 %v3452
        %v3488 = vunpack.c.h.b16 %v3452
        %v3489 = vunpack.c.l.b16 %v3453
        %v3490 = vunpack.c.h.b16 %v3453
        %v3491 = vunpack.c.l.b16 %v3454
        %v3492 = vunpack.c.h.b16 %v3454
        %v3493 = vunpack.c.l.b16 %v3455
        %v3494 = vunpack.c.h.b16 %v3455
        %v3495 = vunpack.c.l.b16 %v3456
        %v3496 = vunpack.c.h.b16 %v3456
        %v3497 = vunpack.c.l.b16 %v3457
        %v3498 = vunpack.c.h.b16 %v3457
        %v3499 = vunpack.c.l.b16 %v3458
        %v3500 = vunpack.c.h.b16 %v3458
        %v3501 = vunpack.c.l.b16 %v3459
        %v3502 = vunpack.c.h.b16 %v3459
        %v3503 = vunpack.c.l.b16 %v3460
        %v3504 = vunpack.c.h.b16 %v3460
        %v3505 = vunpack.c.l.b16 %v3461
        %v3506 = vunpack.c.h.b16 %v3461
        %v3507 = vunpack.c.l.b16 %v3462
        %v3508 = vunpack.c.h.b16 %v3462
        %v3509 = vunpack.c.l.b16 %v3463
        %v3510 = vunpack.c.h.b16 %v3463
        %v3511 = vunpack.c.l.b16 %v3464
        %v3512 = vunpack.c.h.b16 %v3464
        %v3513 = vpack.c.b16 %v3481, %v3481
        %v3514 = vpack.c.b16 %v3482, %v3482
        %v3515 = vpack.c.b16 %v3483, %v3483
        %v3516 = vpack.c.b16 %v3484, %v3484
        %v3517 = vpack.c.b16 %v3485, %v3485
        %v3518 = vpack.c.b16 %v3486, %v3486
        %v3519 = vpack.c.b16 %v3487, %v3487
        %v3520 = vpack.c.b16 %v3488, %v3488
        %v3521 = vpack.c.b16 %v3489, %v3489
        %v3522 = vpack.c.b16 %v3490, %v3490
        %v3523 = vpack.c.b16 %v3491, %v3491
        %v3524 = vpack.c.b16 %v3492, %v3492
        %v3525 = vpack.c.b16 %v3493, %v3493
        %v3526 = vpack.c.b16 %v3494, %v3494
        %v3527 = vpack.c.b16 %v3495, %v3495
        %v3528 = vpack.c.b16 %v3496, %v3496
        %v3529 = vpack.c.b16 %v3497, %v3497
        %v3530 = vpack.c.b16 %v3498, %v3498
        %v3531 = vpack.c.b16 %v3499, %v3499
        %v3532 = vpack.c.b16 %v3500, %v3500
        %v3533 = vpack.c.b16 %v3501, %v3501
        %v3534 = vpack.c.b16 %v3502, %v3502
        %v3535 = vpack.c.b16 %v3503, %v3503
        %v3536 = vpack.c.b16 %v3504, %v3504
        %v3537 = vpack.c.b16 %v3505, %v3505
        %v3538 = vpack.c.b16 %v3506, %v3506
        %v3539 = vpack.c.b16 %v3507, %v3507
        %v3540 = vpack.c.b16 %v3508, %v3508
        %v3541 = vpack.c.b16 %v3509, %v3509
        %v3542 = vpack.c.b16 %v3510, %v3510
        %v3543 = vpack.c.b16 %v3511, %v3511
        %v3544 = vpack.c.b16 %v3512, %v3512
        %3577 = vst [vmem:[%s503] sm:$0xf] %v3513
        %3578 = vst [vmem:[%s503 + $0x4] sm:$0xf] %v3514
        %3579 = vst [vmem:[%s503 + $0x8] sm:$0xf] %v3515
        %3580 = vst [vmem:[%s503 + $0xc] sm:$0xf] %v3516
        %3581 = vst [vmem:[%s503 + $0x10] sm:$0xf] %v3517
        %3582 = vst [vmem:[%s503 + $0x14] sm:$0xf] %v3518
        %3583 = vst [vmem:[%s503 + $0x18] sm:$0xf] %v3519
        %3584 = vst [vmem:[%s503 + $0x1c] sm:$0xf] %v3520
        %3585 = vst [vmem:[%s503 + $0x20] sm:$0xf] %v3521
        %3586 = vst [vmem:[%s503 + $0x24] sm:$0xf] %v3522
        %3587 = vst [vmem:[%s503 + $0x28] sm:$0xf] %v3523
        %3588 = vst [vmem:[%s503 + $0x2c] sm:$0xf] %v3524
        %3589 = vst [vmem:[%s503 + $0x30] sm:$0xf] %v3525
        %3590 = vst [vmem:[%s503 + $0x34] sm:$0xf] %v3526
        %3591 = vst [vmem:[%s503 + $0x38] sm:$0xf] %v3527
        %3592 = vst [vmem:[%s503 + $0x3c] sm:$0xf] %v3528
        %3593 = vst [vmem:[%s503 + $0x40] sm:$0xf] %v3529
        %3594 = vst [vmem:[%s503 + $0x44] sm:$0xf] %v3530
        %3595 = vst [vmem:[%s503 + $0x48] sm:$0xf] %v3531
        %3596 = vst [vmem:[%s503 + $0x4c] sm:$0xf] %v3532
        %3597 = vst [vmem:[%s503 + $0x50] sm:$0xf] %v3533
        %3598 = vst [vmem:[%s503 + $0x54] sm:$0xf] %v3534
        %3599 = vst [vmem:[%s503 + $0x58] sm:$0xf] %v3535
        %3600 = vst [vmem:[%s503 + $0x5c] sm:$0xf] %v3536
        %3601 = vst [vmem:[%s503 + $0x60] sm:$0xf] %v3537
        %3602 = vst [vmem:[%s503 + $0x64] sm:$0xf] %v3538
        %3603 = vst [vmem:[%s503 + $0x68] sm:$0xf] %v3539
        %3604 = vst [vmem:[%s503 + $0x6c] sm:$0xf] %v3540
        %3605 = vst [vmem:[%s503 + $0x70] sm:$0xf] %v3541
        %3606 = vst [vmem:[%s503 + $0x74] sm:$0xf] %v3542
        %3607 = vst [vmem:[%s503 + $0x78] sm:$0xf] %v3543
        %3608 = vst [vmem:[%s503 + $0x7c] sm:$0xf] %v3544
        %s3609 = sand.u32 %s282, 1
        %s3610 = scalar_lea.sflag [#allocation4], %s3609
        %s3611 = sand.u32 %s282, 1
        %s3612 = smul.addr %s3611, 128
        %s3613 = scalar_lea.vmem [#allocation13], %s3612
        // Predicated region
        $region89: #{tpu_custom_call.1} parent=63 // pred_check
          %p3614 = pneg %p292
        $region90: #{tpu_custom_call.1} parent=63 // pred_check_branch
          %3616 = sbr.rel (%p3614) target = $region92
        $region91: #{tpu_custom_call.1} parent=63 // pred_region
          %s3617 = smul.u32 32, %s33
          %s3619 = ssub.s32 2048, 2048
          %3620 = vsyncadd %s3610, %s3619
          %s3621 = smul.addr %s3617, 64
          %s3622 = scalar_lea.hbm %s11, %s3621
          %s3623 = sshll.u32 %s3613, 4
          %s3624 = int_to_ptr.vmem [resolvable:$true] %s3623
          %3629 = dma.vmem_to_hbm [thread:$0]  %s3624, 2048, %s3622, %s3610, 64, 64, 4
        $region92: #{tpu_custom_call.1} parent=63 // pred_fallthru
          _
      $region64: #{tpu_custom_call.1} parent=5 // pred_fallthru
        _
      %p3630 = scmp.le.s32.totalorder 2, %s28
      // Predicated region
      $region93: #{tpu_custom_call.1} parent=5 // pred_check
        %p3631 = pneg %p3630
      $region94: #{tpu_custom_call.1} parent=5 // pred_check_branch
        %3633 = sbr.rel (%p3631) target = $region96
      $region95: #{tpu_custom_call.1} parent=5 // pred_region
        %s3634 = ssub.s32 %s28, 2
        // Predicated region
        $region97: #{tpu_custom_call.1} parent=95 // pred_check
          %p3635 = pneg %p298
        $region98: #{tpu_custom_call.1} parent=95 // pred_check_branch
          %3637 = sbr.rel (%p3635) target = $region100
        $region99: #{tpu_custom_call.1} parent=95 // pred_region
          %s3638 = sand.u32 %s283, 1
          %s3639 = scalar_lea.sflag [#allocation4], %s3638
          %s3640 = sand.u32 %s283, 1
          %s3641 = smul.addr %s3640, 128
          %s3642 = scalar_lea.vmem [#allocation13], %s3641
          %3643 = dma.done %s3639, 2048
        $region100: #{tpu_custom_call.1} parent=95 // pred_fallthru
          _
      $region96: #{tpu_custom_call.1} parent=5 // pred_fallthru
        _
    $region6: #{tpu_custom_call.1} parent=1 // loop_footer
      %s32 = sadd.s32 1, %s28
    $region7: #{tpu_custom_call.1} parent=1 // loop_footer_branch
      %27 = sbr.rel target = $region3
    $region8: #{tpu_custom_call.1} parent=1 // loop_exit
      _
    %3644 = vsyncpa [#allocation3], 1
    %s3645 = scalar_lea.sflag [#allocation3], 1
    %3646 = vsyncpa %s3645, 1
    %3647 = vsyncpa [#allocation6], 1
    %s3648 = scalar_lea.sflag [#allocation6], 1
    %3649 = vsyncpa %s3648, 1
    %3650 = vsyncpa [#allocation9], 1
    %3651 = vsyncpa [#allocation12], 1
    %3652 = vsyncpa [#allocation4], 1
    %s3653 = scalar_lea.sflag [#allocation4], 1
    %3654 = vsyncpa %s3653, 1

// kernel: tpu_custom_call.1
$region0: #{tpu_custom_call.1}
  #allocation0 [shape = 'u32[]', space=smem, size = 0x4, offset = 0x4, fixed_abs, tag = 'smem constant byte address 0x4 - core index']
  #allocation1 [shape = 'u32[144,128]{1,0:T(1,128)}', space=vmem, size = 0x12000, scoped, tag = 'internal scratch']
  %s0 = inlined_call_operand.hbm [shape: f32[512,128], index: 0, kind: input, shape index: {}]
  %s1 = inlined_call_operand.hbm [shape: f32[512,256], index: 1, kind: input, shape index: {}]
  %s2 = inlined_call_operand.hbm [shape: f32[128,256], index: 2, kind: input, shape index: {}]
  %s3 = inlined_call_operand.hbm [shape: bf16[256,256], index: 3, kind: input, shape index: {}]
  %s4 = inlined_call_operand.vmem [shape: f32[1,256], index: 4, kind: input, shape index: {}]
  %s5 = inlined_call_operand.hbm [shape: bf16[768,256], index: 5, kind: input, shape index: {}]
  %s6 = inlined_call_operand.vmem [shape: f32[1,256], index: 6, kind: input, shape index: {}]
  %s7 = inlined_call_operand.vmem [shape: f32[1,256], index: 7, kind: input, shape index: {}]
  %s8 = inlined_call_operand.vmem [shape: f32[1,256], index: 8, kind: input, shape index: {}]
  %s9 = inlined_call_operand.hbm [shape: bf16[256,128], index: 9, kind: input, shape index: {}]
  %s10 = inlined_call_operand.vmem [shape: f32[1,128], index: 10, kind: input, shape index: {}]
  %s11 = inlined_call_operand.hbm [shape: bf16[512,128], index: 11, kind: output, shape index: {}]
  %s12 = sld [smem:[#allocation0]]
  $region101: #{tpu_custom_call.1} parent=0
    _
  %s14 = ssub.s32 1, %s12
  %s15 = scalar_select 0, %s14, %s12
  $region1: #{tpu_custom_call.1} parent=0
    #allocation2 [shape = 'u8[262144]{0}', space=vmem, size = 0x40000, scoped, tag = 'input window, operand 0']
    #allocation3 [shape = 's32[2]{0}', space=sflag, size = 0x8, scoped, tag = 'scoped memory for tpu_custom_call.1']
    #allocation4 [shape = 's32[2]{0}', space=sflag, size = 0x8, scoped, tag = 'scoped memory for tpu_custom_call.1']
    #allocation5 [shape = 'u8[524288]{0}', space=vmem, size = 0x80000, scoped, tag = 'input window, operand 1']
    #allocation6 [shape = 's32[2]{0}', space=sflag, size = 0x8, scoped, tag = 'scoped memory for tpu_custom_call.1']
    #allocation7 [shape = 'u8[131072]{0}', space=vmem, size = 0x20000, scoped, tag = 'input window, operand 2, single buffered']
    #allocation8 [shape = 'u8[131072]{0}', space=vmem, size = 0x20000, scoped, tag = 'input window, operand 3, single buffered']
    #allocation9 [shape = 's32[1]{0}', space=sflag, size = 0x4, scoped, tag = 'scoped memory for tpu_custom_call.1']
    #allocation10 [shape = 'u8[393216]{0}', space=vmem, size = 0x60000, scoped, tag = 'input window, operand 5, single buffered']
    #allocation11 [shape = 'u8[65536]{0}', space=vmem, size = 0x10000, scoped, tag = 'input window, operand 9, single buffered']
    #allocation12 [shape = 's32[1]{0}', space=sflag, size = 0x4, scoped, tag = 'scoped memory for tpu_custom_call.1']
    #allocation13 [shape = 'u8[131072]{0}', space=vmem, size = 0x20000, scoped, tag = 'output window, operand 0']
    %16 = vsyncpa [#allocation3], 0
    %s17 = scalar_lea.sflag [#allocation3], 1
    %18 = vsyncpa %s17, 0
    %19 = vsyncpa [#allocation6], 0
    %s20 = scalar_lea.sflag [#allocation6], 1
    %21 = vsyncpa %s20, 0
    %22 = vsyncpa [#allocation9], 0
    %23 = vsyncpa [#allocation12], 0
    %24 = vsyncpa [#allocation4], 0
    %s25 = scalar_lea.sflag [#allocation4], 1
    %26 = vsyncpa %s25, 0
    loop: start=0, step=1, limit=4
    $region2: #{tpu_custom_call.1} parent=1 // loop_pre_header
      _
    $region3: #{tpu_custom_call.1} parent=1 // loop_header
      %s28 = sphi 0, %s32
      %p29 = scmp.ge.s32.totalorder %s28, 4
      %s38 = sphi 0, %s40
      %s41 = sphi 0, %s38
      %s42 = sphi 0, %s41
      %s58 = sphi 0, %s42
      %s64 = sphi 0, %s66
      %s67 = sphi 0, %s64
      %s68 = sphi 0, %s67
      %s84 = sphi 0, %s68
      %s88 = sphi 0, %s88
      %s90 = sphi 0, %s88
      %s91 = sphi 0, %s90
      %s105 = sphi 0, %s91
      %s109 = sphi 0, %s109
      %s111 = sphi 0, %s109
      %s112 = sphi 0, %s111
      %s126 = sphi 0, %s112
      %s130 = sphi 0, %s130
      %s132 = sphi 0, %s130
      %s133 = sphi 0, %s132
      %s147 = sphi 0, %s133
      %s151 = sphi 0, %s151
      %s153 = sphi 0, %s151
      %s154 = sphi 0, %s153
      %s168 = sphi 0, %s154
      %s172 = sphi 0, %s172
      %s174 = sphi 0, %s172
      %s175 = sphi 0, %s174
      %s189 = sphi 0, %s175
      %s193 = sphi 0, %s193
      %s195 = sphi 0, %s193
      %s196 = sphi 0, %s195
      %s210 = sphi 0, %s196
      %s214 = sphi 0, %s214
      %s216 = sphi 0, %s214
      %s217 = sphi 0, %s216
      %s231 = sphi 0, %s217
      %s235 = sphi 0, %s235
      %s237 = sphi 0, %s235
      %s238 = sphi 0, %s237
      %s252 = sphi 0, %s238
      %s256 = sphi 0, %s256
      %s258 = sphi 0, %s256
      %s259 = sphi 0, %s258
      %s273 = sphi 0, %s259
      %s279 = sphi 0, %s281
      %s282 = sphi 0, %s279
      %s283 = sphi 0, %s282
      %s299 = sphi 0, %s283
    $region4: #{tpu_custom_call.1} parent=1 // loop_header_branch
      %31 = sbr.rel (%p29) target = $region8
    $region5: #{tpu_custom_call.1} parent=1 // loop_body
      %s33 = ssub.s32 %s28, 1
      %s34 = ssub.s32 %s28, 2
      %s35 = sadd.s32 %s28, 1
      %s36 = ssub.s32 %s28, %s35
      %p37 = scmp.eq.s32.totalorder %s36, 0
      %s39 = sadd.s32 %s38, 1
      %s40 = scalar_select %p37, %s38, %s39
      %p43 = pneg %p37
      %p44 = scmp.eq.s32.totalorder %s28, 1
      %p45 = por %p43, %p44
      %p46 = scmp.ne.s32.totalorder %s38, %s41
      %p47 = scmp.eq.s32.totalorder %s28, 0
      %p48 = por %p46, %p47
      %p49 = scmp.ne.s32.totalorder %s38, %s41
      %p50 = scmp.eq.s32.totalorder %s33, 1
      %p51 = por %p49, %p50
      %p52 = scmp.ne.s32.totalorder %s41, %s42
      %p53 = scmp.eq.s32.totalorder %s33, 0
      %p54 = por %p52, %p53
      %p55 = scmp.ne.s32.totalorder %s41, %s42
      %p56 = scmp.eq.s32.totalorder %s34, 1
      %p57 = por %p55, %p56
      %p59 = scmp.ne.s32.totalorder %s42, %s58
      %p60 = scmp.eq.s32.totalorder %s34, 0
      %p61 = por %p59, %p60
      %s62 = ssub.s32 %s28, %s35
      %p63 = scmp.eq.s32.totalorder %s62, 0
      %s65 = sadd.s32 %s64, 1
      %s66 = scalar_select %p63, %s64, %s65
      %p69 = pneg %p63
      %p70 = scmp.eq.s32.totalorder %s28, 1
      %p71 = por %p69, %p70
      %p72 = scmp.ne.s32.totalorder %s64, %s67
      %p73 = scmp.eq.s32.totalorder %s28, 0
      %p74 = por %p72, %p73
      %p75 = scmp.ne.s32.totalorder %s64, %s67
      %p76 = scmp.eq.s32.totalorder %s33, 1
      %p77 = por %p75, %p76
      %p78 = scmp.ne.s32.totalorder %s67, %s68
      %p79 = scmp.eq.s32.totalorder %s33, 0
      %p80 = por %p78, %p79
      %p81 = scmp.ne.s32.totalorder %s67, %s68
      %p82 = scmp.eq.s32.totalorder %s34, 1
      %p83 = por %p81, %p82
      %p85 = scmp.ne.s32.totalorder %s68, %s84
      %p86 = scmp.eq.s32.totalorder %s34, 0
      %p87 = por %p85, %p86
      %s89 = sadd.s32 %s88, 1
      %p92 = scmp.eq.s32.totalorder %s28, 1
      %p93 = scmp.ne.s32.totalorder %s88, %s90
      %p94 = scmp.eq.s32.totalorder %s28, 0
      %p95 = por %p93, %p94
      %p96 = scmp.ne.s32.totalorder %s88, %s90
      %p97 = scmp.eq.s32.totalorder %s33, 1
      %p98 = por %p96, %p97
      %p99 = scmp.ne.s32.totalorder %s90, %s91
      %p100 = scmp.eq.s32.totalorder %s33, 0
      %p101 = por %p99, %p100
      %p102 = scmp.ne.s32.totalorder %s90, %s91
      %p103 = scmp.eq.s32.totalorder %s34, 1
      %p104 = por %p102, %p103
      %p106 = scmp.ne.s32.totalorder %s91, %s105
      %p107 = scmp.eq.s32.totalorder %s34, 0
      %p108 = por %p106, %p107
      %s110 = sadd.s32 %s109, 1
      %p113 = scmp.eq.s32.totalorder %s28, 1
      %p114 = scmp.ne.s32.totalorder %s109, %s111
      %p115 = scmp.eq.s32.totalorder %s28, 0
      %p116 = por %p114, %p115
      %p117 = scmp.ne.s32.totalorder %s109, %s111
      %p118 = scmp.eq.s32.totalorder %s33, 1
      %p119 = por %p117, %p118
      %p120 = scmp.ne.s32.totalorder %s111, %s112
      %p121 = scmp.eq.s32.totalorder %s33, 0
      %p122 = por %p120, %p121
      %p123 = scmp.ne.s32.totalorder %s111, %s112
      %p124 = scmp.eq.s32.totalorder %s34, 1
      %p125 = por %p123, %p124
      %p127 = scmp.ne.s32.totalorder %s112, %s126
      %p128 = scmp.eq.s32.totalorder %s34, 0
      %p129 = por %p127, %p128
      %s131 = sadd.s32 %s130, 1
      %p134 = scmp.eq.s32.totalorder %s28, 1
      %p135 = scmp.ne.s32.totalorder %s130, %s132
      %p136 = scmp.eq.s32.totalorder %s28, 0
      %p137 = por %p135, %p136
      %p138 = scmp.ne.s32.totalorder %s130, %s132
      %p139 = scmp.eq.s32.totalorder %s33, 1
      %p140 = por %p138, %p139
      %p141 = scmp.ne.s32.totalorder %s132, %s133
      %p142 = scmp.eq.s32.totalorder %s33, 0
      %p143 = por %p141, %p142
      %p144 = scmp.ne.s32.totalorder %s132, %s133
      %p145 = scmp.eq.s32.totalorder %s34, 1
      %p146 = por %p144, %p145
      %p148 = scmp.ne.s32.totalorder %s133, %s147
      %p149 = scmp.eq.s32.totalorder %s34, 0
      %p150 = por %p148, %p149
      %s152 = sadd.s32 %s151, 1
      %p155 = scmp.eq.s32.totalorder %s28, 1
      %p156 = scmp.ne.s32.totalorder %s151, %s153
      %p157 = scmp.eq.s32.totalorder %s28, 0
      %p158 = por %p156, %p157
      %p159 = scmp.ne.s32.totalorder %s151, %s153
      %p160 = scmp.eq.s32.totalorder %s33, 1
      %p161 = por %p159, %p160
      %p162 = scmp.ne.s32.totalorder %s153, %s154
      %p163 = scmp.eq.s32.totalorder %s33, 0
      %p164 = por %p162, %p163
      %p165 = scmp.ne.s32.totalorder %s153, %s154
      %p166 = scmp.eq.s32.totalorder %s34, 1
      %p167 = por %p165, %p166
      %p169 = scmp.ne.s32.totalorder %s154, %s168
      %p170 = scmp.eq.s32.totalorder %s34, 0
      %p171 = por %p169, %p170
      %s173 = sadd.s32 %s172, 1
      %p176 = scmp.eq.s32.totalorder %s28, 1
      %p177 = scmp.ne.s32.totalorder %s172, %s174
      %p178 = scmp.eq.s32.totalorder %s28, 0
      %p179 = por %p177, %p178
      %p180 = scmp.ne.s32.totalorder %s172, %s174
      %p181 = scmp.eq.s32.totalorder %s33, 1
      %p182 = por %p180, %p181
      %p183 = scmp.ne.s32.totalorder %s174, %s175
      %p184 = scmp.eq.s32.totalorder %s33, 0
      %p185 = por %p183, %p184
      %p186 = scmp.ne.s32.totalorder %s174, %s175
      %p187 = scmp.eq.s32.totalorder %s34, 1
      %p188 = por %p186, %p187
      %p190 = scmp.ne.s32.totalorder %s175, %s189
      %p191 = scmp.eq.s32.totalorder %s34, 0
      %p192 = por %p190, %p191
      %s194 = sadd.s32 %s193, 1
      %p197 = scmp.eq.s32.totalorder %s28, 1
      %p198 = scmp.ne.s32.totalorder %s193, %s195
      %p199 = scmp.eq.s32.totalorder %s28, 0
      %p200 = por %p198, %p199
      %p201 = scmp.ne.s32.totalorder %s193, %s195
      %p202 = scmp.eq.s32.totalorder %s33, 1
      %p203 = por %p201, %p202
      %p204 = scmp.ne.s32.totalorder %s195, %s196
      %p205 = scmp.eq.s32.totalorder %s33, 0
      %p206 = por %p204, %p205
      %p207 = scmp.ne.s32.totalorder %s195, %s196
      %p208 = scmp.eq.s32.totalorder %s34, 1
      %p209 = por %p207, %p208
      %p211 = scmp.ne.s32.totalorder %s196, %s210
      %p212 = scmp.eq.s32.totalorder %s34, 0
      %p213 = por %p211, %p212
      %s215 = sadd.s32 %s214, 1
      %p218 = scmp.eq.s32.totalorder %s28, 1
      %p219 = scmp.ne.s32.totalorder %s214, %s216
      %p220 = scmp.eq.s32.totalorder %s28, 0
      %p221 = por %p219, %p220
      %p222 = scmp.ne.s32.totalorder %s214, %s216
      %p223 = scmp.eq.s32.totalorder %s33, 1
      %p224 = por %p222, %p223
      %p225 = scmp.ne.s32.totalorder %s216, %s217
      %p226 = scmp.eq.s32.totalorder %s33, 0
      %p227 = por %p225, %p226
      %p228 = scmp.ne.s32.totalorder %s216, %s217
      %p229 = scmp.eq.s32.totalorder %s34, 1
      %p230 = por %p228, %p229
      %p232 = scmp.ne.s32.totalorder %s217, %s231
      %p233 = scmp.eq.s32.totalorder %s34, 0
      %p234 = por %p232, %p233
      %s236 = sadd.s32 %s235, 1
      %p239 = scmp.eq.s32.totalorder %s28, 1
      %p240 = scmp.ne.s32.totalorder %s235, %s237
      %p241 = scmp.eq.s32.totalorder %s28, 0
      %p242 = por %p240, %p241
      %p243 = scmp.ne.s32.totalorder %s235, %s237
      %p244 = scmp.eq.s32.totalorder %s33, 1
      %p245 = por %p243, %p244
      %p246 = scmp.ne.s32.totalorder %s237, %s238
      %p247 = scmp.eq.s32.totalorder %s33, 0
      %p248 = por %p246, %p247
      %p249 = scmp.ne.s32.totalorder %s237, %s238
      %p250 = scmp.eq.s32.totalorder %s34, 1
      %p251 = por %p249, %p250
      %p253 = scmp.ne.s32.totalorder %s238, %s252
      %p254 = scmp.eq.s32.totalorder %s34, 0
      %p255 = por %p253, %p254
      %s257 = sadd.s32 %s256, 1
      %p260 = scmp.eq.s32.totalorder %s28, 1
      %p261 = scmp.ne.s32.totalorder %s256, %s258
      %p262 = scmp.eq.s32.totalorder %s28, 0
      %p263 = por %p261, %p262
      %p264 = scmp.ne.s32.totalorder %s256, %s258
      %p265 = scmp.eq.s32.totalorder %s33, 1
      %p266 = por %p264, %p265
      %p267 = scmp.ne.s32.totalorder %s258, %s259
      %p268 = scmp.eq.s32.totalorder %s33, 0
      %p269 = por %p267, %p268
      %p270 = scmp.ne.s32.totalorder %s258, %s259
      %p271 = scmp.eq.s32.totalorder %s34, 1
      %p272 = por %p270, %p271
      %p274 = scmp.ne.s32.totalorder %s259, %s273
      %p275 = scmp.eq.s32.totalorder %s34, 0
      %p276 = por %p274, %p275
      %s277 = ssub.s32 %s28, %s35
      %p278 = scmp.eq.s32.totalorder %s277, 0
      %s280 = sadd.s32 %s279, 1
      %s281 = scalar_select %p278, %s279, %s280
      %p284 = pneg %p278
      %p285 = scmp.eq.s32.totalorder %s28, 1
      %p286 = por %p284, %p285
      %p287 = scmp.ne.s32.totalorder %s279, %s282
      %p288 = scmp.eq.s32.totalorder %s28, 0
      %p289 = por %p287, %p288
      %p290 = scmp.ne.s32.totalorder %s279, %s282
      %p291 = scmp.eq.s32.totalorder %s33, 1
      %p292 = por %p290, %p291
      %p293 = scmp.ne.s32.totalorder %s282, %s283
      %p294 = scmp.eq.s32.totalorder %s33, 0
      %p295 = por %p293, %p294
      %p296 = scmp.ne.s32.totalorder %s282, %s283
      %p297 = scmp.eq.s32.totalorder %s34, 1
      %p298 = por %p296, %p297
      %p300 = scmp.ne.s32.totalorder %s283, %s299
      %p301 = scmp.eq.s32.totalorder %s34, 0
      %p302 = por %p300, %p301
      %p303 = scmp.le.s32.totalorder 1, %s28
      %p304 = scmp.lt.s32.totalorder %s28, 3
      %p305 = pnand %p303, %p304
      %p306 = pneg %p305
      // Predicated region
      $region9: #{tpu_custom_call.1} parent=5 // pred_check
        _
      $region10: #{tpu_custom_call.1} parent=5 // pred_check_branch
        %308 = sbr.rel (%p305) target = $region12
      $region11: #{tpu_custom_call.1} parent=5 // pred_region
        %s309 = ssub.s32 %s28, 1
        // Predicated region
        $region13: #{tpu_custom_call.1} parent=11 // pred_check
          %p310 = pneg %p101
        $region14: #{tpu_custom_call.1} parent=11 // pred_check_branch
          %312 = sbr.rel (%p310) target = $region16
        $region15: #{tpu_custom_call.1} parent=11 // pred_region
          %s314 = ssub.s32 4096, 4096
          %315 = vsyncadd [#allocation6], %s314
          %s316 = sshll.u32 [#allocation7], 4
          %s317 = int_to_ptr.vmem [resolvable:$true] %s316
          %322 = dma.hbm_to_vmem [thread:$0]  %s2, 4096, %s317, [#allocation6], 256, 256, 16
        $region16: #{tpu_custom_call.1} parent=11 // pred_fallthru
          _
        // Predicated region
        $region17: #{tpu_custom_call.1} parent=11 // pred_check
          %p323 = pneg %p122
        $region18: #{tpu_custom_call.1} parent=11 // pred_check_branch
          %325 = sbr.rel (%p323) target = $region20
        $region19: #{tpu_custom_call.1} parent=11 // pred_region
          %s327 = ssub.s32 4096, 4096
          %328 = vsyncadd [#allocation9], %s327
          %s329 = sshll.u32 [#allocation8], 4
          %s330 = int_to_ptr.vmem [resolvable:$true] %s329
          %335 = dma.hbm_to_vmem [thread:$0]  %s3, 4096, %s330, [#allocation9], 128, 128, 8
        $region20: #{tpu_custom_call.1} parent=11 // pred_fallthru
          _
        // Predicated region
        $region21: #{tpu_custom_call.1} parent=11 // pred_check
          %p336 = pneg %p143
        $region22: #{tpu_custom_call.1} parent=11 // pred_check_branch
          %338 = sbr.rel (%p336) target = $region24
        $region23: #{tpu_custom_call.1} parent=11 // pred_region
          _
        $region24: #{tpu_custom_call.1} parent=11 // pred_fallthru
          _
        // Predicated region
        $region25: #{tpu_custom_call.1} parent=11 // pred_check
          %p339 = pneg %p164
        $region26: #{tpu_custom_call.1} parent=11 // pred_check_branch
          %341 = sbr.rel (%p339) target = $region28
        $region27: #{tpu_custom_call.1} parent=11 // pred_region
          %s343 = ssub.s32 12288, 12288
          %344 = vsyncadd [#allocation9], %s343
          %s345 = sshll.u32 [#allocation10], 4
          %s346 = int_to_ptr.vmem [resolvable:$true] %s345
          %351 = dma.hbm_to_vmem [thread:$0]  %s5, 12288, %s346, [#allocation9], 128, 128, 8
        $region28: #{tpu_custom_call.1} parent=11 // pred_fallthru
          _
        // Predicated region
        $region29: #{tpu_custom_call.1} parent=11 // pred_check
          %p352 = pneg %p185
        $region30: #{tpu_custom_call.1} parent=11 // pred_check_branch
          %354 = sbr.rel (%p352) target = $region32
        $region31: #{tpu_custom_call.1} parent=11 // pred_region
          _
        $region32: #{tpu_custom_call.1} parent=11 // pred_fallthru
          _
        // Predicated region
        $region33: #{tpu_custom_call.1} parent=11 // pred_check
          %p355 = pneg %p206
        $region34: #{tpu_custom_call.1} parent=11 // pred_check_branch
          %357 = sbr.rel (%p355) target = $region36
        $region35: #{tpu_custom_call.1} parent=11 // pred_region
          _
        $region36: #{tpu_custom_call.1} parent=11 // pred_fallthru
          _
        // Predicated region
        $region37: #{tpu_custom_call.1} parent=11 // pred_check
          %p358 = pneg %p227
        $region38: #{tpu_custom_call.1} parent=11 // pred_check_branch
          %360 = sbr.rel (%p358) target = $region40
        $region39: #{tpu_custom_call.1} parent=11 // pred_region
          _
        $region40: #{tpu_custom_call.1} parent=11 // pred_fallthru
          _
        // Predicated region
        $region41: #{tpu_custom_call.1} parent=11 // pred_check
          %p361 = pneg %p248
        $region42: #{tpu_custom_call.1} parent=11 // pred_check_branch
          %363 = sbr.rel (%p361) target = $region44
        $region43: #{tpu_custom_call.1} parent=11 // pred_region
          %s365 = ssub.s32 2048, 2048
          %366 = vsyncadd [#allocation12], %s365
          %s367 = sshll.u32 [#allocation11], 4
          %s368 = int_to_ptr.vmem [resolvable:$true] %s367
          %373 = dma.hbm_to_vmem [thread:$0]  %s9, 2048, %s368, [#allocation12], 64, 64, 4
        $region44: #{tpu_custom_call.1} parent=11 // pred_fallthru
          _
        // Predicated region
        $region45: #{tpu_custom_call.1} parent=11 // pred_check
          %p374 = pneg %p269
        $region46: #{tpu_custom_call.1} parent=11 // pred_check_branch
          %376 = sbr.rel (%p374) target = $region48
        $region47: #{tpu_custom_call.1} parent=11 // pred_region
          _
        $region48: #{tpu_custom_call.1} parent=11 // pred_fallthru
          _
      $region12: #{tpu_custom_call.1} parent=5 // pred_fallthru
        _
      %p377 = scmp.lt.s32.totalorder %s28, 2
      // Predicated region
      $region49: #{tpu_custom_call.1} parent=5 // pred_check
        %p378 = pneg %p377
      $region50: #{tpu_custom_call.1} parent=5 // pred_check_branch
        %380 = sbr.rel (%p378) target = $region52
      $region51: #{tpu_custom_call.1} parent=5 // pred_region
        // Predicated region
        $region53: #{tpu_custom_call.1} parent=51 // pred_check
          %p381 = pneg %p48
        $region54: #{tpu_custom_call.1} parent=51 // pred_check_branch
          %383 = sbr.rel (%p381) target = $region56
        $region55: #{tpu_custom_call.1} parent=51 // pred_region
          %s384 = sand.u32 %s38, 1
          %s385 = scalar_lea.sflag [#allocation3], %s384
          %s386 = sand.u32 %s38, 1
          %s387 = smul.addr %s386, 256
          %s388 = scalar_lea.vmem [#allocation2], %s387
          %s389 = smul.u32 32, %s28
          %s391 = ssub.s32 4096, 4096
          %392 = vsyncadd %s385, %s391
          %s393 = smul.addr %s389, 128
          %s394 = scalar_lea.hbm %s0, %s393
          %s395 = sshll.u32 %s388, 4
          %s396 = int_to_ptr.vmem [resolvable:$true] %s395
          %401 = dma.hbm_to_vmem [thread:$0]  %s394, 4096, %s396, %s385, 128, 128, 8
        $region56: #{tpu_custom_call.1} parent=51 // pred_fallthru
          _
        // Predicated region
        $region57: #{tpu_custom_call.1} parent=51 // pred_check
          %p402 = pneg %p74
        $region58: #{tpu_custom_call.1} parent=51 // pred_check_branch
          %404 = sbr.rel (%p402) target = $region60
        $region59: #{tpu_custom_call.1} parent=51 // pred_region
          %s405 = sand.u32 %s28, 1
          %s406 = scalar_lea.sflag [#allocation6], %s405
          %s407 = sand.u32 %s64, 1
          %s408 = smul.addr %s407, 512
          %s409 = scalar_lea.vmem [#allocation5], %s408
          %s410 = smul.u32 32, %s28
          %s412 = ssub.s32 8192, 8192
          %413 = vsyncadd %s406, %s412
          %s414 = smul.addr %s410, 2
          %s415 = smul.addr %s414, 128
          %s416 = scalar_lea.hbm %s1, %s415
          %s417 = sshll.u32 %s409, 4
          %s418 = int_to_ptr.vmem [resolvable:$true] %s417
          %423 = dma.hbm_to_vmem [thread:$0]  %s416, 8192, %s418, %s406, 256, 256, 16
        $region60: #{tpu_custom_call.1} parent=51 // pred_fallthru
          _
      $region52: #{tpu_custom_call.1} parent=5 // pred_fallthru
        _
      %p424 = scmp.le.s32.totalorder 1, %s28
      %p425 = scmp.lt.s32.totalorder %s28, 3
      %p426 = pnand %p424, %p425
      %p427 = pneg %p426
      // Predicated region
      $region61: #{tpu_custom_call.1} parent=5 // pred_check
        _
      $region62: #{tpu_custom_call.1} parent=5 // pred_check_branch
        %429 = sbr.rel (%p426) target = $region64
      $region63: #{tpu_custom_call.1} parent=5 // pred_region
        %s430 = ssub.s32 %s28, 1
        %s431 = sand.u32 %s41, 1
        %s432 = scalar_lea.sflag [#allocation3], %s431
        %s433 = sand.u32 %s41, 1
        %s434 = smul.addr %s433, 256
        %s435 = scalar_lea.vmem [#allocation2], %s434
        // Predicated region
        $region65: #{tpu_custom_call.1} parent=63 // pred_check
          %p436 = pneg %p54
        $region66: #{tpu_custom_call.1} parent=63 // pred_check_branch
          %438 = sbr.rel (%p436) target = $region68
        $region67: #{tpu_custom_call.1} parent=63 // pred_region
          %439 = dma.done %s432, 4096
        $region68: #{tpu_custom_call.1} parent=63 // pred_fallthru
          _
        %s440 = sand.u32 %s33, 1
        %s441 = scalar_lea.sflag [#allocation6], %s440
        %s442 = sand.u32 %s67, 1
        %s443 = smul.addr %s442, 512
        %s444 = scalar_lea.vmem [#allocation5], %s443
        // Predicated region
        $region69: #{tpu_custom_call.1} parent=63 // pred_check
          %p445 = pneg %p80
        $region70: #{tpu_custom_call.1} parent=63 // pred_check_branch
          %447 = sbr.rel (%p445) target = $region72
        $region71: #{tpu_custom_call.1} parent=63 // pred_region
          %448 = dma.done %s441, 8192
        $region72: #{tpu_custom_call.1} parent=63 // pred_fallthru
          _
        // Predicated region
        $region73: #{tpu_custom_call.1} parent=63 // pred_check
          %p449 = pneg %p101
        $region74: #{tpu_custom_call.1} parent=63 // pred_check_branch
          %451 = sbr.rel (%p449) target = $region76
        $region75: #{tpu_custom_call.1} parent=63 // pred_region
          %452 = dma.done [#allocation6], 4096
        $region76: #{tpu_custom_call.1} parent=63 // pred_fallthru
          _
        // Predicated region
        $region77: #{tpu_custom_call.1} parent=63 // pred_check
          %p453 = pneg %p122
        $region78: #{tpu_custom_call.1} parent=63 // pred_check_branch
          %455 = sbr.rel (%p453) target = $region80
        $region79: #{tpu_custom_call.1} parent=63 // pred_region
          %456 = dma.done [#allocation9], 4096
        $region80: #{tpu_custom_call.1} parent=63 // pred_fallthru
          _
        // Predicated region
        $region81: #{tpu_custom_call.1} parent=63 // pred_check
          %p457 = pneg %p164
        $region82: #{tpu_custom_call.1} parent=63 // pred_check_branch
          %459 = sbr.rel (%p457) target = $region84
        $region83: #{tpu_custom_call.1} parent=63 // pred_region
          %460 = dma.done [#allocation9], 12288
        $region84: #{tpu_custom_call.1} parent=63 // pred_fallthru
          _
        // Predicated region
        $region85: #{tpu_custom_call.1} parent=63 // pred_check
          %p461 = pneg %p248
        $region86: #{tpu_custom_call.1} parent=63 // pred_check_branch
          %463 = sbr.rel (%p461) target = $region88
        $region87: #{tpu_custom_call.1} parent=63 // pred_region
          %464 = dma.done [#allocation12], 2048
        $region88: #{tpu_custom_call.1} parent=63 // pred_fallthru
          _
        %s465 = sand.u32 %s41, 1
        %s466 = scalar_lea.sflag [#allocation3], %s465
        %s467 = sand.u32 %s41, 1
        %s468 = smul.addr %s467, 256
        %s469 = scalar_lea.vmem [#allocation2], %s468
        %p470 = pneg %p54
        %p471 = pneg %p51
        %s472 = sand.u32 %s33, 1
        %s473 = scalar_lea.sflag [#allocation6], %s472
        %s474 = sand.u32 %s67, 1
        %s475 = smul.addr %s474, 512
        %s476 = scalar_lea.vmem [#allocation5], %s475
        %p477 = pneg %p80
        %p478 = pneg %p77
        %p479 = pneg %p101
        %p480 = pneg %p98
        %p481 = pneg %p122
        %p482 = pneg %p119
        %p483 = pneg %p143
        %p484 = pneg %p140
        %p485 = pneg %p164
        %p486 = pneg %p161
        %p487 = pneg %p185
        %p488 = pneg %p182
        %p489 = pneg %p206
        %p490 = pneg %p203
        %p491 = pneg %p227
        %p492 = pneg %p224
        %p493 = pneg %p248
        %p494 = pneg %p245
        %p495 = pneg %p269
        %p496 = pneg %p266
        %p497 = pneg %p295
        %p498 = pneg %p292
        %s499 = sand.u32 %s282, 1
        %s500 = scalar_lea.sflag [#allocation4], %s499
        %s501 = sand.u32 %s282, 1
        %s502 = smul.addr %s501, 128
        %s503 = scalar_lea.vmem [#allocation13], %s502
        %s504 = smul.u32 32, %s33
        %s505 = smul.u32 32, %s33
        %s506 = smul.u32 32, %s33
        %v508 = vld [vmem:[%s435] sm:$0xff]
        %v509 = vld [vmem:[%s435 + $0x8] sm:$0xff]
        %v510 = vld [vmem:[%s435 + $0x10] sm:$0xff]
        %v511 = vld [vmem:[%s435 + $0x18] sm:$0xff]
        %v512 = vld [vmem:[%s435 + $0x20] sm:$0xff]
        %v513 = vld [vmem:[%s435 + $0x28] sm:$0xff]
        %v514 = vld [vmem:[%s435 + $0x30] sm:$0xff]
        %v515 = vld [vmem:[%s435 + $0x38] sm:$0xff]
        %v516 = vld [vmem:[%s435 + $0x40] sm:$0xff]
        %v517 = vld [vmem:[%s435 + $0x48] sm:$0xff]
        %v518 = vld [vmem:[%s435 + $0x50] sm:$0xff]
        %v519 = vld [vmem:[%s435 + $0x58] sm:$0xff]
        %v520 = vld [vmem:[%s435 + $0x60] sm:$0xff]
        %v521 = vld [vmem:[%s435 + $0x68] sm:$0xff]
        %v522 = vld [vmem:[%s435 + $0x70] sm:$0xff]
        %v523 = vld [vmem:[%s435 + $0x78] sm:$0xff]
        %v524 = vld [vmem:[%s435 + $0x80] sm:$0xff]
        %v525 = vld [vmem:[%s435 + $0x88] sm:$0xff]
        %v526 = vld [vmem:[%s435 + $0x90] sm:$0xff]
        %v527 = vld [vmem:[%s435 + $0x98] sm:$0xff]
        %v528 = vld [vmem:[%s435 + $0xa0] sm:$0xff]
        %v529 = vld [vmem:[%s435 + $0xa8] sm:$0xff]
        %v530 = vld [vmem:[%s435 + $0xb0] sm:$0xff]
        %v531 = vld [vmem:[%s435 + $0xb8] sm:$0xff]
        %v532 = vld [vmem:[%s435 + $0xc0] sm:$0xff]
        %v533 = vld [vmem:[%s435 + $0xc8] sm:$0xff]
        %v534 = vld [vmem:[%s435 + $0xd0] sm:$0xff]
        %v535 = vld [vmem:[%s435 + $0xd8] sm:$0xff]
        %v536 = vld [vmem:[%s435 + $0xe0] sm:$0xff]
        %v537 = vld [vmem:[%s435 + $0xe8] sm:$0xff]
        %v538 = vld [vmem:[%s435 + $0xf0] sm:$0xff]
        %v539 = vld [vmem:[%s435 + $0xf8] sm:$0xff]
        %v540 = vld [vmem:[#allocation7] sm:$0xff]
        %v541 = vld [vmem:[#allocation7 + $0x8] sm:$0xff]
        %v542 = vld [vmem:[#allocation7 + $0x10] sm:$0xff]
        %v543 = vld [vmem:[#allocation7 + $0x18] sm:$0xff]
        %v544 = vld [vmem:[#allocation7 + $0x20] sm:$0xff]
        %v545 = vld [vmem:[#allocation7 + $0x28] sm:$0xff]
        %v546 = vld [vmem:[#allocation7 + $0x30] sm:$0xff]
        %v547 = vld [vmem:[#allocation7 + $0x38] sm:$0xff]
        %v548 = vld [vmem:[#allocation7 + $0x40] sm:$0xff]
        %v549 = vld [vmem:[#allocation7 + $0x48] sm:$0xff]
        %v550 = vld [vmem:[#allocation7 + $0x50] sm:$0xff]
        %v551 = vld [vmem:[#allocation7 + $0x58] sm:$0xff]
        %v552 = vld [vmem:[#allocation7 + $0x60] sm:$0xff]
        %v553 = vld [vmem:[#allocation7 + $0x68] sm:$0xff]
        %v554 = vld [vmem:[#allocation7 + $0x70] sm:$0xff]
        %v555 = vld [vmem:[#allocation7 + $0x78] sm:$0xff]
        %v556 = vld [vmem:[#allocation7 + $0x80] sm:$0xff]
        %v557 = vld [vmem:[#allocation7 + $0x88] sm:$0xff]
        %v558 = vld [vmem:[#allocation7 + $0x90] sm:$0xff]
        %v559 = vld [vmem:[#allocation7 + $0x98] sm:$0xff]
        %v560 = vld [vmem:[#allocation7 + $0xa0] sm:$0xff]
        %v561 = vld [vmem:[#allocation7 + $0xa8] sm:$0xff]
        %v562 = vld [vmem:[#allocation7 + $0xb0] sm:$0xff]
        %v563 = vld [vmem:[#allocation7 + $0xb8] sm:$0xff]
        %v564 = vld [vmem:[#allocation7 + $0xc0] sm:$0xff]
        %v565 = vld [vmem:[#allocation7 + $0xc8] sm:$0xff]
        %v566 = vld [vmem:[#allocation7 + $0xd0] sm:$0xff]
        %v567 = vld [vmem:[#allocation7 + $0xd8] sm:$0xff]
        %v568 = vld [vmem:[#allocation7 + $0xe0] sm:$0xff]
        %v569 = vld [vmem:[#allocation7 + $0xe8] sm:$0xff]
        %v570 = vld [vmem:[#allocation7 + $0xf0] sm:$0xff]
        %v571 = vld [vmem:[#allocation7 + $0xf8] sm:$0xff]
        %v572 = vld [vmem:[%s444] sm:$0xff]
        %v573 = vld [vmem:[%s444 + $0x8] sm:$0xff]
        %v574 = vld [vmem:[%s444 + $0x10] sm:$0xff]
        %v575 = vld [vmem:[%s444 + $0x18] sm:$0xff]
        %v576 = vld [vmem:[%s444 + $0x20] sm:$0xff]
        %v577 = vld [vmem:[%s444 + $0x28] sm:$0xff]
        %v578 = vld [vmem:[%s444 + $0x30] sm:$0xff]
        %v579 = vld [vmem:[%s444 + $0x38] sm:$0xff]
        %v580 = vld [vmem:[%s444 + $0x40] sm:$0xff]
        %v581 = vld [vmem:[%s444 + $0x48] sm:$0xff]
        %v582 = vld [vmem:[%s444 + $0x50] sm:$0xff]
        %v583 = vld [vmem:[%s444 + $0x58] sm:$0xff]
        %v584 = vld [vmem:[%s444 + $0x60] sm:$0xff]
        %v585 = vld [vmem:[%s444 + $0x68] sm:$0xff]
        %v586 = vld [vmem:[%s444 + $0x70] sm:$0xff]
        %v587 = vld [vmem:[%s444 + $0x78] sm:$0xff]
        %v588 = vld [vmem:[%s444 + $0x80] sm:$0xff]
        %v589 = vld [vmem:[%s444 + $0x88] sm:$0xff]
        %v590 = vld [vmem:[%s444 + $0x90] sm:$0xff]
        %v591 = vld [vmem:[%s444 + $0x98] sm:$0xff]
        %v592 = vld [vmem:[%s444 + $0xa0] sm:$0xff]
        %v593 = vld [vmem:[%s444 + $0xa8] sm:$0xff]
        %v594 = vld [vmem:[%s444 + $0xb0] sm:$0xff]
        %v595 = vld [vmem:[%s444 + $0xb8] sm:$0xff]
        %v596 = vld [vmem:[%s444 + $0xc0] sm:$0xff]
        %v597 = vld [vmem:[%s444 + $0xc8] sm:$0xff]
        %v598 = vld [vmem:[%s444 + $0xd0] sm:$0xff]
        %v599 = vld [vmem:[%s444 + $0xd8] sm:$0xff]
        %v600 = vld [vmem:[%s444 + $0xe0] sm:$0xff]
        %v601 = vld [vmem:[%s444 + $0xe8] sm:$0xff]
        %v602 = vld [vmem:[%s444 + $0xf0] sm:$0xff]
        %v603 = vld [vmem:[%s444 + $0xf8] sm:$0xff]
        %v604 = vld [vmem:[%s444 + $0x100] sm:$0xff]
        %v605 = vld [vmem:[%s444 + $0x108] sm:$0xff]
        %v606 = vld [vmem:[%s444 + $0x110] sm:$0xff]
        %v607 = vld [vmem:[%s444 + $0x118] sm:$0xff]
        %v608 = vld [vmem:[%s444 + $0x120] sm:$0xff]
        %v609 = vld [vmem:[%s444 + $0x128] sm:$0xff]
        %v610 = vld [vmem:[%s444 + $0x130] sm:$0xff]
        %v611 = vld [vmem:[%s444 + $0x138] sm:$0xff]
        %v612 = vld [vmem:[%s444 + $0x140] sm:$0xff]
        %v613 = vld [vmem:[%s444 + $0x148] sm:$0xff]
        %v614 = vld [vmem:[%s444 + $0x150] sm:$0xff]
        %v615 = vld [vmem:[%s444 + $0x158] sm:$0xff]
        %v616 = vld [vmem:[%s444 + $0x160] sm:$0xff]
        %v617 = vld [vmem:[%s444 + $0x168] sm:$0xff]
        %v618 = vld [vmem:[%s444 + $0x170] sm:$0xff]
        %v619 = vld [vmem:[%s444 + $0x178] sm:$0xff]
        %v620 = vld [vmem:[%s444 + $0x180] sm:$0xff]
        %v621 = vld [vmem:[%s444 + $0x188] sm:$0xff]
        %v622 = vld [vmem:[%s444 + $0x190] sm:$0xff]
        %v623 = vld [vmem:[%s444 + $0x198] sm:$0xff]
        %v624 = vld [vmem:[%s444 + $0x1a0] sm:$0xff]
        %v625 = vld [vmem:[%s444 + $0x1a8] sm:$0xff]
        %v626 = vld [vmem:[%s444 + $0x1b0] sm:$0xff]
        %v627 = vld [vmem:[%s444 + $0x1b8] sm:$0xff]
        %v628 = vld [vmem:[%s444 + $0x1c0] sm:$0xff]
        %v629 = vld [vmem:[%s444 + $0x1c8] sm:$0xff]
        %v630 = vld [vmem:[%s444 + $0x1d0] sm:$0xff]
        %v631 = vld [vmem:[%s444 + $0x1d8] sm:$0xff]
        %v632 = vld [vmem:[%s444 + $0x1e0] sm:$0xff]
        %v633 = vld [vmem:[%s444 + $0x1e8] sm:$0xff]
        %v634 = vld [vmem:[%s444 + $0x1f0] sm:$0xff]
        %v635 = vld [vmem:[%s444 + $0x1f8] sm:$0xff]
        %v636 = vpack.c.bf16 %v574, %v572
        %v637 = vpack.c.bf16 %v575, %v573
        %v638 = vpack.c.bf16 %v578, %v576
        %v639 = vpack.c.bf16 %v579, %v577
        %v640 = vpack.c.bf16 %v582, %v580
        %v641 = vpack.c.bf16 %v583, %v581
        %v642 = vpack.c.bf16 %v586, %v584
        %v643 = vpack.c.bf16 %v587, %v585
        %v644 = vpack.c.bf16 %v590, %v588
        %v645 = vpack.c.bf16 %v591, %v589
        %v646 = vpack.c.bf16 %v594, %v592
        %v647 = vpack.c.bf16 %v595, %v593
        %v648 = vpack.c.bf16 %v598, %v596
        %v649 = vpack.c.bf16 %v599, %v597
        %v650 = vpack.c.bf16 %v602, %v600
        %v651 = vpack.c.bf16 %v603, %v601
        %v652 = vpack.c.bf16 %v606, %v604
        %v653 = vpack.c.bf16 %v607, %v605
        %v654 = vpack.c.bf16 %v610, %v608
        %v655 = vpack.c.bf16 %v611, %v609
        %v656 = vpack.c.bf16 %v614, %v612
        %v657 = vpack.c.bf16 %v615, %v613
        %v658 = vpack.c.bf16 %v618, %v616
        %v659 = vpack.c.bf16 %v619, %v617
        %v660 = vpack.c.bf16 %v622, %v620
        %v661 = vpack.c.bf16 %v623, %v621
        %v662 = vpack.c.bf16 %v626, %v624
        %v663 = vpack.c.bf16 %v627, %v625
        %v664 = vpack.c.bf16 %v630, %v628
        %v665 = vpack.c.bf16 %v631, %v629
        %v666 = vpack.c.bf16 %v634, %v632
        %v667 = vpack.c.bf16 %v635, %v633
        %v668 = vld [vmem:[#allocation8] sm:$0xff]
        %v669 = vld [vmem:[#allocation8 + $0x8] sm:$0xff]
        %v670 = vld [vmem:[#allocation8 + $0x10] sm:$0xff]
        %v671 = vld [vmem:[#allocation8 + $0x18] sm:$0xff]
        %v672 = vld [vmem:[#allocation8 + $0x20] sm:$0xff]
        %v673 = vld [vmem:[#allocation8 + $0x28] sm:$0xff]
        %v674 = vld [vmem:[#allocation8 + $0x30] sm:$0xff]
        %v675 = vld [vmem:[#allocation8 + $0x38] sm:$0xff]
        %v676 = vld [vmem:[#allocation8 + $0x40] sm:$0xff]
        %v677 = vld [vmem:[#allocation8 + $0x48] sm:$0xff]
        %v678 = vld [vmem:[#allocation8 + $0x50] sm:$0xff]
        %v679 = vld [vmem:[#allocation8 + $0x58] sm:$0xff]
        %v680 = vld [vmem:[#allocation8 + $0x60] sm:$0xff]
        %v681 = vld [vmem:[#allocation8 + $0x68] sm:$0xff]
        %v682 = vld [vmem:[#allocation8 + $0x70] sm:$0xff]
        %v683 = vld [vmem:[#allocation8 + $0x78] sm:$0xff]
        %v684 = vld [vmem:[#allocation8 + $0x80] sm:$0xff]
        %v685 = vld [vmem:[#allocation8 + $0x88] sm:$0xff]
        %v686 = vld [vmem:[#allocation8 + $0x90] sm:$0xff]
        %v687 = vld [vmem:[#allocation8 + $0x98] sm:$0xff]
        %v688 = vld [vmem:[#allocation8 + $0xa0] sm:$0xff]
        %v689 = vld [vmem:[#allocation8 + $0xa8] sm:$0xff]
        %v690 = vld [vmem:[#allocation8 + $0xb0] sm:$0xff]
        %v691 = vld [vmem:[#allocation8 + $0xb8] sm:$0xff]
        %v692 = vld [vmem:[#allocation8 + $0xc0] sm:$0xff]
        %v693 = vld [vmem:[#allocation8 + $0xc8] sm:$0xff]
        %v694 = vld [vmem:[#allocation8 + $0xd0] sm:$0xff]
        %v695 = vld [vmem:[#allocation8 + $0xd8] sm:$0xff]
        %v696 = vld [vmem:[#allocation8 + $0xe0] sm:$0xff]
        %v697 = vld [vmem:[#allocation8 + $0xe8] sm:$0xff]
        %v698 = vld [vmem:[#allocation8 + $0xf0] sm:$0xff]
        %v699 = vld [vmem:[#allocation8 + $0xf8] sm:$0xff]
        %v732 = vunpack.c.l.b16 %v668
        %v733 = vunpack.c.h.b16 %v668
        %v734 = vunpack.c.l.b16 %v669
        %v735 = vunpack.c.h.b16 %v669
        %v736 = vunpack.c.l.b16 %v670
        %v737 = vunpack.c.h.b16 %v670
        %v738 = vunpack.c.l.b16 %v671
        %v739 = vunpack.c.h.b16 %v671
        %v740 = vunpack.c.l.b16 %v672
        %v741 = vunpack.c.h.b16 %v672
        %v742 = vunpack.c.l.b16 %v673
        %v743 = vunpack.c.h.b16 %v673
        %v744 = vunpack.c.l.b16 %v674
        %v745 = vunpack.c.h.b16 %v674
        %v746 = vunpack.c.l.b16 %v675
        %v747 = vunpack.c.h.b16 %v675
        %v748 = vunpack.c.l.b16 %v676
        %v749 = vunpack.c.h.b16 %v676
        %v750 = vunpack.c.l.b16 %v677
        %v751 = vunpack.c.h.b16 %v677
        %v752 = vunpack.c.l.b16 %v678
        %v753 = vunpack.c.h.b16 %v678
        %v754 = vunpack.c.l.b16 %v679
        %v755 = vunpack.c.h.b16 %v679
        %v756 = vunpack.c.l.b16 %v680
        %v757 = vunpack.c.h.b16 %v680
        %v758 = vunpack.c.l.b16 %v681
        %v759 = vunpack.c.h.b16 %v681
        %v760 = vunpack.c.l.b16 %v682
        %v761 = vunpack.c.h.b16 %v682
        %v762 = vunpack.c.l.b16 %v683
        %v763 = vunpack.c.h.b16 %v683
        %v764 = vunpack.c.l.b16 %v684
        %v765 = vunpack.c.h.b16 %v684
        %v766 = vunpack.c.l.b16 %v685
        %v767 = vunpack.c.h.b16 %v685
        %v768 = vunpack.c.l.b16 %v686
        %v769 = vunpack.c.h.b16 %v686
        %v770 = vunpack.c.l.b16 %v687
        %v771 = vunpack.c.h.b16 %v687
        %v772 = vunpack.c.l.b16 %v688
        %v773 = vunpack.c.h.b16 %v688
        %v774 = vunpack.c.l.b16 %v689
        %v775 = vunpack.c.h.b16 %v689
        %v776 = vunpack.c.l.b16 %v690
        %v777 = vunpack.c.h.b16 %v690
        %v778 = vunpack.c.l.b16 %v691
        %v779 = vunpack.c.h.b16 %v691
        %v780 = vunpack.c.l.b16 %v692
        %v781 = vunpack.c.h.b16 %v692
        %v782 = vunpack.c.l.b16 %v693
        %v783 = vunpack.c.h.b16 %v693
        %v784 = vunpack.c.l.b16 %v694
        %v785 = vunpack.c.h.b16 %v694
        %v786 = vunpack.c.l.b16 %v695
        %v787 = vunpack.c.h.b16 %v695
        %v788 = vunpack.c.l.b16 %v696
        %v789 = vunpack.c.h.b16 %v696
        %v790 = vunpack.c.l.b16 %v697
        %v791 = vunpack.c.h.b16 %v697
        %v792 = vunpack.c.l.b16 %v698
        %v793 = vunpack.c.h.b16 %v698
        %v794 = vunpack.c.l.b16 %v699
        %v795 = vunpack.c.h.b16 %v699
        %v796 = vpack.c.b16 %v734, %v732
        %v797 = vpack.c.b16 %v735, %v733
        %v798 = vpack.c.b16 %v738, %v736
        %v799 = vpack.c.b16 %v739, %v737
        %v800 = vpack.c.b16 %v742, %v740
        %v801 = vpack.c.b16 %v743, %v741
        %v802 = vpack.c.b16 %v746, %v744
        %v803 = vpack.c.b16 %v747, %v745
        %v804 = vpack.c.b16 %v750, %v748
        %v805 = vpack.c.b16 %v751, %v749
        %v806 = vpack.c.b16 %v754, %v752
        %v807 = vpack.c.b16 %v755, %v753
        %v808 = vpack.c.b16 %v758, %v756
        %v809 = vpack.c.b16 %v759, %v757
        %v810 = vpack.c.b16 %v762, %v760
        %v811 = vpack.c.b16 %v763, %v761
        %v812 = vpack.c.b16 %v766, %v764
        %v813 = vpack.c.b16 %v767, %v765
        %v814 = vpack.c.b16 %v770, %v768
        %v815 = vpack.c.b16 %v771, %v769
        %v816 = vpack.c.b16 %v774, %v772
        %v817 = vpack.c.b16 %v775, %v773
        %v818 = vpack.c.b16 %v778, %v776
        %v819 = vpack.c.b16 %v779, %v777
        %v820 = vpack.c.b16 %v782, %v780
        %v821 = vpack.c.b16 %v783, %v781
        %v822 = vpack.c.b16 %v786, %v784
        %v823 = vpack.c.b16 %v787, %v785
        %v824 = vpack.c.b16 %v790, %v788
        %v825 = vpack.c.b16 %v791, %v789
        %v826 = vpack.c.b16 %v794, %v792
        %v827 = vpack.c.b16 %v795, %v793
        %860 = vmatprep.subr.bf16.mxu0 %v797
        %861 = vmatpush1.bf16.msra.mxu0 %v796
        %862 = vmatprep.subr.bf16.mxu0 %v799
        %863 = vmatpush1.bf16.msra.mxu0 %v798
        %864 = vmatprep.subr.bf16.mxu0 %v801
        %865 = vmatpush1.bf16.msra.mxu0 %v800
        %866 = vmatprep.subr.bf16.mxu0 %v803
        %867 = vmatpush1.bf16.msra.mxu0 %v802
        %868 = vmatprep.subr.bf16.mxu0 %v805
        %869 = vmatpush1.bf16.msra.mxu0 %v804
        %870 = vmatprep.subr.bf16.mxu0 %v807
        %871 = vmatpush1.bf16.msra.mxu0 %v806
        %872 = vmatprep.subr.bf16.mxu0 %v809
        %873 = vmatpush1.bf16.msra.mxu0 %v808
        %874 = vmatprep.subr.bf16.mxu0 %v811
        %875 = vmatpush1.bf16.msra.mxu0 %v810
        %876 = vmatprep.subr.bf16.mxu0 %v813
        %877 = vmatpush1.bf16.msra.mxu0 %v812
        %878 = vmatprep.subr.bf16.mxu0 %v815
        %879 = vmatpush1.bf16.msra.mxu0 %v814
        %880 = vmatprep.subr.bf16.mxu0 %v817
        %881 = vmatpush1.bf16.msra.mxu0 %v816
        %882 = vmatprep.subr.bf16.mxu0 %v819
        %883 = vmatpush1.bf16.msra.mxu0 %v818
        %884 = vmatprep.subr.bf16.mxu0 %v821
        %885 = vmatpush1.bf16.msra.mxu0 %v820
        %886 = vmatprep.subr.bf16.mxu0 %v823
        %887 = vmatpush1.bf16.msra.mxu0 %v822
        %888 = vmatprep.subr.bf16.mxu0 %v825
        %889 = vmatpush1.bf16.msra.mxu0 %v824
        %890 = vmatprep.subr.bf16.mxu0 %v827
        %891 = vmatpush1.bf16.msra.mxu0 %v826
        %892 = vmatprep.mubr.bf16.mxu0 %v637
        %893 = vmatmul.mubr.bf16.gmra.mrb[0].mxu0 %v636
        %v894 = vpop.f32.mrb[0].mxu0
        %v895 = vadd.f32 0.0, %v894
        %v896 = vpop.f32.mrb[0].mxu0
        %v897 = vadd.f32 0.0, %v896
        %v898 = vpop.f32.mrb[0].mxu0
        %v899 = vadd.f32 0.0, %v898
        %v900 = vpop.f32.mrb[0].mxu0
        %v901 = vadd.f32 0.0, %v900
        %902 = vmatprep.mubr.bf16.mxu0 %v639
        %903 = vmatmul.mubr.bf16.gmra.mrb[0].mxu0 %v638
        %v904 = vpop.f32.mrb[0].mxu0
        %v905 = vadd.f32 0.0, %v904
        %v906 = vpop.f32.mrb[0].mxu0
        %v907 = vadd.f32 0.0, %v906
        %v908 = vpop.f32.mrb[0].mxu0
        %v909 = vadd.f32 0.0, %v908
        %v910 = vpop.f32.mrb[0].mxu0
        %v911 = vadd.f32 0.0, %v910
        %912 = vmatprep.mubr.bf16.mxu0 %v641
        %913 = vmatmul.mubr.bf16.gmra.mrb[0].mxu0 %v640
        %v914 = vpop.f32.mrb[0].mxu0
        %v915 = vadd.f32 0.0, %v914
        %v916 = vpop.f32.mrb[0].mxu0
        %v917 = vadd.f32 0.0, %v916
        %v918 = vpop.f32.mrb[0].mxu0
        %v919 = vadd.f32 0.0, %v918
        %v920 = vpop.f32.mrb[0].mxu0
        %v921 = vadd.f32 0.0, %v920
        %922 = vmatprep.mubr.bf16.mxu0 %v643
        %923 = vmatmul.mubr.bf16.gmra.mrb[0].mxu0 %v642
        %v924 = vpop.f32.mrb[0].mxu0
        %v925 = vadd.f32 0.0, %v924
        %v926 = vpop.f32.mrb[0].mxu0
        %v927 = vadd.f32 0.0, %v926
        %v928 = vpop.f32.mrb[0].mxu0
        %v929 = vadd.f32 0.0, %v928
        %v930 = vpop.f32.mrb[0].mxu0
        %v931 = vadd.f32 0.0, %v930
        %932 = vmatprep.mubr.bf16.mxu0 %v645
        %933 = vmatmul.mubr.bf16.gmra.mrb[0].mxu0 %v644
        %v934 = vpop.f32.mrb[0].mxu0
        %v935 = vadd.f32 0.0, %v934
        %v936 = vpop.f32.mrb[0].mxu0
        %v937 = vadd.f32 0.0, %v936
        %v938 = vpop.f32.mrb[0].mxu0
        %v939 = vadd.f32 0.0, %v938
        %v940 = vpop.f32.mrb[0].mxu0
        %v941 = vadd.f32 0.0, %v940
        %942 = vmatprep.mubr.bf16.mxu0 %v647
        %943 = vmatmul.mubr.bf16.gmra.mrb[0].mxu0 %v646
        %v944 = vpop.f32.mrb[0].mxu0
        %v945 = vadd.f32 0.0, %v944
        %v946 = vpop.f32.mrb[0].mxu0
        %v947 = vadd.f32 0.0, %v946
        %v948 = vpop.f32.mrb[0].mxu0
        %v949 = vadd.f32 0.0, %v948
        %v950 = vpop.f32.mrb[0].mxu0
        %v951 = vadd.f32 0.0, %v950
        %952 = vmatprep.mubr.bf16.mxu0 %v649
        %953 = vmatmul.mubr.bf16.gmra.mrb[0].mxu0 %v648
        %v954 = vpop.f32.mrb[0].mxu0
        %v955 = vadd.f32 0.0, %v954
        %v956 = vpop.f32.mrb[0].mxu0
        %v957 = vadd.f32 0.0, %v956
        %v958 = vpop.f32.mrb[0].mxu0
        %v959 = vadd.f32 0.0, %v958
        %v960 = vpop.f32.mrb[0].mxu0
        %v961 = vadd.f32 0.0, %v960
        %962 = vmatprep.mubr.bf16.mxu0 %v651
        %963 = vmatmul.mubr.bf16.gmra.mrb[0].mxu0 %v650
        %v964 = vpop.f32.mrb[0].mxu0
        %v965 = vadd.f32 0.0, %v964
        %v966 = vpop.f32.mrb[0].mxu0
        %v967 = vadd.f32 0.0, %v966
        %v968 = vpop.f32.mrb[0].mxu0
        %v969 = vadd.f32 0.0, %v968
        %v970 = vpop.f32.mrb[0].mxu0
        %v971 = vadd.f32 0.0, %v970
        %972 = vmatprep.mubr.bf16.mxu0 %v653
        %973 = vmatmul.mubr.bf16.gmra.mrb[0].mxu0 %v652
        %v974 = vpop.f32.mrb[0].mxu0
        %v975 = vadd.f32 0.0, %v974
        %v976 = vpop.f32.mrb[0].mxu0
        %v977 = vadd.f32 0.0, %v976
        %v978 = vpop.f32.mrb[0].mxu0
        %v979 = vadd.f32 0.0, %v978
        %v980 = vpop.f32.mrb[0].mxu0
        %v981 = vadd.f32 0.0, %v980
        %982 = vmatprep.mubr.bf16.mxu0 %v655
        %983 = vmatmul.mubr.bf16.gmra.mrb[0].mxu0 %v654
        %v984 = vpop.f32.mrb[0].mxu0
        %v985 = vadd.f32 0.0, %v984
        %v986 = vpop.f32.mrb[0].mxu0
        %v987 = vadd.f32 0.0, %v986
        %v988 = vpop.f32.mrb[0].mxu0
        %v989 = vadd.f32 0.0, %v988
        %v990 = vpop.f32.mrb[0].mxu0
        %v991 = vadd.f32 0.0, %v990
        %992 = vmatprep.mubr.bf16.mxu0 %v657
        %993 = vmatmul.mubr.bf16.gmra.mrb[0].mxu0 %v656
        %v994 = vpop.f32.mrb[0].mxu0
        %v995 = vadd.f32 0.0, %v994
        %v996 = vpop.f32.mrb[0].mxu0
        %v997 = vadd.f32 0.0, %v996
        %v998 = vpop.f32.mrb[0].mxu0
        %v999 = vadd.f32 0.0, %v998
        %v1000 = vpop.f32.mrb[0].mxu0
        %v1001 = vadd.f32 0.0, %v1000
        %1002 = vmatprep.mubr.bf16.mxu0 %v659
        %1003 = vmatmul.mubr.bf16.gmra.mrb[0].mxu0 %v658
        %v1004 = vpop.f32.mrb[0].mxu0
        %v1005 = vadd.f32 0.0, %v1004
        %v1006 = vpop.f32.mrb[0].mxu0
        %v1007 = vadd.f32 0.0, %v1006
        %v1008 = vpop.f32.mrb[0].mxu0
        %v1009 = vadd.f32 0.0, %v1008
        %v1010 = vpop.f32.mrb[0].mxu0
        %v1011 = vadd.f32 0.0, %v1010
        %1012 = vmatprep.mubr.bf16.mxu0 %v661
        %1013 = vmatmul.mubr.bf16.gmra.mrb[0].mxu0 %v660
        %v1014 = vpop.f32.mrb[0].mxu0
        %v1015 = vadd.f32 0.0, %v1014
        %v1016 = vpop.f32.mrb[0].mxu0
        %v1017 = vadd.f32 0.0, %v1016
        %v1018 = vpop.f32.mrb[0].mxu0
        %v1019 = vadd.f32 0.0, %v1018
        %v1020 = vpop.f32.mrb[0].mxu0
        %v1021 = vadd.f32 0.0, %v1020
        %1022 = vmatprep.mubr.bf16.mxu0 %v663
        %1023 = vmatmul.mubr.bf16.gmra.mrb[0].mxu0 %v662
        %v1024 = vpop.f32.mrb[0].mxu0
        %v1025 = vadd.f32 0.0, %v1024
        %v1026 = vpop.f32.mrb[0].mxu0
        %v1027 = vadd.f32 0.0, %v1026
        %v1028 = vpop.f32.mrb[0].mxu0
        %v1029 = vadd.f32 0.0, %v1028
        %v1030 = vpop.f32.mrb[0].mxu0
        %v1031 = vadd.f32 0.0, %v1030
        %1032 = vmatprep.mubr.bf16.mxu0 %v665
        %1033 = vmatmul.mubr.bf16.gmra.mrb[0].mxu0 %v664
        %v1034 = vpop.f32.mrb[0].mxu0
        %v1035 = vadd.f32 0.0, %v1034
        %v1036 = vpop.f32.mrb[0].mxu0
        %v1037 = vadd.f32 0.0, %v1036
        %v1038 = vpop.f32.mrb[0].mxu0
        %v1039 = vadd.f32 0.0, %v1038
        %v1040 = vpop.f32.mrb[0].mxu0
        %v1041 = vadd.f32 0.0, %v1040
        %1042 = vmatprep.mubr.bf16.mxu0 %v667
        %1043 = vmatmul.mubr.bf16.gmra.mrb[0].mxu0 %v666
        %v1044 = vpop.f32.mrb[0].mxu0
        %v1045 = vadd.f32 0.0, %v1044
        %v1046 = vpop.f32.mrb[0].mxu0
        %v1047 = vadd.f32 0.0, %v1046
        %v1048 = vpop.f32.mrb[0].mxu0
        %v1049 = vadd.f32 0.0, %v1048
        %v1050 = vpop.f32.mrb[0].mxu0
        %v1051 = vadd.f32 0.0, %v1050
        %1052 = vdwg.mxu0
        %1053 = vmatprep.subr.mxu0 %v541
        %1054 = vmatpush1.msra.mxu0 %v540
        %1055 = vmatprep.subr.mxu0 %v543
        %1056 = vmatpush1.msra.mxu0 %v542
        %1057 = vmatprep.subr.mxu0 %v545
        %1058 = vmatpush1.msra.mxu0 %v544
        %1059 = vmatprep.subr.mxu0 %v547
        %1060 = vmatpush1.msra.mxu0 %v546
        %1061 = vmatprep.subr.mxu0 %v549
        %1062 = vmatpush1.msra.mxu0 %v548
        %1063 = vmatprep.subr.mxu0 %v551
        %1064 = vmatpush1.msra.mxu0 %v550
        %1065 = vmatprep.subr.mxu0 %v553
        %1066 = vmatpush1.msra.mxu0 %v552
        %1067 = vmatprep.subr.mxu0 %v555
        %1068 = vmatpush1.msra.mxu0 %v554
        %1069 = vmatprep.subr.mxu0 %v557
        %1070 = vmatpush1.msra.mxu0 %v556
        %1071 = vmatprep.subr.mxu0 %v559
        %1072 = vmatpush1.msra.mxu0 %v558
        %1073 = vmatprep.subr.mxu0 %v561
        %1074 = vmatpush1.msra.mxu0 %v560
        %1075 = vmatprep.subr.mxu0 %v563
        %1076 = vmatpush1.msra.mxu0 %v562
        %1077 = vmatprep.subr.mxu0 %v565
        %1078 = vmatpush1.msra.mxu0 %v564
        %1079 = vmatprep.subr.mxu0 %v567
        %1080 = vmatpush1.msra.mxu0 %v566
        %1081 = vmatprep.subr.mxu0 %v569
        %1082 = vmatpush1.msra.mxu0 %v568
        %1083 = vmatprep.subr.mxu0 %v571
        %1084 = vmatpush1.msra.mxu0 %v570
        %1085 = vmatprep.subr.mxu0 0.0
        %1086 = vmatpush1.msra.mxu0 0.0
        %1087 = vmatprep.subr.mxu0 0.0
        %1088 = vmatpush1.msra.mxu0 0.0
        %1089 = vmatprep.subr.mxu0 0.0
        %1090 = vmatpush1.msra.mxu0 0.0
        %1091 = vmatprep.subr.mxu0 0.0
        %1092 = vmatpush1.msra.mxu0 0.0
        %1093 = vmatprep.subr.mxu0 0.0
        %1094 = vmatpush1.msra.mxu0 0.0
        %1095 = vmatprep.subr.mxu0 0.0
        %1096 = vmatpush1.msra.mxu0 0.0
        %1097 = vmatprep.subr.mxu0 0.0
        %1098 = vmatpush1.msra.mxu0 0.0
        %1099 = vmatprep.subr.mxu0 0.0
        %1100 = vmatpush1.msra.mxu0 0.0
        %1101 = vmatprep.subr.mxu0 0.0
        %1102 = vmatpush1.msra.mxu0 0.0
        %1103 = vmatprep.subr.mxu0 0.0
        %1104 = vmatpush1.msra.mxu0 0.0
        %1105 = vmatprep.subr.mxu0 0.0
        %1106 = vmatpush1.msra.mxu0 0.0
        %1107 = vmatprep.subr.mxu0 0.0
        %1108 = vmatpush1.msra.mxu0 0.0
        %1109 = vmatprep.subr.mxu0 0.0
        %1110 = vmatpush1.msra.mxu0 0.0
        %1111 = vmatprep.subr.mxu0 0.0
        %1112 = vmatpush1.msra.mxu0 0.0
        %1113 = vmatprep.subr.mxu0 0.0
        %1114 = vmatpush1.msra.mxu0 0.0
        %1115 = vmatprep.subr.mxu0 0.0
        %1116 = vmatpush1.msra.mxu0 0.0
        %1117 = vmatprep.mubr.f32.mxu0 0.0
        %1118 = vmatmul.mubr.f32.gmra.mrb[0].mxu0 %v508
        %v1119 = vpop.f32.mrb[0].mxu0
        %v1120 = vadd.f32 %v895, %v1119
        %v1121 = vpop.f32.mrb[0].mxu0
        %v1122 = vadd.f32 %v897, %v1121
        %1123 = vmatprep.mubr.f32.mxu0 0.0
        %1124 = vmatmul.mubr.f32.gmra.mrb[0].mxu0 %v509
        %v1125 = vpop.f32.mrb[0].mxu0
        %v1126 = vadd.f32 %v899, %v1125
        %v1127 = vpop.f32.mrb[0].mxu0
        %v1128 = vadd.f32 %v901, %v1127
        %1129 = vmatprep.mubr.f32.mxu0 0.0
        %1130 = vmatmul.mubr.f32.gmra.mrb[0].mxu0 %v510
        %v1131 = vpop.f32.mrb[0].mxu0
        %v1132 = vadd.f32 %v905, %v1131
        %v1133 = vpop.f32.mrb[0].mxu0
        %v1134 = vadd.f32 %v907, %v1133
        %1135 = vmatprep.mubr.f32.mxu0 0.0
        %1136 = vmatmul.mubr.f32.gmra.mrb[0].mxu0 %v511
        %v1137 = vpop.f32.mrb[0].mxu0
        %v1138 = vadd.f32 %v909, %v1137
        %v1139 = vpop.f32.mrb[0].mxu0
        %v1140 = vadd.f32 %v911, %v1139
        %1141 = vmatprep.mubr.f32.mxu0 0.0
        %1142 = vmatmul.mubr.f32.gmra.mrb[0].mxu0 %v512
        %v1143 = vpop.f32.mrb[0].mxu0
        %v1144 = vadd.f32 %v915, %v1143
        %v1145 = vpop.f32.mrb[0].mxu0
        %v1146 = vadd.f32 %v917, %v1145
        %1147 = vmatprep.mubr.f32.mxu0 0.0
        %1148 = vmatmul.mubr.f32.gmra.mrb[0].mxu0 %v513
        %v1149 = vpop.f32.mrb[0].mxu0
        %v1150 = vadd.f32 %v919, %v1149
        %v1151 = vpop.f32.mrb[0].mxu0
        %v1152 = vadd.f32 %v921, %v1151
        %1153 = vmatprep.mubr.f32.mxu0 0.0
        %1154 = vmatmul.mubr.f32.gmra.mrb[0].mxu0 %v514
        %v1155 = vpop.f32.mrb[0].mxu0
        %v1156 = vadd.f32 %v925, %v1155
        %v1157 = vpop.f32.mrb[0].mxu0
        %v1158 = vadd.f32 %v927, %v1157
        %1159 = vmatprep.mubr.f32.mxu0 0.0
        %1160 = vmatmul.mubr.f32.gmra.mrb[0].mxu0 %v515
        %v1161 = vpop.f32.mrb[0].mxu0
        %v1162 = vadd.f32 %v929, %v1161
        %v1163 = vpop.f32.mrb[0].mxu0
        %v1164 = vadd.f32 %v931, %v1163
        %1165 = vmatprep.mubr.f32.mxu0 0.0
        %1166 = vmatmul.mubr.f32.gmra.mrb[0].mxu0 %v516
        %v1167 = vpop.f32.mrb[0].mxu0
        %v1168 = vadd.f32 %v935, %v1167
        %v1169 = vpop.f32.mrb[0].mxu0
        %v1170 = vadd.f32 %v937, %v1169
        %1171 = vmatprep.mubr.f32.mxu0 0.0
        %1172 = vmatmul.mubr.f32.gmra.mrb[0].mxu0 %v517
        %v1173 = vpop.f32.mrb[0].mxu0
        %v1174 = vadd.f32 %v939, %v1173
        %v1175 = vpop.f32.mrb[0].mxu0
        %v1176 = vadd.f32 %v941, %v1175
        %1177 = vmatprep.mubr.f32.mxu0 0.0
        %1178 = vmatmul.mubr.f32.gmra.mrb[0].mxu0 %v518
        %v1179 = vpop.f32.mrb[0].mxu0
        %v1180 = vadd.f32 %v945, %v1179
        %v1181 = vpop.f32.mrb[0].mxu0
        %v1182 = vadd.f32 %v947, %v1181
        %1183 = vmatprep.mubr.f32.mxu0 0.0
        %1184 = vmatmul.mubr.f32.gmra.mrb[0].mxu0 %v519
        %v1185 = vpop.f32.mrb[0].mxu0
        %v1186 = vadd.f32 %v949, %v1185
        %v1187 = vpop.f32.mrb[0].mxu0
        %v1188 = vadd.f32 %v951, %v1187
        %1189 = vmatprep.mubr.f32.mxu0 0.0
        %1190 = vmatmul.mubr.f32.gmra.mrb[0].mxu0 %v520
        %v1191 = vpop.f32.mrb[0].mxu0
        %v1192 = vadd.f32 %v955, %v1191
        %v1193 = vpop.f32.mrb[0].mxu0
        %v1194 = vadd.f32 %v957, %v1193
        %1195 = vmatprep.mubr.f32.mxu0 0.0
        %1196 = vmatmul.mubr.f32.gmra.mrb[0].mxu0 %v521
        %v1197 = vpop.f32.mrb[0].mxu0
        %v1198 = vadd.f32 %v959, %v1197
        %v1199 = vpop.f32.mrb[0].mxu0
        %v1200 = vadd.f32 %v961, %v1199
        %1201 = vmatprep.mubr.f32.mxu0 0.0
        %1202 = vmatmul.mubr.f32.gmra.mrb[0].mxu0 %v522
        %v1203 = vpop.f32.mrb[0].mxu0
        %v1204 = vadd.f32 %v965, %v1203
        %v1205 = vpop.f32.mrb[0].mxu0
        %v1206 = vadd.f32 %v967, %v1205
        %1207 = vmatprep.mubr.f32.mxu0 0.0
        %1208 = vmatmul.mubr.f32.gmra.mrb[0].mxu0 %v523
        %v1209 = vpop.f32.mrb[0].mxu0
        %v1210 = vadd.f32 %v969, %v1209
        %v1211 = vpop.f32.mrb[0].mxu0
        %v1212 = vadd.f32 %v971, %v1211
        %1213 = vmatprep.mubr.f32.mxu0 0.0
        %1214 = vmatmul.mubr.f32.gmra.mrb[0].mxu0 %v524
        %v1215 = vpop.f32.mrb[0].mxu0
        %v1216 = vadd.f32 %v975, %v1215
        %v1217 = vpop.f32.mrb[0].mxu0
        %v1218 = vadd.f32 %v977, %v1217
        %1219 = vmatprep.mubr.f32.mxu0 0.0
        %1220 = vmatmul.mubr.f32.gmra.mrb[0].mxu0 %v525
        %v1221 = vpop.f32.mrb[0].mxu0
        %v1222 = vadd.f32 %v979, %v1221
        %v1223 = vpop.f32.mrb[0].mxu0
        %v1224 = vadd.f32 %v981, %v1223
        %1225 = vmatprep.mubr.f32.mxu0 0.0
        %1226 = vmatmul.mubr.f32.gmra.mrb[0].mxu0 %v526
        %v1227 = vpop.f32.mrb[0].mxu0
        %v1228 = vadd.f32 %v985, %v1227
        %v1229 = vpop.f32.mrb[0].mxu0
        %v1230 = vadd.f32 %v987, %v1229
        %1231 = vmatprep.mubr.f32.mxu0 0.0
        %1232 = vmatmul.mubr.f32.gmra.mrb[0].mxu0 %v527
        %v1233 = vpop.f32.mrb[0].mxu0
        %v1234 = vadd.f32 %v989, %v1233
        %v1235 = vpop.f32.mrb[0].mxu0
        %v1236 = vadd.f32 %v991, %v1235
        %1237 = vmatprep.mubr.f32.mxu0 0.0
        %1238 = vmatmul.mubr.f32.gmra.mrb[0].mxu0 %v528
        %v1239 = vpop.f32.mrb[0].mxu0
        %v1240 = vadd.f32 %v995, %v1239
        %v1241 = vpop.f32.mrb[0].mxu0
        %v1242 = vadd.f32 %v997, %v1241
        %1243 = vmatprep.mubr.f32.mxu0 0.0
        %1244 = vmatmul.mubr.f32.gmra.mrb[0].mxu0 %v529
        %v1245 = vpop.f32.mrb[0].mxu0
        %v1246 = vadd.f32 %v999, %v1245
        %v1247 = vpop.f32.mrb[0].mxu0
        %v1248 = vadd.f32 %v1001, %v1247
        %1249 = vmatprep.mubr.f32.mxu0 0.0
        %1250 = vmatmul.mubr.f32.gmra.mrb[0].mxu0 %v530
        %v1251 = vpop.f32.mrb[0].mxu0
        %v1252 = vadd.f32 %v1005, %v1251
        %v1253 = vpop.f32.mrb[0].mxu0
        %v1254 = vadd.f32 %v1007, %v1253
        %1255 = vmatprep.mubr.f32.mxu0 0.0
        %1256 = vmatmul.mubr.f32.gmra.mrb[0].mxu0 %v531
        %v1257 = vpop.f32.mrb[0].mxu0
        %v1258 = vadd.f32 %v1009, %v1257
        %v1259 = vpop.f32.mrb[0].mxu0
        %v1260 = vadd.f32 %v1011, %v1259
        %1261 = vmatprep.mubr.f32.mxu0 0.0
        %1262 = vmatmul.mubr.f32.gmra.mrb[0].mxu0 %v532
        %v1263 = vpop.f32.mrb[0].mxu0
        %v1264 = vadd.f32 %v1015, %v1263
        %v1265 = vpop.f32.mrb[0].mxu0
        %v1266 = vadd.f32 %v1017, %v1265
        %1267 = vmatprep.mubr.f32.mxu0 0.0
        %1268 = vmatmul.mubr.f32.gmra.mrb[0].mxu0 %v533
        %v1269 = vpop.f32.mrb[0].mxu0
        %v1270 = vadd.f32 %v1019, %v1269
        %v1271 = vpop.f32.mrb[0].mxu0
        %v1272 = vadd.f32 %v1021, %v1271
        %1273 = vmatprep.mubr.f32.mxu0 0.0
        %1274 = vmatmul.mubr.f32.gmra.mrb[0].mxu0 %v534
        %v1275 = vpop.f32.mrb[0].mxu0
        %v1276 = vadd.f32 %v1025, %v1275
        %v1277 = vpop.f32.mrb[0].mxu0
        %v1278 = vadd.f32 %v1027, %v1277
        %1279 = vmatprep.mubr.f32.mxu0 0.0
        %1280 = vmatmul.mubr.f32.gmra.mrb[0].mxu0 %v535
        %v1281 = vpop.f32.mrb[0].mxu0
        %v1282 = vadd.f32 %v1029, %v1281
        %v1283 = vpop.f32.mrb[0].mxu0
        %v1284 = vadd.f32 %v1031, %v1283
        %1285 = vmatprep.mubr.f32.mxu0 0.0
        %1286 = vmatmul.mubr.f32.gmra.mrb[0].mxu0 %v536
        %v1287 = vpop.f32.mrb[0].mxu0
        %v1288 = vadd.f32 %v1035, %v1287
        %v1289 = vpop.f32.mrb[0].mxu0
        %v1290 = vadd.f32 %v1037, %v1289
        %1291 = vmatprep.mubr.f32.mxu0 0.0
        %1292 = vmatmul.mubr.f32.gmra.mrb[0].mxu0 %v537
        %v1293 = vpop.f32.mrb[0].mxu0
        %v1294 = vadd.f32 %v1039, %v1293
        %v1295 = vpop.f32.mrb[0].mxu0
        %v1296 = vadd.f32 %v1041, %v1295
        %1297 = vmatprep.mubr.f32.mxu0 0.0
        %1298 = vmatmul.mubr.f32.gmra.mrb[0].mxu0 %v538
        %v1299 = vpop.f32.mrb[0].mxu0
        %v1300 = vadd.f32 %v1045, %v1299
        %v1301 = vpop.f32.mrb[0].mxu0
        %v1302 = vadd.f32 %v1047, %v1301
        %1303 = vmatprep.mubr.f32.mxu0 0.0
        %1304 = vmatmul.mubr.f32.gmra.mrb[0].mxu0 %v539
        %v1305 = vpop.f32.mrb[0].mxu0
        %v1306 = vadd.f32 %v1049, %v1305
        %v1307 = vpop.f32.mrb[0].mxu0
        %v1308 = vadd.f32 %v1051, %v1307
        %1309 = vdwg.mxu0
        %v1310 = vld [vmem:[%s4] sm:$0x3]
        %v1312 = vlaneseq
        %v1313 = vshrl.u32 %v1312, 7
        %v1314 = vsub.s32 0, %v1313
        %v1315 = vrot.slane %v1310, %v1314
        %v1316 = vlaneseq
        %v1317 = vshrl.u32 %v1316, 7
        %v1318 = vsub.s32 1, %v1317
        %v1319 = vrot.slane %v1310, %v1318
        %v1322 = vadd.f32 %v1120, %v1315
        %v1323 = vadd.f32 %v1122, %v1319
        %v1324 = vadd.f32 %v1126, %v1315
        %v1325 = vadd.f32 %v1128, %v1319
        %v1326 = vadd.f32 %v1132, %v1315
        %v1327 = vadd.f32 %v1134, %v1319
        %v1328 = vadd.f32 %v1138, %v1315
        %v1329 = vadd.f32 %v1140, %v1319
        %v1330 = vadd.f32 %v1144, %v1315
        %v1331 = vadd.f32 %v1146, %v1319
        %v1332 = vadd.f32 %v1150, %v1315
        %v1333 = vadd.f32 %v1152, %v1319
        %v1334 = vadd.f32 %v1156, %v1315
        %v1335 = vadd.f32 %v1158, %v1319
        %v1336 = vadd.f32 %v1162, %v1315
        %v1337 = vadd.f32 %v1164, %v1319
        %v1338 = vadd.f32 %v1168, %v1315
        %v1339 = vadd.f32 %v1170, %v1319
        %v1340 = vadd.f32 %v1174, %v1315
        %v1341 = vadd.f32 %v1176, %v1319
        %v1342 = vadd.f32 %v1180, %v1315
        %v1343 = vadd.f32 %v1182, %v1319
        %v1344 = vadd.f32 %v1186, %v1315
        %v1345 = vadd.f32 %v1188, %v1319
        %v1346 = vadd.f32 %v1192, %v1315
        %v1347 = vadd.f32 %v1194, %v1319
        %v1348 = vadd.f32 %v1198, %v1315
        %v1349 = vadd.f32 %v1200, %v1319
        %v1350 = vadd.f32 %v1204, %v1315
        %v1351 = vadd.f32 %v1206, %v1319
        %v1352 = vadd.f32 %v1210, %v1315
        %v1353 = vadd.f32 %v1212, %v1319
        %v1354 = vadd.f32 %v1216, %v1315
        %v1355 = vadd.f32 %v1218, %v1319
        %v1356 = vadd.f32 %v1222, %v1315
        %v1357 = vadd.f32 %v1224, %v1319
        %v1358 = vadd.f32 %v1228, %v1315
        %v1359 = vadd.f32 %v1230, %v1319
        %v1360 = vadd.f32 %v1234, %v1315
        %v1361 = vadd.f32 %v1236, %v1319
        %v1362 = vadd.f32 %v1240, %v1315
        %v1363 = vadd.f32 %v1242, %v1319
        %v1364 = vadd.f32 %v1246, %v1315
        %v1365 = vadd.f32 %v1248, %v1319
        %v1366 = vadd.f32 %v1252, %v1315
        %v1367 = vadd.f32 %v1254, %v1319
        %v1368 = vadd.f32 %v1258, %v1315
        %v1369 = vadd.f32 %v1260, %v1319
        %v1370 = vadd.f32 %v1264, %v1315
        %v1371 = vadd.f32 %v1266, %v1319
        %v1372 = vadd.f32 %v1270, %v1315
        %v1373 = vadd.f32 %v1272, %v1319
        %v1374 = vadd.f32 %v1276, %v1315
        %v1375 = vadd.f32 %v1278, %v1319
        %v1376 = vadd.f32 %v1282, %v1315
        %v1377 = vadd.f32 %v1284, %v1319
        %v1378 = vadd.f32 %v1288, %v1315
        %v1379 = vadd.f32 %v1290, %v1319
        %v1380 = vadd.f32 %v1294, %v1315
        %v1381 = vadd.f32 %v1296, %v1319
        %v1382 = vadd.f32 %v1300, %v1315
        %v1383 = vadd.f32 %v1302, %v1319
        %v1384 = vadd.f32 %v1306, %v1315
        %v1385 = vadd.f32 %v1308, %v1319
        %v1386 = vmax.f32 %v1322, 0.0
        %v1387 = vmax.f32 %v1323, 0.0
        %v1388 = vmax.f32 %v1324, 0.0
        %v1389 = vmax.f32 %v1325, 0.0
        %v1390 = vmax.f32 %v1326, 0.0
        %v1391 = vmax.f32 %v1327, 0.0
        %v1392 = vmax.f32 %v1328, 0.0
        %v1393 = vmax.f32 %v1329, 0.0
        %v1394 = vmax.f32 %v1330, 0.0
        %v1395 = vmax.f32 %v1331, 0.0
        %v1396 = vmax.f32 %v1332, 0.0
        %v1397 = vmax.f32 %v1333, 0.0
        %v1398 = vmax.f32 %v1334, 0.0
        %v1399 = vmax.f32 %v1335, 0.0
        %v1400 = vmax.f32 %v1336, 0.0
        %v1401 = vmax.f32 %v1337, 0.0
        %v1402 = vmax.f32 %v1338, 0.0
        %v1403 = vmax.f32 %v1339, 0.0
        %v1404 = vmax.f32 %v1340, 0.0
        %v1405 = vmax.f32 %v1341, 0.0
        %v1406 = vmax.f32 %v1342, 0.0
        %v1407 = vmax.f32 %v1343, 0.0
        %v1408 = vmax.f32 %v1344, 0.0
        %v1409 = vmax.f32 %v1345, 0.0
        %v1410 = vmax.f32 %v1346, 0.0
        %v1411 = vmax.f32 %v1347, 0.0
        %v1412 = vmax.f32 %v1348, 0.0
        %v1413 = vmax.f32 %v1349, 0.0
        %v1414 = vmax.f32 %v1350, 0.0
        %v1415 = vmax.f32 %v1351, 0.0
        %v1416 = vmax.f32 %v1352, 0.0
        %v1417 = vmax.f32 %v1353, 0.0
        %v1418 = vmax.f32 %v1354, 0.0
        %v1419 = vmax.f32 %v1355, 0.0
        %v1420 = vmax.f32 %v1356, 0.0
        %v1421 = vmax.f32 %v1357, 0.0
        %v1422 = vmax.f32 %v1358, 0.0
        %v1423 = vmax.f32 %v1359, 0.0
        %v1424 = vmax.f32 %v1360, 0.0
        %v1425 = vmax.f32 %v1361, 0.0
        %v1426 = vmax.f32 %v1362, 0.0
        %v1427 = vmax.f32 %v1363, 0.0
        %v1428 = vmax.f32 %v1364, 0.0
        %v1429 = vmax.f32 %v1365, 0.0
        %v1430 = vmax.f32 %v1366, 0.0
        %v1431 = vmax.f32 %v1367, 0.0
        %v1432 = vmax.f32 %v1368, 0.0
        %v1433 = vmax.f32 %v1369, 0.0
        %v1434 = vmax.f32 %v1370, 0.0
        %v1435 = vmax.f32 %v1371, 0.0
        %v1436 = vmax.f32 %v1372, 0.0
        %v1437 = vmax.f32 %v1373, 0.0
        %v1438 = vmax.f32 %v1374, 0.0
        %v1439 = vmax.f32 %v1375, 0.0
        %v1440 = vmax.f32 %v1376, 0.0
        %v1441 = vmax.f32 %v1377, 0.0
        %v1442 = vmax.f32 %v1378, 0.0
        %v1443 = vmax.f32 %v1379, 0.0
        %v1444 = vmax.f32 %v1380, 0.0
        %v1445 = vmax.f32 %v1381, 0.0
        %v1446 = vmax.f32 %v1382, 0.0
        %v1447 = vmax.f32 %v1383, 0.0
        %v1448 = vmax.f32 %v1384, 0.0
        %v1449 = vmax.f32 %v1385, 0.0
        %v1450 = vpack.c.bf16 %v1388, %v1386
        %v1451 = vpack.c.bf16 %v1389, %v1387
        %v1452 = vpack.c.bf16 %v1392, %v1390
        %v1453 = vpack.c.bf16 %v1393, %v1391
        %v1454 = vpack.c.bf16 %v1396, %v1394
        %v1455 = vpack.c.bf16 %v1397, %v1395
        %v1456 = vpack.c.bf16 %v1400, %v1398
        %v1457 = vpack.c.bf16 %v1401, %v1399
        %v1458 = vpack.c.bf16 %v1404, %v1402
        %v1459 = vpack.c.bf16 %v1405, %v1403
        %v1460 = vpack.c.bf16 %v1408, %v1406
        %v1461 = vpack.c.bf16 %v1409, %v1407
        %v1462 = vpack.c.bf16 %v1412, %v1410
        %v1463 = vpack.c.bf16 %v1413, %v1411
        %v1464 = vpack.c.bf16 %v1416, %v1414
        %v1465 = vpack.c.bf16 %v1417, %v1415
        %v1466 = vpack.c.bf16 %v1420, %v1418
        %v1467 = vpack.c.bf16 %v1421, %v1419
        %v1468 = vpack.c.bf16 %v1424, %v1422
        %v1469 = vpack.c.bf16 %v1425, %v1423
        %v1470 = vpack.c.bf16 %v1428, %v1426
        %v1471 = vpack.c.bf16 %v1429, %v1427
        %v1472 = vpack.c.bf16 %v1432, %v1430
        %v1473 = vpack.c.bf16 %v1433, %v1431
        %v1474 = vpack.c.bf16 %v1436, %v1434
        %v1475 = vpack.c.bf16 %v1437, %v1435
        %v1476 = vpack.c.bf16 %v1440, %v1438
        %v1477 = vpack.c.bf16 %v1441, %v1439
        %v1478 = vpack.c.bf16 %v1444, %v1442
        %v1479 = vpack.c.bf16 %v1445, %v1443
        %v1480 = vpack.c.bf16 %v1448, %v1446
        %v1481 = vpack.c.bf16 %v1449, %v1447
        %v1482 = vld [vmem:[#allocation10] sm:$0xff]
        %v1483 = vld [vmem:[#allocation10 + $0x8] sm:$0xff]
        %v1484 = vld [vmem:[#allocation10 + $0x10] sm:$0xff]
        %v1485 = vld [vmem:[#allocation10 + $0x18] sm:$0xff]
        %v1486 = vld [vmem:[#allocation10 + $0x20] sm:$0xff]
        %v1487 = vld [vmem:[#allocation10 + $0x28] sm:$0xff]
        %v1488 = vld [vmem:[#allocation10 + $0x30] sm:$0xff]
        %v1489 = vld [vmem:[#allocation10 + $0x38] sm:$0xff]
        %v1490 = vld [vmem:[#allocation10 + $0x40] sm:$0xff]
        %v1491 = vld [vmem:[#allocation10 + $0x48] sm:$0xff]
        %v1492 = vld [vmem:[#allocation10 + $0x50] sm:$0xff]
        %v1493 = vld [vmem:[#allocation10 + $0x58] sm:$0xff]
        %v1494 = vld [vmem:[#allocation10 + $0x60] sm:$0xff]
        %v1495 = vld [vmem:[#allocation10 + $0x68] sm:$0xff]
        %v1496 = vld [vmem:[#allocation10 + $0x70] sm:$0xff]
        %v1497 = vld [vmem:[#allocation10 + $0x78] sm:$0xff]
        %v1498 = vld [vmem:[#allocation10 + $0x80] sm:$0xff]
        %v1499 = vld [vmem:[#allocation10 + $0x88] sm:$0xff]
        %v1500 = vld [vmem:[#allocation10 + $0x90] sm:$0xff]
        %v1501 = vld [vmem:[#allocation10 + $0x98] sm:$0xff]
        %v1502 = vld [vmem:[#allocation10 + $0xa0] sm:$0xff]
        %v1503 = vld [vmem:[#allocation10 + $0xa8] sm:$0xff]
        %v1504 = vld [vmem:[#allocation10 + $0xb0] sm:$0xff]
        %v1505 = vld [vmem:[#allocation10 + $0xb8] sm:$0xff]
        %v1506 = vld [vmem:[#allocation10 + $0xc0] sm:$0xff]
        %v1507 = vld [vmem:[#allocation10 + $0xc8] sm:$0xff]
        %v1508 = vld [vmem:[#allocation10 + $0xd0] sm:$0xff]
        %v1509 = vld [vmem:[#allocation10 + $0xd8] sm:$0xff]
        %v1510 = vld [vmem:[#allocation10 + $0xe0] sm:$0xff]
        %v1511 = vld [vmem:[#allocation10 + $0xe8] sm:$0xff]
        %v1512 = vld [vmem:[#allocation10 + $0xf0] sm:$0xff]
        %v1513 = vld [vmem:[#allocation10 + $0xf8] sm:$0xff]
        %v1514 = vld [vmem:[%s6] sm:$0x3]
        %v1516 = vlaneseq
        %v1517 = vshrl.u32 %v1516, 7
        %v1518 = vsub.s32 0, %v1517
        %v1519 = vrot.slane %v1514, %v1518
        %v1520 = vlaneseq
        %v1521 = vshrl.u32 %v1520, 7
        %v1522 = vsub.s32 1, %v1521
        %v1523 = vrot.slane %v1514, %v1522
        %v1558 = vunpack.c.l.b16 %v1482
        %v1559 = vunpack.c.h.b16 %v1482
        %v1560 = vunpack.c.l.b16 %v1483
        %v1561 = vunpack.c.h.b16 %v1483
        %v1562 = vunpack.c.l.b16 %v1484
        %v1563 = vunpack.c.h.b16 %v1484
        %v1564 = vunpack.c.l.b16 %v1485
        %v1565 = vunpack.c.h.b16 %v1485
        %v1566 = vunpack.c.l.b16 %v1486
        %v1567 = vunpack.c.h.b16 %v1486
        %v1568 = vunpack.c.l.b16 %v1487
        %v1569 = vunpack.c.h.b16 %v1487
        %v1570 = vunpack.c.l.b16 %v1488
        %v1571 = vunpack.c.h.b16 %v1488
        %v1572 = vunpack.c.l.b16 %v1489
        %v1573 = vunpack.c.h.b16 %v1489
        %v1574 = vunpack.c.l.b16 %v1490
        %v1575 = vunpack.c.h.b16 %v1490
        %v1576 = vunpack.c.l.b16 %v1491
        %v1577 = vunpack.c.h.b16 %v1491
        %v1578 = vunpack.c.l.b16 %v1492
        %v1579 = vunpack.c.h.b16 %v1492
        %v1580 = vunpack.c.l.b16 %v1493
        %v1581 = vunpack.c.h.b16 %v1493
        %v1582 = vunpack.c.l.b16 %v1494
        %v1583 = vunpack.c.h.b16 %v1494
        %v1584 = vunpack.c.l.b16 %v1495
        %v1585 = vunpack.c.h.b16 %v1495
        %v1586 = vunpack.c.l.b16 %v1496
        %v1587 = vunpack.c.h.b16 %v1496
        %v1588 = vunpack.c.l.b16 %v1497
        %v1589 = vunpack.c.h.b16 %v1497
        %v1590 = vunpack.c.l.b16 %v1498
        %v1591 = vunpack.c.h.b16 %v1498
        %v1592 = vunpack.c.l.b16 %v1499
        %v1593 = vunpack.c.h.b16 %v1499
        %v1594 = vunpack.c.l.b16 %v1500
        %v1595 = vunpack.c.h.b16 %v1500
        %v1596 = vunpack.c.l.b16 %v1501
        %v1597 = vunpack.c.h.b16 %v1501
        %v1598 = vunpack.c.l.b16 %v1502
        %v1599 = vunpack.c.h.b16 %v1502
        %v1600 = vunpack.c.l.b16 %v1503
        %v1601 = vunpack.c.h.b16 %v1503
        %v1602 = vunpack.c.l.b16 %v1504
        %v1603 = vunpack.c.h.b16 %v1504
        %v1604 = vunpack.c.l.b16 %v1505
        %v1605 = vunpack.c.h.b16 %v1505
        %v1606 = vunpack.c.l.b16 %v1506
        %v1607 = vunpack.c.h.b16 %v1506
        %v1608 = vunpack.c.l.b16 %v1507
        %v1609 = vunpack.c.h.b16 %v1507
        %v1610 = vunpack.c.l.b16 %v1508
        %v1611 = vunpack.c.h.b16 %v1508
        %v1612 = vunpack.c.l.b16 %v1509
        %v1613 = vunpack.c.h.b16 %v1509
        %v1614 = vunpack.c.l.b16 %v1510
        %v1615 = vunpack.c.h.b16 %v1510
        %v1616 = vunpack.c.l.b16 %v1511
        %v1617 = vunpack.c.h.b16 %v1511
        %v1618 = vunpack.c.l.b16 %v1512
        %v1619 = vunpack.c.h.b16 %v1512
        %v1620 = vunpack.c.l.b16 %v1513
        %v1621 = vunpack.c.h.b16 %v1513
        %v1622 = vpack.c.b16 %v1560, %v1558
        %v1623 = vpack.c.b16 %v1561, %v1559
        %v1624 = vpack.c.b16 %v1564, %v1562
        %v1625 = vpack.c.b16 %v1565, %v1563
        %v1626 = vpack.c.b16 %v1568, %v1566
        %v1627 = vpack.c.b16 %v1569, %v1567
        %v1628 = vpack.c.b16 %v1572, %v1570
        %v1629 = vpack.c.b16 %v1573, %v1571
        %v1630 = vpack.c.b16 %v1576, %v1574
        %v1631 = vpack.c.b16 %v1577, %v1575
        %v1632 = vpack.c.b16 %v1580, %v1578
        %v1633 = vpack.c.b16 %v1581, %v1579
        %v1634 = vpack.c.b16 %v1584, %v1582
        %v1635 = vpack.c.b16 %v1585, %v1583
        %v1636 = vpack.c.b16 %v1588, %v1586
        %v1637 = vpack.c.b16 %v1589, %v1587
        %v1638 = vpack.c.b16 %v1592, %v1590
        %v1639 = vpack.c.b16 %v1593, %v1591
        %v1640 = vpack.c.b16 %v1596, %v1594
        %v1641 = vpack.c.b16 %v1597, %v1595
        %v1642 = vpack.c.b16 %v1600, %v1598
        %v1643 = vpack.c.b16 %v1601, %v1599
        %v1644 = vpack.c.b16 %v1604, %v1602
        %v1645 = vpack.c.b16 %v1605, %v1603
        %v1646 = vpack.c.b16 %v1608, %v1606
        %v1647 = vpack.c.b16 %v1609, %v1607
        %v1648 = vpack.c.b16 %v1612, %v1610
        %v1649 = vpack.c.b16 %v1613, %v1611
        %v1650 = vpack.c.b16 %v1616, %v1614
        %v1651 = vpack.c.b16 %v1617, %v1615
        %v1652 = vpack.c.b16 %v1620, %v1618
        %v1653 = vpack.c.b16 %v1621, %v1619
        %1686 = vmatprep.subr.bf16.mxu0 %v1623
        %1687 = vmatpush1.bf16.msra.mxu0 %v1622
        %1688 = vmatprep.subr.bf16.mxu0 %v1625
        %1689 = vmatpush1.bf16.msra.mxu0 %v1624
        %1690 = vmatprep.subr.bf16.mxu0 %v1627
        %1691 = vmatpush1.bf16.msra.mxu0 %v1626
        %1692 = vmatprep.subr.bf16.mxu0 %v1629
        %1693 = vmatpush1.bf16.msra.mxu0 %v1628
        %1694 = vmatprep.subr.bf16.mxu0 %v1631
        %1695 = vmatpush1.bf16.msra.mxu0 %v1630
        %1696 = vmatprep.subr.bf16.mxu0 %v1633
        %1697 = vmatpush1.bf16.msra.mxu0 %v1632
        %1698 = vmatprep.subr.bf16.mxu0 %v1635
        %1699 = vmatpush1.bf16.msra.mxu0 %v1634
        %1700 = vmatprep.subr.bf16.mxu0 %v1637
        %1701 = vmatpush1.bf16.msra.mxu0 %v1636
        %1702 = vmatprep.subr.bf16.mxu0 %v1639
        %1703 = vmatpush1.bf16.msra.mxu0 %v1638
        %1704 = vmatprep.subr.bf16.mxu0 %v1641
        %1705 = vmatpush1.bf16.msra.mxu0 %v1640
        %1706 = vmatprep.subr.bf16.mxu0 %v1643
        %1707 = vmatpush1.bf16.msra.mxu0 %v1642
        %1708 = vmatprep.subr.bf16.mxu0 %v1645
        %1709 = vmatpush1.bf16.msra.mxu0 %v1644
        %1710 = vmatprep.subr.bf16.mxu0 %v1647
        %1711 = vmatpush1.bf16.msra.mxu0 %v1646
        %1712 = vmatprep.subr.bf16.mxu0 %v1649
        %1713 = vmatpush1.bf16.msra.mxu0 %v1648
        %1714 = vmatprep.subr.bf16.mxu0 %v1651
        %1715 = vmatpush1.bf16.msra.mxu0 %v1650
        %1716 = vmatprep.subr.bf16.mxu0 %v1653
        %1717 = vmatpush1.bf16.msra.mxu0 %v1652
        %1718 = vmatprep.mubr.bf16.mxu0 %v1451
        %1719 = vmatmul.mubr.bf16.gmra.mrb[0].mxu0 %v1450
        %v1720 = vpop.f32.mrb[0].mxu0
        %v1721 = vadd.f32 %v1519, %v1720
        %v1722 = vpop.f32.mrb[0].mxu0
        %v1723 = vadd.f32 %v1523, %v1722
        %v1724 = vpop.f32.mrb[0].mxu0
        %v1725 = vadd.f32 %v1519, %v1724
        %v1726 = vpop.f32.mrb[0].mxu0
        %v1727 = vadd.f32 %v1523, %v1726
        %1728 = vmatprep.mubr.bf16.mxu0 %v1453
        %1729 = vmatmul.mubr.bf16.gmra.mrb[0].mxu0 %v1452
        %v1730 = vpop.f32.mrb[0].mxu0
        %v1731 = vadd.f32 %v1519, %v1730
        %v1732 = vpop.f32.mrb[0].mxu0
        %v1733 = vadd.f32 %v1523, %v1732
        %v1734 = vpop.f32.mrb[0].mxu0
        %v1735 = vadd.f32 %v1519, %v1734
        %v1736 = vpop.f32.mrb[0].mxu0
        %v1737 = vadd.f32 %v1523, %v1736
        %1738 = vmatprep.mubr.bf16.mxu0 %v1455
        %1739 = vmatmul.mubr.bf16.gmra.mrb[0].mxu0 %v1454
        %v1740 = vpop.f32.mrb[0].mxu0
        %v1741 = vadd.f32 %v1519, %v1740
        %v1742 = vpop.f32.mrb[0].mxu0
        %v1743 = vadd.f32 %v1523, %v1742
        %v1744 = vpop.f32.mrb[0].mxu0
        %v1745 = vadd.f32 %v1519, %v1744
        %v1746 = vpop.f32.mrb[0].mxu0
        %v1747 = vadd.f32 %v1523, %v1746
        %1748 = vmatprep.mubr.bf16.mxu0 %v1457
        %1749 = vmatmul.mubr.bf16.gmra.mrb[0].mxu0 %v1456
        %v1750 = vpop.f32.mrb[0].mxu0
        %v1751 = vadd.f32 %v1519, %v1750
        %v1752 = vpop.f32.mrb[0].mxu0
        %v1753 = vadd.f32 %v1523, %v1752
        %v1754 = vpop.f32.mrb[0].mxu0
        %v1755 = vadd.f32 %v1519, %v1754
        %v1756 = vpop.f32.mrb[0].mxu0
        %v1757 = vadd.f32 %v1523, %v1756
        %1758 = vmatprep.mubr.bf16.mxu0 %v1459
        %1759 = vmatmul.mubr.bf16.gmra.mrb[0].mxu0 %v1458
        %v1760 = vpop.f32.mrb[0].mxu0
        %v1761 = vadd.f32 %v1519, %v1760
        %v1762 = vpop.f32.mrb[0].mxu0
        %v1763 = vadd.f32 %v1523, %v1762
        %v1764 = vpop.f32.mrb[0].mxu0
        %v1765 = vadd.f32 %v1519, %v1764
        %v1766 = vpop.f32.mrb[0].mxu0
        %v1767 = vadd.f32 %v1523, %v1766
        %1768 = vmatprep.mubr.bf16.mxu0 %v1461
        %1769 = vmatmul.mubr.bf16.gmra.mrb[0].mxu0 %v1460
        %v1770 = vpop.f32.mrb[0].mxu0
        %v1771 = vadd.f32 %v1519, %v1770
        %v1772 = vpop.f32.mrb[0].mxu0
        %v1773 = vadd.f32 %v1523, %v1772
        %v1774 = vpop.f32.mrb[0].mxu0
        %v1775 = vadd.f32 %v1519, %v1774
        %v1776 = vpop.f32.mrb[0].mxu0
        %v1777 = vadd.f32 %v1523, %v1776
        %1778 = vmatprep.mubr.bf16.mxu0 %v1463
        %1779 = vmatmul.mubr.bf16.gmra.mrb[0].mxu0 %v1462
        %v1780 = vpop.f32.mrb[0].mxu0
        %v1781 = vadd.f32 %v1519, %v1780
        %v1782 = vpop.f32.mrb[0].mxu0
        %v1783 = vadd.f32 %v1523, %v1782
        %v1784 = vpop.f32.mrb[0].mxu0
        %v1785 = vadd.f32 %v1519, %v1784
        %v1786 = vpop.f32.mrb[0].mxu0
        %v1787 = vadd.f32 %v1523, %v1786
        %1788 = vmatprep.mubr.bf16.mxu0 %v1465
        %1789 = vmatmul.mubr.bf16.gmra.mrb[0].mxu0 %v1464
        %v1790 = vpop.f32.mrb[0].mxu0
        %v1791 = vadd.f32 %v1519, %v1790
        %v1792 = vpop.f32.mrb[0].mxu0
        %v1793 = vadd.f32 %v1523, %v1792
        %v1794 = vpop.f32.mrb[0].mxu0
        %v1795 = vadd.f32 %v1519, %v1794
        %v1796 = vpop.f32.mrb[0].mxu0
        %v1797 = vadd.f32 %v1523, %v1796
        %1798 = vmatprep.mubr.bf16.mxu0 %v1467
        %1799 = vmatmul.mubr.bf16.gmra.mrb[0].mxu0 %v1466
        %v1800 = vpop.f32.mrb[0].mxu0
        %v1801 = vadd.f32 %v1519, %v1800
        %v1802 = vpop.f32.mrb[0].mxu0
        %v1803 = vadd.f32 %v1523, %v1802
        %v1804 = vpop.f32.mrb[0].mxu0
        %v1805 = vadd.f32 %v1519, %v1804
        %v1806 = vpop.f32.mrb[0].mxu0
        %v1807 = vadd.f32 %v1523, %v1806
        %1808 = vmatprep.mubr.bf16.mxu0 %v1469
        %1809 = vmatmul.mubr.bf16.gmra.mrb[0].mxu0 %v1468
        %v1810 = vpop.f32.mrb[0].mxu0
        %v1811 = vadd.f32 %v1519, %v1810
        %v1812 = vpop.f32.mrb[0].mxu0
        %v1813 = vadd.f32 %v1523, %v1812
        %v1814 = vpop.f32.mrb[0].mxu0
        %v1815 = vadd.f32 %v1519, %v1814
        %v1816 = vpop.f32.mrb[0].mxu0
        %v1817 = vadd.f32 %v1523, %v1816
        %1818 = vmatprep.mubr.bf16.mxu0 %v1471
        %1819 = vmatmul.mubr.bf16.gmra.mrb[0].mxu0 %v1470
        %v1820 = vpop.f32.mrb[0].mxu0
        %v1821 = vadd.f32 %v1519, %v1820
        %v1822 = vpop.f32.mrb[0].mxu0
        %v1823 = vadd.f32 %v1523, %v1822
        %v1824 = vpop.f32.mrb[0].mxu0
        %v1825 = vadd.f32 %v1519, %v1824
        %v1826 = vpop.f32.mrb[0].mxu0
        %v1827 = vadd.f32 %v1523, %v1826
        %1828 = vmatprep.mubr.bf16.mxu0 %v1473
        %1829 = vmatmul.mubr.bf16.gmra.mrb[0].mxu0 %v1472
        %v1830 = vpop.f32.mrb[0].mxu0
        %v1831 = vadd.f32 %v1519, %v1830
        %v1832 = vpop.f32.mrb[0].mxu0
        %v1833 = vadd.f32 %v1523, %v1832
        %v1834 = vpop.f32.mrb[0].mxu0
        %v1835 = vadd.f32 %v1519, %v1834
        %v1836 = vpop.f32.mrb[0].mxu0
        %v1837 = vadd.f32 %v1523, %v1836
        %1838 = vmatprep.mubr.bf16.mxu0 %v1475
        %1839 = vmatmul.mubr.bf16.gmra.mrb[0].mxu0 %v1474
        %v1840 = vpop.f32.mrb[0].mxu0
        %v1841 = vadd.f32 %v1519, %v1840
        %v1842 = vpop.f32.mrb[0].mxu0
        %v1843 = vadd.f32 %v1523, %v1842
        %v1844 = vpop.f32.mrb[0].mxu0
        %v1845 = vadd.f32 %v1519, %v1844
        %v1846 = vpop.f32.mrb[0].mxu0
        %v1847 = vadd.f32 %v1523, %v1846
        %1848 = vmatprep.mubr.bf16.mxu0 %v1477
        %1849 = vmatmul.mubr.bf16.gmra.mrb[0].mxu0 %v1476
        %v1850 = vpop.f32.mrb[0].mxu0
        %v1851 = vadd.f32 %v1519, %v1850
        %v1852 = vpop.f32.mrb[0].mxu0
        %v1853 = vadd.f32 %v1523, %v1852
        %v1854 = vpop.f32.mrb[0].mxu0
        %v1855 = vadd.f32 %v1519, %v1854
        %v1856 = vpop.f32.mrb[0].mxu0
        %v1857 = vadd.f32 %v1523, %v1856
        %1858 = vmatprep.mubr.bf16.mxu0 %v1479
        %1859 = vmatmul.mubr.bf16.gmra.mrb[0].mxu0 %v1478
        %v1860 = vpop.f32.mrb[0].mxu0
        %v1861 = vadd.f32 %v1519, %v1860
        %v1862 = vpop.f32.mrb[0].mxu0
        %v1863 = vadd.f32 %v1523, %v1862
        %v1864 = vpop.f32.mrb[0].mxu0
        %v1865 = vadd.f32 %v1519, %v1864
        %v1866 = vpop.f32.mrb[0].mxu0
        %v1867 = vadd.f32 %v1523, %v1866
        %1868 = vmatprep.mubr.bf16.mxu0 %v1481
        %1869 = vmatmul.mubr.bf16.gmra.mrb[0].mxu0 %v1480
        %v1870 = vpop.f32.mrb[0].mxu0
        %v1871 = vadd.f32 %v1519, %v1870
        %v1872 = vpop.f32.mrb[0].mxu0
        %v1873 = vadd.f32 %v1523, %v1872
        %v1874 = vpop.f32.mrb[0].mxu0
        %v1875 = vadd.f32 %v1519, %v1874
        %v1876 = vpop.f32.mrb[0].mxu0
        %v1877 = vadd.f32 %v1523, %v1876
        %1878 = vdwg.mxu0
        %v1879 = vmax.f32 %v1721, 0.0
        %v1880 = vmax.f32 %v1723, 0.0
        %v1881 = vmax.f32 %v1725, 0.0
        %v1882 = vmax.f32 %v1727, 0.0
        %v1883 = vmax.f32 %v1731, 0.0
        %v1884 = vmax.f32 %v1733, 0.0
        %v1885 = vmax.f32 %v1735, 0.0
        %v1886 = vmax.f32 %v1737, 0.0
        %v1887 = vmax.f32 %v1741, 0.0
        %v1888 = vmax.f32 %v1743, 0.0
        %v1889 = vmax.f32 %v1745, 0.0
        %v1890 = vmax.f32 %v1747, 0.0
        %v1891 = vmax.f32 %v1751, 0.0
        %v1892 = vmax.f32 %v1753, 0.0
        %v1893 = vmax.f32 %v1755, 0.0
        %v1894 = vmax.f32 %v1757, 0.0
        %v1895 = vmax.f32 %v1761, 0.0
        %v1896 = vmax.f32 %v1763, 0.0
        %v1897 = vmax.f32 %v1765, 0.0
        %v1898 = vmax.f32 %v1767, 0.0
        %v1899 = vmax.f32 %v1771, 0.0
        %v1900 = vmax.f32 %v1773, 0.0
        %v1901 = vmax.f32 %v1775, 0.0
        %v1902 = vmax.f32 %v1777, 0.0
        %v1903 = vmax.f32 %v1781, 0.0
        %v1904 = vmax.f32 %v1783, 0.0
        %v1905 = vmax.f32 %v1785, 0.0
        %v1906 = vmax.f32 %v1787, 0.0
        %v1907 = vmax.f32 %v1791, 0.0
        %v1908 = vmax.f32 %v1793, 0.0
        %v1909 = vmax.f32 %v1795, 0.0
        %v1910 = vmax.f32 %v1797, 0.0
        %v1911 = vmax.f32 %v1801, 0.0
        %v1912 = vmax.f32 %v1803, 0.0
        %v1913 = vmax.f32 %v1805, 0.0
        %v1914 = vmax.f32 %v1807, 0.0
        %v1915 = vmax.f32 %v1811, 0.0
        %v1916 = vmax.f32 %v1813, 0.0
        %v1917 = vmax.f32 %v1815, 0.0
        %v1918 = vmax.f32 %v1817, 0.0
        %v1919 = vmax.f32 %v1821, 0.0
        %v1920 = vmax.f32 %v1823, 0.0
        %v1921 = vmax.f32 %v1825, 0.0
        %v1922 = vmax.f32 %v1827, 0.0
        %v1923 = vmax.f32 %v1831, 0.0
        %v1924 = vmax.f32 %v1833, 0.0
        %v1925 = vmax.f32 %v1835, 0.0
        %v1926 = vmax.f32 %v1837, 0.0
        %v1927 = vmax.f32 %v1841, 0.0
        %v1928 = vmax.f32 %v1843, 0.0
        %v1929 = vmax.f32 %v1845, 0.0
        %v1930 = vmax.f32 %v1847, 0.0
        %v1931 = vmax.f32 %v1851, 0.0
        %v1932 = vmax.f32 %v1853, 0.0
        %v1933 = vmax.f32 %v1855, 0.0
        %v1934 = vmax.f32 %v1857, 0.0
        %v1935 = vmax.f32 %v1861, 0.0
        %v1936 = vmax.f32 %v1863, 0.0
        %v1937 = vmax.f32 %v1865, 0.0
        %v1938 = vmax.f32 %v1867, 0.0
        %v1939 = vmax.f32 %v1871, 0.0
        %v1940 = vmax.f32 %v1873, 0.0
        %v1941 = vmax.f32 %v1875, 0.0
        %v1942 = vmax.f32 %v1877, 0.0
        %v1943 = vpack.c.bf16 %v1881, %v1879
        %v1944 = vpack.c.bf16 %v1882, %v1880
        %v1945 = vpack.c.bf16 %v1885, %v1883
        %v1946 = vpack.c.bf16 %v1886, %v1884
        %v1947 = vpack.c.bf16 %v1889, %v1887
        %v1948 = vpack.c.bf16 %v1890, %v1888
        %v1949 = vpack.c.bf16 %v1893, %v1891
        %v1950 = vpack.c.bf16 %v1894, %v1892
        %v1951 = vpack.c.bf16 %v1897, %v1895
        %v1952 = vpack.c.bf16 %v1898, %v1896
        %v1953 = vpack.c.bf16 %v1901, %v1899
        %v1954 = vpack.c.bf16 %v1902, %v1900
        %v1955 = vpack.c.bf16 %v1905, %v1903
        %v1956 = vpack.c.bf16 %v1906, %v1904
        %v1957 = vpack.c.bf16 %v1909, %v1907
        %v1958 = vpack.c.bf16 %v1910, %v1908
        %v1959 = vpack.c.bf16 %v1913, %v1911
        %v1960 = vpack.c.bf16 %v1914, %v1912
        %v1961 = vpack.c.bf16 %v1917, %v1915
        %v1962 = vpack.c.bf16 %v1918, %v1916
        %v1963 = vpack.c.bf16 %v1921, %v1919
        %v1964 = vpack.c.bf16 %v1922, %v1920
        %v1965 = vpack.c.bf16 %v1925, %v1923
        %v1966 = vpack.c.bf16 %v1926, %v1924
        %v1967 = vpack.c.bf16 %v1929, %v1927
        %v1968 = vpack.c.bf16 %v1930, %v1928
        %v1969 = vpack.c.bf16 %v1933, %v1931
        %v1970 = vpack.c.bf16 %v1934, %v1932
        %v1971 = vpack.c.bf16 %v1937, %v1935
        %v1972 = vpack.c.bf16 %v1938, %v1936
        %v1973 = vpack.c.bf16 %v1941, %v1939
        %v1974 = vpack.c.bf16 %v1942, %v1940
        %v1975 = vld [vmem:[#allocation10 + $0x100] sm:$0xff]
        %v1976 = vld [vmem:[#allocation10 + $0x108] sm:$0xff]
        %v1977 = vld [vmem:[#allocation10 + $0x110] sm:$0xff]
        %v1978 = vld [vmem:[#allocation10 + $0x118] sm:$0xff]
        %v1979 = vld [vmem:[#allocation10 + $0x120] sm:$0xff]
        %v1980 = vld [vmem:[#allocation10 + $0x128] sm:$0xff]
        %v1981 = vld [vmem:[#allocation10 + $0x130] sm:$0xff]
        %v1982 = vld [vmem:[#allocation10 + $0x138] sm:$0xff]
        %v1983 = vld [vmem:[#allocation10 + $0x140] sm:$0xff]
        %v1984 = vld [vmem:[#allocation10 + $0x148] sm:$0xff]
        %v1985 = vld [vmem:[#allocation10 + $0x150] sm:$0xff]
        %v1986 = vld [vmem:[#allocation10 + $0x158] sm:$0xff]
        %v1987 = vld [vmem:[#allocation10 + $0x160] sm:$0xff]
        %v1988 = vld [vmem:[#allocation10 + $0x168] sm:$0xff]
        %v1989 = vld [vmem:[#allocation10 + $0x170] sm:$0xff]
        %v1990 = vld [vmem:[#allocation10 + $0x178] sm:$0xff]
        %v1991 = vld [vmem:[#allocation10 + $0x180] sm:$0xff]
        %v1992 = vld [vmem:[#allocation10 + $0x188] sm:$0xff]
        %v1993 = vld [vmem:[#allocation10 + $0x190] sm:$0xff]
        %v1994 = vld [vmem:[#allocation10 + $0x198] sm:$0xff]
        %v1995 = vld [vmem:[#allocation10 + $0x1a0] sm:$0xff]
        %v1996 = vld [vmem:[#allocation10 + $0x1a8] sm:$0xff]
        %v1997 = vld [vmem:[#allocation10 + $0x1b0] sm:$0xff]
        %v1998 = vld [vmem:[#allocation10 + $0x1b8] sm:$0xff]
        %v1999 = vld [vmem:[#allocation10 + $0x1c0] sm:$0xff]
        %v2000 = vld [vmem:[#allocation10 + $0x1c8] sm:$0xff]
        %v2001 = vld [vmem:[#allocation10 + $0x1d0] sm:$0xff]
        %v2002 = vld [vmem:[#allocation10 + $0x1d8] sm:$0xff]
        %v2003 = vld [vmem:[#allocation10 + $0x1e0] sm:$0xff]
        %v2004 = vld [vmem:[#allocation10 + $0x1e8] sm:$0xff]
        %v2005 = vld [vmem:[#allocation10 + $0x1f0] sm:$0xff]
        %v2006 = vld [vmem:[#allocation10 + $0x1f8] sm:$0xff]
        %v2007 = vld [vmem:[%s7] sm:$0x3]
        %v2009 = vlaneseq
        %v2010 = vshrl.u32 %v2009, 7
        %v2011 = vsub.s32 0, %v2010
        %v2012 = vrot.slane %v2007, %v2011
        %v2013 = vlaneseq
        %v2014 = vshrl.u32 %v2013, 7
        %v2015 = vsub.s32 1, %v2014
        %v2016 = vrot.slane %v2007, %v2015
        %v2051 = vunpack.c.l.b16 %v1975
        %v2052 = vunpack.c.h.b16 %v1975
        %v2053 = vunpack.c.l.b16 %v1976
        %v2054 = vunpack.c.h.b16 %v1976
        %v2055 = vunpack.c.l.b16 %v1977
        %v2056 = vunpack.c.h.b16 %v1977
        %v2057 = vunpack.c.l.b16 %v1978
        %v2058 = vunpack.c.h.b16 %v1978
        %v2059 = vunpack.c.l.b16 %v1979
        %v2060 = vunpack.c.h.b16 %v1979
        %v2061 = vunpack.c.l.b16 %v1980
        %v2062 = vunpack.c.h.b16 %v1980
        %v2063 = vunpack.c.l.b16 %v1981
        %v2064 = vunpack.c.h.b16 %v1981
        %v2065 = vunpack.c.l.b16 %v1982
        %v2066 = vunpack.c.h.b16 %v1982
        %v2067 = vunpack.c.l.b16 %v1983
        %v2068 = vunpack.c.h.b16 %v1983
        %v2069 = vunpack.c.l.b16 %v1984
        %v2070 = vunpack.c.h.b16 %v1984
        %v2071 = vunpack.c.l.b16 %v1985
        %v2072 = vunpack.c.h.b16 %v1985
        %v2073 = vunpack.c.l.b16 %v1986
        %v2074 = vunpack.c.h.b16 %v1986
        %v2075 = vunpack.c.l.b16 %v1987
        %v2076 = vunpack.c.h.b16 %v1987
        %v2077 = vunpack.c.l.b16 %v1988
        %v2078 = vunpack.c.h.b16 %v1988
        %v2079 = vunpack.c.l.b16 %v1989
        %v2080 = vunpack.c.h.b16 %v1989
        %v2081 = vunpack.c.l.b16 %v1990
        %v2082 = vunpack.c.h.b16 %v1990
        %v2083 = vunpack.c.l.b16 %v1991
        %v2084 = vunpack.c.h.b16 %v1991
        %v2085 = vunpack.c.l.b16 %v1992
        %v2086 = vunpack.c.h.b16 %v1992
        %v2087 = vunpack.c.l.b16 %v1993
        %v2088 = vunpack.c.h.b16 %v1993
        %v2089 = vunpack.c.l.b16 %v1994
        %v2090 = vunpack.c.h.b16 %v1994
        %v2091 = vunpack.c.l.b16 %v1995
        %v2092 = vunpack.c.h.b16 %v1995
        %v2093 = vunpack.c.l.b16 %v1996
        %v2094 = vunpack.c.h.b16 %v1996
        %v2095 = vunpack.c.l.b16 %v1997
        %v2096 = vunpack.c.h.b16 %v1997
        %v2097 = vunpack.c.l.b16 %v1998
        %v2098 = vunpack.c.h.b16 %v1998
        %v2099 = vunpack.c.l.b16 %v1999
        %v2100 = vunpack.c.h.b16 %v1999
        %v2101 = vunpack.c.l.b16 %v2000
        %v2102 = vunpack.c.h.b16 %v2000
        %v2103 = vunpack.c.l.b16 %v2001
        %v2104 = vunpack.c.h.b16 %v2001
        %v2105 = vunpack.c.l.b16 %v2002
        %v2106 = vunpack.c.h.b16 %v2002
        %v2107 = vunpack.c.l.b16 %v2003
        %v2108 = vunpack.c.h.b16 %v2003
        %v2109 = vunpack.c.l.b16 %v2004
        %v2110 = vunpack.c.h.b16 %v2004
        %v2111 = vunpack.c.l.b16 %v2005
        %v2112 = vunpack.c.h.b16 %v2005
        %v2113 = vunpack.c.l.b16 %v2006
        %v2114 = vunpack.c.h.b16 %v2006
        %v2115 = vpack.c.b16 %v2053, %v2051
        %v2116 = vpack.c.b16 %v2054, %v2052
        %v2117 = vpack.c.b16 %v2057, %v2055
        %v2118 = vpack.c.b16 %v2058, %v2056
        %v2119 = vpack.c.b16 %v2061, %v2059
        %v2120 = vpack.c.b16 %v2062, %v2060
        %v2121 = vpack.c.b16 %v2065, %v2063
        %v2122 = vpack.c.b16 %v2066, %v2064
        %v2123 = vpack.c.b16 %v2069, %v2067
        %v2124 = vpack.c.b16 %v2070, %v2068
        %v2125 = vpack.c.b16 %v2073, %v2071
        %v2126 = vpack.c.b16 %v2074, %v2072
        %v2127 = vpack.c.b16 %v2077, %v2075
        %v2128 = vpack.c.b16 %v2078, %v2076
        %v2129 = vpack.c.b16 %v2081, %v2079
        %v2130 = vpack.c.b16 %v2082, %v2080
        %v2131 = vpack.c.b16 %v2085, %v2083
        %v2132 = vpack.c.b16 %v2086, %v2084
        %v2133 = vpack.c.b16 %v2089, %v2087
        %v2134 = vpack.c.b16 %v2090, %v2088
        %v2135 = vpack.c.b16 %v2093, %v2091
        %v2136 = vpack.c.b16 %v2094, %v2092
        %v2137 = vpack.c.b16 %v2097, %v2095
        %v2138 = vpack.c.b16 %v2098, %v2096
        %v2139 = vpack.c.b16 %v2101, %v2099
        %v2140 = vpack.c.b16 %v2102, %v2100
        %v2141 = vpack.c.b16 %v2105, %v2103
        %v2142 = vpack.c.b16 %v2106, %v2104
        %v2143 = vpack.c.b16 %v2109, %v2107
        %v2144 = vpack.c.b16 %v2110, %v2108
        %v2145 = vpack.c.b16 %v2113, %v2111
        %v2146 = vpack.c.b16 %v2114, %v2112
        %2179 = vmatprep.subr.bf16.mxu0 %v2116
        %2180 = vmatpush1.bf16.msra.mxu0 %v2115
        %2181 = vmatprep.subr.bf16.mxu0 %v2118
        %2182 = vmatpush1.bf16.msra.mxu0 %v2117
        %2183 = vmatprep.subr.bf16.mxu0 %v2120
        %2184 = vmatpush1.bf16.msra.mxu0 %v2119
        %2185 = vmatprep.subr.bf16.mxu0 %v2122
        %2186 = vmatpush1.bf16.msra.mxu0 %v2121
        %2187 = vmatprep.subr.bf16.mxu0 %v2124
        %2188 = vmatpush1.bf16.msra.mxu0 %v2123
        %2189 = vmatprep.subr.bf16.mxu0 %v2126
        %2190 = vmatpush1.bf16.msra.mxu0 %v2125
        %2191 = vmatprep.subr.bf16.mxu0 %v2128
        %2192 = vmatpush1.bf16.msra.mxu0 %v2127
        %2193 = vmatprep.subr.bf16.mxu0 %v2130
        %2194 = vmatpush1.bf16.msra.mxu0 %v2129
        %2195 = vmatprep.subr.bf16.mxu0 %v2132
        %2196 = vmatpush1.bf16.msra.mxu0 %v2131
        %2197 = vmatprep.subr.bf16.mxu0 %v2134
        %2198 = vmatpush1.bf16.msra.mxu0 %v2133
        %2199 = vmatprep.subr.bf16.mxu0 %v2136
        %2200 = vmatpush1.bf16.msra.mxu0 %v2135
        %2201 = vmatprep.subr.bf16.mxu0 %v2138
        %2202 = vmatpush1.bf16.msra.mxu0 %v2137
        %2203 = vmatprep.subr.bf16.mxu0 %v2140
        %2204 = vmatpush1.bf16.msra.mxu0 %v2139
        %2205 = vmatprep.subr.bf16.mxu0 %v2142
        %2206 = vmatpush1.bf16.msra.mxu0 %v2141
        %2207 = vmatprep.subr.bf16.mxu0 %v2144
        %2208 = vmatpush1.bf16.msra.mxu0 %v2143
        %2209 = vmatprep.subr.bf16.mxu0 %v2146
        %2210 = vmatpush1.bf16.msra.mxu0 %v2145
        %2211 = vmatprep.mubr.bf16.mxu0 %v1944
        %2212 = vmatmul.mubr.bf16.gmra.mrb[0].mxu0 %v1943
        %v2213 = vpop.f32.mrb[0].mxu0
        %v2214 = vadd.f32 %v2012, %v2213
        %v2215 = vpop.f32.mrb[0].mxu0
        %v2216 = vadd.f32 %v2016, %v2215
        %v2217 = vpop.f32.mrb[0].mxu0
        %v2218 = vadd.f32 %v2012, %v2217
        %v2219 = vpop.f32.mrb[0].mxu0
        %v2220 = vadd.f32 %v2016, %v2219
        %2221 = vmatprep.mubr.bf16.mxu0 %v1946
        %2222 = vmatmul.mubr.bf16.gmra.mrb[0].mxu0 %v1945
        %v2223 = vpop.f32.mrb[0].mxu0
        %v2224 = vadd.f32 %v2012, %v2223
        %v2225 = vpop.f32.mrb[0].mxu0
        %v2226 = vadd.f32 %v2016, %v2225
        %v2227 = vpop.f32.mrb[0].mxu0
        %v2228 = vadd.f32 %v2012, %v2227
        %v2229 = vpop.f32.mrb[0].mxu0
        %v2230 = vadd.f32 %v2016, %v2229
        %2231 = vmatprep.mubr.bf16.mxu0 %v1948
        %2232 = vmatmul.mubr.bf16.gmra.mrb[0].mxu0 %v1947
        %v2233 = vpop.f32.mrb[0].mxu0
        %v2234 = vadd.f32 %v2012, %v2233
        %v2235 = vpop.f32.mrb[0].mxu0
        %v2236 = vadd.f32 %v2016, %v2235
        %v2237 = vpop.f32.mrb[0].mxu0
        %v2238 = vadd.f32 %v2012, %v2237
        %v2239 = vpop.f32.mrb[0].mxu0
        %v2240 = vadd.f32 %v2016, %v2239
        %2241 = vmatprep.mubr.bf16.mxu0 %v1950
        %2242 = vmatmul.mubr.bf16.gmra.mrb[0].mxu0 %v1949
        %v2243 = vpop.f32.mrb[0].mxu0
        %v2244 = vadd.f32 %v2012, %v2243
        %v2245 = vpop.f32.mrb[0].mxu0
        %v2246 = vadd.f32 %v2016, %v2245
        %v2247 = vpop.f32.mrb[0].mxu0
        %v2248 = vadd.f32 %v2012, %v2247
        %v2249 = vpop.f32.mrb[0].mxu0
        %v2250 = vadd.f32 %v2016, %v2249
        %2251 = vmatprep.mubr.bf16.mxu0 %v1952
        %2252 = vmatmul.mubr.bf16.gmra.mrb[0].mxu0 %v1951
        %v2253 = vpop.f32.mrb[0].mxu0
        %v2254 = vadd.f32 %v2012, %v2253
        %v2255 = vpop.f32.mrb[0].mxu0
        %v2256 = vadd.f32 %v2016, %v2255
        %v2257 = vpop.f32.mrb[0].mxu0
        %v2258 = vadd.f32 %v2012, %v2257
        %v2259 = vpop.f32.mrb[0].mxu0
        %v2260 = vadd.f32 %v2016, %v2259
        %2261 = vmatprep.mubr.bf16.mxu0 %v1954
        %2262 = vmatmul.mubr.bf16.gmra.mrb[0].mxu0 %v1953
        %v2263 = vpop.f32.mrb[0].mxu0
        %v2264 = vadd.f32 %v2012, %v2263
        %v2265 = vpop.f32.mrb[0].mxu0
        %v2266 = vadd.f32 %v2016, %v2265
        %v2267 = vpop.f32.mrb[0].mxu0
        %v2268 = vadd.f32 %v2012, %v2267
        %v2269 = vpop.f32.mrb[0].mxu0
        %v2270 = vadd.f32 %v2016, %v2269
        %2271 = vmatprep.mubr.bf16.mxu0 %v1956
        %2272 = vmatmul.mubr.bf16.gmra.mrb[0].mxu0 %v1955
        %v2273 = vpop.f32.mrb[0].mxu0
        %v2274 = vadd.f32 %v2012, %v2273
        %v2275 = vpop.f32.mrb[0].mxu0
        %v2276 = vadd.f32 %v2016, %v2275
        %v2277 = vpop.f32.mrb[0].mxu0
        %v2278 = vadd.f32 %v2012, %v2277
        %v2279 = vpop.f32.mrb[0].mxu0
        %v2280 = vadd.f32 %v2016, %v2279
        %2281 = vmatprep.mubr.bf16.mxu0 %v1958
        %2282 = vmatmul.mubr.bf16.gmra.mrb[0].mxu0 %v1957
        %v2283 = vpop.f32.mrb[0].mxu0
        %v2284 = vadd.f32 %v2012, %v2283
        %v2285 = vpop.f32.mrb[0].mxu0
        %v2286 = vadd.f32 %v2016, %v2285
        %v2287 = vpop.f32.mrb[0].mxu0
        %v2288 = vadd.f32 %v2012, %v2287
        %v2289 = vpop.f32.mrb[0].mxu0
        %v2290 = vadd.f32 %v2016, %v2289
        %2291 = vmatprep.mubr.bf16.mxu0 %v1960
        %2292 = vmatmul.mubr.bf16.gmra.mrb[0].mxu0 %v1959
        %v2293 = vpop.f32.mrb[0].mxu0
        %v2294 = vadd.f32 %v2012, %v2293
        %v2295 = vpop.f32.mrb[0].mxu0
        %v2296 = vadd.f32 %v2016, %v2295
        %v2297 = vpop.f32.mrb[0].mxu0
        %v2298 = vadd.f32 %v2012, %v2297
        %v2299 = vpop.f32.mrb[0].mxu0
        %v2300 = vadd.f32 %v2016, %v2299
        %2301 = vmatprep.mubr.bf16.mxu0 %v1962
        %2302 = vmatmul.mubr.bf16.gmra.mrb[0].mxu0 %v1961
        %v2303 = vpop.f32.mrb[0].mxu0
        %v2304 = vadd.f32 %v2012, %v2303
        %v2305 = vpop.f32.mrb[0].mxu0
        %v2306 = vadd.f32 %v2016, %v2305
        %v2307 = vpop.f32.mrb[0].mxu0
        %v2308 = vadd.f32 %v2012, %v2307
        %v2309 = vpop.f32.mrb[0].mxu0
        %v2310 = vadd.f32 %v2016, %v2309
        %2311 = vmatprep.mubr.bf16.mxu0 %v1964
        %2312 = vmatmul.mubr.bf16.gmra.mrb[0].mxu0 %v1963
        %v2313 = vpop.f32.mrb[0].mxu0
        %v2314 = vadd.f32 %v2012, %v2313
        %v2315 = vpop.f32.mrb[0].mxu0
        %v2316 = vadd.f32 %v2016, %v2315
        %v2317 = vpop.f32.mrb[0].mxu0
        %v2318 = vadd.f32 %v2012, %v2317
        %v2319 = vpop.f32.mrb[0].mxu0
        %v2320 = vadd.f32 %v2016, %v2319
        %2321 = vmatprep.mubr.bf16.mxu0 %v1966
        %2322 = vmatmul.mubr.bf16.gmra.mrb[0].mxu0 %v1965
        %v2323 = vpop.f32.mrb[0].mxu0
        %v2324 = vadd.f32 %v2012, %v2323
        %v2325 = vpop.f32.mrb[0].mxu0
        %v2326 = vadd.f32 %v2016, %v2325
        %v2327 = vpop.f32.mrb[0].mxu0
        %v2328 = vadd.f32 %v2012, %v2327
        %v2329 = vpop.f32.mrb[0].mxu0
        %v2330 = vadd.f32 %v2016, %v2329
        %2331 = vmatprep.mubr.bf16.mxu0 %v1968
        %2332 = vmatmul.mubr.bf16.gmra.mrb[0].mxu0 %v1967
        %v2333 = vpop.f32.mrb[0].mxu0
        %v2334 = vadd.f32 %v2012, %v2333
        %v2335 = vpop.f32.mrb[0].mxu0
        %v2336 = vadd.f32 %v2016, %v2335
        %v2337 = vpop.f32.mrb[0].mxu0
        %v2338 = vadd.f32 %v2012, %v2337
        %v2339 = vpop.f32.mrb[0].mxu0
        %v2340 = vadd.f32 %v2016, %v2339
        %2341 = vmatprep.mubr.bf16.mxu0 %v1970
        %2342 = vmatmul.mubr.bf16.gmra.mrb[0].mxu0 %v1969
        %v2343 = vpop.f32.mrb[0].mxu0
        %v2344 = vadd.f32 %v2012, %v2343
        %v2345 = vpop.f32.mrb[0].mxu0
        %v2346 = vadd.f32 %v2016, %v2345
        %v2347 = vpop.f32.mrb[0].mxu0
        %v2348 = vadd.f32 %v2012, %v2347
        %v2349 = vpop.f32.mrb[0].mxu0
        %v2350 = vadd.f32 %v2016, %v2349
        %2351 = vmatprep.mubr.bf16.mxu0 %v1972
        %2352 = vmatmul.mubr.bf16.gmra.mrb[0].mxu0 %v1971
        %v2353 = vpop.f32.mrb[0].mxu0
        %v2354 = vadd.f32 %v2012, %v2353
        %v2355 = vpop.f32.mrb[0].mxu0
        %v2356 = vadd.f32 %v2016, %v2355
        %v2357 = vpop.f32.mrb[0].mxu0
        %v2358 = vadd.f32 %v2012, %v2357
        %v2359 = vpop.f32.mrb[0].mxu0
        %v2360 = vadd.f32 %v2016, %v2359
        %2361 = vmatprep.mubr.bf16.mxu0 %v1974
        %2362 = vmatmul.mubr.bf16.gmra.mrb[0].mxu0 %v1973
        %v2363 = vpop.f32.mrb[0].mxu0
        %v2364 = vadd.f32 %v2012, %v2363
        %v2365 = vpop.f32.mrb[0].mxu0
        %v2366 = vadd.f32 %v2016, %v2365
        %v2367 = vpop.f32.mrb[0].mxu0
        %v2368 = vadd.f32 %v2012, %v2367
        %v2369 = vpop.f32.mrb[0].mxu0
        %v2370 = vadd.f32 %v2016, %v2369
        %2371 = vdwg.mxu0
        %v2372 = vmax.f32 %v2214, 0.0
        %v2373 = vmax.f32 %v2216, 0.0
        %v2374 = vmax.f32 %v2218, 0.0
        %v2375 = vmax.f32 %v2220, 0.0
        %v2376 = vmax.f32 %v2224, 0.0
        %v2377 = vmax.f32 %v2226, 0.0
        %v2378 = vmax.f32 %v2228, 0.0
        %v2379 = vmax.f32 %v2230, 0.0
        %v2380 = vmax.f32 %v2234, 0.0
        %v2381 = vmax.f32 %v2236, 0.0
        %v2382 = vmax.f32 %v2238, 0.0
        %v2383 = vmax.f32 %v2240, 0.0
        %v2384 = vmax.f32 %v2244, 0.0
        %v2385 = vmax.f32 %v2246, 0.0
        %v2386 = vmax.f32 %v2248, 0.0
        %v2387 = vmax.f32 %v2250, 0.0
        %v2388 = vmax.f32 %v2254, 0.0
        %v2389 = vmax.f32 %v2256, 0.0
        %v2390 = vmax.f32 %v2258, 0.0
        %v2391 = vmax.f32 %v2260, 0.0
        %v2392 = vmax.f32 %v2264, 0.0
        %v2393 = vmax.f32 %v2266, 0.0
        %v2394 = vmax.f32 %v2268, 0.0
        %v2395 = vmax.f32 %v2270, 0.0
        %v2396 = vmax.f32 %v2274, 0.0
        %v2397 = vmax.f32 %v2276, 0.0
        %v2398 = vmax.f32 %v2278, 0.0
        %v2399 = vmax.f32 %v2280, 0.0
        %v2400 = vmax.f32 %v2284, 0.0
        %v2401 = vmax.f32 %v2286, 0.0
        %v2402 = vmax.f32 %v2288, 0.0
        %v2403 = vmax.f32 %v2290, 0.0
        %v2404 = vmax.f32 %v2294, 0.0
        %v2405 = vmax.f32 %v2296, 0.0
        %v2406 = vmax.f32 %v2298, 0.0
        %v2407 = vmax.f32 %v2300, 0.0
        %v2408 = vmax.f32 %v2304, 0.0
        %v2409 = vmax.f32 %v2306, 0.0
        %v2410 = vmax.f32 %v2308, 0.0
        %v2411 = vmax.f32 %v2310, 0.0
        %v2412 = vmax.f32 %v2314, 0.0
        %v2413 = vmax.f32 %v2316, 0.0
        %v2414 = vmax.f32 %v2318, 0.0
        %v2415 = vmax.f32 %v2320, 0.0
        %v2416 = vmax.f32 %v2324, 0.0
        %v2417 = vmax.f32 %v2326, 0.0
        %v2418 = vmax.f32 %v2328, 0.0
        %v2419 = vmax.f32 %v2330, 0.0
        %v2420 = vmax.f32 %v2334, 0.0
        %v2421 = vmax.f32 %v2336, 0.0
        %v2422 = vmax.f32 %v2338, 0.0
        %v2423 = vmax.f32 %v2340, 0.0
        %v2424 = vmax.f32 %v2344, 0.0
        %v2425 = vmax.f32 %v2346, 0.0
        %v2426 = vmax.f32 %v2348, 0.0
        %v2427 = vmax.f32 %v2350, 0.0
        %v2428 = vmax.f32 %v2354, 0.0
        %v2429 = vmax.f32 %v2356, 0.0
        %v2430 = vmax.f32 %v2358, 0.0
        %v2431 = vmax.f32 %v2360, 0.0
        %v2432 = vmax.f32 %v2364, 0.0
        %v2433 = vmax.f32 %v2366, 0.0
        %v2434 = vmax.f32 %v2368, 0.0
        %v2435 = vmax.f32 %v2370, 0.0
        %v2436 = vpack.c.bf16 %v2374, %v2372
        %v2437 = vpack.c.bf16 %v2375, %v2373
        %v2438 = vpack.c.bf16 %v2378, %v2376
        %v2439 = vpack.c.bf16 %v2379, %v2377
        %v2440 = vpack.c.bf16 %v2382, %v2380
        %v2441 = vpack.c.bf16 %v2383, %v2381
        %v2442 = vpack.c.bf16 %v2386, %v2384
        %v2443 = vpack.c.bf16 %v2387, %v2385
        %v2444 = vpack.c.bf16 %v2390, %v2388
        %v2445 = vpack.c.bf16 %v2391, %v2389
        %v2446 = vpack.c.bf16 %v2394, %v2392
        %v2447 = vpack.c.bf16 %v2395, %v2393
        %v2448 = vpack.c.bf16 %v2398, %v2396
        %v2449 = vpack.c.bf16 %v2399, %v2397
        %v2450 = vpack.c.bf16 %v2402, %v2400
        %v2451 = vpack.c.bf16 %v2403, %v2401
        %v2452 = vpack.c.bf16 %v2406, %v2404
        %v2453 = vpack.c.bf16 %v2407, %v2405
        %v2454 = vpack.c.bf16 %v2410, %v2408
        %v2455 = vpack.c.bf16 %v2411, %v2409
        %v2456 = vpack.c.bf16 %v2414, %v2412
        %v2457 = vpack.c.bf16 %v2415, %v2413
        %v2458 = vpack.c.bf16 %v2418, %v2416
        %v2459 = vpack.c.bf16 %v2419, %v2417
        %v2460 = vpack.c.bf16 %v2422, %v2420
        %v2461 = vpack.c.bf16 %v2423, %v2421
        %v2462 = vpack.c.bf16 %v2426, %v2424
        %v2463 = vpack.c.bf16 %v2427, %v2425
        %v2464 = vpack.c.bf16 %v2430, %v2428
        %v2465 = vpack.c.bf16 %v2431, %v2429
        %v2466 = vpack.c.bf16 %v2434, %v2432
        %v2467 = vpack.c.bf16 %v2435, %v2433
        %v2468 = vld [vmem:[#allocation10 + $0x200] sm:$0xff]
        %v2469 = vld [vmem:[#allocation10 + $0x208] sm:$0xff]
        %v2470 = vld [vmem:[#allocation10 + $0x210] sm:$0xff]
        %v2471 = vld [vmem:[#allocation10 + $0x218] sm:$0xff]
        %v2472 = vld [vmem:[#allocation10 + $0x220] sm:$0xff]
        %v2473 = vld [vmem:[#allocation10 + $0x228] sm:$0xff]
        %v2474 = vld [vmem:[#allocation10 + $0x230] sm:$0xff]
        %v2475 = vld [vmem:[#allocation10 + $0x238] sm:$0xff]
        %v2476 = vld [vmem:[#allocation10 + $0x240] sm:$0xff]
        %v2477 = vld [vmem:[#allocation10 + $0x248] sm:$0xff]
        %v2478 = vld [vmem:[#allocation10 + $0x250] sm:$0xff]
        %v2479 = vld [vmem:[#allocation10 + $0x258] sm:$0xff]
        %v2480 = vld [vmem:[#allocation10 + $0x260] sm:$0xff]
        %v2481 = vld [vmem:[#allocation10 + $0x268] sm:$0xff]
        %v2482 = vld [vmem:[#allocation10 + $0x270] sm:$0xff]
        %v2483 = vld [vmem:[#allocation10 + $0x278] sm:$0xff]
        %v2484 = vld [vmem:[#allocation10 + $0x280] sm:$0xff]
        %v2485 = vld [vmem:[#allocation10 + $0x288] sm:$0xff]
        %v2486 = vld [vmem:[#allocation10 + $0x290] sm:$0xff]
        %v2487 = vld [vmem:[#allocation10 + $0x298] sm:$0xff]
        %v2488 = vld [vmem:[#allocation10 + $0x2a0] sm:$0xff]
        %v2489 = vld [vmem:[#allocation10 + $0x2a8] sm:$0xff]
        %v2490 = vld [vmem:[#allocation10 + $0x2b0] sm:$0xff]
        %v2491 = vld [vmem:[#allocation10 + $0x2b8] sm:$0xff]
        %v2492 = vld [vmem:[#allocation10 + $0x2c0] sm:$0xff]
        %v2493 = vld [vmem:[#allocation10 + $0x2c8] sm:$0xff]
        %v2494 = vld [vmem:[#allocation10 + $0x2d0] sm:$0xff]
        %v2495 = vld [vmem:[#allocation10 + $0x2d8] sm:$0xff]
        %v2496 = vld [vmem:[#allocation10 + $0x2e0] sm:$0xff]
        %v2497 = vld [vmem:[#allocation10 + $0x2e8] sm:$0xff]
        %v2498 = vld [vmem:[#allocation10 + $0x2f0] sm:$0xff]
        %v2499 = vld [vmem:[#allocation10 + $0x2f8] sm:$0xff]
        %v2500 = vld [vmem:[%s8] sm:$0x3]
        %v2502 = vlaneseq
        %v2503 = vshrl.u32 %v2502, 7
        %v2504 = vsub.s32 0, %v2503
        %v2505 = vrot.slane %v2500, %v2504
        %v2506 = vlaneseq
        %v2507 = vshrl.u32 %v2506, 7
        %v2508 = vsub.s32 1, %v2507
        %v2509 = vrot.slane %v2500, %v2508
        %v2544 = vunpack.c.l.b16 %v2468
        %v2545 = vunpack.c.h.b16 %v2468
        %v2546 = vunpack.c.l.b16 %v2469
        %v2547 = vunpack.c.h.b16 %v2469
        %v2548 = vunpack.c.l.b16 %v2470
        %v2549 = vunpack.c.h.b16 %v2470
        %v2550 = vunpack.c.l.b16 %v2471
        %v2551 = vunpack.c.h.b16 %v2471
        %v2552 = vunpack.c.l.b16 %v2472
        %v2553 = vunpack.c.h.b16 %v2472
        %v2554 = vunpack.c.l.b16 %v2473
        %v2555 = vunpack.c.h.b16 %v2473
        %v2556 = vunpack.c.l.b16 %v2474
        %v2557 = vunpack.c.h.b16 %v2474
        %v2558 = vunpack.c.l.b16 %v2475
        %v2559 = vunpack.c.h.b16 %v2475
        %v2560 = vunpack.c.l.b16 %v2476
        %v2561 = vunpack.c.h.b16 %v2476
        %v2562 = vunpack.c.l.b16 %v2477
        %v2563 = vunpack.c.h.b16 %v2477
        %v2564 = vunpack.c.l.b16 %v2478
        %v2565 = vunpack.c.h.b16 %v2478
        %v2566 = vunpack.c.l.b16 %v2479
        %v2567 = vunpack.c.h.b16 %v2479
        %v2568 = vunpack.c.l.b16 %v2480
        %v2569 = vunpack.c.h.b16 %v2480
        %v2570 = vunpack.c.l.b16 %v2481
        %v2571 = vunpack.c.h.b16 %v2481
        %v2572 = vunpack.c.l.b16 %v2482
        %v2573 = vunpack.c.h.b16 %v2482
        %v2574 = vunpack.c.l.b16 %v2483
        %v2575 = vunpack.c.h.b16 %v2483
        %v2576 = vunpack.c.l.b16 %v2484
        %v2577 = vunpack.c.h.b16 %v2484
        %v2578 = vunpack.c.l.b16 %v2485
        %v2579 = vunpack.c.h.b16 %v2485
        %v2580 = vunpack.c.l.b16 %v2486
        %v2581 = vunpack.c.h.b16 %v2486
        %v2582 = vunpack.c.l.b16 %v2487
        %v2583 = vunpack.c.h.b16 %v2487
        %v2584 = vunpack.c.l.b16 %v2488
        %v2585 = vunpack.c.h.b16 %v2488
        %v2586 = vunpack.c.l.b16 %v2489
        %v2587 = vunpack.c.h.b16 %v2489
        %v2588 = vunpack.c.l.b16 %v2490
        %v2589 = vunpack.c.h.b16 %v2490
        %v2590 = vunpack.c.l.b16 %v2491
        %v2591 = vunpack.c.h.b16 %v2491
        %v2592 = vunpack.c.l.b16 %v2492
        %v2593 = vunpack.c.h.b16 %v2492
        %v2594 = vunpack.c.l.b16 %v2493
        %v2595 = vunpack.c.h.b16 %v2493
        %v2596 = vunpack.c.l.b16 %v2494
        %v2597 = vunpack.c.h.b16 %v2494
        %v2598 = vunpack.c.l.b16 %v2495
        %v2599 = vunpack.c.h.b16 %v2495
        %v2600 = vunpack.c.l.b16 %v2496
        %v2601 = vunpack.c.h.b16 %v2496
        %v2602 = vunpack.c.l.b16 %v2497
        %v2603 = vunpack.c.h.b16 %v2497
        %v2604 = vunpack.c.l.b16 %v2498
        %v2605 = vunpack.c.h.b16 %v2498
        %v2606 = vunpack.c.l.b16 %v2499
        %v2607 = vunpack.c.h.b16 %v2499
        %v2608 = vpack.c.b16 %v2546, %v2544
        %v2609 = vpack.c.b16 %v2547, %v2545
        %v2610 = vpack.c.b16 %v2550, %v2548
        %v2611 = vpack.c.b16 %v2551, %v2549
        %v2612 = vpack.c.b16 %v2554, %v2552
        %v2613 = vpack.c.b16 %v2555, %v2553
        %v2614 = vpack.c.b16 %v2558, %v2556
        %v2615 = vpack.c.b16 %v2559, %v2557
        %v2616 = vpack.c.b16 %v2562, %v2560
        %v2617 = vpack.c.b16 %v2563, %v2561
        %v2618 = vpack.c.b16 %v2566, %v2564
        %v2619 = vpack.c.b16 %v2567, %v2565
        %v2620 = vpack.c.b16 %v2570, %v2568
        %v2621 = vpack.c.b16 %v2571, %v2569
        %v2622 = vpack.c.b16 %v2574, %v2572
        %v2623 = vpack.c.b16 %v2575, %v2573
        %v2624 = vpack.c.b16 %v2578, %v2576
        %v2625 = vpack.c.b16 %v2579, %v2577
        %v2626 = vpack.c.b16 %v2582, %v2580
        %v2627 = vpack.c.b16 %v2583, %v2581
        %v2628 = vpack.c.b16 %v2586, %v2584
        %v2629 = vpack.c.b16 %v2587, %v2585
        %v2630 = vpack.c.b16 %v2590, %v2588
        %v2631 = vpack.c.b16 %v2591, %v2589
        %v2632 = vpack.c.b16 %v2594, %v2592
        %v2633 = vpack.c.b16 %v2595, %v2593
        %v2634 = vpack.c.b16 %v2598, %v2596
        %v2635 = vpack.c.b16 %v2599, %v2597
        %v2636 = vpack.c.b16 %v2602, %v2600
        %v2637 = vpack.c.b16 %v2603, %v2601
        %v2638 = vpack.c.b16 %v2606, %v2604
        %v2639 = vpack.c.b16 %v2607, %v2605
        %2672 = vmatprep.subr.bf16.mxu0 %v2609
        %2673 = vmatpush1.bf16.msra.mxu0 %v2608
        %2674 = vmatprep.subr.bf16.mxu0 %v2611
        %2675 = vmatpush1.bf16.msra.mxu0 %v2610
        %2676 = vmatprep.subr.bf16.mxu0 %v2613
        %2677 = vmatpush1.bf16.msra.mxu0 %v2612
        %2678 = vmatprep.subr.bf16.mxu0 %v2615
        %2679 = vmatpush1.bf16.msra.mxu0 %v2614
        %2680 = vmatprep.subr.bf16.mxu0 %v2617
        %2681 = vmatpush1.bf16.msra.mxu0 %v2616
        %2682 = vmatprep.subr.bf16.mxu0 %v2619
        %2683 = vmatpush1.bf16.msra.mxu0 %v2618
        %2684 = vmatprep.subr.bf16.mxu0 %v2621
        %2685 = vmatpush1.bf16.msra.mxu0 %v2620
        %2686 = vmatprep.subr.bf16.mxu0 %v2623
        %2687 = vmatpush1.bf16.msra.mxu0 %v2622
        %2688 = vmatprep.subr.bf16.mxu0 %v2625
        %2689 = vmatpush1.bf16.msra.mxu0 %v2624
        %2690 = vmatprep.subr.bf16.mxu0 %v2627
        %2691 = vmatpush1.bf16.msra.mxu0 %v2626
        %2692 = vmatprep.subr.bf16.mxu0 %v2629
        %2693 = vmatpush1.bf16.msra.mxu0 %v2628
        %2694 = vmatprep.subr.bf16.mxu0 %v2631
        %2695 = vmatpush1.bf16.msra.mxu0 %v2630
        %2696 = vmatprep.subr.bf16.mxu0 %v2633
        %2697 = vmatpush1.bf16.msra.mxu0 %v2632
        %2698 = vmatprep.subr.bf16.mxu0 %v2635
        %2699 = vmatpush1.bf16.msra.mxu0 %v2634
        %2700 = vmatprep.subr.bf16.mxu0 %v2637
        %2701 = vmatpush1.bf16.msra.mxu0 %v2636
        %2702 = vmatprep.subr.bf16.mxu0 %v2639
        %2703 = vmatpush1.bf16.msra.mxu0 %v2638
        %2704 = vmatprep.mubr.bf16.mxu0 %v2437
        %2705 = vmatmul.mubr.bf16.gmra.mrb[0].mxu0 %v2436
        %v2706 = vpop.f32.mrb[0].mxu0
        %v2707 = vadd.f32 %v2505, %v2706
        %v2708 = vpop.f32.mrb[0].mxu0
        %v2709 = vadd.f32 %v2509, %v2708
        %v2710 = vpop.f32.mrb[0].mxu0
        %v2711 = vadd.f32 %v2505, %v2710
        %v2712 = vpop.f32.mrb[0].mxu0
        %v2713 = vadd.f32 %v2509, %v2712
        %2714 = vmatprep.mubr.bf16.mxu0 %v2439
        %2715 = vmatmul.mubr.bf16.gmra.mrb[0].mxu0 %v2438
        %v2716 = vpop.f32.mrb[0].mxu0
        %v2717 = vadd.f32 %v2505, %v2716
        %v2718 = vpop.f32.mrb[0].mxu0
        %v2719 = vadd.f32 %v2509, %v2718
        %v2720 = vpop.f32.mrb[0].mxu0
        %v2721 = vadd.f32 %v2505, %v2720
        %v2722 = vpop.f32.mrb[0].mxu0
        %v2723 = vadd.f32 %v2509, %v2722
        %2724 = vmatprep.mubr.bf16.mxu0 %v2441
        %2725 = vmatmul.mubr.bf16.gmra.mrb[0].mxu0 %v2440
        %v2726 = vpop.f32.mrb[0].mxu0
        %v2727 = vadd.f32 %v2505, %v2726
        %v2728 = vpop.f32.mrb[0].mxu0
        %v2729 = vadd.f32 %v2509, %v2728
        %v2730 = vpop.f32.mrb[0].mxu0
        %v2731 = vadd.f32 %v2505, %v2730
        %v2732 = vpop.f32.mrb[0].mxu0
        %v2733 = vadd.f32 %v2509, %v2732
        %2734 = vmatprep.mubr.bf16.mxu0 %v2443
        %2735 = vmatmul.mubr.bf16.gmra.mrb[0].mxu0 %v2442
        %v2736 = vpop.f32.mrb[0].mxu0
        %v2737 = vadd.f32 %v2505, %v2736
        %v2738 = vpop.f32.mrb[0].mxu0
        %v2739 = vadd.f32 %v2509, %v2738
        %v2740 = vpop.f32.mrb[0].mxu0
        %v2741 = vadd.f32 %v2505, %v2740
        %v2742 = vpop.f32.mrb[0].mxu0
        %v2743 = vadd.f32 %v2509, %v2742
        %2744 = vmatprep.mubr.bf16.mxu0 %v2445
        %2745 = vmatmul.mubr.bf16.gmra.mrb[0].mxu0 %v2444
        %v2746 = vpop.f32.mrb[0].mxu0
        %v2747 = vadd.f32 %v2505, %v2746
        %v2748 = vpop.f32.mrb[0].mxu0
        %v2749 = vadd.f32 %v2509, %v2748
        %v2750 = vpop.f32.mrb[0].mxu0
        %v2751 = vadd.f32 %v2505, %v2750
        %v2752 = vpop.f32.mrb[0].mxu0
        %v2753 = vadd.f32 %v2509, %v2752
        %2754 = vmatprep.mubr.bf16.mxu0 %v2447
        %2755 = vmatmul.mubr.bf16.gmra.mrb[0].mxu0 %v2446
        %v2756 = vpop.f32.mrb[0].mxu0
        %v2757 = vadd.f32 %v2505, %v2756
        %v2758 = vpop.f32.mrb[0].mxu0
        %v2759 = vadd.f32 %v2509, %v2758
        %v2760 = vpop.f32.mrb[0].mxu0
        %v2761 = vadd.f32 %v2505, %v2760
        %v2762 = vpop.f32.mrb[0].mxu0
        %v2763 = vadd.f32 %v2509, %v2762
        %2764 = vmatprep.mubr.bf16.mxu0 %v2449
        %2765 = vmatmul.mubr.bf16.gmra.mrb[0].mxu0 %v2448
        %v2766 = vpop.f32.mrb[0].mxu0
        %v2767 = vadd.f32 %v2505, %v2766
        %v2768 = vpop.f32.mrb[0].mxu0
        %v2769 = vadd.f32 %v2509, %v2768
        %v2770 = vpop.f32.mrb[0].mxu0
        %v2771 = vadd.f32 %v2505, %v2770
        %v2772 = vpop.f32.mrb[0].mxu0
        %v2773 = vadd.f32 %v2509, %v2772
        %2774 = vmatprep.mubr.bf16.mxu0 %v2451
        %2775 = vmatmul.mubr.bf16.gmra.mrb[0].mxu0 %v2450
        %v2776 = vpop.f32.mrb[0].mxu0
        %v2777 = vadd.f32 %v2505, %v2776
        %v2778 = vpop.f32.mrb[0].mxu0
        %v2779 = vadd.f32 %v2509, %v2778
        %v2780 = vpop.f32.mrb[0].mxu0
        %v2781 = vadd.f32 %v2505, %v2780
        %v2782 = vpop.f32.mrb[0].mxu0
        %v2783 = vadd.f32 %v2509, %v2782
        %2784 = vmatprep.mubr.bf16.mxu0 %v2453
        %2785 = vmatmul.mubr.bf16.gmra.mrb[0].mxu0 %v2452
        %v2786 = vpop.f32.mrb[0].mxu0
        %v2787 = vadd.f32 %v2505, %v2786
        %v2788 = vpop.f32.mrb[0].mxu0
        %v2789 = vadd.f32 %v2509, %v2788
        %v2790 = vpop.f32.mrb[0].mxu0
        %v2791 = vadd.f32 %v2505, %v2790
        %v2792 = vpop.f32.mrb[0].mxu0
        %v2793 = vadd.f32 %v2509, %v2792
        %2794 = vmatprep.mubr.bf16.mxu0 %v2455
        %2795 = vmatmul.mubr.bf16.gmra.mrb[0].mxu0 %v2454
        %v2796 = vpop.f32.mrb[0].mxu0
        %v2797 = vadd.f32 %v2505, %v2796
        %v2798 = vpop.f32.mrb[0].mxu0
        %v2799 = vadd.f32 %v2509, %v2798
        %v2800 = vpop.f32.mrb[0].mxu0
        %v2801 = vadd.f32 %v2505, %v2800
        %v2802 = vpop.f32.mrb[0].mxu0
        %v2803 = vadd.f32 %v2509, %v2802
        %2804 = vmatprep.mubr.bf16.mxu0 %v2457
        %2805 = vmatmul.mubr.bf16.gmra.mrb[0].mxu0 %v2456
        %v2806 = vpop.f32.mrb[0].mxu0
        %v2807 = vadd.f32 %v2505, %v2806
        %v2808 = vpop.f32.mrb[0].mxu0
        %v2809 = vadd.f32 %v2509, %v2808
        %v2810 = vpop.f32.mrb[0].mxu0
        %v2811 = vadd.f32 %v2505, %v2810
        %v2812 = vpop.f32.mrb[0].mxu0
        %v2813 = vadd.f32 %v2509, %v2812
        %2814 = vmatprep.mubr.bf16.mxu0 %v2459
        %2815 = vmatmul.mubr.bf16.gmra.mrb[0].mxu0 %v2458
        %v2816 = vpop.f32.mrb[0].mxu0
        %v2817 = vadd.f32 %v2505, %v2816
        %v2818 = vpop.f32.mrb[0].mxu0
        %v2819 = vadd.f32 %v2509, %v2818
        %v2820 = vpop.f32.mrb[0].mxu0
        %v2821 = vadd.f32 %v2505, %v2820
        %v2822 = vpop.f32.mrb[0].mxu0
        %v2823 = vadd.f32 %v2509, %v2822
        %2824 = vmatprep.mubr.bf16.mxu0 %v2461
        %2825 = vmatmul.mubr.bf16.gmra.mrb[0].mxu0 %v2460
        %v2826 = vpop.f32.mrb[0].mxu0
        %v2827 = vadd.f32 %v2505, %v2826
        %v2828 = vpop.f32.mrb[0].mxu0
        %v2829 = vadd.f32 %v2509, %v2828
        %v2830 = vpop.f32.mrb[0].mxu0
        %v2831 = vadd.f32 %v2505, %v2830
        %v2832 = vpop.f32.mrb[0].mxu0
        %v2833 = vadd.f32 %v2509, %v2832
        %2834 = vmatprep.mubr.bf16.mxu0 %v2463
        %2835 = vmatmul.mubr.bf16.gmra.mrb[0].mxu0 %v2462
        %v2836 = vpop.f32.mrb[0].mxu0
        %v2837 = vadd.f32 %v2505, %v2836
        %v2838 = vpop.f32.mrb[0].mxu0
        %v2839 = vadd.f32 %v2509, %v2838
        %v2840 = vpop.f32.mrb[0].mxu0
        %v2841 = vadd.f32 %v2505, %v2840
        %v2842 = vpop.f32.mrb[0].mxu0
        %v2843 = vadd.f32 %v2509, %v2842
        %2844 = vmatprep.mubr.bf16.mxu0 %v2465
        %2845 = vmatmul.mubr.bf16.gmra.mrb[0].mxu0 %v2464
        %v2846 = vpop.f32.mrb[0].mxu0
        %v2847 = vadd.f32 %v2505, %v2846
        %v2848 = vpop.f32.mrb[0].mxu0
        %v2849 = vadd.f32 %v2509, %v2848
        %v2850 = vpop.f32.mrb[0].mxu0
        %v2851 = vadd.f32 %v2505, %v2850
        %v2852 = vpop.f32.mrb[0].mxu0
        %v2853 = vadd.f32 %v2509, %v2852
        %2854 = vmatprep.mubr.bf16.mxu0 %v2467
        %2855 = vmatmul.mubr.bf16.gmra.mrb[0].mxu0 %v2466
        %v2856 = vpop.f32.mrb[0].mxu0
        %v2857 = vadd.f32 %v2505, %v2856
        %v2858 = vpop.f32.mrb[0].mxu0
        %v2859 = vadd.f32 %v2509, %v2858
        %v2860 = vpop.f32.mrb[0].mxu0
        %v2861 = vadd.f32 %v2505, %v2860
        %v2862 = vpop.f32.mrb[0].mxu0
        %v2863 = vadd.f32 %v2509, %v2862
        %2864 = vdwg.mxu0
        %v2865 = vmax.f32 %v2707, 0.0
        %v2866 = vmax.f32 %v2709, 0.0
        %v2867 = vmax.f32 %v2711, 0.0
        %v2868 = vmax.f32 %v2713, 0.0
        %v2869 = vmax.f32 %v2717, 0.0
        %v2870 = vmax.f32 %v2719, 0.0
        %v2871 = vmax.f32 %v2721, 0.0
        %v2872 = vmax.f32 %v2723, 0.0
        %v2873 = vmax.f32 %v2727, 0.0
        %v2874 = vmax.f32 %v2729, 0.0
        %v2875 = vmax.f32 %v2731, 0.0
        %v2876 = vmax.f32 %v2733, 0.0
        %v2877 = vmax.f32 %v2737, 0.0
        %v2878 = vmax.f32 %v2739, 0.0
        %v2879 = vmax.f32 %v2741, 0.0
        %v2880 = vmax.f32 %v2743, 0.0
        %v2881 = vmax.f32 %v2747, 0.0
        %v2882 = vmax.f32 %v2749, 0.0
        %v2883 = vmax.f32 %v2751, 0.0
        %v2884 = vmax.f32 %v2753, 0.0
        %v2885 = vmax.f32 %v2757, 0.0
        %v2886 = vmax.f32 %v2759, 0.0
        %v2887 = vmax.f32 %v2761, 0.0
        %v2888 = vmax.f32 %v2763, 0.0
        %v2889 = vmax.f32 %v2767, 0.0
        %v2890 = vmax.f32 %v2769, 0.0
        %v2891 = vmax.f32 %v2771, 0.0
        %v2892 = vmax.f32 %v2773, 0.0
        %v2893 = vmax.f32 %v2777, 0.0
        %v2894 = vmax.f32 %v2779, 0.0
        %v2895 = vmax.f32 %v2781, 0.0
        %v2896 = vmax.f32 %v2783, 0.0
        %v2897 = vmax.f32 %v2787, 0.0
        %v2898 = vmax.f32 %v2789, 0.0
        %v2899 = vmax.f32 %v2791, 0.0
        %v2900 = vmax.f32 %v2793, 0.0
        %v2901 = vmax.f32 %v2797, 0.0
        %v2902 = vmax.f32 %v2799, 0.0
        %v2903 = vmax.f32 %v2801, 0.0
        %v2904 = vmax.f32 %v2803, 0.0
        %v2905 = vmax.f32 %v2807, 0.0
        %v2906 = vmax.f32 %v2809, 0.0
        %v2907 = vmax.f32 %v2811, 0.0
        %v2908 = vmax.f32 %v2813, 0.0
        %v2909 = vmax.f32 %v2817, 0.0
        %v2910 = vmax.f32 %v2819, 0.0
        %v2911 = vmax.f32 %v2821, 0.0
        %v2912 = vmax.f32 %v2823, 0.0
        %v2913 = vmax.f32 %v2827, 0.0
        %v2914 = vmax.f32 %v2829, 0.0
        %v2915 = vmax.f32 %v2831, 0.0
        %v2916 = vmax.f32 %v2833, 0.0
        %v2917 = vmax.f32 %v2837, 0.0
        %v2918 = vmax.f32 %v2839, 0.0
        %v2919 = vmax.f32 %v2841, 0.0
        %v2920 = vmax.f32 %v2843, 0.0
        %v2921 = vmax.f32 %v2847, 0.0
        %v2922 = vmax.f32 %v2849, 0.0
        %v2923 = vmax.f32 %v2851, 0.0
        %v2924 = vmax.f32 %v2853, 0.0
        %v2925 = vmax.f32 %v2857, 0.0
        %v2926 = vmax.f32 %v2859, 0.0
        %v2927 = vmax.f32 %v2861, 0.0
        %v2928 = vmax.f32 %v2863, 0.0
        %v2929 = vpack.c.bf16 %v2867, %v2865
        %v2930 = vpack.c.bf16 %v2868, %v2866
        %v2931 = vpack.c.bf16 %v2871, %v2869
        %v2932 = vpack.c.bf16 %v2872, %v2870
        %v2933 = vpack.c.bf16 %v2875, %v2873
        %v2934 = vpack.c.bf16 %v2876, %v2874
        %v2935 = vpack.c.bf16 %v2879, %v2877
        %v2936 = vpack.c.bf16 %v2880, %v2878
        %v2937 = vpack.c.bf16 %v2883, %v2881
        %v2938 = vpack.c.bf16 %v2884, %v2882
        %v2939 = vpack.c.bf16 %v2887, %v2885
        %v2940 = vpack.c.bf16 %v2888, %v2886
        %v2941 = vpack.c.bf16 %v2891, %v2889
        %v2942 = vpack.c.bf16 %v2892, %v2890
        %v2943 = vpack.c.bf16 %v2895, %v2893
        %v2944 = vpack.c.bf16 %v2896, %v2894
        %v2945 = vpack.c.bf16 %v2899, %v2897
        %v2946 = vpack.c.bf16 %v2900, %v2898
        %v2947 = vpack.c.bf16 %v2903, %v2901
        %v2948 = vpack.c.bf16 %v2904, %v2902
        %v2949 = vpack.c.bf16 %v2907, %v2905
        %v2950 = vpack.c.bf16 %v2908, %v2906
        %v2951 = vpack.c.bf16 %v2911, %v2909
        %v2952 = vpack.c.bf16 %v2912, %v2910
        %v2953 = vpack.c.bf16 %v2915, %v2913
        %v2954 = vpack.c.bf16 %v2916, %v2914
        %v2955 = vpack.c.bf16 %v2919, %v2917
        %v2956 = vpack.c.bf16 %v2920, %v2918
        %v2957 = vpack.c.bf16 %v2923, %v2921
        %v2958 = vpack.c.bf16 %v2924, %v2922
        %v2959 = vpack.c.bf16 %v2927, %v2925
        %v2960 = vpack.c.bf16 %v2928, %v2926
        %v2961 = vld [vmem:[#allocation11] sm:$0xf]
        %v2962 = vld [vmem:[#allocation11 + $0x4] sm:$0xf]
        %v2963 = vld [vmem:[#allocation11 + $0x8] sm:$0xf]
        %v2964 = vld [vmem:[#allocation11 + $0xc] sm:$0xf]
        %v2965 = vld [vmem:[#allocation11 + $0x10] sm:$0xf]
        %v2966 = vld [vmem:[#allocation11 + $0x14] sm:$0xf]
        %v2967 = vld [vmem:[#allocation11 + $0x18] sm:$0xf]
        %v2968 = vld [vmem:[#allocation11 + $0x1c] sm:$0xf]
        %v2969 = vld [vmem:[#allocation11 + $0x20] sm:$0xf]
        %v2970 = vld [vmem:[#allocation11 + $0x24] sm:$0xf]
        %v2971 = vld [vmem:[#allocation11 + $0x28] sm:$0xf]
        %v2972 = vld [vmem:[#allocation11 + $0x2c] sm:$0xf]
        %v2973 = vld [vmem:[#allocation11 + $0x30] sm:$0xf]
        %v2974 = vld [vmem:[#allocation11 + $0x34] sm:$0xf]
        %v2975 = vld [vmem:[#allocation11 + $0x38] sm:$0xf]
        %v2976 = vld [vmem:[#allocation11 + $0x3c] sm:$0xf]
        %v2977 = vld [vmem:[#allocation11 + $0x40] sm:$0xf]
        %v2978 = vld [vmem:[#allocation11 + $0x44] sm:$0xf]
        %v2979 = vld [vmem:[#allocation11 + $0x48] sm:$0xf]
        %v2980 = vld [vmem:[#allocation11 + $0x4c] sm:$0xf]
        %v2981 = vld [vmem:[#allocation11 + $0x50] sm:$0xf]
        %v2982 = vld [vmem:[#allocation11 + $0x54] sm:$0xf]
        %v2983 = vld [vmem:[#allocation11 + $0x58] sm:$0xf]
        %v2984 = vld [vmem:[#allocation11 + $0x5c] sm:$0xf]
        %v2985 = vld [vmem:[#allocation11 + $0x60] sm:$0xf]
        %v2986 = vld [vmem:[#allocation11 + $0x64] sm:$0xf]
        %v2987 = vld [vmem:[#allocation11 + $0x68] sm:$0xf]
        %v2988 = vld [vmem:[#allocation11 + $0x6c] sm:$0xf]
        %v2989 = vld [vmem:[#allocation11 + $0x70] sm:$0xf]
        %v2990 = vld [vmem:[#allocation11 + $0x74] sm:$0xf]
        %v2991 = vld [vmem:[#allocation11 + $0x78] sm:$0xf]
        %v2992 = vld [vmem:[#allocation11 + $0x7c] sm:$0xf]
        %v2993 = vld [vmem:[%s10] sm:$0x1]
        %v2995 = vlaneseq
        %v2996 = vshrl.u32 %v2995, 7
        %v2997 = vsub.s32 0, %v2996
        %v2998 = vrot.slane %v2993, %v2997
        %v3032 = vunpack.c.l.b16 %v2961
        %v3033 = vunpack.c.l.b16 %v2962
        %v3034 = vunpack.c.l.b16 %v2963
        %v3035 = vunpack.c.l.b16 %v2964
        %v3036 = vunpack.c.l.b16 %v2965
        %v3037 = vunpack.c.l.b16 %v2966
        %v3038 = vunpack.c.l.b16 %v2967
        %v3039 = vunpack.c.l.b16 %v2968
        %v3040 = vunpack.c.l.b16 %v2969
        %v3041 = vunpack.c.l.b16 %v2970
        %v3042 = vunpack.c.l.b16 %v2971
        %v3043 = vunpack.c.l.b16 %v2972
        %v3044 = vunpack.c.l.b16 %v2973
        %v3045 = vunpack.c.l.b16 %v2974
        %v3046 = vunpack.c.l.b16 %v2975
        %v3047 = vunpack.c.l.b16 %v2976
        %v3048 = vunpack.c.l.b16 %v2977
        %v3049 = vunpack.c.l.b16 %v2978
        %v3050 = vunpack.c.l.b16 %v2979
        %v3051 = vunpack.c.l.b16 %v2980
        %v3052 = vunpack.c.l.b16 %v2981
        %v3053 = vunpack.c.l.b16 %v2982
        %v3054 = vunpack.c.l.b16 %v2983
        %v3055 = vunpack.c.l.b16 %v2984
        %v3056 = vunpack.c.l.b16 %v2985
        %v3057 = vunpack.c.l.b16 %v2986
        %v3058 = vunpack.c.l.b16 %v2987
        %v3059 = vunpack.c.l.b16 %v2988
        %v3060 = vunpack.c.l.b16 %v2989
        %v3061 = vunpack.c.l.b16 %v2990
        %v3062 = vunpack.c.l.b16 %v2991
        %v3063 = vunpack.c.l.b16 %v2992
        %v3064 = vpack.c.b16 %v3033, %v3032
        %v3065 = vpack.c.b16 %v3035, %v3034
        %v3066 = vpack.c.b16 %v3037, %v3036
        %v3067 = vpack.c.b16 %v3039, %v3038
        %v3068 = vpack.c.b16 %v3041, %v3040
        %v3069 = vpack.c.b16 %v3043, %v3042
        %v3070 = vpack.c.b16 %v3045, %v3044
        %v3071 = vpack.c.b16 %v3047, %v3046
        %v3072 = vpack.c.b16 %v3049, %v3048
        %v3073 = vpack.c.b16 %v3051, %v3050
        %v3074 = vpack.c.b16 %v3053, %v3052
        %v3075 = vpack.c.b16 %v3055, %v3054
        %v3076 = vpack.c.b16 %v3057, %v3056
        %v3077 = vpack.c.b16 %v3059, %v3058
        %v3078 = vpack.c.b16 %v3061, %v3060
        %v3079 = vpack.c.b16 %v3063, %v3062
        %3096 = vmatprep.subr.bf16.mxu0 0
        %3097 = vmatpush1.bf16.msra.mxu0 %v3064
        %3098 = vmatprep.subr.bf16.mxu0 0
        %3099 = vmatpush1.bf16.msra.mxu0 %v3065
        %3100 = vmatprep.subr.bf16.mxu0 0
        %3101 = vmatpush1.bf16.msra.mxu0 %v3066
        %3102 = vmatprep.subr.bf16.mxu0 0
        %3103 = vmatpush1.bf16.msra.mxu0 %v3067
        %3104 = vmatprep.subr.bf16.mxu0 0
        %3105 = vmatpush1.bf16.msra.mxu0 %v3068
        %3106 = vmatprep.subr.bf16.mxu0 0
        %3107 = vmatpush1.bf16.msra.mxu0 %v3069
        %3108 = vmatprep.subr.bf16.mxu0 0
        %3109 = vmatpush1.bf16.msra.mxu0 %v3070
        %3110 = vmatprep.subr.bf16.mxu0 0
        %3111 = vmatpush1.bf16.msra.mxu0 %v3071
        %3112 = vmatprep.subr.bf16.mxu0 0
        %3113 = vmatpush1.bf16.msra.mxu0 %v3072
        %3114 = vmatprep.subr.bf16.mxu0 0
        %3115 = vmatpush1.bf16.msra.mxu0 %v3073
        %3116 = vmatprep.subr.bf16.mxu0 0
        %3117 = vmatpush1.bf16.msra.mxu0 %v3074
        %3118 = vmatprep.subr.bf16.mxu0 0
        %3119 = vmatpush1.bf16.msra.mxu0 %v3075
        %3120 = vmatprep.subr.bf16.mxu0 0
        %3121 = vmatpush1.bf16.msra.mxu0 %v3076
        %3122 = vmatprep.subr.bf16.mxu0 0
        %3123 = vmatpush1.bf16.msra.mxu0 %v3077
        %3124 = vmatprep.subr.bf16.mxu0 0
        %3125 = vmatpush1.bf16.msra.mxu0 %v3078
        %3126 = vmatprep.subr.bf16.mxu0 0
        %3127 = vmatpush1.bf16.msra.mxu0 %v3079
        %3128 = vmatprep.mubr.bf16.mxu0 %v2930
        %3129 = vmatmul.mubr.bf16.gmra.mrb[0].mxu0 %v2929
        %v3130 = vpop.f32.mrb[0].mxu0
        %v3131 = vadd.f32 %v2998, %v3130
        %v3132 = vpop.f32.mrb[0].mxu0
        %v3133 = vpop.f32.mrb[0].mxu0
        %v3134 = vadd.f32 %v2998, %v3133
        %v3135 = vpop.f32.mrb[0].mxu0
        %3136 = vmatprep.mubr.bf16.mxu0 %v2932
        %3137 = vmatmul.mubr.bf16.gmra.mrb[0].mxu0 %v2931
        %v3138 = vpop.f32.mrb[0].mxu0
        %v3139 = vadd.f32 %v2998, %v3138
        %v3140 = vpop.f32.mrb[0].mxu0
        %v3141 = vpop.f32.mrb[0].mxu0
        %v3142 = vadd.f32 %v2998, %v3141
        %v3143 = vpop.f32.mrb[0].mxu0
        %3144 = vmatprep.mubr.bf16.mxu0 %v2934
        %3145 = vmatmul.mubr.bf16.gmra.mrb[0].mxu0 %v2933
        %v3146 = vpop.f32.mrb[0].mxu0
        %v3147 = vadd.f32 %v2998, %v3146
        %v3148 = vpop.f32.mrb[0].mxu0
        %v3149 = vpop.f32.mrb[0].mxu0
        %v3150 = vadd.f32 %v2998, %v3149
        %v3151 = vpop.f32.mrb[0].mxu0
        %3152 = vmatprep.mubr.bf16.mxu0 %v2936
        %3153 = vmatmul.mubr.bf16.gmra.mrb[0].mxu0 %v2935
        %v3154 = vpop.f32.mrb[0].mxu0
        %v3155 = vadd.f32 %v2998, %v3154
        %v3156 = vpop.f32.mrb[0].mxu0
        %v3157 = vpop.f32.mrb[0].mxu0
        %v3158 = vadd.f32 %v2998, %v3157
        %v3159 = vpop.f32.mrb[0].mxu0
        %3160 = vmatprep.mubr.bf16.mxu0 %v2938
        %3161 = vmatmul.mubr.bf16.gmra.mrb[0].mxu0 %v2937
        %v3162 = vpop.f32.mrb[0].mxu0
        %v3163 = vadd.f32 %v2998, %v3162
        %v3164 = vpop.f32.mrb[0].mxu0
        %v3165 = vpop.f32.mrb[0].mxu0
        %v3166 = vadd.f32 %v2998, %v3165
        %v3167 = vpop.f32.mrb[0].mxu0
        %3168 = vmatprep.mubr.bf16.mxu0 %v2940
        %3169 = vmatmul.mubr.bf16.gmra.mrb[0].mxu0 %v2939
        %v3170 = vpop.f32.mrb[0].mxu0
        %v3171 = vadd.f32 %v2998, %v3170
        %v3172 = vpop.f32.mrb[0].mxu0
        %v3173 = vpop.f32.mrb[0].mxu0
        %v3174 = vadd.f32 %v2998, %v3173
        %v3175 = vpop.f32.mrb[0].mxu0
        %3176 = vmatprep.mubr.bf16.mxu0 %v2942
        %3177 = vmatmul.mubr.bf16.gmra.mrb[0].mxu0 %v2941
        %v3178 = vpop.f32.mrb[0].mxu0
        %v3179 = vadd.f32 %v2998, %v3178
        %v3180 = vpop.f32.mrb[0].mxu0
        %v3181 = vpop.f32.mrb[0].mxu0
        %v3182 = vadd.f32 %v2998, %v3181
        %v3183 = vpop.f32.mrb[0].mxu0
        %3184 = vmatprep.mubr.bf16.mxu0 %v2944
        %3185 = vmatmul.mubr.bf16.gmra.mrb[0].mxu0 %v2943
        %v3186 = vpop.f32.mrb[0].mxu0
        %v3187 = vadd.f32 %v2998, %v3186
        %v3188 = vpop.f32.mrb[0].mxu0
        %v3189 = vpop.f32.mrb[0].mxu0
        %v3190 = vadd.f32 %v2998, %v3189
        %v3191 = vpop.f32.mrb[0].mxu0
        %3192 = vmatprep.mubr.bf16.mxu0 %v2946
        %3193 = vmatmul.mubr.bf16.gmra.mrb[0].mxu0 %v2945
        %v3194 = vpop.f32.mrb[0].mxu0
        %v3195 = vadd.f32 %v2998, %v3194
        %v3196 = vpop.f32.mrb[0].mxu0
        %v3197 = vpop.f32.mrb[0].mxu0
        %v3198 = vadd.f32 %v2998, %v3197
        %v3199 = vpop.f32.mrb[0].mxu0
        %3200 = vmatprep.mubr.bf16.mxu0 %v2948
        %3201 = vmatmul.mubr.bf16.gmra.mrb[0].mxu0 %v2947
        %v3202 = vpop.f32.mrb[0].mxu0
        %v3203 = vadd.f32 %v2998, %v3202
        %v3204 = vpop.f32.mrb[0].mxu0
        %v3205 = vpop.f32.mrb[0].mxu0
        %v3206 = vadd.f32 %v2998, %v3205
        %v3207 = vpop.f32.mrb[0].mxu0
        %3208 = vmatprep.mubr.bf16.mxu0 %v2950
        %3209 = vmatmul.mubr.bf16.gmra.mrb[0].mxu0 %v2949
        %v3210 = vpop.f32.mrb[0].mxu0
        %v3211 = vadd.f32 %v2998, %v3210
        %v3212 = vpop.f32.mrb[0].mxu0
        %v3213 = vpop.f32.mrb[0].mxu0
        %v3214 = vadd.f32 %v2998, %v3213
        %v3215 = vpop.f32.mrb[0].mxu0
        %3216 = vmatprep.mubr.bf16.mxu0 %v2952
        %3217 = vmatmul.mubr.bf16.gmra.mrb[0].mxu0 %v2951
        %v3218 = vpop.f32.mrb[0].mxu0
        %v3219 = vadd.f32 %v2998, %v3218
        %v3220 = vpop.f32.mrb[0].mxu0
        %v3221 = vpop.f32.mrb[0].mxu0
        %v3222 = vadd.f32 %v2998, %v3221
        %v3223 = vpop.f32.mrb[0].mxu0
        %3224 = vmatprep.mubr.bf16.mxu0 %v2954
        %3225 = vmatmul.mubr.bf16.gmra.mrb[0].mxu0 %v2953
        %v3226 = vpop.f32.mrb[0].mxu0
        %v3227 = vadd.f32 %v2998, %v3226
        %v3228 = vpop.f32.mrb[0].mxu0
        %v3229 = vpop.f32.mrb[0].mxu0
        %v3230 = vadd.f32 %v2998, %v3229
        %v3231 = vpop.f32.mrb[0].mxu0
        %3232 = vmatprep.mubr.bf16.mxu0 %v2956
        %3233 = vmatmul.mubr.bf16.gmra.mrb[0].mxu0 %v2955
        %v3234 = vpop.f32.mrb[0].mxu0
        %v3235 = vadd.f32 %v2998, %v3234
        %v3236 = vpop.f32.mrb[0].mxu0
        %v3237 = vpop.f32.mrb[0].mxu0
        %v3238 = vadd.f32 %v2998, %v3237
        %v3239 = vpop.f32.mrb[0].mxu0
        %3240 = vmatprep.mubr.bf16.mxu0 %v2958
        %3241 = vmatmul.mubr.bf16.gmra.mrb[0].mxu0 %v2957
        %v3242 = vpop.f32.mrb[0].mxu0
        %v3243 = vadd.f32 %v2998, %v3242
        %v3244 = vpop.f32.mrb[0].mxu0
        %v3245 = vpop.f32.mrb[0].mxu0
        %v3246 = vadd.f32 %v2998, %v3245
        %v3247 = vpop.f32.mrb[0].mxu0
        %3248 = vmatprep.mubr.bf16.mxu0 %v2960
        %3249 = vmatmul.mubr.bf16.gmra.mrb[0].mxu0 %v2959
        %v3250 = vpop.f32.mrb[0].mxu0
        %v3251 = vadd.f32 %v2998, %v3250
        %v3252 = vpop.f32.mrb[0].mxu0
        %v3253 = vpop.f32.mrb[0].mxu0
        %v3254 = vadd.f32 %v2998, %v3253
        %v3255 = vpop.f32.mrb[0].mxu0
        %3256 = vdwg.mxu0
        %v3257 = vxor.u32 %v3131, 2147483648
        %v3258 = vxor.u32 %v3134, 2147483648
        %v3259 = vxor.u32 %v3139, 2147483648
        %v3260 = vxor.u32 %v3142, 2147483648
        %v3261 = vxor.u32 %v3147, 2147483648
        %v3262 = vxor.u32 %v3150, 2147483648
        %v3263 = vxor.u32 %v3155, 2147483648
        %v3264 = vxor.u32 %v3158, 2147483648
        %v3265 = vxor.u32 %v3163, 2147483648
        %v3266 = vxor.u32 %v3166, 2147483648
        %v3267 = vxor.u32 %v3171, 2147483648
        %v3268 = vxor.u32 %v3174, 2147483648
        %v3269 = vxor.u32 %v3179, 2147483648
        %v3270 = vxor.u32 %v3182, 2147483648
        %v3271 = vxor.u32 %v3187, 2147483648
        %v3272 = vxor.u32 %v3190, 2147483648
        %v3273 = vxor.u32 %v3195, 2147483648
        %v3274 = vxor.u32 %v3198, 2147483648
        %v3275 = vxor.u32 %v3203, 2147483648
        %v3276 = vxor.u32 %v3206, 2147483648
        %v3277 = vxor.u32 %v3211, 2147483648
        %v3278 = vxor.u32 %v3214, 2147483648
        %v3279 = vxor.u32 %v3219, 2147483648
        %v3280 = vxor.u32 %v3222, 2147483648
        %v3281 = vxor.u32 %v3227, 2147483648
        %v3282 = vxor.u32 %v3230, 2147483648
        %v3283 = vxor.u32 %v3235, 2147483648
        %v3284 = vxor.u32 %v3238, 2147483648
        %v3285 = vxor.u32 %v3243, 2147483648
        %v3286 = vxor.u32 %v3246, 2147483648
        %v3287 = vxor.u32 %v3251, 2147483648
        %v3288 = vxor.u32 %v3254, 2147483648
        %v3289 = vmul.f32 %v3257, 1.442695
        %v3290 = vpow.pop %v3289
        %v3291 = vmul.f32 %v3258, 1.442695
        %v3292 = vpow.pop %v3291
        %v3293 = vmul.f32 %v3259, 1.442695
        %v3294 = vpow.pop %v3293
        %v3295 = vmul.f32 %v3260, 1.442695
        %v3296 = vpow.pop %v3295
        %v3297 = vmul.f32 %v3261, 1.442695
        %v3298 = vpow.pop %v3297
        %v3299 = vmul.f32 %v3262, 1.442695
        %v3300 = vpow.pop %v3299
        %v3301 = vmul.f32 %v3263, 1.442695
        %v3302 = vpow.pop %v3301
        %v3303 = vmul.f32 %v3264, 1.442695
        %v3304 = vpow.pop %v3303
        %v3305 = vmul.f32 %v3265, 1.442695
        %v3306 = vpow.pop %v3305
        %v3307 = vmul.f32 %v3266, 1.442695
        %v3308 = vpow.pop %v3307
        %v3309 = vmul.f32 %v3267, 1.442695
        %v3310 = vpow.pop %v3309
        %v3311 = vmul.f32 %v3268, 1.442695
        %v3312 = vpow.pop %v3311
        %v3313 = vmul.f32 %v3269, 1.442695
        %v3314 = vpow.pop %v3313
        %v3315 = vmul.f32 %v3270, 1.442695
        %v3316 = vpow.pop %v3315
        %v3317 = vmul.f32 %v3271, 1.442695
        %v3318 = vpow.pop %v3317
        %v3319 = vmul.f32 %v3272, 1.442695
        %v3320 = vpow.pop %v3319
        %v3321 = vmul.f32 %v3273, 1.442695
        %v3322 = vpow.pop %v3321
        %v3323 = vmul.f32 %v3274, 1.442695
        %v3324 = vpow.pop %v3323
        %v3325 = vmul.f32 %v3275, 1.442695
        %v3326 = vpow.pop %v3325
        %v3327 = vmul.f32 %v3276, 1.442695
        %v3328 = vpow.pop %v3327
        %v3329 = vmul.f32 %v3277, 1.442695
        %v3330 = vpow.pop %v3329
        %v3331 = vmul.f32 %v3278, 1.442695
        %v3332 = vpow.pop %v3331
        %v3333 = vmul.f32 %v3279, 1.442695
        %v3334 = vpow.pop %v3333
        %v3335 = vmul.f32 %v3280, 1.442695
        %v3336 = vpow.pop %v3335
        %v3337 = vmul.f32 %v3281, 1.442695
        %v3338 = vpow.pop %v3337
        %v3339 = vmul.f32 %v3282, 1.442695
        %v3340 = vpow.pop %v3339
        %v3341 = vmul.f32 %v3283, 1.442695
        %v3342 = vpow.pop %v3341
        %v3343 = vmul.f32 %v3284, 1.442695
        %v3344 = vpow.pop %v3343
        %v3345 = vmul.f32 %v3285, 1.442695
        %v3346 = vpow.pop %v3345
        %v3347 = vmul.f32 %v3286, 1.442695
        %v3348 = vpow.pop %v3347
        %v3349 = vmul.f32 %v3287, 1.442695
        %v3350 = vpow.pop %v3349
        %v3351 = vmul.f32 %v3288, 1.442695
        %v3352 = vpow.pop %v3351
        %v3353 = vadd.f32 %v3290, 1.0
        %v3354 = vadd.f32 %v3292, 1.0
        %v3355 = vadd.f32 %v3294, 1.0
        %v3356 = vadd.f32 %v3296, 1.0
        %v3357 = vadd.f32 %v3298, 1.0
        %v3358 = vadd.f32 %v3300, 1.0
        %v3359 = vadd.f32 %v3302, 1.0
        %v3360 = vadd.f32 %v3304, 1.0
        %v3361 = vadd.f32 %v3306, 1.0
        %v3362 = vadd.f32 %v3308, 1.0
        %v3363 = vadd.f32 %v3310, 1.0
        %v3364 = vadd.f32 %v3312, 1.0
        %v3365 = vadd.f32 %v3314, 1.0
        %v3366 = vadd.f32 %v3316, 1.0
        %v3367 = vadd.f32 %v3318, 1.0
        %v3368 = vadd.f32 %v3320, 1.0
        %v3369 = vadd.f32 %v3322, 1.0
        %v3370 = vadd.f32 %v3324, 1.0
        %v3371 = vadd.f32 %v3326, 1.0
        %v3372 = vadd.f32 %v3328, 1.0
        %v3373 = vadd.f32 %v3330, 1.0
        %v3374 = vadd.f32 %v3332, 1.0
        %v3375 = vadd.f32 %v3334, 1.0
        %v3376 = vadd.f32 %v3336, 1.0
        %v3377 = vadd.f32 %v3338, 1.0
        %v3378 = vadd.f32 %v3340, 1.0
        %v3379 = vadd.f32 %v3342, 1.0
        %v3380 = vadd.f32 %v3344, 1.0
        %v3381 = vadd.f32 %v3346, 1.0
        %v3382 = vadd.f32 %v3348, 1.0
        %v3383 = vadd.f32 %v3350, 1.0
        %v3384 = vadd.f32 %v3352, 1.0
        %v3385 = vrcp.pop %v3353
        %v3386 = vmul.f32 1.0, %v3385
        %v3387 = vrcp.pop %v3354
        %v3388 = vmul.f32 1.0, %v3387
        %v3389 = vrcp.pop %v3355
        %v3390 = vmul.f32 1.0, %v3389
        %v3391 = vrcp.pop %v3356
        %v3392 = vmul.f32 1.0, %v3391
        %v3393 = vrcp.pop %v3357
        %v3394 = vmul.f32 1.0, %v3393
        %v3395 = vrcp.pop %v3358
        %v3396 = vmul.f32 1.0, %v3395
        %v3397 = vrcp.pop %v3359
        %v3398 = vmul.f32 1.0, %v3397
        %v3399 = vrcp.pop %v3360
        %v3400 = vmul.f32 1.0, %v3399
        %v3401 = vrcp.pop %v3361
        %v3402 = vmul.f32 1.0, %v3401
        %v3403 = vrcp.pop %v3362
        %v3404 = vmul.f32 1.0, %v3403
        %v3405 = vrcp.pop %v3363
        %v3406 = vmul.f32 1.0, %v3405
        %v3407 = vrcp.pop %v3364
        %v3408 = vmul.f32 1.0, %v3407
        %v3409 = vrcp.pop %v3365
        %v3410 = vmul.f32 1.0, %v3409
        %v3411 = vrcp.pop %v3366
        %v3412 = vmul.f32 1.0, %v3411
        %v3413 = vrcp.pop %v3367
        %v3414 = vmul.f32 1.0, %v3413
        %v3415 = vrcp.pop %v3368
        %v3416 = vmul.f32 1.0, %v3415
        %v3417 = vrcp.pop %v3369
        %v3418 = vmul.f32 1.0, %v3417
        %v3419 = vrcp.pop %v3370
        %v3420 = vmul.f32 1.0, %v3419
        %v3421 = vrcp.pop %v3371
        %v3422 = vmul.f32 1.0, %v3421
        %v3423 = vrcp.pop %v3372
        %v3424 = vmul.f32 1.0, %v3423
        %v3425 = vrcp.pop %v3373
        %v3426 = vmul.f32 1.0, %v3425
        %v3427 = vrcp.pop %v3374
        %v3428 = vmul.f32 1.0, %v3427
        %v3429 = vrcp.pop %v3375
        %v3430 = vmul.f32 1.0, %v3429
        %v3431 = vrcp.pop %v3376
        %v3432 = vmul.f32 1.0, %v3431
        %v3433 = vrcp.pop %v3377
        %v3434 = vmul.f32 1.0, %v3433
        %v3435 = vrcp.pop %v3378
        %v3436 = vmul.f32 1.0, %v3435
        %v3437 = vrcp.pop %v3379
        %v3438 = vmul.f32 1.0, %v3437
        %v3439 = vrcp.pop %v3380
        %v3440 = vmul.f32 1.0, %v3439
        %v3441 = vrcp.pop %v3381
        %v3442 = vmul.f32 1.0, %v3441
        %v3443 = vrcp.pop %v3382
        %v3444 = vmul.f32 1.0, %v3443
        %v3445 = vrcp.pop %v3383
        %v3446 = vmul.f32 1.0, %v3445
        %v3447 = vrcp.pop %v3384
        %v3448 = vmul.f32 1.0, %v3447
        %v3449 = vpack.c.bf16 %v3388, %v3386
        %v3450 = vpack.c.bf16 %v3392, %v3390
        %v3451 = vpack.c.bf16 %v3396, %v3394
        %v3452 = vpack.c.bf16 %v3400, %v3398
        %v3453 = vpack.c.bf16 %v3404, %v3402
        %v3454 = vpack.c.bf16 %v3408, %v3406
        %v3455 = vpack.c.bf16 %v3412, %v3410
        %v3456 = vpack.c.bf16 %v3416, %v3414
        %v3457 = vpack.c.bf16 %v3420, %v3418
        %v3458 = vpack.c.bf16 %v3424, %v3422
        %v3459 = vpack.c.bf16 %v3428, %v3426
        %v3460 = vpack.c.bf16 %v3432, %v3430
        %v3461 = vpack.c.bf16 %v3436, %v3434
        %v3462 = vpack.c.bf16 %v3440, %v3438
        %v3463 = vpack.c.bf16 %v3444, %v3442
        %v3464 = vpack.c.bf16 %v3448, %v3446
        %v3481 = vunpack.c.l.b16 %v3449
        %v3482 = vunpack.c.h.b16 %v3449
        %v3483 = vunpack.c.l.b16 %v3450
        %v3484 = vunpack.c.h.b16 %v3450
        %v3485 = vunpack.c.l.b16 %v3451
        %v3486 = vunpack.c.h.b16 %v3451
        %v3487 = vunpack.c.l.b16 %v3452
        %v3488 = vunpack.c.h.b16 %v3452
        %v3489 = vunpack.c.l.b16 %v3453
        %v3490 = vunpack.c.h.b16 %v3453
        %v3491 = vunpack.c.l.b16 %v3454
        %v3492 = vunpack.c.h.b16 %v3454
        %v3493 = vunpack.c.l.b16 %v3455
        %v3494 = vunpack.c.h.b16 %v3455
        %v3495 = vunpack.c.l.b16 %v3456
        %v3496 = vunpack.c.h.b16 %v3456
        %v3497 = vunpack.c.l.b16 %v3457
        %v3498 = vunpack.c.h.b16 %v3457
        %v3499 = vunpack.c.l.b16 %v3458
        %v3500 = vunpack.c.h.b16 %v3458
        %v3501 = vunpack.c.l.b16 %v3459
        %v3502 = vunpack.c.h.b16 %v3459
        %v3503 = vunpack.c.l.b16 %v3460
        %v3504 = vunpack.c.h.b16 %v3460
        %v3505 = vunpack.c.l.b16 %v3461
        %v3506 = vunpack.c.h.b16 %v3461
        %v3507 = vunpack.c.l.b16 %v3462
        %v3508 = vunpack.c.h.b16 %v3462
        %v3509 = vunpack.c.l.b16 %v3463
        %v3510 = vunpack.c.h.b16 %v3463
        %v3511 = vunpack.c.l.b16 %v3464
        %v3512 = vunpack.c.h.b16 %v3464
        %v3513 = vpack.c.b16 %v3481, %v3481
        %v3514 = vpack.c.b16 %v3482, %v3482
        %v3515 = vpack.c.b16 %v3483, %v3483
        %v3516 = vpack.c.b16 %v3484, %v3484
        %v3517 = vpack.c.b16 %v3485, %v3485
        %v3518 = vpack.c.b16 %v3486, %v3486
        %v3519 = vpack.c.b16 %v3487, %v3487
        %v3520 = vpack.c.b16 %v3488, %v3488
        %v3521 = vpack.c.b16 %v3489, %v3489
        %v3522 = vpack.c.b16 %v3490, %v3490
        %v3523 = vpack.c.b16 %v3491, %v3491
        %v3524 = vpack.c.b16 %v3492, %v3492
        %v3525 = vpack.c.b16 %v3493, %v3493
        %v3526 = vpack.c.b16 %v3494, %v3494
        %v3527 = vpack.c.b16 %v3495, %v3495
        %v3528 = vpack.c.b16 %v3496, %v3496
        %v3529 = vpack.c.b16 %v3497, %v3497
        %v3530 = vpack.c.b16 %v3498, %v3498
        %v3531 = vpack.c.b16 %v3499, %v3499
        %v3532 = vpack.c.b16 %v3500, %v3500
        %v3533 = vpack.c.b16 %v3501, %v3501
        %v3534 = vpack.c.b16 %v3502, %v3502
        %v3535 = vpack.c.b16 %v3503, %v3503
        %v3536 = vpack.c.b16 %v3504, %v3504
        %v3537 = vpack.c.b16 %v3505, %v3505
        %v3538 = vpack.c.b16 %v3506, %v3506
        %v3539 = vpack.c.b16 %v3507, %v3507
        %v3540 = vpack.c.b16 %v3508, %v3508
        %v3541 = vpack.c.b16 %v3509, %v3509
        %v3542 = vpack.c.b16 %v3510, %v3510
        %v3543 = vpack.c.b16 %v3511, %v3511
        %v3544 = vpack.c.b16 %v3512, %v3512
        %3577 = vst [vmem:[%s503] sm:$0xf] %v3513
        %3578 = vst [vmem:[%s503 + $0x4] sm:$0xf] %v3514
        %3579 = vst [vmem:[%s503 + $0x8] sm:$0xf] %v3515
        %3580 = vst [vmem:[%s503 + $0xc] sm:$0xf] %v3516
        %3581 = vst [vmem:[%s503 + $0x10] sm:$0xf] %v3517
        %3582 = vst [vmem:[%s503 + $0x14] sm:$0xf] %v3518
        %3583 = vst [vmem:[%s503 + $0x18] sm:$0xf] %v3519
        %3584 = vst [vmem:[%s503 + $0x1c] sm:$0xf] %v3520
        %3585 = vst [vmem:[%s503 + $0x20] sm:$0xf] %v3521
        %3586 = vst [vmem:[%s503 + $0x24] sm:$0xf] %v3522
        %3587 = vst [vmem:[%s503 + $0x28] sm:$0xf] %v3523
        %3588 = vst [vmem:[%s503 + $0x2c] sm:$0xf] %v3524
        %3589 = vst [vmem:[%s503 + $0x30] sm:$0xf] %v3525
        %3590 = vst [vmem:[%s503 + $0x34] sm:$0xf] %v3526
        %3591 = vst [vmem:[%s503 + $0x38] sm:$0xf] %v3527
        %3592 = vst [vmem:[%s503 + $0x3c] sm:$0xf] %v3528
        %3593 = vst [vmem:[%s503 + $0x40] sm:$0xf] %v3529
        %3594 = vst [vmem:[%s503 + $0x44] sm:$0xf] %v3530
        %3595 = vst [vmem:[%s503 + $0x48] sm:$0xf] %v3531
        %3596 = vst [vmem:[%s503 + $0x4c] sm:$0xf] %v3532
        %3597 = vst [vmem:[%s503 + $0x50] sm:$0xf] %v3533
        %3598 = vst [vmem:[%s503 + $0x54] sm:$0xf] %v3534
        %3599 = vst [vmem:[%s503 + $0x58] sm:$0xf] %v3535
        %3600 = vst [vmem:[%s503 + $0x5c] sm:$0xf] %v3536
        %3601 = vst [vmem:[%s503 + $0x60] sm:$0xf] %v3537
        %3602 = vst [vmem:[%s503 + $0x64] sm:$0xf] %v3538
        %3603 = vst [vmem:[%s503 + $0x68] sm:$0xf] %v3539
        %3604 = vst [vmem:[%s503 + $0x6c] sm:$0xf] %v3540
        %3605 = vst [vmem:[%s503 + $0x70] sm:$0xf] %v3541
        %3606 = vst [vmem:[%s503 + $0x74] sm:$0xf] %v3542
        %3607 = vst [vmem:[%s503 + $0x78] sm:$0xf] %v3543
        %3608 = vst [vmem:[%s503 + $0x7c] sm:$0xf] %v3544
        %s3609 = sand.u32 %s282, 1
        %s3610 = scalar_lea.sflag [#allocation4], %s3609
        %s3611 = sand.u32 %s282, 1
        %s3612 = smul.addr %s3611, 128
        %s3613 = scalar_lea.vmem [#allocation13], %s3612
        // Predicated region
        $region89: #{tpu_custom_call.1} parent=63 // pred_check
          %p3614 = pneg %p292
        $region90: #{tpu_custom_call.1} parent=63 // pred_check_branch
          %3616 = sbr.rel (%p3614) target = $region92
        $region91: #{tpu_custom_call.1} parent=63 // pred_region
          %s3617 = smul.u32 32, %s33
          %s3619 = ssub.s32 2048, 2048
          %3620 = vsyncadd %s3610, %s3619
          %s3621 = smul.addr %s3617, 64
          %s3622 = scalar_lea.hbm %s11, %s3621
          %s3623 = sshll.u32 %s3613, 4
          %s3624 = int_to_ptr.vmem [resolvable:$true] %s3623
          %3629 = dma.vmem_to_hbm [thread:$0]  %s3624, 2048, %s3622, %s3610, 64, 64, 4
        $region92: #{tpu_custom_call.1} parent=63 // pred_fallthru
          _
      $region64: #{tpu_custom_call.1} parent=5 // pred_fallthru
        _
      %p3630 = scmp.le.s32.totalorder 2, %s28
      // Predicated region
      $region93: #{tpu_custom_call.1} parent=5 // pred_check
        %p3631 = pneg %p3630
      $region94: #{tpu_custom_call.1} parent=5 // pred_check_branch
        %3633 = sbr.rel (%p3631) target = $region96
      $region95: #{tpu_custom_call.1} parent=5 // pred_region
        %s3634 = ssub.s32 %s28, 2
        // Predicated region
        $region97: #{tpu_custom_call.1} parent=95 // pred_check
          %p3635 = pneg %p298
        $region98: #{tpu_custom_call.1} parent=95 // pred_check_branch
          %3637 = sbr.rel (%p3635) target = $region100
        $region99: #{tpu_custom_call.1} parent=95 // pred_region
          %s3638 = sand.u32 %s283, 1
          %s3639 = scalar_lea.sflag [#allocation4], %s3638
          %s3640 = sand.u32 %s283, 1
          %s3641 = smul.addr %s3640, 128
          %s3642 = scalar_lea.vmem [#allocation13], %s3641
          %3643 = dma.done %s3639, 2048
        $region100: #{tpu_custom_call.1} parent=95 // pred_fallthru
          _
      $region96: #{tpu_custom_call.1} parent=5 // pred_fallthru
        _
    $region6: #{tpu_custom_call.1} parent=1 // loop_footer
      %s32 = sadd.s32 1, %s28
    $region7: #{tpu_custom_call.1} parent=1 // loop_footer_branch
      %27 = sbr.rel target = $region3
    $region8: #{tpu_custom_call.1} parent=1 // loop_exit
      _
    %3644 = vsyncpa [#allocation3], 1
    %s3645 = scalar_lea.sflag [#allocation3], 1
    %3646 = vsyncpa %s3645, 1
    %3647 = vsyncpa [#allocation6], 1
    %s3648 = scalar_lea.sflag [#allocation6], 1
    %3649 = vsyncpa %s3648, 1
    %3650 = vsyncpa [#allocation9], 1
    %3651 = vsyncpa [#allocation12], 1
    %3652 = vsyncpa [#allocation4], 1
    %s3653 = scalar_lea.sflag [#allocation4], 1
    %3654 = vsyncpa %s3653, 1

</llo_original>
